<compile_context>
chip_gen: v6e
topology: v6e:2x2x1
jax: 0.10.0
libtpu: 0.0.40
codegen_flags: <defaults>
</compile_context>

<pallas_src>
import jax
import jax.numpy as jnp
from jax import lax
from jax.experimental import pallas as pl
from jax.experimental.pallas import tpu as pltpu

_NPER = 4      # packed refs per layer: w_i (Din,3Hp) bf16, w_h (Hp,3Hp) bf16, b_i, b_h (1,3Hp) f32
_BM = 8        # batch tile = sublane count
_LANE = 128


def _round_up(n, m):
    return ((n + m - 1) // m) * m


def make_gru_fc_kernel(num_layers: int, seq_len: int, hidden_pad: int):
    """Fused (stacked GRU + Linear) kernel for fixed layer count / seq len / padded H."""
    Hp = hidden_pad

    def kernel(*refs):
        n_in = 1 + num_layers * _NPER + 2          # x, per-layer packed params, fc_w, fc_b
        x_ref = refs[0]
        fc_w_ref = refs[1 + num_layers * _NPER]
        fc_b_ref = refs[1 + num_layers * _NPER + 1]
        out_ref = refs[n_in]
        seq_refs = refs[n_in + 1:]                 # 0/1/2 (T, BM, Hp) bf16 VMEM scratch bufs

        bm = x_ref.shape[1]

        in_ref = x_ref                             # layer input sequence (time-major ref)
        h_last = None
        for layer in range(num_layers):
            w_i_ref, w_h_ref, b_i_ref, b_h_ref = \
                refs[1 + layer * _NPER: 1 + (layer + 1) * _NPER]
            write_seq = layer < num_layers - 1     # last layer: only final h is needed
            seq_out = seq_refs[layer % len(seq_refs)] if write_seq else None

            def step(t, h, in_ref=in_ref, seq_out=seq_out, write_seq=write_seq,
                     w_i_ref=w_i_ref, w_h_ref=w_h_ref,
                     b_i_ref=b_i_ref, b_h_ref=b_h_ref):
                x_t = in_ref[t]                                          # (bm, Din_pad) bf16
                # Fused gate pre-activations: one input dot + one hidden dot per step.
                gx = jnp.dot(x_t, w_i_ref[...],
                             preferred_element_type=jnp.float32) + b_i_ref[...]
                gh = jnp.dot(h.astype(jnp.bfloat16), w_h_ref[...],
                             preferred_element_type=jnp.float32) + b_h_ref[...]
                r = jax.nn.sigmoid(gx[:, :Hp] + gh[:, :Hp])
                z = jax.nn.sigmoid(gx[:, Hp:2 * Hp] + gh[:, Hp:2 * Hp])
                n = jnp.tanh(gx[:, 2 * Hp:] + r * gh[:, 2 * Hp:])
                h_new = (1.0 - z) * n + z * h
                if write_seq:
                    seq_out[t] = h_new.astype(seq_out.dtype)             # lane-dense store
                return h_new

            h0 = jnp.zeros((bm, Hp), jnp.float32)
            # Fully unrolled time loop (T is small & static) -> LLO can interleave steps.
            h_last = lax.fori_loop(0, seq_len, step, h0, unroll=True)
            if write_seq:
                in_ref = seq_out                    # next layer reads this sequence

        # out = h_T @ W_fc + b_fc  (padded H rows of W_fc are zero -> exact)
        out_ref[...] = (jnp.dot(h_last, fc_w_ref[...],
                                preferred_element_type=jnp.float32) + fc_b_ref[...])

    return kernel


def init_params(key, input_dim, hidden_dim, layer_dim, output_dim):
    """PyTorch-style U(-1/sqrt(H), 1/sqrt(H)) init, per-gate pre-transposed weights.

    Per layer (12 arrays): w_i{r,z,n}: (D_in, H), w_h{r,z,n}: (H, H),
                           b_i{r,z,n}, b_h{r,z,n}: (1, H).
    """
    k = float(1.0 / (hidden_dim ** 0.5))
    n_per = 12
    keys = jax.random.split(key, layer_dim * n_per + 2)
    idx = 0
    params = []
    for layer in range(layer_dim):
        d_in = input_dim if layer == 0 else hidden_dim
        shapes = ([(d_in, hidden_dim)] * 3 + [(hidden_dim, hidden_dim)] * 3
                  + [(1, hidden_dim)] * 6)
        layer_p = []
        for s in shapes:
            layer_p.append(jax.random.uniform(keys[idx], s, jnp.float32, -k, k))
            idx += 1
        params.append(tuple(layer_p))
    fc_w = jax.random.uniform(keys[idx], (hidden_dim, output_dim), jnp.float32, -k, k)
    idx += 1
    fc_b = jax.random.uniform(keys[idx], (1, output_dim), jnp.float32, -k, k)
    return params, fc_w, fc_b


def _pack_layer(p, d_in_pad, h_pad):
    """Pack per-gate weights into fused, zero-padded, bf16 (D_pad, 3*Hp)/(Hp, 3*Hp) mats."""
    (w_ir, w_iz, w_in_, w_hr, w_hz, w_hn,
     b_ir, b_iz, b_in_, b_hr, b_hz, b_hn) = p

    def pad_w(w, rows):
        out = jnp.zeros((rows, h_pad), jnp.float32)
        return out.at[:w.shape[0], :w.shape[1]].set(w)

    def pad_b(b):
        out = jnp.zeros((1, h_pad), jnp.float32)
        return out.at[:, :b.shape[1]].set(b)

    w_i = jnp.concatenate([pad_w(w_ir, d_in_pad), pad_w(w_iz, d_in_pad),
                           pad_w(w_in_, d_in_pad)], axis=1).astype(jnp.bfloat16)
    w_h = jnp.concatenate([pad_w(w_hr, h_pad), pad_w(w_hz, h_pad),
                           pad_w(w_hn, h_pad)], axis=1).astype(jnp.bfloat16)
    b_i = jnp.concatenate([pad_b(b_ir), pad_b(b_iz), pad_b(b_in_)], axis=1)
    b_h = jnp.concatenate([pad_b(b_hr), pad_b(b_hz), pad_b(b_hn)], axis=1)
    return w_i, w_h, b_i, b_h


@jax.jit
def gru_model_forward(x, params, fc_w, fc_b):
    """x: (B, T, D) batch-first, like the PyTorch module. Returns (B, output_dim)."""
    B, T, D = x.shape
    L = len(params)
    H = params[0][3].shape[0]          # w_hr is (H, H)
    O = fc_w.shape[1]

    Dp = _round_up(D, _LANE)
    Hp = _round_up(H, _LANE)
    Bp = _round_up(B, _BM)

    # time-major, batch- & lane-padded, bf16 for the MXU
    x_tm = jnp.transpose(x, (1, 0, 2)).astype(jnp.float32)
    x_tm = jnp.pad(x_tm, ((0, 0), (0, Bp - B), (0, Dp - D))).astype(jnp.bfloat16)

    packed = []
    for layer, p in enumerate(params):
        d_in_pad = Dp if layer == 0 else Hp
        packed.extend(_pack_layer(p, d_in_pad, Hp))

    fc_w_p = jnp.zeros((Hp, O), jnp.float32).at[:H, :].set(fc_w)
    fc_b_p = fc_b.astype(jnp.float32)

    inputs = [x_tm] + packed + [fc_w_p, fc_b_p]

    def whole(arr):
        nd = arr.ndim
        return pl.BlockSpec(arr.shape, lambda b, _nd=nd: (0,) * _nd)

    in_specs = [pl.BlockSpec((T, _BM, Dp), lambda b: (0, b, 0))]
    in_specs += [whole(a) for a in packed]
    in_specs += [whole(fc_w_p), whole(fc_b_p)]

    n_scratch = 0 if L == 1 else (1 if L == 2 else 2)     # ping-pong only when L >= 3
    scratch_shapes = [pltpu.VMEM((T, _BM, Hp), jnp.bfloat16) for _ in range(n_scratch)]

    kernel = make_gru_fc_kernel(L, T, Hp)
    out = pl.pallas_call(
        kernel,
        out_shape=jax.ShapeDtypeStruct((Bp, O), jnp.float32),
        grid=(Bp // _BM,),
        in_specs=in_specs,
        out_specs=pl.BlockSpec((_BM, O), lambda b: (b, 0)),
        scratch_shapes=scratch_shapes,
        compiler_params=pltpu.CompilerParams(
            dimension_semantics=("parallel",),
            vmem_limit_bytes=48 * 1024 * 1024),
    )(*inputs)
    return out[:B]


def gru_model_reference(x, params, fc_w, fc_b):
    """Pure-JAX reference (same math as PyTorch nn.GRU + nn.Linear, eval mode)."""
    hi = jax.lax.Precision.HIGHEST
    inp = x.astype(jnp.float32)
    B = x.shape[0]
    for p in params:
        (w_ir, w_iz, w_in_, w_hr, w_hz, w_hn,
         b_ir, b_iz, b_in_, b_hr, b_hz, b_hn) = p
        H = w_hr.shape[0]
        h = jnp.zeros((B, H), jnp.float32)
        outs = []
        for t in range(x.shape[1]):
            xt = inp[:, t, :]
            r = jax.nn.sigmoid(jnp.dot(xt, w_ir, precision=hi) + b_ir
                               + jnp.dot(h, w_hr, precision=hi) + b_hr)
            z = jax.nn.sigmoid(jnp.dot(xt, w_iz, precision=hi) + b_iz
                               + jnp.dot(h, w_hz, precision=hi) + b_hz)
            n = jnp.tanh(jnp.dot(xt, w_in_, precision=hi) + b_in_
                         + r * (jnp.dot(h, w_hn, precision=hi) + b_hn))
            h = (1.0 - z) * n + z * h
            outs.append(h)
        inp = jnp.stack(outs, axis=1)
    return jnp.dot(inp[:, -1, :], fc_w, precision=hi) + fc_b


if __name__ == "__main__":
    # Small shapes consistent with the module's forward:
    #   x: (batch=2, seq=8, input_dim=16), hidden_dim=32, layer_dim=2, output_dim=4
    input_dim, hidden_dim, layer_dim, output_dim = 16, 32, 2, 4
    batch, seq = 2, 8

    key = jax.random.PRNGKey(0)
    k_x, k_p = jax.random.split(key)
    x = jax.random.normal(k_x, (batch, seq, input_dim), dtype=jnp.float32)
    params, fc_w, fc_b = init_params(k_p, input_dim, hidden_dim, layer_dim, output_dim)

    out = gru_model_forward(x, params, fc_w, fc_b)
    out = jax.block_until_ready(out)
    assert out.shape == (batch, output_dim), out.shape

    ref = gru_model_reference(x, params, fc_w, fc_b)
    err = float(jnp.max(jnp.abs(out - ref)))
    if err > 5e-2:
        raise RuntimeError(f"Pallas GRU mismatch vs reference: max abs err = {err}")

    print("KERNEL_OK")
</pallas_src>

<mosaic_0001>
module attributes {stable_mosaic.version = 11 : i64} {
  func.func @kernel(%arg0: i32, %arg1: memref<8x8x128xbf16, #tpu.memory_space<vmem>>, %arg2: memref<128x384xbf16, #tpu.memory_space<vmem>>, %arg3: memref<128x384xbf16, #tpu.memory_space<vmem>>, %arg4: memref<1x384xf32, #tpu.memory_space<vmem>>, %arg5: memref<1x384xf32, #tpu.memory_space<vmem>>, %arg6: memref<128x384xbf16, #tpu.memory_space<vmem>>, %arg7: memref<128x384xbf16, #tpu.memory_space<vmem>>, %arg8: memref<1x384xf32, #tpu.memory_space<vmem>>, %arg9: memref<1x384xf32, #tpu.memory_space<vmem>>, %arg10: memref<128x4xf32, #tpu.memory_space<vmem>>, %arg11: memref<1x4xf32, #tpu.memory_space<vmem>>, %arg12: memref<8x4xf32, #tpu.memory_space<vmem>>, %arg13: memref<8x8x128xbf16, #tpu.memory_space<vmem>>) attributes {dimension_semantics = [#tpu.dimension_semantics<parallel>], iteration_bounds = array<i64: 1>, scalar_prefetch = 0 : i64, scratch_operands = 1 : i64, tpu.core_type = #tpu.core_type<tc>, window_params = [{transform_indices = @transform_0, window_bounds = array<i64: 8, 8, 128>}, {pipeline_mode = #tpu.pipeline_mode<synchronous>, transform_indices = @transform_1, window_bounds = array<i64: 128, 384>}, {pipeline_mode = #tpu.pipeline_mode<synchronous>, transform_indices = @transform_2, window_bounds = array<i64: 128, 384>}, {pipeline_mode = #tpu.pipeline_mode<synchronous>, transform_indices = @transform_3, window_bounds = array<i64: 1, 384>}, {pipeline_mode = #tpu.pipeline_mode<synchronous>, transform_indices = @transform_4, window_bounds = array<i64: 1, 384>}, {pipeline_mode = #tpu.pipeline_mode<synchronous>, transform_indices = @transform_5, window_bounds = array<i64: 128, 384>}, {pipeline_mode = #tpu.pipeline_mode<synchronous>, transform_indices = @transform_6, window_bounds = array<i64: 128, 384>}, {pipeline_mode = #tpu.pipeline_mode<synchronous>, transform_indices = @transform_7, window_bounds = array<i64: 1, 384>}, {pipeline_mode = #tpu.pipeline_mode<synchronous>, transform_indices = @transform_8, window_bounds = array<i64: 1, 384>}, {pipeline_mode = #tpu.pipeline_mode<synchronous>, transform_indices = @transform_9, window_bounds = array<i64: 128, 4>}, {pipeline_mode = #tpu.pipeline_mode<synchronous>, transform_indices = @transform_10, window_bounds = array<i64: 1, 4>}, {transform_indices = @transform_11, window_bounds = array<i64: 8, 4>}]} {
    %cst = arith.constant 0.000000e+00 : f32
    %0 = vector.broadcast %cst : f32 to vector<8x128xf32>
    %c0_i32 = arith.constant 0 : i32
    %1 = arith.index_cast %c0_i32 : i32 to index
    %c0 = arith.constant 0 : index
    %c0_0 = arith.constant 0 : index
    %2 = vector.load %arg1[%1, %c0, %c0_0] : memref<8x8x128xbf16, #tpu.memory_space<vmem>>, vector<1x8x128xbf16>
    %3 = vector.shape_cast %2 : vector<1x8x128xbf16> to vector<8x128xbf16>
    %c0_1 = arith.constant 0 : index
    %c0_2 = arith.constant 0 : index
    %4 = vector.load %arg2[%c0_1, %c0_2] : memref<128x384xbf16, #tpu.memory_space<vmem>>, vector<128x384xbf16>
    %cst_3 = arith.constant dense<0.000000e+00> : vector<8x384xf32>
    %5 = tpu.matmul %3, %4, %cst_3 {dimension_numbers = #tpu.dot_dimension_numbers<[1], [0], [0], [1], [0, 0, 1, 1], [], []>} : vector<8x128xbf16>, vector<128x384xbf16>, vector<8x384xf32> -> vector<8x384xf32>
    %c0_4 = arith.constant 0 : index
    %c0_5 = arith.constant 0 : index
    %6 = vector.load %arg4[%c0_4, %c0_5] : memref<1x384xf32, #tpu.memory_space<vmem>>, vector<1x384xf32>
    %7 = vector.broadcast %6 : vector<1x384xf32> to vector<8x384xf32>
    %8 = arith.addf %5, %7 : vector<8x384xf32>
    %9 = arith.truncf %0 : vector<8x128xf32> to vector<8x128xbf16>
    %c0_6 = arith.constant 0 : index
    %c0_7 = arith.constant 0 : index
    %10 = vector.load %arg3[%c0_6, %c0_7] : memref<128x384xbf16, #tpu.memory_space<vmem>>, vector<128x384xbf16>
    %cst_8 = arith.constant dense<0.000000e+00> : vector<8x384xf32>
    %11 = tpu.matmul %9, %10, %cst_8 {dimension_numbers = #tpu.dot_dimension_numbers<[1], [0], [0], [1], [0, 0, 1, 1], [], []>} : vector<8x128xbf16>, vector<128x384xbf16>, vector<8x384xf32> -> vector<8x384xf32>
    %c0_9 = arith.constant 0 : index
    %c0_10 = arith.constant 0 : index
    %12 = vector.load %arg5[%c0_9, %c0_10] : memref<1x384xf32, #tpu.memory_space<vmem>>, vector<1x384xf32>
    %13 = vector.broadcast %12 : vector<1x384xf32> to vector<8x384xf32>
    %14 = arith.addf %11, %13 : vector<8x384xf32>
    %15 = vector.extract_strided_slice %8 {offsets = [0, 0], sizes = [8, 128], strides = [1, 1]} : vector<8x384xf32> to vector<8x128xf32>
    %16 = vector.extract_strided_slice %14 {offsets = [0, 0], sizes = [8, 128], strides = [1, 1]} : vector<8x384xf32> to vector<8x128xf32>
    %17 = arith.addf %15, %16 : vector<8x128xf32>
    %18 = arith.negf %17 : vector<8x128xf32>
    %19 = math.exp %18 : vector<8x128xf32>
    %cst_11 = arith.constant 1.000000e+00 : f32
    %20 = vector.broadcast %cst_11 : f32 to vector<8x128xf32>
    %21 = arith.addf %20, %19 : vector<8x128xf32>
    %22 = arith.divf %20, %21 : vector<8x128xf32>
    %23 = vector.extract_strided_slice %8 {offsets = [0, 128], sizes = [8, 128], strides = [1, 1]} : vector<8x384xf32> to vector<8x128xf32>
    %24 = vector.extract_strided_slice %14 {offsets = [0, 128], sizes = [8, 128], strides = [1, 1]} : vector<8x384xf32> to vector<8x128xf32>
    %25 = arith.addf %23, %24 : vector<8x128xf32>
    %26 = arith.negf %25 : vector<8x128xf32>
    %27 = math.exp %26 : vector<8x128xf32>
    %cst_12 = arith.constant 1.000000e+00 : f32
    %28 = vector.broadcast %cst_12 : f32 to vector<8x128xf32>
    %29 = arith.addf %28, %27 : vector<8x128xf32>
    %30 = arith.divf %28, %29 : vector<8x128xf32>
    %31 = vector.extract_strided_slice %8 {offsets = [0, 256], sizes = [8, 128], strides = [1, 1]} : vector<8x384xf32> to vector<8x128xf32>
    %32 = vector.extract_strided_slice %14 {offsets = [0, 256], sizes = [8, 128], strides = [1, 1]} : vector<8x384xf32> to vector<8x128xf32>
    %33 = arith.mulf %22, %32 : vector<8x128xf32>
    %34 = arith.addf %31, %33 : vector<8x128xf32>
    %35 = math.tanh %34 : vector<8x128xf32>
    %cst_13 = arith.constant 1.000000e+00 : f32
    %36 = vector.broadcast %cst_13 : f32 to vector<8x128xf32>
    %37 = arith.subf %36, %30 : vector<8x128xf32>
    %38 = arith.mulf %37, %35 : vector<8x128xf32>
    %39 = arith.mulf %30, %0 : vector<8x128xf32>
    %40 = arith.addf %38, %39 : vector<8x128xf32>
    %41 = arith.truncf %40 : vector<8x128xf32> to vector<8x128xbf16>
    %42 = arith.index_cast %c0_i32 : i32 to index
    %c0_14 = arith.constant 0 : index
    %c0_15 = arith.constant 0 : index
    %43 = vector.load %arg13[%42, %c0_14, %c0_15] : memref<8x8x128xbf16, #tpu.memory_space<vmem>>, vector<1x8x128xbf16>
    %44 = vector.shape_cast %43 : vector<1x8x128xbf16> to vector<8x128xbf16>
    %45 = vector.shape_cast %41 : vector<8x128xbf16> to vector<1x8x128xbf16>
    tpu.vector_store %arg13[%42, %c0_14, %c0_15], %45 {strides = array<i32>} : memref<8x8x128xbf16, #tpu.memory_space<vmem>>, vector<1x8x128xbf16>,
    %c1_i32 = arith.constant 1 : i32
    %46 = arith.index_cast %c1_i32 : i32 to index
    %c0_16 = arith.constant 0 : index
    %c0_17 = arith.constant 0 : index
    %47 = vector.load %arg1[%46, %c0_16, %c0_17] : memref<8x8x128xbf16, #tpu.memory_space<vmem>>, vector<1x8x128xbf16>
    %48 = vector.shape_cast %47 : vector<1x8x128xbf16> to vector<8x128xbf16>
    %c0_18 = arith.constant 0 : index
    %c0_19 = arith.constant 0 : index
    %49 = vector.load %arg2[%c0_18, %c0_19] : memref<128x384xbf16, #tpu.memory_space<vmem>>, vector<128x384xbf16>
    %cst_20 = arith.constant dense<0.000000e+00> : vector<8x384xf32>
    %50 = tpu.matmul %48, %49, %cst_20 {dimension_numbers = #tpu.dot_dimension_numbers<[1], [0], [0], [1], [0, 0, 1, 1], [], []>} : vector<8x128xbf16>, vector<128x384xbf16>, vector<8x384xf32> -> vector<8x384xf32>
    %c0_21 = arith.constant 0 : index
    %c0_22 = arith.constant 0 : index
    %51 = vector.load %arg4[%c0_21, %c0_22] : memref<1x384xf32, #tpu.memory_space<vmem>>, vector<1x384xf32>
    %52 = vector.broadcast %51 : vector<1x384xf32> to vector<8x384xf32>
    %53 = arith.addf %50, %52 : vector<8x384xf32>
    %54 = arith.truncf %40 : vector<8x128xf32> to vector<8x128xbf16>
    %c0_23 = arith.constant 0 : index
    %c0_24 = arith.constant 0 : index
    %55 = vector.load %arg3[%c0_23, %c0_24] : memref<128x384xbf16, #tpu.memory_space<vmem>>, vector<128x384xbf16>
    %cst_25 = arith.constant dense<0.000000e+00> : vector<8x384xf32>
    %56 = tpu.matmul %54, %55, %cst_25 {dimension_numbers = #tpu.dot_dimension_numbers<[1], [0], [0], [1], [0, 0, 1, 1], [], []>} : vector<8x128xbf16>, vector<128x384xbf16>, vector<8x384xf32> -> vector<8x384xf32>
    %c0_26 = arith.constant 0 : index
    %c0_27 = arith.constant 0 : index
    %57 = vector.load %arg5[%c0_26, %c0_27] : memref<1x384xf32, #tpu.memory_space<vmem>>, vector<1x384xf32>
    %58 = vector.broadcast %57 : vector<1x384xf32> to vector<8x384xf32>
    %59 = arith.addf %56, %58 : vector<8x384xf32>
    %60 = vector.extract_strided_slice %53 {offsets = [0, 0], sizes = [8, 128], strides = [1, 1]} : vector<8x384xf32> to vector<8x128xf32>
    %61 = vector.extract_strided_slice %59 {offsets = [0, 0], sizes = [8, 128], strides = [1, 1]} : vector<8x384xf32> to vector<8x128xf32>
    %62 = arith.addf %60, %61 : vector<8x128xf32>
    %63 = arith.negf %62 : vector<8x128xf32>
    %64 = math.exp %63 : vector<8x128xf32>
    %cst_28 = arith.constant 1.000000e+00 : f32
    %65 = vector.broadcast %cst_28 : f32 to vector<8x128xf32>
    %66 = arith.addf %65, %64 : vector<8x128xf32>
    %67 = arith.divf %65, %66 : vector<8x128xf32>
    %68 = vector.extract_strided_slice %53 {offsets = [0, 128], sizes = [8, 128], strides = [1, 1]} : vector<8x384xf32> to vector<8x128xf32>
    %69 = vector.extract_strided_slice %59 {offsets = [0, 128], sizes = [8, 128], strides = [1, 1]} : vector<8x384xf32> to vector<8x128xf32>
    %70 = arith.addf %68, %69 : vector<8x128xf32>
    %71 = arith.negf %70 : vector<8x128xf32>
    %72 = math.exp %71 : vector<8x128xf32>
    %cst_29 = arith.constant 1.000000e+00 : f32
    %73 = vector.broadcast %cst_29 : f32 to vector<8x128xf32>
    %74 = arith.addf %73, %72 : vector<8x128xf32>
    %75 = arith.divf %73, %74 : vector<8x128xf32>
    %76 = vector.extract_strided_slice %53 {offsets = [0, 256], sizes = [8, 128], strides = [1, 1]} : vector<8x384xf32> to vector<8x128xf32>
    %77 = vector.extract_strided_slice %59 {offsets = [0, 256], sizes = [8, 128], strides = [1, 1]} : vector<8x384xf32> to vector<8x128xf32>
    %78 = arith.mulf %67, %77 : vector<8x128xf32>
    %79 = arith.addf %76, %78 : vector<8x128xf32>
    %80 = math.tanh %79 : vector<8x128xf32>
    %cst_30 = arith.constant 1.000000e+00 : f32
    %81 = vector.broadcast %cst_30 : f32 to vector<8x128xf32>
    %82 = arith.subf %81, %75 : vector<8x128xf32>
    %83 = arith.mulf %82, %80 : vector<8x128xf32>
    %84 = arith.mulf %75, %40 : vector<8x128xf32>
    %85 = arith.addf %83, %84 : vector<8x128xf32>
    %86 = arith.truncf %85 : vector<8x128xf32> to vector<8x128xbf16>
    %87 = arith.index_cast %c1_i32 : i32 to index
    %c0_31 = arith.constant 0 : index
    %c0_32 = arith.constant 0 : index
    %88 = vector.load %arg13[%87, %c0_31, %c0_32] : memref<8x8x128xbf16, #tpu.memory_space<vmem>>, vector<1x8x128xbf16>
    %89 = vector.shape_cast %88 : vector<1x8x128xbf16> to vector<8x128xbf16>
    %90 = vector.shape_cast %86 : vector<8x128xbf16> to vector<1x8x128xbf16>
    tpu.vector_store %arg13[%87, %c0_31, %c0_32], %90 {strides = array<i32>} : memref<8x8x128xbf16, #tpu.memory_space<vmem>>, vector<1x8x128xbf16>,
    %c2_i32 = arith.constant 2 : i32
    %91 = arith.index_cast %c2_i32 : i32 to index
    %c0_33 = arith.constant 0 : index
    %c0_34 = arith.constant 0 : index
    %92 = vector.load %arg1[%91, %c0_33, %c0_34] : memref<8x8x128xbf16, #tpu.memory_space<vmem>>, vector<1x8x128xbf16>
    %93 = vector.shape_cast %92 : vector<1x8x128xbf16> to vector<8x128xbf16>
    %c0_35 = arith.constant 0 : index
    %c0_36 = arith.constant 0 : index
    %94 = vector.load %arg2[%c0_35, %c0_36] : memref<128x384xbf16, #tpu.memory_space<vmem>>, vector<128x384xbf16>
    %cst_37 = arith.constant dense<0.000000e+00> : vector<8x384xf32>
    %95 = tpu.matmul %93, %94, %cst_37 {dimension_numbers = #tpu.dot_dimension_numbers<[1], [0], [0], [1], [0, 0, 1, 1], [], []>} : vector<8x128xbf16>, vector<128x384xbf16>, vector<8x384xf32> -> vector<8x384xf32>
    %c0_38 = arith.constant 0 : index
    %c0_39 = arith.constant 0 : index
    %96 = vector.load %arg4[%c0_38, %c0_39] : memref<1x384xf32, #tpu.memory_space<vmem>>, vector<1x384xf32>
    %97 = vector.broadcast %96 : vector<1x384xf32> to vector<8x384xf32>
    %98 = arith.addf %95, %97 : vector<8x384xf32>
    %99 = arith.truncf %85 : vector<8x128xf32> to vector<8x128xbf16>
    %c0_40 = arith.constant 0 : index
    %c0_41 = arith.constant 0 : index
    %100 = vector.load %arg3[%c0_40, %c0_41] : memref<128x384xbf16, #tpu.memory_space<vmem>>, vector<128x384xbf16>
    %cst_42 = arith.constant dense<0.000000e+00> : vector<8x384xf32>
    %101 = tpu.matmul %99, %100, %cst_42 {dimension_numbers = #tpu.dot_dimension_numbers<[1], [0], [0], [1], [0, 0, 1, 1], [], []>} : vector<8x128xbf16>, vector<128x384xbf16>, vector<8x384xf32> -> vector<8x384xf32>
    %c0_43 = arith.constant 0 : index
    %c0_44 = arith.constant 0 : index
    %102 = vector.load %arg5[%c0_43, %c0_44] : memref<1x384xf32, #tpu.memory_space<vmem>>, vector<1x384xf32>
    %103 = vector.broadcast %102 : vector<1x384xf32> to vector<8x384xf32>
    %104 = arith.addf %101, %103 : vector<8x384xf32>
    %105 = vector.extract_strided_slice %98 {offsets = [0, 0], sizes = [8, 128], strides = [1, 1]} : vector<8x384xf32> to vector<8x128xf32>
    %106 = vector.extract_strided_slice %104 {offsets = [0, 0], sizes = [8, 128], strides = [1, 1]} : vector<8x384xf32> to vector<8x128xf32>
    %107 = arith.addf %105, %106 : vector<8x128xf32>
    %108 = arith.negf %107 : vector<8x128xf32>
    %109 = math.exp %108 : vector<8x128xf32>
    %cst_45 = arith.constant 1.000000e+00 : f32
    %110 = vector.broadcast %cst_45 : f32 to vector<8x128xf32>
    %111 = arith.addf %110, %109 : vector<8x128xf32>
    %112 = arith.divf %110, %111 : vector<8x128xf32>
    %113 = vector.extract_strided_slice %98 {offsets = [0, 128], sizes = [8, 128], strides = [1, 1]} : vector<8x384xf32> to vector<8x128xf32>
    %114 = vector.extract_strided_slice %104 {offsets = [0, 128], sizes = [8, 128], strides = [1, 1]} : vector<8x384xf32> to vector<8x128xf32>
    %115 = arith.addf %113, %114 : vector<8x128xf32>
    %116 = arith.negf %115 : vector<8x128xf32>
    %117 = math.exp %116 : vector<8x128xf32>
    %cst_46 = arith.constant 1.000000e+00 : f32
    %118 = vector.broadcast %cst_46 : f32 to vector<8x128xf32>
    %119 = arith.addf %118, %117 : vector<8x128xf32>
    %120 = arith.divf %118, %119 : vector<8x128xf32>
    %121 = vector.extract_strided_slice %98 {offsets = [0, 256], sizes = [8, 128], strides = [1, 1]} : vector<8x384xf32> to vector<8x128xf32>
    %122 = vector.extract_strided_slice %104 {offsets = [0, 256], sizes = [8, 128], strides = [1, 1]} : vector<8x384xf32> to vector<8x128xf32>
    %123 = arith.mulf %112, %122 : vector<8x128xf32>
    %124 = arith.addf %121, %123 : vector<8x128xf32>
    %125 = math.tanh %124 : vector<8x128xf32>
    %cst_47 = arith.constant 1.000000e+00 : f32
    %126 = vector.broadcast %cst_47 : f32 to vector<8x128xf32>
    %127 = arith.subf %126, %120 : vector<8x128xf32>
    %128 = arith.mulf %127, %125 : vector<8x128xf32>
    %129 = arith.mulf %120, %85 : vector<8x128xf32>
    %130 = arith.addf %128, %129 : vector<8x128xf32>
    %131 = arith.truncf %130 : vector<8x128xf32> to vector<8x128xbf16>
    %132 = arith.index_cast %c2_i32 : i32 to index
    %c0_48 = arith.constant 0 : index
    %c0_49 = arith.constant 0 : index
    %133 = vector.load %arg13[%132, %c0_48, %c0_49] : memref<8x8x128xbf16, #tpu.memory_space<vmem>>, vector<1x8x128xbf16>
    %134 = vector.shape_cast %133 : vector<1x8x128xbf16> to vector<8x128xbf16>
    %135 = vector.shape_cast %131 : vector<8x128xbf16> to vector<1x8x128xbf16>
    tpu.vector_store %arg13[%132, %c0_48, %c0_49], %135 {strides = array<i32>} : memref<8x8x128xbf16, #tpu.memory_space<vmem>>, vector<1x8x128xbf16>,
    %c3_i32 = arith.constant 3 : i32
    %136 = arith.index_cast %c3_i32 : i32 to index
    %c0_50 = arith.constant 0 : index
    %c0_51 = arith.constant 0 : index
    %137 = vector.load %arg1[%136, %c0_50, %c0_51] : memref<8x8x128xbf16, #tpu.memory_space<vmem>>, vector<1x8x128xbf16>
    %138 = vector.shape_cast %137 : vector<1x8x128xbf16> to vector<8x128xbf16>
    %c0_52 = arith.constant 0 : index
    %c0_53 = arith.constant 0 : index
    %139 = vector.load %arg2[%c0_52, %c0_53] : memref<128x384xbf16, #tpu.memory_space<vmem>>, vector<128x384xbf16>
    %cst_54 = arith.constant dense<0.000000e+00> : vector<8x384xf32>
    %140 = tpu.matmul %138, %139, %cst_54 {dimension_numbers = #tpu.dot_dimension_numbers<[1], [0], [0], [1], [0, 0, 1, 1], [], []>} : vector<8x128xbf16>, vector<128x384xbf16>, vector<8x384xf32> -> vector<8x384xf32>
    %c0_55 = arith.constant 0 : index
    %c0_56 = arith.constant 0 : index
    %141 = vector.load %arg4[%c0_55, %c0_56] : memref<1x384xf32, #tpu.memory_space<vmem>>, vector<1x384xf32>
    %142 = vector.broadcast %141 : vector<1x384xf32> to vector<8x384xf32>
    %143 = arith.addf %140, %142 : vector<8x384xf32>
    %144 = arith.truncf %130 : vector<8x128xf32> to vector<8x128xbf16>
    %c0_57 = arith.constant 0 : index
    %c0_58 = arith.constant 0 : index
    %145 = vector.load %arg3[%c0_57, %c0_58] : memref<128x384xbf16, #tpu.memory_space<vmem>>, vector<128x384xbf16>
    %cst_59 = arith.constant dense<0.000000e+00> : vector<8x384xf32>
    %146 = tpu.matmul %144, %145, %cst_59 {dimension_numbers = #tpu.dot_dimension_numbers<[1], [0], [0], [1], [0, 0, 1, 1], [], []>} : vector<8x128xbf16>, vector<128x384xbf16>, vector<8x384xf32> -> vector<8x384xf32>
    %c0_60 = arith.constant 0 : index
    %c0_61 = arith.constant 0 : index
    %147 = vector.load %arg5[%c0_60, %c0_61] : memref<1x384xf32, #tpu.memory_space<vmem>>, vector<1x384xf32>
    %148 = vector.broadcast %147 : vector<1x384xf32> to vector<8x384xf32>
    %149 = arith.addf %146, %148 : vector<8x384xf32>
    %150 = vector.extract_strided_slice %143 {offsets = [0, 0], sizes = [8, 128], strides = [1, 1]} : vector<8x384xf32> to vector<8x128xf32>
    %151 = vector.extract_strided_slice %149 {offsets = [0, 0], sizes = [8, 128], strides = [1, 1]} : vector<8x384xf32> to vector<8x128xf32>
    %152 = arith.addf %150, %151 : vector<8x128xf32>
    %153 = arith.negf %152 : vector<8x128xf32>
    %154 = math.exp %153 : vector<8x128xf32>
    %cst_62 = arith.constant 1.000000e+00 : f32
    %155 = vector.broadcast %cst_62 : f32 to vector<8x128xf32>
    %156 = arith.addf %155, %154 : vector<8x128xf32>
    %157 = arith.divf %155, %156 : vector<8x128xf32>
    %158 = vector.extract_strided_slice %143 {offsets = [0, 128], sizes = [8, 128], strides = [1, 1]} : vector<8x384xf32> to vector<8x128xf32>
    %159 = vector.extract_strided_slice %149 {offsets = [0, 128], sizes = [8, 128], strides = [1, 1]} : vector<8x384xf32> to vector<8x128xf32>
    %160 = arith.addf %158, %159 : vector<8x128xf32>
    %161 = arith.negf %160 : vector<8x128xf32>
    %162 = math.exp %161 : vector<8x128xf32>
    %cst_63 = arith.constant 1.000000e+00 : f32
    %163 = vector.broadcast %cst_63 : f32 to vector<8x128xf32>
    %164 = arith.addf %163, %162 : vector<8x128xf32>
    %165 = arith.divf %163, %164 : vector<8x128xf32>
    %166 = vector.extract_strided_slice %143 {offsets = [0, 256], sizes = [8, 128], strides = [1, 1]} : vector<8x384xf32> to vector<8x128xf32>
    %167 = vector.extract_strided_slice %149 {offsets = [0, 256], sizes = [8, 128], strides = [1, 1]} : vector<8x384xf32> to vector<8x128xf32>
    %168 = arith.mulf %157, %167 : vector<8x128xf32>
    %169 = arith.addf %166, %168 : vector<8x128xf32>
    %170 = math.tanh %169 : vector<8x128xf32>
    %cst_64 = arith.constant 1.000000e+00 : f32
    %171 = vector.broadcast %cst_64 : f32 to vector<8x128xf32>
    %172 = arith.subf %171, %165 : vector<8x128xf32>
    %173 = arith.mulf %172, %170 : vector<8x128xf32>
    %174 = arith.mulf %165, %130 : vector<8x128xf32>
    %175 = arith.addf %173, %174 : vector<8x128xf32>
    %176 = arith.truncf %175 : vector<8x128xf32> to vector<8x128xbf16>
    %177 = arith.index_cast %c3_i32 : i32 to index
    %c0_65 = arith.constant 0 : index
    %c0_66 = arith.constant 0 : index
    %178 = vector.load %arg13[%177, %c0_65, %c0_66] : memref<8x8x128xbf16, #tpu.memory_space<vmem>>, vector<1x8x128xbf16>
    %179 = vector.shape_cast %178 : vector<1x8x128xbf16> to vector<8x128xbf16>
    %180 = vector.shape_cast %176 : vector<8x128xbf16> to vector<1x8x128xbf16>
    tpu.vector_store %arg13[%177, %c0_65, %c0_66], %180 {strides = array<i32>} : memref<8x8x128xbf16, #tpu.memory_space<vmem>>, vector<1x8x128xbf16>,
    %c4_i32 = arith.constant 4 : i32
    %181 = arith.index_cast %c4_i32 : i32 to index
    %c0_67 = arith.constant 0 : index
    %c0_68 = arith.constant 0 : index
    %182 = vector.load %arg1[%181, %c0_67, %c0_68] : memref<8x8x128xbf16, #tpu.memory_space<vmem>>, vector<1x8x128xbf16>
    %183 = vector.shape_cast %182 : vector<1x8x128xbf16> to vector<8x128xbf16>
    %c0_69 = arith.constant 0 : index
    %c0_70 = arith.constant 0 : index
    %184 = vector.load %arg2[%c0_69, %c0_70] : memref<128x384xbf16, #tpu.memory_space<vmem>>, vector<128x384xbf16>
    %cst_71 = arith.constant dense<0.000000e+00> : vector<8x384xf32>
    %185 = tpu.matmul %183, %184, %cst_71 {dimension_numbers = #tpu.dot_dimension_numbers<[1], [0], [0], [1], [0, 0, 1, 1], [], []>} : vector<8x128xbf16>, vector<128x384xbf16>, vector<8x384xf32> -> vector<8x384xf32>
    %c0_72 = arith.constant 0 : index
    %c0_73 = arith.constant 0 : index
    %186 = vector.load %arg4[%c0_72, %c0_73] : memref<1x384xf32, #tpu.memory_space<vmem>>, vector<1x384xf32>
    %187 = vector.broadcast %186 : vector<1x384xf32> to vector<8x384xf32>
    %188 = arith.addf %185, %187 : vector<8x384xf32>
    %189 = arith.truncf %175 : vector<8x128xf32> to vector<8x128xbf16>
    %c0_74 = arith.constant 0 : index
    %c0_75 = arith.constant 0 : index
    %190 = vector.load %arg3[%c0_74, %c0_75] : memref<128x384xbf16, #tpu.memory_space<vmem>>, vector<128x384xbf16>
    %cst_76 = arith.constant dense<0.000000e+00> : vector<8x384xf32>
    %191 = tpu.matmul %189, %190, %cst_76 {dimension_numbers = #tpu.dot_dimension_numbers<[1], [0], [0], [1], [0, 0, 1, 1], [], []>} : vector<8x128xbf16>, vector<128x384xbf16>, vector<8x384xf32> -> vector<8x384xf32>
    %c0_77 = arith.constant 0 : index
    %c0_78 = arith.constant 0 : index
    %192 = vector.load %arg5[%c0_77, %c0_78] : memref<1x384xf32, #tpu.memory_space<vmem>>, vector<1x384xf32>
    %193 = vector.broadcast %192 : vector<1x384xf32> to vector<8x384xf32>
    %194 = arith.addf %191, %193 : vector<8x384xf32>
    %195 = vector.extract_strided_slice %188 {offsets = [0, 0], sizes = [8, 128], strides = [1, 1]} : vector<8x384xf32> to vector<8x128xf32>
    %196 = vector.extract_strided_slice %194 {offsets = [0, 0], sizes = [8, 128], strides = [1, 1]} : vector<8x384xf32> to vector<8x128xf32>
    %197 = arith.addf %195, %196 : vector<8x128xf32>
    %198 = arith.negf %197 : vector<8x128xf32>
    %199 = math.exp %198 : vector<8x128xf32>
    %cst_79 = arith.constant 1.000000e+00 : f32
    %200 = vector.broadcast %cst_79 : f32 to vector<8x128xf32>
    %201 = arith.addf %200, %199 : vector<8x128xf32>
    %202 = arith.divf %200, %201 : vector<8x128xf32>
    %203 = vector.extract_strided_slice %188 {offsets = [0, 128], sizes = [8, 128], strides = [1, 1]} : vector<8x384xf32> to vector<8x128xf32>
    %204 = vector.extract_strided_slice %194 {offsets = [0, 128], sizes = [8, 128], strides = [1, 1]} : vector<8x384xf32> to vector<8x128xf32>
    %205 = arith.addf %203, %204 : vector<8x128xf32>
    %206 = arith.negf %205 : vector<8x128xf32>
    %207 = math.exp %206 : vector<8x128xf32>
    %cst_80 = arith.constant 1.000000e+00 : f32
    %208 = vector.broadcast %cst_80 : f32 to vector<8x128xf32>
    %209 = arith.addf %208, %207 : vector<8x128xf32>
    %210 = arith.divf %208, %209 : vector<8x128xf32>
    %211 = vector.extract_strided_slice %188 {offsets = [0, 256], sizes = [8, 128], strides = [1, 1]} : vector<8x384xf32> to vector<8x128xf32>
    %212 = vector.extract_strided_slice %194 {offsets = [0, 256], sizes = [8, 128], strides = [1, 1]} : vector<8x384xf32> to vector<8x128xf32>
    %213 = arith.mulf %202, %212 : vector<8x128xf32>
    %214 = arith.addf %211, %213 : vector<8x128xf32>
    %215 = math.tanh %214 : vector<8x128xf32>
    %cst_81 = arith.constant 1.000000e+00 : f32
    %216 = vector.broadcast %cst_81 : f32 to vector<8x128xf32>
    %217 = arith.subf %216, %210 : vector<8x128xf32>
    %218 = arith.mulf %217, %215 : vector<8x128xf32>
    %219 = arith.mulf %210, %175 : vector<8x128xf32>
    %220 = arith.addf %218, %219 : vector<8x128xf32>
    %221 = arith.truncf %220 : vector<8x128xf32> to vector<8x128xbf16>
    %222 = arith.index_cast %c4_i32 : i32 to index
    %c0_82 = arith.constant 0 : index
    %c0_83 = arith.constant 0 : index
    %223 = vector.load %arg13[%222, %c0_82, %c0_83] : memref<8x8x128xbf16, #tpu.memory_space<vmem>>, vector<1x8x128xbf16>
    %224 = vector.shape_cast %223 : vector<1x8x128xbf16> to vector<8x128xbf16>
    %225 = vector.shape_cast %221 : vector<8x128xbf16> to vector<1x8x128xbf16>
    tpu.vector_store %arg13[%222, %c0_82, %c0_83], %225 {strides = array<i32>} : memref<8x8x128xbf16, #tpu.memory_space<vmem>>, vector<1x8x128xbf16>,
    %c5_i32 = arith.constant 5 : i32
    %226 = arith.index_cast %c5_i32 : i32 to index
    %c0_84 = arith.constant 0 : index
    %c0_85 = arith.constant 0 : index
    %227 = vector.load %arg1[%226, %c0_84, %c0_85] : memref<8x8x128xbf16, #tpu.memory_space<vmem>>, vector<1x8x128xbf16>
    %228 = vector.shape_cast %227 : vector<1x8x128xbf16> to vector<8x128xbf16>
    %c0_86 = arith.constant 0 : index
    %c0_87 = arith.constant 0 : index
    %229 = vector.load %arg2[%c0_86, %c0_87] : memref<128x384xbf16, #tpu.memory_space<vmem>>, vector<128x384xbf16>
    %cst_88 = arith.constant dense<0.000000e+00> : vector<8x384xf32>
    %230 = tpu.matmul %228, %229, %cst_88 {dimension_numbers = #tpu.dot_dimension_numbers<[1], [0], [0], [1], [0, 0, 1, 1], [], []>} : vector<8x128xbf16>, vector<128x384xbf16>, vector<8x384xf32> -> vector<8x384xf32>
    %c0_89 = arith.constant 0 : index
    %c0_90 = arith.constant 0 : index
    %231 = vector.load %arg4[%c0_89, %c0_90] : memref<1x384xf32, #tpu.memory_space<vmem>>, vector<1x384xf32>
    %232 = vector.broadcast %231 : vector<1x384xf32> to vector<8x384xf32>
    %233 = arith.addf %230, %232 : vector<8x384xf32>
    %234 = arith.truncf %220 : vector<8x128xf32> to vector<8x128xbf16>
    %c0_91 = arith.constant 0 : index
    %c0_92 = arith.constant 0 : index
    %235 = vector.load %arg3[%c0_91, %c0_92] : memref<128x384xbf16, #tpu.memory_space<vmem>>, vector<128x384xbf16>
    %cst_93 = arith.constant dense<0.000000e+00> : vector<8x384xf32>
    %236 = tpu.matmul %234, %235, %cst_93 {dimension_numbers = #tpu.dot_dimension_numbers<[1], [0], [0], [1], [0, 0, 1, 1], [], []>} : vector<8x128xbf16>, vector<128x384xbf16>, vector<8x384xf32> -> vector<8x384xf32>
    %c0_94 = arith.constant 0 : index
    %c0_95 = arith.constant 0 : index
    %237 = vector.load %arg5[%c0_94, %c0_95] : memref<1x384xf32, #tpu.memory_space<vmem>>, vector<1x384xf32>
    %238 = vector.broadcast %237 : vector<1x384xf32> to vector<8x384xf32>
    %239 = arith.addf %236, %238 : vector<8x384xf32>
    %240 = vector.extract_strided_slice %233 {offsets = [0, 0], sizes = [8, 128], strides = [1, 1]} : vector<8x384xf32> to vector<8x128xf32>
    %241 = vector.extract_strided_slice %239 {offsets = [0, 0], sizes = [8, 128], strides = [1, 1]} : vector<8x384xf32> to vector<8x128xf32>
    %242 = arith.addf %240, %241 : vector<8x128xf32>
    %243 = arith.negf %242 : vector<8x128xf32>
    %244 = math.exp %243 : vector<8x128xf32>
    %cst_96 = arith.constant 1.000000e+00 : f32
    %245 = vector.broadcast %cst_96 : f32 to vector<8x128xf32>
    %246 = arith.addf %245, %244 : vector<8x128xf32>
    %247 = arith.divf %245, %246 : vector<8x128xf32>
    %248 = vector.extract_strided_slice %233 {offsets = [0, 128], sizes = [8, 128], strides = [1, 1]} : vector<8x384xf32> to vector<8x128xf32>
    %249 = vector.extract_strided_slice %239 {offsets = [0, 128], sizes = [8, 128], strides = [1, 1]} : vector<8x384xf32> to vector<8x128xf32>
    %250 = arith.addf %248, %249 : vector<8x128xf32>
    %251 = arith.negf %250 : vector<8x128xf32>
    %252 = math.exp %251 : vector<8x128xf32>
    %cst_97 = arith.constant 1.000000e+00 : f32
    %253 = vector.broadcast %cst_97 : f32 to vector<8x128xf32>
    %254 = arith.addf %253, %252 : vector<8x128xf32>
    %255 = arith.divf %253, %254 : vector<8x128xf32>
    %256 = vector.extract_strided_slice %233 {offsets = [0, 256], sizes = [8, 128], strides = [1, 1]} : vector<8x384xf32> to vector<8x128xf32>
    %257 = vector.extract_strided_slice %239 {offsets = [0, 256], sizes = [8, 128], strides = [1, 1]} : vector<8x384xf32> to vector<8x128xf32>
    %258 = arith.mulf %247, %257 : vector<8x128xf32>
    %259 = arith.addf %256, %258 : vector<8x128xf32>
    %260 = math.tanh %259 : vector<8x128xf32>
    %cst_98 = arith.constant 1.000000e+00 : f32
    %261 = vector.broadcast %cst_98 : f32 to vector<8x128xf32>
    %262 = arith.subf %261, %255 : vector<8x128xf32>
    %263 = arith.mulf %262, %260 : vector<8x128xf32>
    %264 = arith.mulf %255, %220 : vector<8x128xf32>
    %265 = arith.addf %263, %264 : vector<8x128xf32>
    %266 = arith.truncf %265 : vector<8x128xf32> to vector<8x128xbf16>
    %267 = arith.index_cast %c5_i32 : i32 to index
    %c0_99 = arith.constant 0 : index
    %c0_100 = arith.constant 0 : index
    %268 = vector.load %arg13[%267, %c0_99, %c0_100] : memref<8x8x128xbf16, #tpu.memory_space<vmem>>, vector<1x8x128xbf16>
    %269 = vector.shape_cast %268 : vector<1x8x128xbf16> to vector<8x128xbf16>
    %270 = vector.shape_cast %266 : vector<8x128xbf16> to vector<1x8x128xbf16>
    tpu.vector_store %arg13[%267, %c0_99, %c0_100], %270 {strides = array<i32>} : memref<8x8x128xbf16, #tpu.memory_space<vmem>>, vector<1x8x128xbf16>,
    %c6_i32 = arith.constant 6 : i32
    %271 = arith.index_cast %c6_i32 : i32 to index
    %c0_101 = arith.constant 0 : index
    %c0_102 = arith.constant 0 : index
    %272 = vector.load %arg1[%271, %c0_101, %c0_102] : memref<8x8x128xbf16, #tpu.memory_space<vmem>>, vector<1x8x128xbf16>
    %273 = vector.shape_cast %272 : vector<1x8x128xbf16> to vector<8x128xbf16>
    %c0_103 = arith.constant 0 : index
    %c0_104 = arith.constant 0 : index
    %274 = vector.load %arg2[%c0_103, %c0_104] : memref<128x384xbf16, #tpu.memory_space<vmem>>, vector<128x384xbf16>
    %cst_105 = arith.constant dense<0.000000e+00> : vector<8x384xf32>
    %275 = tpu.matmul %273, %274, %cst_105 {dimension_numbers = #tpu.dot_dimension_numbers<[1], [0], [0], [1], [0, 0, 1, 1], [], []>} : vector<8x128xbf16>, vector<128x384xbf16>, vector<8x384xf32> -> vector<8x384xf32>
    %c0_106 = arith.constant 0 : index
    %c0_107 = arith.constant 0 : index
    %276 = vector.load %arg4[%c0_106, %c0_107] : memref<1x384xf32, #tpu.memory_space<vmem>>, vector<1x384xf32>
    %277 = vector.broadcast %276 : vector<1x384xf32> to vector<8x384xf32>
    %278 = arith.addf %275, %277 : vector<8x384xf32>
    %279 = arith.truncf %265 : vector<8x128xf32> to vector<8x128xbf16>
    %c0_108 = arith.constant 0 : index
    %c0_109 = arith.constant 0 : index
    %280 = vector.load %arg3[%c0_108, %c0_109] : memref<128x384xbf16, #tpu.memory_space<vmem>>, vector<128x384xbf16>
    %cst_110 = arith.constant dense<0.000000e+00> : vector<8x384xf32>
    %281 = tpu.matmul %279, %280, %cst_110 {dimension_numbers = #tpu.dot_dimension_numbers<[1], [0], [0], [1], [0, 0, 1, 1], [], []>} : vector<8x128xbf16>, vector<128x384xbf16>, vector<8x384xf32> -> vector<8x384xf32>
    %c0_111 = arith.constant 0 : index
    %c0_112 = arith.constant 0 : index
    %282 = vector.load %arg5[%c0_111, %c0_112] : memref<1x384xf32, #tpu.memory_space<vmem>>, vector<1x384xf32>
    %283 = vector.broadcast %282 : vector<1x384xf32> to vector<8x384xf32>
    %284 = arith.addf %281, %283 : vector<8x384xf32>
    %285 = vector.extract_strided_slice %278 {offsets = [0, 0], sizes = [8, 128], strides = [1, 1]} : vector<8x384xf32> to vector<8x128xf32>
    %286 = vector.extract_strided_slice %284 {offsets = [0, 0], sizes = [8, 128], strides = [1, 1]} : vector<8x384xf32> to vector<8x128xf32>
    %287 = arith.addf %285, %286 : vector<8x128xf32>
    %288 = arith.negf %287 : vector<8x128xf32>
    %289 = math.exp %288 : vector<8x128xf32>
    %cst_113 = arith.constant 1.000000e+00 : f32
    %290 = vector.broadcast %cst_113 : f32 to vector<8x128xf32>
    %291 = arith.addf %290, %289 : vector<8x128xf32>
    %292 = arith.divf %290, %291 : vector<8x128xf32>
    %293 = vector.extract_strided_slice %278 {offsets = [0, 128], sizes = [8, 128], strides = [1, 1]} : vector<8x384xf32> to vector<8x128xf32>
    %294 = vector.extract_strided_slice %284 {offsets = [0, 128], sizes = [8, 128], strides = [1, 1]} : vector<8x384xf32> to vector<8x128xf32>
    %295 = arith.addf %293, %294 : vector<8x128xf32>
    %296 = arith.negf %295 : vector<8x128xf32>
    %297 = math.exp %296 : vector<8x128xf32>
    %cst_114 = arith.constant 1.000000e+00 : f32
    %298 = vector.broadcast %cst_114 : f32 to vector<8x128xf32>
    %299 = arith.addf %298, %297 : vector<8x128xf32>
    %300 = arith.divf %298, %299 : vector<8x128xf32>
    %301 = vector.extract_strided_slice %278 {offsets = [0, 256], sizes = [8, 128], strides = [1, 1]} : vector<8x384xf32> to vector<8x128xf32>
    %302 = vector.extract_strided_slice %284 {offsets = [0, 256], sizes = [8, 128], strides = [1, 1]} : vector<8x384xf32> to vector<8x128xf32>
    %303 = arith.mulf %292, %302 : vector<8x128xf32>
    %304 = arith.addf %301, %303 : vector<8x128xf32>
    %305 = math.tanh %304 : vector<8x128xf32>
    %cst_115 = arith.constant 1.000000e+00 : f32
    %306 = vector.broadcast %cst_115 : f32 to vector<8x128xf32>
    %307 = arith.subf %306, %300 : vector<8x128xf32>
    %308 = arith.mulf %307, %305 : vector<8x128xf32>
    %309 = arith.mulf %300, %265 : vector<8x128xf32>
    %310 = arith.addf %308, %309 : vector<8x128xf32>
    %311 = arith.truncf %310 : vector<8x128xf32> to vector<8x128xbf16>
    %312 = arith.index_cast %c6_i32 : i32 to index
    %c0_116 = arith.constant 0 : index
    %c0_117 = arith.constant 0 : index
    %313 = vector.load %arg13[%312, %c0_116, %c0_117] : memref<8x8x128xbf16, #tpu.memory_space<vmem>>, vector<1x8x128xbf16>
    %314 = vector.shape_cast %313 : vector<1x8x128xbf16> to vector<8x128xbf16>
    %315 = vector.shape_cast %311 : vector<8x128xbf16> to vector<1x8x128xbf16>
    tpu.vector_store %arg13[%312, %c0_116, %c0_117], %315 {strides = array<i32>} : memref<8x8x128xbf16, #tpu.memory_space<vmem>>, vector<1x8x128xbf16>,
    %c7_i32 = arith.constant 7 : i32
    %316 = arith.index_cast %c7_i32 : i32 to index
    %c0_118 = arith.constant 0 : index
    %c0_119 = arith.constant 0 : index
    %317 = vector.load %arg1[%316, %c0_118, %c0_119] : memref<8x8x128xbf16, #tpu.memory_space<vmem>>, vector<1x8x128xbf16>
    %318 = vector.shape_cast %317 : vector<1x8x128xbf16> to vector<8x128xbf16>
    %c0_120 = arith.constant 0 : index
    %c0_121 = arith.constant 0 : index
    %319 = vector.load %arg2[%c0_120, %c0_121] : memref<128x384xbf16, #tpu.memory_space<vmem>>, vector<128x384xbf16>
    %cst_122 = arith.constant dense<0.000000e+00> : vector<8x384xf32>
    %320 = tpu.matmul %318, %319, %cst_122 {dimension_numbers = #tpu.dot_dimension_numbers<[1], [0], [0], [1], [0, 0, 1, 1], [], []>} : vector<8x128xbf16>, vector<128x384xbf16>, vector<8x384xf32> -> vector<8x384xf32>
    %c0_123 = arith.constant 0 : index
    %c0_124 = arith.constant 0 : index
    %321 = vector.load %arg4[%c0_123, %c0_124] : memref<1x384xf32, #tpu.memory_space<vmem>>, vector<1x384xf32>
    %322 = vector.broadcast %321 : vector<1x384xf32> to vector<8x384xf32>
    %323 = arith.addf %320, %322 : vector<8x384xf32>
    %324 = arith.truncf %310 : vector<8x128xf32> to vector<8x128xbf16>
    %c0_125 = arith.constant 0 : index
    %c0_126 = arith.constant 0 : index
    %325 = vector.load %arg3[%c0_125, %c0_126] : memref<128x384xbf16, #tpu.memory_space<vmem>>, vector<128x384xbf16>
    %cst_127 = arith.constant dense<0.000000e+00> : vector<8x384xf32>
    %326 = tpu.matmul %324, %325, %cst_127 {dimension_numbers = #tpu.dot_dimension_numbers<[1], [0], [0], [1], [0, 0, 1, 1], [], []>} : vector<8x128xbf16>, vector<128x384xbf16>, vector<8x384xf32> -> vector<8x384xf32>
    %c0_128 = arith.constant 0 : index
    %c0_129 = arith.constant 0 : index
    %327 = vector.load %arg5[%c0_128, %c0_129] : memref<1x384xf32, #tpu.memory_space<vmem>>, vector<1x384xf32>
    %328 = vector.broadcast %327 : vector<1x384xf32> to vector<8x384xf32>
    %329 = arith.addf %326, %328 : vector<8x384xf32>
    %330 = vector.extract_strided_slice %323 {offsets = [0, 0], sizes = [8, 128], strides = [1, 1]} : vector<8x384xf32> to vector<8x128xf32>
    %331 = vector.extract_strided_slice %329 {offsets = [0, 0], sizes = [8, 128], strides = [1, 1]} : vector<8x384xf32> to vector<8x128xf32>
    %332 = arith.addf %330, %331 : vector<8x128xf32>
    %333 = arith.negf %332 : vector<8x128xf32>
    %334 = math.exp %333 : vector<8x128xf32>
    %cst_130 = arith.constant 1.000000e+00 : f32
    %335 = vector.broadcast %cst_130 : f32 to vector<8x128xf32>
    %336 = arith.addf %335, %334 : vector<8x128xf32>
    %337 = arith.divf %335, %336 : vector<8x128xf32>
    %338 = vector.extract_strided_slice %323 {offsets = [0, 128], sizes = [8, 128], strides = [1, 1]} : vector<8x384xf32> to vector<8x128xf32>
    %339 = vector.extract_strided_slice %329 {offsets = [0, 128], sizes = [8, 128], strides = [1, 1]} : vector<8x384xf32> to vector<8x128xf32>
    %340 = arith.addf %338, %339 : vector<8x128xf32>
    %341 = arith.negf %340 : vector<8x128xf32>
    %342 = math.exp %341 : vector<8x128xf32>
    %cst_131 = arith.constant 1.000000e+00 : f32
    %343 = vector.broadcast %cst_131 : f32 to vector<8x128xf32>
    %344 = arith.addf %343, %342 : vector<8x128xf32>
    %345 = arith.divf %343, %344 : vector<8x128xf32>
    %346 = vector.extract_strided_slice %323 {offsets = [0, 256], sizes = [8, 128], strides = [1, 1]} : vector<8x384xf32> to vector<8x128xf32>
    %347 = vector.extract_strided_slice %329 {offsets = [0, 256], sizes = [8, 128], strides = [1, 1]} : vector<8x384xf32> to vector<8x128xf32>
    %348 = arith.mulf %337, %347 : vector<8x128xf32>
    %349 = arith.addf %346, %348 : vector<8x128xf32>
    %350 = math.tanh %349 : vector<8x128xf32>
    %cst_132 = arith.constant 1.000000e+00 : f32
    %351 = vector.broadcast %cst_132 : f32 to vector<8x128xf32>
    %352 = arith.subf %351, %345 : vector<8x128xf32>
    %353 = arith.mulf %352, %350 : vector<8x128xf32>
    %354 = arith.mulf %345, %310 : vector<8x128xf32>
    %355 = arith.addf %353, %354 : vector<8x128xf32>
    %356 = arith.truncf %355 : vector<8x128xf32> to vector<8x128xbf16>
    %357 = arith.index_cast %c7_i32 : i32 to index
    %c0_133 = arith.constant 0 : index
    %c0_134 = arith.constant 0 : index
    %358 = vector.load %arg13[%357, %c0_133, %c0_134] : memref<8x8x128xbf16, #tpu.memory_space<vmem>>, vector<1x8x128xbf16>
    %359 = vector.shape_cast %358 : vector<1x8x128xbf16> to vector<8x128xbf16>
    %360 = vector.shape_cast %356 : vector<8x128xbf16> to vector<1x8x128xbf16>
    tpu.vector_store %arg13[%357, %c0_133, %c0_134], %360 {strides = array<i32>} : memref<8x8x128xbf16, #tpu.memory_space<vmem>>, vector<1x8x128xbf16>,
    %c8_i32 = arith.constant 8 : i32
    %cst_135 = arith.constant 0.000000e+00 : f32
    %361 = vector.broadcast %cst_135 : f32 to vector<8x128xf32>
    %c0_i32_136 = arith.constant 0 : i32
    %362 = arith.index_cast %c0_i32_136 : i32 to index
    %c0_137 = arith.constant 0 : index
    %c0_138 = arith.constant 0 : index
    %363 = vector.load %arg13[%362, %c0_137, %c0_138] : memref<8x8x128xbf16, #tpu.memory_space<vmem>>, vector<1x8x128xbf16>
    %364 = vector.shape_cast %363 : vector<1x8x128xbf16> to vector<8x128xbf16>
    %c0_139 = arith.constant 0 : index
    %c0_140 = arith.constant 0 : index
    %365 = vector.load %arg6[%c0_139, %c0_140] : memref<128x384xbf16, #tpu.memory_space<vmem>>, vector<128x384xbf16>
    %cst_141 = arith.constant dense<0.000000e+00> : vector<8x384xf32>
    %366 = tpu.matmul %364, %365, %cst_141 {dimension_numbers = #tpu.dot_dimension_numbers<[1], [0], [0], [1], [0, 0, 1, 1], [], []>} : vector<8x128xbf16>, vector<128x384xbf16>, vector<8x384xf32> -> vector<8x384xf32>
    %c0_142 = arith.constant 0 : index
    %c0_143 = arith.constant 0 : index
    %367 = vector.load %arg8[%c0_142, %c0_143] : memref<1x384xf32, #tpu.memory_space<vmem>>, vector<1x384xf32>
    %368 = vector.broadcast %367 : vector<1x384xf32> to vector<8x384xf32>
    %369 = arith.addf %366, %368 : vector<8x384xf32>
    %370 = arith.truncf %361 : vector<8x128xf32> to vector<8x128xbf16>
    %c0_144 = arith.constant 0 : index
    %c0_145 = arith.constant 0 : index
    %371 = vector.load %arg7[%c0_144, %c0_145] : memref<128x384xbf16, #tpu.memory_space<vmem>>, vector<128x384xbf16>
    %cst_146 = arith.constant dense<0.000000e+00> : vector<8x384xf32>
    %372 = tpu.matmul %370, %371, %cst_146 {dimension_numbers = #tpu.dot_dimension_numbers<[1], [0], [0], [1], [0, 0, 1, 1], [], []>} : vector<8x128xbf16>, vector<128x384xbf16>, vector<8x384xf32> -> vector<8x384xf32>
    %c0_147 = arith.constant 0 : index
    %c0_148 = arith.constant 0 : index
    %373 = vector.load %arg9[%c0_147, %c0_148] : memref<1x384xf32, #tpu.memory_space<vmem>>, vector<1x384xf32>
    %374 = vector.broadcast %373 : vector<1x384xf32> to vector<8x384xf32>
    %375 = arith.addf %372, %374 : vector<8x384xf32>
    %376 = vector.extract_strided_slice %369 {offsets = [0, 0], sizes = [8, 128], strides = [1, 1]} : vector<8x384xf32> to vector<8x128xf32>
    %377 = vector.extract_strided_slice %375 {offsets = [0, 0], sizes = [8, 128], strides = [1, 1]} : vector<8x384xf32> to vector<8x128xf32>
    %378 = arith.addf %376, %377 : vector<8x128xf32>
    %379 = arith.negf %378 : vector<8x128xf32>
    %380 = math.exp %379 : vector<8x128xf32>
    %cst_149 = arith.constant 1.000000e+00 : f32
    %381 = vector.broadcast %cst_149 : f32 to vector<8x128xf32>
    %382 = arith.addf %381, %380 : vector<8x128xf32>
    %383 = arith.divf %381, %382 : vector<8x128xf32>
    %384 = vector.extract_strided_slice %369 {offsets = [0, 128], sizes = [8, 128], strides = [1, 1]} : vector<8x384xf32> to vector<8x128xf32>
    %385 = vector.extract_strided_slice %375 {offsets = [0, 128], sizes = [8, 128], strides = [1, 1]} : vector<8x384xf32> to vector<8x128xf32>
    %386 = arith.addf %384, %385 : vector<8x128xf32>
    %387 = arith.negf %386 : vector<8x128xf32>
    %388 = math.exp %387 : vector<8x128xf32>
    %cst_150 = arith.constant 1.000000e+00 : f32
    %389 = vector.broadcast %cst_150 : f32 to vector<8x128xf32>
    %390 = arith.addf %389, %388 : vector<8x128xf32>
    %391 = arith.divf %389, %390 : vector<8x128xf32>
    %392 = vector.extract_strided_slice %369 {offsets = [0, 256], sizes = [8, 128], strides = [1, 1]} : vector<8x384xf32> to vector<8x128xf32>
    %393 = vector.extract_strided_slice %375 {offsets = [0, 256], sizes = [8, 128], strides = [1, 1]} : vector<8x384xf32> to vector<8x128xf32>
    %394 = arith.mulf %383, %393 : vector<8x128xf32>
    %395 = arith.addf %392, %394 : vector<8x128xf32>
    %396 = math.tanh %395 : vector<8x128xf32>
    %cst_151 = arith.constant 1.000000e+00 : f32
    %397 = vector.broadcast %cst_151 : f32 to vector<8x128xf32>
    %398 = arith.subf %397, %391 : vector<8x128xf32>
    %399 = arith.mulf %398, %396 : vector<8x128xf32>
    %400 = arith.mulf %391, %361 : vector<8x128xf32>
    %401 = arith.addf %399, %400 : vector<8x128xf32>
    %c1_i32_152 = arith.constant 1 : i32
    %402 = arith.index_cast %c1_i32_152 : i32 to index
    %c0_153 = arith.constant 0 : index
    %c0_154 = arith.constant 0 : index
    %403 = vector.load %arg13[%402, %c0_153, %c0_154] : memref<8x8x128xbf16, #tpu.memory_space<vmem>>, vector<1x8x128xbf16>
    %404 = vector.shape_cast %403 : vector<1x8x128xbf16> to vector<8x128xbf16>
    %c0_155 = arith.constant 0 : index
    %c0_156 = arith.constant 0 : index
    %405 = vector.load %arg6[%c0_155, %c0_156] : memref<128x384xbf16, #tpu.memory_space<vmem>>, vector<128x384xbf16>
    %cst_157 = arith.constant dense<0.000000e+00> : vector<8x384xf32>
    %406 = tpu.matmul %404, %405, %cst_157 {dimension_numbers = #tpu.dot_dimension_numbers<[1], [0], [0], [1], [0, 0, 1, 1], [], []>} : vector<8x128xbf16>, vector<128x384xbf16>, vector<8x384xf32> -> vector<8x384xf32>
    %c0_158 = arith.constant 0 : index
    %c0_159 = arith.constant 0 : index
    %407 = vector.load %arg8[%c0_158, %c0_159] : memref<1x384xf32, #tpu.memory_space<vmem>>, vector<1x384xf32>
    %408 = vector.broadcast %407 : vector<1x384xf32> to vector<8x384xf32>
    %409 = arith.addf %406, %408 : vector<8x384xf32>
    %410 = arith.truncf %401 : vector<8x128xf32> to vector<8x128xbf16>
    %c0_160 = arith.constant 0 : index
    %c0_161 = arith.constant 0 : index
    %411 = vector.load %arg7[%c0_160, %c0_161] : memref<128x384xbf16, #tpu.memory_space<vmem>>, vector<128x384xbf16>
    %cst_162 = arith.constant dense<0.000000e+00> : vector<8x384xf32>
    %412 = tpu.matmul %410, %411, %cst_162 {dimension_numbers = #tpu.dot_dimension_numbers<[1], [0], [0], [1], [0, 0, 1, 1], [], []>} : vector<8x128xbf16>, vector<128x384xbf16>, vector<8x384xf32> -> vector<8x384xf32>
    %c0_163 = arith.constant 0 : index
    %c0_164 = arith.constant 0 : index
    %413 = vector.load %arg9[%c0_163, %c0_164] : memref<1x384xf32, #tpu.memory_space<vmem>>, vector<1x384xf32>
    %414 = vector.broadcast %413 : vector<1x384xf32> to vector<8x384xf32>
    %415 = arith.addf %412, %414 : vector<8x384xf32>
    %416 = vector.extract_strided_slice %409 {offsets = [0, 0], sizes = [8, 128], strides = [1, 1]} : vector<8x384xf32> to vector<8x128xf32>
    %417 = vector.extract_strided_slice %415 {offsets = [0, 0], sizes = [8, 128], strides = [1, 1]} : vector<8x384xf32> to vector<8x128xf32>
    %418 = arith.addf %416, %417 : vector<8x128xf32>
    %419 = arith.negf %418 : vector<8x128xf32>
    %420 = math.exp %419 : vector<8x128xf32>
    %cst_165 = arith.constant 1.000000e+00 : f32
    %421 = vector.broadcast %cst_165 : f32 to vector<8x128xf32>
    %422 = arith.addf %421, %420 : vector<8x128xf32>
    %423 = arith.divf %421, %422 : vector<8x128xf32>
    %424 = vector.extract_strided_slice %409 {offsets = [0, 128], sizes = [8, 128], strides = [1, 1]} : vector<8x384xf32> to vector<8x128xf32>
    %425 = vector.extract_strided_slice %415 {offsets = [0, 128], sizes = [8, 128], strides = [1, 1]} : vector<8x384xf32> to vector<8x128xf32>
    %426 = arith.addf %424, %425 : vector<8x128xf32>
    %427 = arith.negf %426 : vector<8x128xf32>
    %428 = math.exp %427 : vector<8x128xf32>
    %cst_166 = arith.constant 1.000000e+00 : f32
    %429 = vector.broadcast %cst_166 : f32 to vector<8x128xf32>
    %430 = arith.addf %429, %428 : vector<8x128xf32>
    %431 = arith.divf %429, %430 : vector<8x128xf32>
    %432 = vector.extract_strided_slice %409 {offsets = [0, 256], sizes = [8, 128], strides = [1, 1]} : vector<8x384xf32> to vector<8x128xf32>
    %433 = vector.extract_strided_slice %415 {offsets = [0, 256], sizes = [8, 128], strides = [1, 1]} : vector<8x384xf32> to vector<8x128xf32>
    %434 = arith.mulf %423, %433 : vector<8x128xf32>
    %435 = arith.addf %432, %434 : vector<8x128xf32>
    %436 = math.tanh %435 : vector<8x128xf32>
    %cst_167 = arith.constant 1.000000e+00 : f32
    %437 = vector.broadcast %cst_167 : f32 to vector<8x128xf32>
    %438 = arith.subf %437, %431 : vector<8x128xf32>
    %439 = arith.mulf %438, %436 : vector<8x128xf32>
    %440 = arith.mulf %431, %401 : vector<8x128xf32>
    %441 = arith.addf %439, %440 : vector<8x128xf32>
    %c2_i32_168 = arith.constant 2 : i32
    %442 = arith.index_cast %c2_i32_168 : i32 to index
    %c0_169 = arith.constant 0 : index
    %c0_170 = arith.constant 0 : index
    %443 = vector.load %arg13[%442, %c0_169, %c0_170] : memref<8x8x128xbf16, #tpu.memory_space<vmem>>, vector<1x8x128xbf16>
    %444 = vector.shape_cast %443 : vector<1x8x128xbf16> to vector<8x128xbf16>
    %c0_171 = arith.constant 0 : index
    %c0_172 = arith.constant 0 : index
    %445 = vector.load %arg6[%c0_171, %c0_172] : memref<128x384xbf16, #tpu.memory_space<vmem>>, vector<128x384xbf16>
    %cst_173 = arith.constant dense<0.000000e+00> : vector<8x384xf32>
    %446 = tpu.matmul %444, %445, %cst_173 {dimension_numbers = #tpu.dot_dimension_numbers<[1], [0], [0], [1], [0, 0, 1, 1], [], []>} : vector<8x128xbf16>, vector<128x384xbf16>, vector<8x384xf32> -> vector<8x384xf32>
    %c0_174 = arith.constant 0 : index
    %c0_175 = arith.constant 0 : index
    %447 = vector.load %arg8[%c0_174, %c0_175] : memref<1x384xf32, #tpu.memory_space<vmem>>, vector<1x384xf32>
    %448 = vector.broadcast %447 : vector<1x384xf32> to vector<8x384xf32>
    %449 = arith.addf %446, %448 : vector<8x384xf32>
    %450 = arith.truncf %441 : vector<8x128xf32> to vector<8x128xbf16>
    %c0_176 = arith.constant 0 : index
    %c0_177 = arith.constant 0 : index
    %451 = vector.load %arg7[%c0_176, %c0_177] : memref<128x384xbf16, #tpu.memory_space<vmem>>, vector<128x384xbf16>
    %cst_178 = arith.constant dense<0.000000e+00> : vector<8x384xf32>
    %452 = tpu.matmul %450, %451, %cst_178 {dimension_numbers = #tpu.dot_dimension_numbers<[1], [0], [0], [1], [0, 0, 1, 1], [], []>} : vector<8x128xbf16>, vector<128x384xbf16>, vector<8x384xf32> -> vector<8x384xf32>
    %c0_179 = arith.constant 0 : index
    %c0_180 = arith.constant 0 : index
    %453 = vector.load %arg9[%c0_179, %c0_180] : memref<1x384xf32, #tpu.memory_space<vmem>>, vector<1x384xf32>
    %454 = vector.broadcast %453 : vector<1x384xf32> to vector<8x384xf32>
    %455 = arith.addf %452, %454 : vector<8x384xf32>
    %456 = vector.extract_strided_slice %449 {offsets = [0, 0], sizes = [8, 128], strides = [1, 1]} : vector<8x384xf32> to vector<8x128xf32>
    %457 = vector.extract_strided_slice %455 {offsets = [0, 0], sizes = [8, 128], strides = [1, 1]} : vector<8x384xf32> to vector<8x128xf32>
    %458 = arith.addf %456, %457 : vector<8x128xf32>
    %459 = arith.negf %458 : vector<8x128xf32>
    %460 = math.exp %459 : vector<8x128xf32>
    %cst_181 = arith.constant 1.000000e+00 : f32
    %461 = vector.broadcast %cst_181 : f32 to vector<8x128xf32>
    %462 = arith.addf %461, %460 : vector<8x128xf32>
    %463 = arith.divf %461, %462 : vector<8x128xf32>
    %464 = vector.extract_strided_slice %449 {offsets = [0, 128], sizes = [8, 128], strides = [1, 1]} : vector<8x384xf32> to vector<8x128xf32>
    %465 = vector.extract_strided_slice %455 {offsets = [0, 128], sizes = [8, 128], strides = [1, 1]} : vector<8x384xf32> to vector<8x128xf32>
    %466 = arith.addf %464, %465 : vector<8x128xf32>
    %467 = arith.negf %466 : vector<8x128xf32>
    %468 = math.exp %467 : vector<8x128xf32>
    %cst_182 = arith.constant 1.000000e+00 : f32
    %469 = vector.broadcast %cst_182 : f32 to vector<8x128xf32>
    %470 = arith.addf %469, %468 : vector<8x128xf32>
    %471 = arith.divf %469, %470 : vector<8x128xf32>
    %472 = vector.extract_strided_slice %449 {offsets = [0, 256], sizes = [8, 128], strides = [1, 1]} : vector<8x384xf32> to vector<8x128xf32>
    %473 = vector.extract_strided_slice %455 {offsets = [0, 256], sizes = [8, 128], strides = [1, 1]} : vector<8x384xf32> to vector<8x128xf32>
    %474 = arith.mulf %463, %473 : vector<8x128xf32>
    %475 = arith.addf %472, %474 : vector<8x128xf32>
    %476 = math.tanh %475 : vector<8x128xf32>
    %cst_183 = arith.constant 1.000000e+00 : f32
    %477 = vector.broadcast %cst_183 : f32 to vector<8x128xf32>
    %478 = arith.subf %477, %471 : vector<8x128xf32>
    %479 = arith.mulf %478, %476 : vector<8x128xf32>
    %480 = arith.mulf %471, %441 : vector<8x128xf32>
    %481 = arith.addf %479, %480 : vector<8x128xf32>
    %c3_i32_184 = arith.constant 3 : i32
    %482 = arith.index_cast %c3_i32_184 : i32 to index
    %c0_185 = arith.constant 0 : index
    %c0_186 = arith.constant 0 : index
    %483 = vector.load %arg13[%482, %c0_185, %c0_186] : memref<8x8x128xbf16, #tpu.memory_space<vmem>>, vector<1x8x128xbf16>
    %484 = vector.shape_cast %483 : vector<1x8x128xbf16> to vector<8x128xbf16>
    %c0_187 = arith.constant 0 : index
    %c0_188 = arith.constant 0 : index
    %485 = vector.load %arg6[%c0_187, %c0_188] : memref<128x384xbf16, #tpu.memory_space<vmem>>, vector<128x384xbf16>
    %cst_189 = arith.constant dense<0.000000e+00> : vector<8x384xf32>
    %486 = tpu.matmul %484, %485, %cst_189 {dimension_numbers = #tpu.dot_dimension_numbers<[1], [0], [0], [1], [0, 0, 1, 1], [], []>} : vector<8x128xbf16>, vector<128x384xbf16>, vector<8x384xf32> -> vector<8x384xf32>
    %c0_190 = arith.constant 0 : index
    %c0_191 = arith.constant 0 : index
    %487 = vector.load %arg8[%c0_190, %c0_191] : memref<1x384xf32, #tpu.memory_space<vmem>>, vector<1x384xf32>
    %488 = vector.broadcast %487 : vector<1x384xf32> to vector<8x384xf32>
    %489 = arith.addf %486, %488 : vector<8x384xf32>
    %490 = arith.truncf %481 : vector<8x128xf32> to vector<8x128xbf16>
    %c0_192 = arith.constant 0 : index
    %c0_193 = arith.constant 0 : index
    %491 = vector.load %arg7[%c0_192, %c0_193] : memref<128x384xbf16, #tpu.memory_space<vmem>>, vector<128x384xbf16>
    %cst_194 = arith.constant dense<0.000000e+00> : vector<8x384xf32>
    %492 = tpu.matmul %490, %491, %cst_194 {dimension_numbers = #tpu.dot_dimension_numbers<[1], [0], [0], [1], [0, 0, 1, 1], [], []>} : vector<8x128xbf16>, vector<128x384xbf16>, vector<8x384xf32> -> vector<8x384xf32>
    %c0_195 = arith.constant 0 : index
    %c0_196 = arith.constant 0 : index
    %493 = vector.load %arg9[%c0_195, %c0_196] : memref<1x384xf32, #tpu.memory_space<vmem>>, vector<1x384xf32>
    %494 = vector.broadcast %493 : vector<1x384xf32> to vector<8x384xf32>
    %495 = arith.addf %492, %494 : vector<8x384xf32>
    %496 = vector.extract_strided_slice %489 {offsets = [0, 0], sizes = [8, 128], strides = [1, 1]} : vector<8x384xf32> to vector<8x128xf32>
    %497 = vector.extract_strided_slice %495 {offsets = [0, 0], sizes = [8, 128], strides = [1, 1]} : vector<8x384xf32> to vector<8x128xf32>
    %498 = arith.addf %496, %497 : vector<8x128xf32>
    %499 = arith.negf %498 : vector<8x128xf32>
    %500 = math.exp %499 : vector<8x128xf32>
    %cst_197 = arith.constant 1.000000e+00 : f32
    %501 = vector.broadcast %cst_197 : f32 to vector<8x128xf32>
    %502 = arith.addf %501, %500 : vector<8x128xf32>
    %503 = arith.divf %501, %502 : vector<8x128xf32>
    %504 = vector.extract_strided_slice %489 {offsets = [0, 128], sizes = [8, 128], strides = [1, 1]} : vector<8x384xf32> to vector<8x128xf32>
    %505 = vector.extract_strided_slice %495 {offsets = [0, 128], sizes = [8, 128], strides = [1, 1]} : vector<8x384xf32> to vector<8x128xf32>
    %506 = arith.addf %504, %505 : vector<8x128xf32>
    %507 = arith.negf %506 : vector<8x128xf32>
    %508 = math.exp %507 : vector<8x128xf32>
    %cst_198 = arith.constant 1.000000e+00 : f32
    %509 = vector.broadcast %cst_198 : f32 to vector<8x128xf32>
    %510 = arith.addf %509, %508 : vector<8x128xf32>
    %511 = arith.divf %509, %510 : vector<8x128xf32>
    %512 = vector.extract_strided_slice %489 {offsets = [0, 256], sizes = [8, 128], strides = [1, 1]} : vector<8x384xf32> to vector<8x128xf32>
    %513 = vector.extract_strided_slice %495 {offsets = [0, 256], sizes = [8, 128], strides = [1, 1]} : vector<8x384xf32> to vector<8x128xf32>
    %514 = arith.mulf %503, %513 : vector<8x128xf32>
    %515 = arith.addf %512, %514 : vector<8x128xf32>
    %516 = math.tanh %515 : vector<8x128xf32>
    %cst_199 = arith.constant 1.000000e+00 : f32
    %517 = vector.broadcast %cst_199 : f32 to vector<8x128xf32>
    %518 = arith.subf %517, %511 : vector<8x128xf32>
    %519 = arith.mulf %518, %516 : vector<8x128xf32>
    %520 = arith.mulf %511, %481 : vector<8x128xf32>
    %521 = arith.addf %519, %520 : vector<8x128xf32>
    %c4_i32_200 = arith.constant 4 : i32
    %522 = arith.index_cast %c4_i32_200 : i32 to index
    %c0_201 = arith.constant 0 : index
    %c0_202 = arith.constant 0 : index
    %523 = vector.load %arg13[%522, %c0_201, %c0_202] : memref<8x8x128xbf16, #tpu.memory_space<vmem>>, vector<1x8x128xbf16>
    %524 = vector.shape_cast %523 : vector<1x8x128xbf16> to vector<8x128xbf16>
    %c0_203 = arith.constant 0 : index
    %c0_204 = arith.constant 0 : index
    %525 = vector.load %arg6[%c0_203, %c0_204] : memref<128x384xbf16, #tpu.memory_space<vmem>>, vector<128x384xbf16>
    %cst_205 = arith.constant dense<0.000000e+00> : vector<8x384xf32>
    %526 = tpu.matmul %524, %525, %cst_205 {dimension_numbers = #tpu.dot_dimension_numbers<[1], [0], [0], [1], [0, 0, 1, 1], [], []>} : vector<8x128xbf16>, vector<128x384xbf16>, vector<8x384xf32> -> vector<8x384xf32>
    %c0_206 = arith.constant 0 : index
    %c0_207 = arith.constant 0 : index
    %527 = vector.load %arg8[%c0_206, %c0_207] : memref<1x384xf32, #tpu.memory_space<vmem>>, vector<1x384xf32>
    %528 = vector.broadcast %527 : vector<1x384xf32> to vector<8x384xf32>
    %529 = arith.addf %526, %528 : vector<8x384xf32>
    %530 = arith.truncf %521 : vector<8x128xf32> to vector<8x128xbf16>
    %c0_208 = arith.constant 0 : index
    %c0_209 = arith.constant 0 : index
    %531 = vector.load %arg7[%c0_208, %c0_209] : memref<128x384xbf16, #tpu.memory_space<vmem>>, vector<128x384xbf16>
    %cst_210 = arith.constant dense<0.000000e+00> : vector<8x384xf32>
    %532 = tpu.matmul %530, %531, %cst_210 {dimension_numbers = #tpu.dot_dimension_numbers<[1], [0], [0], [1], [0, 0, 1, 1], [], []>} : vector<8x128xbf16>, vector<128x384xbf16>, vector<8x384xf32> -> vector<8x384xf32>
    %c0_211 = arith.constant 0 : index
    %c0_212 = arith.constant 0 : index
    %533 = vector.load %arg9[%c0_211, %c0_212] : memref<1x384xf32, #tpu.memory_space<vmem>>, vector<1x384xf32>
    %534 = vector.broadcast %533 : vector<1x384xf32> to vector<8x384xf32>
    %535 = arith.addf %532, %534 : vector<8x384xf32>
    %536 = vector.extract_strided_slice %529 {offsets = [0, 0], sizes = [8, 128], strides = [1, 1]} : vector<8x384xf32> to vector<8x128xf32>
    %537 = vector.extract_strided_slice %535 {offsets = [0, 0], sizes = [8, 128], strides = [1, 1]} : vector<8x384xf32> to vector<8x128xf32>
    %538 = arith.addf %536, %537 : vector<8x128xf32>
    %539 = arith.negf %538 : vector<8x128xf32>
    %540 = math.exp %539 : vector<8x128xf32>
    %cst_213 = arith.constant 1.000000e+00 : f32
    %541 = vector.broadcast %cst_213 : f32 to vector<8x128xf32>
    %542 = arith.addf %541, %540 : vector<8x128xf32>
    %543 = arith.divf %541, %542 : vector<8x128xf32>
    %544 = vector.extract_strided_slice %529 {offsets = [0, 128], sizes = [8, 128], strides = [1, 1]} : vector<8x384xf32> to vector<8x128xf32>
    %545 = vector.extract_strided_slice %535 {offsets = [0, 128], sizes = [8, 128], strides = [1, 1]} : vector<8x384xf32> to vector<8x128xf32>
    %546 = arith.addf %544, %545 : vector<8x128xf32>
    %547 = arith.negf %546 : vector<8x128xf32>
    %548 = math.exp %547 : vector<8x128xf32>
    %cst_214 = arith.constant 1.000000e+00 : f32
    %549 = vector.broadcast %cst_214 : f32 to vector<8x128xf32>
    %550 = arith.addf %549, %548 : vector<8x128xf32>
    %551 = arith.divf %549, %550 : vector<8x128xf32>
    %552 = vector.extract_strided_slice %529 {offsets = [0, 256], sizes = [8, 128], strides = [1, 1]} : vector<8x384xf32> to vector<8x128xf32>
    %553 = vector.extract_strided_slice %535 {offsets = [0, 256], sizes = [8, 128], strides = [1, 1]} : vector<8x384xf32> to vector<8x128xf32>
    %554 = arith.mulf %543, %553 : vector<8x128xf32>
    %555 = arith.addf %552, %554 : vector<8x128xf32>
    %556 = math.tanh %555 : vector<8x128xf32>
    %cst_215 = arith.constant 1.000000e+00 : f32
    %557 = vector.broadcast %cst_215 : f32 to vector<8x128xf32>
    %558 = arith.subf %557, %551 : vector<8x128xf32>
    %559 = arith.mulf %558, %556 : vector<8x128xf32>
    %560 = arith.mulf %551, %521 : vector<8x128xf32>
    %561 = arith.addf %559, %560 : vector<8x128xf32>
    %c5_i32_216 = arith.constant 5 : i32
    %562 = arith.index_cast %c5_i32_216 : i32 to index
    %c0_217 = arith.constant 0 : index
    %c0_218 = arith.constant 0 : index
    %563 = vector.load %arg13[%562, %c0_217, %c0_218] : memref<8x8x128xbf16, #tpu.memory_space<vmem>>, vector<1x8x128xbf16>
    %564 = vector.shape_cast %563 : vector<1x8x128xbf16> to vector<8x128xbf16>
    %c0_219 = arith.constant 0 : index
    %c0_220 = arith.constant 0 : index
    %565 = vector.load %arg6[%c0_219, %c0_220] : memref<128x384xbf16, #tpu.memory_space<vmem>>, vector<128x384xbf16>
    %cst_221 = arith.constant dense<0.000000e+00> : vector<8x384xf32>
    %566 = tpu.matmul %564, %565, %cst_221 {dimension_numbers = #tpu.dot_dimension_numbers<[1], [0], [0], [1], [0, 0, 1, 1], [], []>} : vector<8x128xbf16>, vector<128x384xbf16>, vector<8x384xf32> -> vector<8x384xf32>
    %c0_222 = arith.constant 0 : index
    %c0_223 = arith.constant 0 : index
    %567 = vector.load %arg8[%c0_222, %c0_223] : memref<1x384xf32, #tpu.memory_space<vmem>>, vector<1x384xf32>
    %568 = vector.broadcast %567 : vector<1x384xf32> to vector<8x384xf32>
    %569 = arith.addf %566, %568 : vector<8x384xf32>
    %570 = arith.truncf %561 : vector<8x128xf32> to vector<8x128xbf16>
    %c0_224 = arith.constant 0 : index
    %c0_225 = arith.constant 0 : index
    %571 = vector.load %arg7[%c0_224, %c0_225] : memref<128x384xbf16, #tpu.memory_space<vmem>>, vector<128x384xbf16>
    %cst_226 = arith.constant dense<0.000000e+00> : vector<8x384xf32>
    %572 = tpu.matmul %570, %571, %cst_226 {dimension_numbers = #tpu.dot_dimension_numbers<[1], [0], [0], [1], [0, 0, 1, 1], [], []>} : vector<8x128xbf16>, vector<128x384xbf16>, vector<8x384xf32> -> vector<8x384xf32>
    %c0_227 = arith.constant 0 : index
    %c0_228 = arith.constant 0 : index
    %573 = vector.load %arg9[%c0_227, %c0_228] : memref<1x384xf32, #tpu.memory_space<vmem>>, vector<1x384xf32>
    %574 = vector.broadcast %573 : vector<1x384xf32> to vector<8x384xf32>
    %575 = arith.addf %572, %574 : vector<8x384xf32>
    %576 = vector.extract_strided_slice %569 {offsets = [0, 0], sizes = [8, 128], strides = [1, 1]} : vector<8x384xf32> to vector<8x128xf32>
    %577 = vector.extract_strided_slice %575 {offsets = [0, 0], sizes = [8, 128], strides = [1, 1]} : vector<8x384xf32> to vector<8x128xf32>
    %578 = arith.addf %576, %577 : vector<8x128xf32>
    %579 = arith.negf %578 : vector<8x128xf32>
    %580 = math.exp %579 : vector<8x128xf32>
    %cst_229 = arith.constant 1.000000e+00 : f32
    %581 = vector.broadcast %cst_229 : f32 to vector<8x128xf32>
    %582 = arith.addf %581, %580 : vector<8x128xf32>
    %583 = arith.divf %581, %582 : vector<8x128xf32>
    %584 = vector.extract_strided_slice %569 {offsets = [0, 128], sizes = [8, 128], strides = [1, 1]} : vector<8x384xf32> to vector<8x128xf32>
    %585 = vector.extract_strided_slice %575 {offsets = [0, 128], sizes = [8, 128], strides = [1, 1]} : vector<8x384xf32> to vector<8x128xf32>
    %586 = arith.addf %584, %585 : vector<8x128xf32>
    %587 = arith.negf %586 : vector<8x128xf32>
    %588 = math.exp %587 : vector<8x128xf32>
    %cst_230 = arith.constant 1.000000e+00 : f32
    %589 = vector.broadcast %cst_230 : f32 to vector<8x128xf32>
    %590 = arith.addf %589, %588 : vector<8x128xf32>
    %591 = arith.divf %589, %590 : vector<8x128xf32>
    %592 = vector.extract_strided_slice %569 {offsets = [0, 256], sizes = [8, 128], strides = [1, 1]} : vector<8x384xf32> to vector<8x128xf32>
    %593 = vector.extract_strided_slice %575 {offsets = [0, 256], sizes = [8, 128], strides = [1, 1]} : vector<8x384xf32> to vector<8x128xf32>
    %594 = arith.mulf %583, %593 : vector<8x128xf32>
    %595 = arith.addf %592, %594 : vector<8x128xf32>
    %596 = math.tanh %595 : vector<8x128xf32>
    %cst_231 = arith.constant 1.000000e+00 : f32
    %597 = vector.broadcast %cst_231 : f32 to vector<8x128xf32>
    %598 = arith.subf %597, %591 : vector<8x128xf32>
    %599 = arith.mulf %598, %596 : vector<8x128xf32>
    %600 = arith.mulf %591, %561 : vector<8x128xf32>
    %601 = arith.addf %599, %600 : vector<8x128xf32>
    %c6_i32_232 = arith.constant 6 : i32
    %602 = arith.index_cast %c6_i32_232 : i32 to index
    %c0_233 = arith.constant 0 : index
    %c0_234 = arith.constant 0 : index
    %603 = vector.load %arg13[%602, %c0_233, %c0_234] : memref<8x8x128xbf16, #tpu.memory_space<vmem>>, vector<1x8x128xbf16>
    %604 = vector.shape_cast %603 : vector<1x8x128xbf16> to vector<8x128xbf16>
    %c0_235 = arith.constant 0 : index
    %c0_236 = arith.constant 0 : index
    %605 = vector.load %arg6[%c0_235, %c0_236] : memref<128x384xbf16, #tpu.memory_space<vmem>>, vector<128x384xbf16>
    %cst_237 = arith.constant dense<0.000000e+00> : vector<8x384xf32>
    %606 = tpu.matmul %604, %605, %cst_237 {dimension_numbers = #tpu.dot_dimension_numbers<[1], [0], [0], [1], [0, 0, 1, 1], [], []>} : vector<8x128xbf16>, vector<128x384xbf16>, vector<8x384xf32> -> vector<8x384xf32>
    %c0_238 = arith.constant 0 : index
    %c0_239 = arith.constant 0 : index
    %607 = vector.load %arg8[%c0_238, %c0_239] : memref<1x384xf32, #tpu.memory_space<vmem>>, vector<1x384xf32>
    %608 = vector.broadcast %607 : vector<1x384xf32> to vector<8x384xf32>
    %609 = arith.addf %606, %608 : vector<8x384xf32>
    %610 = arith.truncf %601 : vector<8x128xf32> to vector<8x128xbf16>
    %c0_240 = arith.constant 0 : index
    %c0_241 = arith.constant 0 : index
    %611 = vector.load %arg7[%c0_240, %c0_241] : memref<128x384xbf16, #tpu.memory_space<vmem>>, vector<128x384xbf16>
    %cst_242 = arith.constant dense<0.000000e+00> : vector<8x384xf32>
    %612 = tpu.matmul %610, %611, %cst_242 {dimension_numbers = #tpu.dot_dimension_numbers<[1], [0], [0], [1], [0, 0, 1, 1], [], []>} : vector<8x128xbf16>, vector<128x384xbf16>, vector<8x384xf32> -> vector<8x384xf32>
    %c0_243 = arith.constant 0 : index
    %c0_244 = arith.constant 0 : index
    %613 = vector.load %arg9[%c0_243, %c0_244] : memref<1x384xf32, #tpu.memory_space<vmem>>, vector<1x384xf32>
    %614 = vector.broadcast %613 : vector<1x384xf32> to vector<8x384xf32>
    %615 = arith.addf %612, %614 : vector<8x384xf32>
    %616 = vector.extract_strided_slice %609 {offsets = [0, 0], sizes = [8, 128], strides = [1, 1]} : vector<8x384xf32> to vector<8x128xf32>
    %617 = vector.extract_strided_slice %615 {offsets = [0, 0], sizes = [8, 128], strides = [1, 1]} : vector<8x384xf32> to vector<8x128xf32>
    %618 = arith.addf %616, %617 : vector<8x128xf32>
    %619 = arith.negf %618 : vector<8x128xf32>
    %620 = math.exp %619 : vector<8x128xf32>
    %cst_245 = arith.constant 1.000000e+00 : f32
    %621 = vector.broadcast %cst_245 : f32 to vector<8x128xf32>
    %622 = arith.addf %621, %620 : vector<8x128xf32>
    %623 = arith.divf %621, %622 : vector<8x128xf32>
    %624 = vector.extract_strided_slice %609 {offsets = [0, 128], sizes = [8, 128], strides = [1, 1]} : vector<8x384xf32> to vector<8x128xf32>
    %625 = vector.extract_strided_slice %615 {offsets = [0, 128], sizes = [8, 128], strides = [1, 1]} : vector<8x384xf32> to vector<8x128xf32>
    %626 = arith.addf %624, %625 : vector<8x128xf32>
    %627 = arith.negf %626 : vector<8x128xf32>
    %628 = math.exp %627 : vector<8x128xf32>
    %cst_246 = arith.constant 1.000000e+00 : f32
    %629 = vector.broadcast %cst_246 : f32 to vector<8x128xf32>
    %630 = arith.addf %629, %628 : vector<8x128xf32>
    %631 = arith.divf %629, %630 : vector<8x128xf32>
    %632 = vector.extract_strided_slice %609 {offsets = [0, 256], sizes = [8, 128], strides = [1, 1]} : vector<8x384xf32> to vector<8x128xf32>
    %633 = vector.extract_strided_slice %615 {offsets = [0, 256], sizes = [8, 128], strides = [1, 1]} : vector<8x384xf32> to vector<8x128xf32>
    %634 = arith.mulf %623, %633 : vector<8x128xf32>
    %635 = arith.addf %632, %634 : vector<8x128xf32>
    %636 = math.tanh %635 : vector<8x128xf32>
    %cst_247 = arith.constant 1.000000e+00 : f32
    %637 = vector.broadcast %cst_247 : f32 to vector<8x128xf32>
    %638 = arith.subf %637, %631 : vector<8x128xf32>
    %639 = arith.mulf %638, %636 : vector<8x128xf32>
    %640 = arith.mulf %631, %601 : vector<8x128xf32>
    %641 = arith.addf %639, %640 : vector<8x128xf32>
    %c7_i32_248 = arith.constant 7 : i32
    %642 = arith.index_cast %c7_i32_248 : i32 to index
    %c0_249 = arith.constant 0 : index
    %c0_250 = arith.constant 0 : index
    %643 = vector.load %arg13[%642, %c0_249, %c0_250] : memref<8x8x128xbf16, #tpu.memory_space<vmem>>, vector<1x8x128xbf16>
    %644 = vector.shape_cast %643 : vector<1x8x128xbf16> to vector<8x128xbf16>
    %c0_251 = arith.constant 0 : index
    %c0_252 = arith.constant 0 : index
    %645 = vector.load %arg6[%c0_251, %c0_252] : memref<128x384xbf16, #tpu.memory_space<vmem>>, vector<128x384xbf16>
    %cst_253 = arith.constant dense<0.000000e+00> : vector<8x384xf32>
    %646 = tpu.matmul %644, %645, %cst_253 {dimension_numbers = #tpu.dot_dimension_numbers<[1], [0], [0], [1], [0, 0, 1, 1], [], []>} : vector<8x128xbf16>, vector<128x384xbf16>, vector<8x384xf32> -> vector<8x384xf32>
    %c0_254 = arith.constant 0 : index
    %c0_255 = arith.constant 0 : index
    %647 = vector.load %arg8[%c0_254, %c0_255] : memref<1x384xf32, #tpu.memory_space<vmem>>, vector<1x384xf32>
    %648 = vector.broadcast %647 : vector<1x384xf32> to vector<8x384xf32>
    %649 = arith.addf %646, %648 : vector<8x384xf32>
    %650 = arith.truncf %641 : vector<8x128xf32> to vector<8x128xbf16>
    %c0_256 = arith.constant 0 : index
    %c0_257 = arith.constant 0 : index
    %651 = vector.load %arg7[%c0_256, %c0_257] : memref<128x384xbf16, #tpu.memory_space<vmem>>, vector<128x384xbf16>
    %cst_258 = arith.constant dense<0.000000e+00> : vector<8x384xf32>
    %652 = tpu.matmul %650, %651, %cst_258 {dimension_numbers = #tpu.dot_dimension_numbers<[1], [0], [0], [1], [0, 0, 1, 1], [], []>} : vector<8x128xbf16>, vector<128x384xbf16>, vector<8x384xf32> -> vector<8x384xf32>
    %c0_259 = arith.constant 0 : index
    %c0_260 = arith.constant 0 : index
    %653 = vector.load %arg9[%c0_259, %c0_260] : memref<1x384xf32, #tpu.memory_space<vmem>>, vector<1x384xf32>
    %654 = vector.broadcast %653 : vector<1x384xf32> to vector<8x384xf32>
    %655 = arith.addf %652, %654 : vector<8x384xf32>
    %656 = vector.extract_strided_slice %649 {offsets = [0, 0], sizes = [8, 128], strides = [1, 1]} : vector<8x384xf32> to vector<8x128xf32>
    %657 = vector.extract_strided_slice %655 {offsets = [0, 0], sizes = [8, 128], strides = [1, 1]} : vector<8x384xf32> to vector<8x128xf32>
    %658 = arith.addf %656, %657 : vector<8x128xf32>
    %659 = arith.negf %658 : vector<8x128xf32>
    %660 = math.exp %659 : vector<8x128xf32>
    %cst_261 = arith.constant 1.000000e+00 : f32
    %661 = vector.broadcast %cst_261 : f32 to vector<8x128xf32>
    %662 = arith.addf %661, %660 : vector<8x128xf32>
    %663 = arith.divf %661, %662 : vector<8x128xf32>
    %664 = vector.extract_strided_slice %649 {offsets = [0, 128], sizes = [8, 128], strides = [1, 1]} : vector<8x384xf32> to vector<8x128xf32>
    %665 = vector.extract_strided_slice %655 {offsets = [0, 128], sizes = [8, 128], strides = [1, 1]} : vector<8x384xf32> to vector<8x128xf32>
    %666 = arith.addf %664, %665 : vector<8x128xf32>
    %667 = arith.negf %666 : vector<8x128xf32>
    %668 = math.exp %667 : vector<8x128xf32>
    %cst_262 = arith.constant 1.000000e+00 : f32
    %669 = vector.broadcast %cst_262 : f32 to vector<8x128xf32>
    %670 = arith.addf %669, %668 : vector<8x128xf32>
    %671 = arith.divf %669, %670 : vector<8x128xf32>
    %672 = vector.extract_strided_slice %649 {offsets = [0, 256], sizes = [8, 128], strides = [1, 1]} : vector<8x384xf32> to vector<8x128xf32>
    %673 = vector.extract_strided_slice %655 {offsets = [0, 256], sizes = [8, 128], strides = [1, 1]} : vector<8x384xf32> to vector<8x128xf32>
    %674 = arith.mulf %663, %673 : vector<8x128xf32>
    %675 = arith.addf %672, %674 : vector<8x128xf32>
    %676 = math.tanh %675 : vector<8x128xf32>
    %cst_263 = arith.constant 1.000000e+00 : f32
    %677 = vector.broadcast %cst_263 : f32 to vector<8x128xf32>
    %678 = arith.subf %677, %671 : vector<8x128xf32>
    %679 = arith.mulf %678, %676 : vector<8x128xf32>
    %680 = arith.mulf %671, %641 : vector<8x128xf32>
    %681 = arith.addf %679, %680 : vector<8x128xf32>
    %c8_i32_264 = arith.constant 8 : i32
    %c0_265 = arith.constant 0 : index
    %c0_266 = arith.constant 0 : index
    %682 = vector.load %arg10[%c0_265, %c0_266] : memref<128x4xf32, #tpu.memory_space<vmem>>, vector<128x4xf32>
    %cst_267 = arith.constant dense<0.000000e+00> : vector<8x4xf32>
    %683 = tpu.matmul %681, %682, %cst_267 {dimension_numbers = #tpu.dot_dimension_numbers<[1], [0], [0], [1], [0, 0, 1, 1], [], []>} : vector<8x128xf32>, vector<128x4xf32>, vector<8x4xf32> -> vector<8x4xf32>
    %c0_268 = arith.constant 0 : index
    %c0_269 = arith.constant 0 : index
    %684 = vector.load %arg11[%c0_268, %c0_269] : memref<1x4xf32, #tpu.memory_space<vmem>>, vector<1x4xf32>
    %685 = vector.broadcast %684 : vector<1x4xf32> to vector<8x4xf32>
    %686 = arith.addf %683, %685 : vector<8x4xf32>
    %c0_270 = arith.constant 0 : index
    %c0_271 = arith.constant 0 : index
    %687 = vector.load %arg12[%c0_270, %c0_271] : memref<8x4xf32, #tpu.memory_space<vmem>>, vector<8x4xf32>
    tpu.vector_store %arg12[%c0_270, %c0_271], %686 {strides = array<i32>} : memref<8x4xf32, #tpu.memory_space<vmem>>, vector<8x4xf32>,
    return
  }
  func.func @transform_0(%arg0: i32) -> (i32, i32, i32) {
    %c0_i32 = arith.constant 0 : i32
    %c0_i32_0 = arith.constant 0 : i32
    %c0_i32_1 = arith.constant 0 : i32
    return %c0_i32, %arg0, %c0_i32_0 : i32, i32, i32
  }
  func.func @transform_1(%arg0: i32) -> (i32, i32) {
    %c0_i32 = arith.constant 0 : i32
    %c0_i32_0 = arith.constant 0 : i32
    %c0_i32_1 = arith.constant 0 : i32
    return %c0_i32, %c0_i32_0 : i32, i32
  }
  func.func @transform_2(%arg0: i32) -> (i32, i32) {
    %c0_i32 = arith.constant 0 : i32
    %c0_i32_0 = arith.constant 0 : i32
    %c0_i32_1 = arith.constant 0 : i32
    return %c0_i32, %c0_i32_0 : i32, i32
  }
  func.func @transform_3(%arg0: i32) -> (i32, i32) {
    %c0_i32 = arith.constant 0 : i32
    %c0_i32_0 = arith.constant 0 : i32
    %c0_i32_1 = arith.constant 0 : i32
    return %c0_i32, %c0_i32_0 : i32, i32
  }
  func.func @transform_4(%arg0: i32) -> (i32, i32) {
    %c0_i32 = arith.constant 0 : i32
    %c0_i32_0 = arith.constant 0 : i32
    %c0_i32_1 = arith.constant 0 : i32
    return %c0_i32, %c0_i32_0 : i32, i32
  }
  func.func @transform_5(%arg0: i32) -> (i32, i32) {
    %c0_i32 = arith.constant 0 : i32
    %c0_i32_0 = arith.constant 0 : i32
    %c0_i32_1 = arith.constant 0 : i32
    return %c0_i32, %c0_i32_0 : i32, i32
  }
  func.func @transform_6(%arg0: i32) -> (i32, i32) {
    %c0_i32 = arith.constant 0 : i32
    %c0_i32_0 = arith.constant 0 : i32
    %c0_i32_1 = arith.constant 0 : i32
    return %c0_i32, %c0_i32_0 : i32, i32
  }
  func.func @transform_7(%arg0: i32) -> (i32, i32) {
    %c0_i32 = arith.constant 0 : i32
    %c0_i32_0 = arith.constant 0 : i32
    %c0_i32_1 = arith.constant 0 : i32
    return %c0_i32, %c0_i32_0 : i32, i32
  }
  func.func @transform_8(%arg0: i32) -> (i32, i32) {
    %c0_i32 = arith.constant 0 : i32
    %c0_i32_0 = arith.constant 0 : i32
    %c0_i32_1 = arith.constant 0 : i32
    return %c0_i32, %c0_i32_0 : i32, i32
  }
  func.func @transform_9(%arg0: i32) -> (i32, i32) {
    %c0_i32 = arith.constant 0 : i32
    %c0_i32_0 = arith.constant 0 : i32
    %c0_i32_1 = arith.constant 0 : i32
    return %c0_i32, %c0_i32_0 : i32, i32
  }
  func.func @transform_10(%arg0: i32) -> (i32, i32) {
    %c0_i32 = arith.constant 0 : i32
    %c0_i32_0 = arith.constant 0 : i32
    %c0_i32_1 = arith.constant 0 : i32
    return %c0_i32, %c0_i32_0 : i32, i32
  }
  func.func @transform_11(%arg0: i32) -> (i32, i32) {
    %c0_i32 = arith.constant 0 : i32
    %c0_i32_0 = arith.constant 0 : i32
    return %arg0, %c0_i32 : i32, i32
  }
}

</mosaic_0001>

<llo_original>
// kernel: gru_model_forward.1
$region0: #{gru_model_forward.1}
  #allocation0 [shape = 'u32[]', space=smem, size = 0x4, offset = 0x4, fixed_abs, tag = 'smem constant byte address 0x4 - core index']
  #allocation1 [shape = 'u32[144,128]{1,0:T(1,128)}', space=vmem, size = 0x12000, scoped, tag = 'internal scratch']
  #allocation2 [shape = 'bf16[8,8,128]{2,1,0:T(8,128)(2,1)}', space=vmem, size = 0x4000, scoped, tag = 'scratch operand']
  %s0 = inlined_call_operand.vmem [shape: bf16[8,8,128], index: 0, kind: input, shape index: {}]
  %s1 = inlined_call_operand.vmem [shape: bf16[128,384], index: 1, kind: input, shape index: {}]
  %s2 = inlined_call_operand.vmem [shape: bf16[128,384], index: 2, kind: input, shape index: {}]
  %s3 = inlined_call_operand.vmem [shape: f32[1,384], index: 3, kind: input, shape index: {}]
  %s4 = inlined_call_operand.vmem [shape: f32[1,384], index: 4, kind: input, shape index: {}]
  %s5 = inlined_call_operand.vmem [shape: bf16[128,384], index: 5, kind: input, shape index: {}]
  %s6 = inlined_call_operand.vmem [shape: bf16[128,384], index: 6, kind: input, shape index: {}]
  %s7 = inlined_call_operand.vmem [shape: f32[1,384], index: 7, kind: input, shape index: {}]
  %s8 = inlined_call_operand.vmem [shape: f32[1,384], index: 8, kind: input, shape index: {}]
  %s9 = inlined_call_operand.vmem [shape: f32[128,4], index: 9, kind: input, shape index: {}]
  %s10 = inlined_call_operand.vmem [shape: f32[1,4], index: 10, kind: input, shape index: {}]
  %s11 = inlined_call_operand.vmem [shape: f32[8,4], index: 11, kind: output, shape index: {}]
  %s12 = sld [smem:[#allocation0]]
  $region54: #{gru_model_forward.1} parent=0
    _
  %s14 = ssub.s32 1, %s12
  %s15 = scalar_select 0, %s14, %s12
  // Predicated region
  $region2: #{gru_model_forward.1} parent=0 // pred_check
    _
  $region3: #{gru_model_forward.1} parent=0 // pred_check_branch
    %17 = sbr.rel (0) target = $region5
  $region4: #{gru_model_forward.1} parent=0 // pred_region
    _
  $region5: #{gru_model_forward.1} parent=0 // pred_fallthru
    _
  // Predicated region
  $region6: #{gru_model_forward.1} parent=0 // pred_check
    _
  $region7: #{gru_model_forward.1} parent=0 // pred_check_branch
    %19 = sbr.rel (0) target = $region9
  $region8: #{gru_model_forward.1} parent=0 // pred_region
    _
  $region9: #{gru_model_forward.1} parent=0 // pred_fallthru
    _
  // Predicated region
  $region10: #{gru_model_forward.1} parent=0 // pred_check
    _
  $region11: #{gru_model_forward.1} parent=0 // pred_check_branch
    %21 = sbr.rel (0) target = $region13
  $region12: #{gru_model_forward.1} parent=0 // pred_region
    _
  $region13: #{gru_model_forward.1} parent=0 // pred_fallthru
    _
  // Predicated region
  $region14: #{gru_model_forward.1} parent=0 // pred_check
    _
  $region15: #{gru_model_forward.1} parent=0 // pred_check_branch
    %23 = sbr.rel (0) target = $region17
  $region16: #{gru_model_forward.1} parent=0 // pred_region
    _
  $region17: #{gru_model_forward.1} parent=0 // pred_fallthru
    _
  // Predicated region
  $region18: #{gru_model_forward.1} parent=0 // pred_check
    _
  $region19: #{gru_model_forward.1} parent=0 // pred_check_branch
    %25 = sbr.rel (0) target = $region21
  $region20: #{gru_model_forward.1} parent=0 // pred_region
    _
  $region21: #{gru_model_forward.1} parent=0 // pred_fallthru
    _
  // Predicated region
  $region22: #{gru_model_forward.1} parent=0 // pred_check
    _
  $region23: #{gru_model_forward.1} parent=0 // pred_check_branch
    %27 = sbr.rel (0) target = $region25
  $region24: #{gru_model_forward.1} parent=0 // pred_region
    _
  $region25: #{gru_model_forward.1} parent=0 // pred_fallthru
    _
  // Predicated region
  $region26: #{gru_model_forward.1} parent=0 // pred_check
    _
  $region27: #{gru_model_forward.1} parent=0 // pred_check_branch
    %29 = sbr.rel (0) target = $region29
  $region28: #{gru_model_forward.1} parent=0 // pred_region
    _
  $region29: #{gru_model_forward.1} parent=0 // pred_fallthru
    _
  // Predicated region
  $region30: #{gru_model_forward.1} parent=0 // pred_check
    _
  $region31: #{gru_model_forward.1} parent=0 // pred_check_branch
    %31 = sbr.rel (0) target = $region33
  $region32: #{gru_model_forward.1} parent=0 // pred_region
    _
  $region33: #{gru_model_forward.1} parent=0 // pred_fallthru
    _
  // Predicated region
  $region34: #{gru_model_forward.1} parent=0 // pred_check
    _
  $region35: #{gru_model_forward.1} parent=0 // pred_check_branch
    %33 = sbr.rel (0) target = $region37
  $region36: #{gru_model_forward.1} parent=0 // pred_region
    _
  $region37: #{gru_model_forward.1} parent=0 // pred_fallthru
    _
  // Predicated region
  $region38: #{gru_model_forward.1} parent=0 // pred_check
    _
  $region39: #{gru_model_forward.1} parent=0 // pred_check_branch
    %35 = sbr.rel (0) target = $region41
  $region40: #{gru_model_forward.1} parent=0 // pred_region
    _
  $region41: #{gru_model_forward.1} parent=0 // pred_fallthru
    _
  // Predicated region
  $region42: #{gru_model_forward.1} parent=0 // pred_check
    _
  $region43: #{gru_model_forward.1} parent=0 // pred_check_branch
    %37 = sbr.rel (0) target = $region45
  $region44: #{gru_model_forward.1} parent=0 // pred_region
    _
  $region45: #{gru_model_forward.1} parent=0 // pred_fallthru
    _
  %v39 = vld [vmem:[%s0] sm:$0xf]
  %v40 = vld [vmem:[%s1] sm:$0xff]
  %v41 = vld [vmem:[%s1 + $0x8] sm:$0xf]
  %v42 = vld [vmem:[%s1 + $0xc] sm:$0xff]
  %v43 = vld [vmem:[%s1 + $0x14] sm:$0xf]
  %v44 = vld [vmem:[%s1 + $0x18] sm:$0xff]
  %v45 = vld [vmem:[%s1 + $0x20] sm:$0xf]
  %v46 = vld [vmem:[%s1 + $0x24] sm:$0xff]
  %v47 = vld [vmem:[%s1 + $0x2c] sm:$0xf]
  %v48 = vld [vmem:[%s1 + $0x30] sm:$0xff]
  %v49 = vld [vmem:[%s1 + $0x38] sm:$0xf]
  %v50 = vld [vmem:[%s1 + $0x3c] sm:$0xff]
  %v51 = vld [vmem:[%s1 + $0x44] sm:$0xf]
  %v52 = vld [vmem:[%s1 + $0x48] sm:$0xff]
  %v53 = vld [vmem:[%s1 + $0x50] sm:$0xf]
  %v54 = vld [vmem:[%s1 + $0x54] sm:$0xff]
  %v55 = vld [vmem:[%s1 + $0x5c] sm:$0xf]
  %v56 = vld [vmem:[%s1 + $0x60] sm:$0xff]
  %v57 = vld [vmem:[%s1 + $0x68] sm:$0xf]
  %v58 = vld [vmem:[%s1 + $0x6c] sm:$0xff]
  %v59 = vld [vmem:[%s1 + $0x74] sm:$0xf]
  %v60 = vld [vmem:[%s1 + $0x78] sm:$0xff]
  %v61 = vld [vmem:[%s1 + $0x80] sm:$0xf]
  %v62 = vld [vmem:[%s1 + $0x84] sm:$0xff]
  %v63 = vld [vmem:[%s1 + $0x8c] sm:$0xf]
  %v64 = vld [vmem:[%s1 + $0x90] sm:$0xff]
  %v65 = vld [vmem:[%s1 + $0x98] sm:$0xf]
  %v66 = vld [vmem:[%s1 + $0x9c] sm:$0xff]
  %v67 = vld [vmem:[%s1 + $0xa4] sm:$0xf]
  %v68 = vld [vmem:[%s1 + $0xa8] sm:$0xff]
  %v69 = vld [vmem:[%s1 + $0xb0] sm:$0xf]
  %v70 = vld [vmem:[%s1 + $0xb4] sm:$0xff]
  %v71 = vld [vmem:[%s1 + $0xbc] sm:$0xf]
  %v72 = vld [vmem:[%s3] sm:$0x7]
  %v74 = vlaneseq
  %v75 = vshrl.u32 %v74, 7
  %v76 = vsub.s32 0, %v75
  %v77 = vrot.slane %v72, %v76
  %v78 = vlaneseq
  %v79 = vshrl.u32 %v78, 7
  %v80 = vsub.s32 1, %v79
  %v81 = vrot.slane %v72, %v80
  %v82 = vlaneseq
  %v83 = vshrl.u32 %v82, 7
  %v84 = vsub.s32 2, %v83
  %v85 = vrot.slane %v72, %v84
  %v121 = vunpack.c.l.b16 %v40
  %v122 = vunpack.c.h.b16 %v40
  %v123 = vunpack.c.l.b16 %v41
  %v124 = vunpack.c.l.b16 %v42
  %v125 = vunpack.c.h.b16 %v42
  %v126 = vunpack.c.l.b16 %v43
  %v127 = vunpack.c.l.b16 %v44
  %v128 = vunpack.c.h.b16 %v44
  %v129 = vunpack.c.l.b16 %v45
  %v130 = vunpack.c.l.b16 %v46
  %v131 = vunpack.c.h.b16 %v46
  %v132 = vunpack.c.l.b16 %v47
  %v133 = vunpack.c.l.b16 %v48
  %v134 = vunpack.c.h.b16 %v48
  %v135 = vunpack.c.l.b16 %v49
  %v136 = vunpack.c.l.b16 %v50
  %v137 = vunpack.c.h.b16 %v50
  %v138 = vunpack.c.l.b16 %v51
  %v139 = vunpack.c.l.b16 %v52
  %v140 = vunpack.c.h.b16 %v52
  %v141 = vunpack.c.l.b16 %v53
  %v142 = vunpack.c.l.b16 %v54
  %v143 = vunpack.c.h.b16 %v54
  %v144 = vunpack.c.l.b16 %v55
  %v145 = vunpack.c.l.b16 %v56
  %v146 = vunpack.c.h.b16 %v56
  %v147 = vunpack.c.l.b16 %v57
  %v148 = vunpack.c.l.b16 %v58
  %v149 = vunpack.c.h.b16 %v58
  %v150 = vunpack.c.l.b16 %v59
  %v151 = vunpack.c.l.b16 %v60
  %v152 = vunpack.c.h.b16 %v60
  %v153 = vunpack.c.l.b16 %v61
  %v154 = vunpack.c.l.b16 %v62
  %v155 = vunpack.c.h.b16 %v62
  %v156 = vunpack.c.l.b16 %v63
  %v157 = vunpack.c.l.b16 %v64
  %v158 = vunpack.c.h.b16 %v64
  %v159 = vunpack.c.l.b16 %v65
  %v160 = vunpack.c.l.b16 %v66
  %v161 = vunpack.c.h.b16 %v66
  %v162 = vunpack.c.l.b16 %v67
  %v163 = vunpack.c.l.b16 %v68
  %v164 = vunpack.c.h.b16 %v68
  %v165 = vunpack.c.l.b16 %v69
  %v166 = vunpack.c.l.b16 %v70
  %v167 = vunpack.c.h.b16 %v70
  %v168 = vunpack.c.l.b16 %v71
  %v169 = vpack.c.b16 %v124, %v121
  %v170 = vpack.c.b16 %v125, %v122
  %v171 = vpack.c.b16 %v126, %v123
  %v172 = vpack.c.b16 %v130, %v127
  %v173 = vpack.c.b16 %v131, %v128
  %v174 = vpack.c.b16 %v132, %v129
  %v175 = vpack.c.b16 %v136, %v133
  %v176 = vpack.c.b16 %v137, %v134
  %v177 = vpack.c.b16 %v138, %v135
  %v178 = vpack.c.b16 %v142, %v139
  %v179 = vpack.c.b16 %v143, %v140
  %v180 = vpack.c.b16 %v144, %v141
  %v181 = vpack.c.b16 %v148, %v145
  %v182 = vpack.c.b16 %v149, %v146
  %v183 = vpack.c.b16 %v150, %v147
  %v184 = vpack.c.b16 %v154, %v151
  %v185 = vpack.c.b16 %v155, %v152
  %v186 = vpack.c.b16 %v156, %v153
  %v187 = vpack.c.b16 %v160, %v157
  %v188 = vpack.c.b16 %v161, %v158
  %v189 = vpack.c.b16 %v162, %v159
  %v190 = vpack.c.b16 %v166, %v163
  %v191 = vpack.c.b16 %v167, %v164
  %v192 = vpack.c.b16 %v168, %v165
  %217 = vmatprep.subr.bf16.mxu0 %v191
  %218 = vmatpush1.bf16.msra.mxu0 %v190
  %219 = vmatprep.subr.bf16.mxu0 %v188
  %220 = vmatpush1.bf16.msra.mxu0 %v187
  %221 = vmatprep.subr.bf16.mxu0 %v185
  %222 = vmatpush1.bf16.msra.mxu0 %v184
  %223 = vmatprep.subr.bf16.mxu0 %v182
  %224 = vmatpush1.bf16.msra.mxu0 %v181
  %225 = vmatprep.subr.bf16.mxu0 %v179
  %226 = vmatpush1.bf16.msra.mxu0 %v178
  %227 = vmatprep.subr.bf16.mxu0 %v176
  %228 = vmatpush1.bf16.msra.mxu0 %v175
  %229 = vmatprep.subr.bf16.mxu0 %v173
  %230 = vmatpush1.bf16.msra.mxu0 %v172
  %231 = vmatprep.subr.bf16.mxu0 %v170
  %232 = vmatpush1.bf16.msra.mxu0 %v169
  %233 = vmatprep.subr.bf16.mxu0 0
  %234 = vmatpush2.bf16.msra.mxu0 0
  %235 = vmatprep.subr.bf16.mxu0 0
  %236 = vmatpush2.bf16.msra.mxu0 0
  %237 = vmatprep.subr.bf16.mxu0 0
  %238 = vmatpush2.bf16.msra.mxu0 0
  %239 = vmatprep.subr.bf16.mxu0 0
  %240 = vmatpush2.bf16.msra.mxu0 0
  %241 = vmatprep.subr.bf16.mxu0 0
  %242 = vmatpush2.bf16.msra.mxu0 0
  %243 = vmatprep.subr.bf16.mxu0 0
  %244 = vmatpush2.bf16.msra.mxu0 0
  %245 = vmatprep.subr.bf16.mxu0 0
  %246 = vmatpush2.bf16.msra.mxu0 0
  %247 = vmatprep.subr.bf16.mxu0 0
  %248 = vmatpush2.bf16.msra.mxu0 0
  %249 = vmatprep.mubr.bf16.mxu0 0
  %250 = vmatmul.mubr.bf16.gmra.mxu0 %v39
  %v251 = vpop.f32.mrf.mxu0
  %v252 = vadd.f32 %v77, %v251
  %v253 = vpop.f32.mrf.mxu0
  %v254 = vadd.f32 %v81, %v253
  %v255 = vpop.f32.mrf.mxu0
  %v256 = vpop.f32.mrf.mxu0
  %257 = vdwg.mxu0
  %258 = vmatprep.subr.bf16.mxu0 0
  %259 = vmatpush1.bf16.msra.mxu0 %v192
  %260 = vmatprep.subr.bf16.mxu0 0
  %261 = vmatpush1.bf16.msra.mxu0 %v189
  %262 = vmatprep.subr.bf16.mxu0 0
  %263 = vmatpush1.bf16.msra.mxu0 %v186
  %264 = vmatprep.subr.bf16.mxu0 0
  %265 = vmatpush1.bf16.msra.mxu0 %v183
  %266 = vmatprep.subr.bf16.mxu0 0
  %267 = vmatpush1.bf16.msra.mxu0 %v180
  %268 = vmatprep.subr.bf16.mxu0 0
  %269 = vmatpush1.bf16.msra.mxu0 %v177
  %270 = vmatprep.subr.bf16.mxu0 0
  %271 = vmatpush1.bf16.msra.mxu0 %v174
  %272 = vmatprep.subr.bf16.mxu0 0
  %273 = vmatpush1.bf16.msra.mxu0 %v171
  %274 = vmatprep.subr.bf16.mxu0 0
  %275 = vmatpush2.bf16.msra.mxu0 0
  %276 = vmatprep.subr.bf16.mxu0 0
  %277 = vmatpush2.bf16.msra.mxu0 0
  %278 = vmatprep.subr.bf16.mxu0 0
  %279 = vmatpush2.bf16.msra.mxu0 0
  %280 = vmatprep.subr.bf16.mxu0 0
  %281 = vmatpush2.bf16.msra.mxu0 0
  %282 = vmatprep.subr.bf16.mxu0 0
  %283 = vmatpush2.bf16.msra.mxu0 0
  %284 = vmatprep.subr.bf16.mxu0 0
  %285 = vmatpush2.bf16.msra.mxu0 0
  %286 = vmatprep.subr.bf16.mxu0 0
  %287 = vmatpush2.bf16.msra.mxu0 0
  %288 = vmatprep.subr.bf16.mxu0 0
  %289 = vmatpush2.bf16.msra.mxu0 0
  %290 = vmatprep.mubr.bf16.mxu0 0
  %291 = vmatmul.mubr.bf16.gmra.mxu0 %v39
  %v292 = vpop.f32.mrf.mxu0
  %v293 = vadd.f32 %v85, %v292
  %v294 = vpop.f32.mrf.mxu0
  %v295 = vpop.f32.mrf.mxu0
  %v296 = vpop.f32.mrf.mxu0
  %297 = vdwg.mxu0
  %v298 = vld [vmem:[%s2] sm:$0xff]
  %v299 = vld [vmem:[%s2 + $0x8] sm:$0xf]
  %v300 = vld [vmem:[%s2 + $0xc] sm:$0xff]
  %v301 = vld [vmem:[%s2 + $0x14] sm:$0xf]
  %v302 = vld [vmem:[%s2 + $0x18] sm:$0xff]
  %v303 = vld [vmem:[%s2 + $0x20] sm:$0xf]
  %v304 = vld [vmem:[%s2 + $0x24] sm:$0xff]
  %v305 = vld [vmem:[%s2 + $0x2c] sm:$0xf]
  %v306 = vld [vmem:[%s2 + $0x30] sm:$0xff]
  %v307 = vld [vmem:[%s2 + $0x38] sm:$0xf]
  %v308 = vld [vmem:[%s2 + $0x3c] sm:$0xff]
  %v309 = vld [vmem:[%s2 + $0x44] sm:$0xf]
  %v310 = vld [vmem:[%s2 + $0x48] sm:$0xff]
  %v311 = vld [vmem:[%s2 + $0x50] sm:$0xf]
  %v312 = vld [vmem:[%s2 + $0x54] sm:$0xff]
  %v313 = vld [vmem:[%s2 + $0x5c] sm:$0xf]
  %v314 = vld [vmem:[%s2 + $0x60] sm:$0xff]
  %v315 = vld [vmem:[%s2 + $0x68] sm:$0xf]
  %v316 = vld [vmem:[%s2 + $0x6c] sm:$0xff]
  %v317 = vld [vmem:[%s2 + $0x74] sm:$0xf]
  %v318 = vld [vmem:[%s2 + $0x78] sm:$0xff]
  %v319 = vld [vmem:[%s2 + $0x80] sm:$0xf]
  %v320 = vld [vmem:[%s2 + $0x84] sm:$0xff]
  %v321 = vld [vmem:[%s2 + $0x8c] sm:$0xf]
  %v322 = vld [vmem:[%s2 + $0x90] sm:$0xff]
  %v323 = vld [vmem:[%s2 + $0x98] sm:$0xf]
  %v324 = vld [vmem:[%s2 + $0x9c] sm:$0xff]
  %v325 = vld [vmem:[%s2 + $0xa4] sm:$0xf]
  %v326 = vld [vmem:[%s2 + $0xa8] sm:$0xff]
  %v327 = vld [vmem:[%s2 + $0xb0] sm:$0xf]
  %v328 = vld [vmem:[%s2 + $0xb4] sm:$0xff]
  %v329 = vld [vmem:[%s2 + $0xbc] sm:$0xf]
  %v330 = vld [vmem:[%s4] sm:$0x7]
  %v332 = vlaneseq
  %v333 = vshrl.u32 %v332, 7
  %v334 = vsub.s32 0, %v333
  %v335 = vrot.slane %v330, %v334
  %v336 = vlaneseq
  %v337 = vshrl.u32 %v336, 7
  %v338 = vsub.s32 1, %v337
  %v339 = vrot.slane %v330, %v338
  %v340 = vlaneseq
  %v341 = vshrl.u32 %v340, 7
  %v342 = vsub.s32 2, %v341
  %v343 = vrot.slane %v330, %v342
  %v379 = vunpack.c.l.b16 %v298
  %v380 = vunpack.c.h.b16 %v298
  %v381 = vunpack.c.l.b16 %v299
  %v382 = vunpack.c.l.b16 %v300
  %v383 = vunpack.c.h.b16 %v300
  %v384 = vunpack.c.l.b16 %v301
  %v385 = vunpack.c.l.b16 %v302
  %v386 = vunpack.c.h.b16 %v302
  %v387 = vunpack.c.l.b16 %v303
  %v388 = vunpack.c.l.b16 %v304
  %v389 = vunpack.c.h.b16 %v304
  %v390 = vunpack.c.l.b16 %v305
  %v391 = vunpack.c.l.b16 %v306
  %v392 = vunpack.c.h.b16 %v306
  %v393 = vunpack.c.l.b16 %v307
  %v394 = vunpack.c.l.b16 %v308
  %v395 = vunpack.c.h.b16 %v308
  %v396 = vunpack.c.l.b16 %v309
  %v397 = vunpack.c.l.b16 %v310
  %v398 = vunpack.c.h.b16 %v310
  %v399 = vunpack.c.l.b16 %v311
  %v400 = vunpack.c.l.b16 %v312
  %v401 = vunpack.c.h.b16 %v312
  %v402 = vunpack.c.l.b16 %v313
  %v403 = vunpack.c.l.b16 %v314
  %v404 = vunpack.c.h.b16 %v314
  %v405 = vunpack.c.l.b16 %v315
  %v406 = vunpack.c.l.b16 %v316
  %v407 = vunpack.c.h.b16 %v316
  %v408 = vunpack.c.l.b16 %v317
  %v409 = vunpack.c.l.b16 %v318
  %v410 = vunpack.c.h.b16 %v318
  %v411 = vunpack.c.l.b16 %v319
  %v412 = vunpack.c.l.b16 %v320
  %v413 = vunpack.c.h.b16 %v320
  %v414 = vunpack.c.l.b16 %v321
  %v415 = vunpack.c.l.b16 %v322
  %v416 = vunpack.c.h.b16 %v322
  %v417 = vunpack.c.l.b16 %v323
  %v418 = vunpack.c.l.b16 %v324
  %v419 = vunpack.c.h.b16 %v324
  %v420 = vunpack.c.l.b16 %v325
  %v421 = vunpack.c.l.b16 %v326
  %v422 = vunpack.c.h.b16 %v326
  %v423 = vunpack.c.l.b16 %v327
  %v424 = vunpack.c.l.b16 %v328
  %v425 = vunpack.c.h.b16 %v328
  %v426 = vunpack.c.l.b16 %v329
  %v427 = vpack.c.b16 %v382, %v379
  %v428 = vpack.c.b16 %v383, %v380
  %v429 = vpack.c.b16 %v384, %v381
  %v430 = vpack.c.b16 %v388, %v385
  %v431 = vpack.c.b16 %v389, %v386
  %v432 = vpack.c.b16 %v390, %v387
  %v433 = vpack.c.b16 %v394, %v391
  %v434 = vpack.c.b16 %v395, %v392
  %v435 = vpack.c.b16 %v396, %v393
  %v436 = vpack.c.b16 %v400, %v397
  %v437 = vpack.c.b16 %v401, %v398
  %v438 = vpack.c.b16 %v402, %v399
  %v439 = vpack.c.b16 %v406, %v403
  %v440 = vpack.c.b16 %v407, %v404
  %v441 = vpack.c.b16 %v408, %v405
  %v442 = vpack.c.b16 %v412, %v409
  %v443 = vpack.c.b16 %v413, %v410
  %v444 = vpack.c.b16 %v414, %v411
  %v445 = vpack.c.b16 %v418, %v415
  %v446 = vpack.c.b16 %v419, %v416
  %v447 = vpack.c.b16 %v420, %v417
  %v448 = vpack.c.b16 %v424, %v421
  %v449 = vpack.c.b16 %v425, %v422
  %v450 = vpack.c.b16 %v426, %v423
  %475 = vmatprep.subr.bf16.mxu0 %v449
  %476 = vmatpush1.bf16.msra.mxu0 %v448
  %477 = vmatprep.subr.bf16.mxu0 %v446
  %478 = vmatpush1.bf16.msra.mxu0 %v445
  %479 = vmatprep.subr.bf16.mxu0 %v443
  %480 = vmatpush1.bf16.msra.mxu0 %v442
  %481 = vmatprep.subr.bf16.mxu0 %v440
  %482 = vmatpush1.bf16.msra.mxu0 %v439
  %483 = vmatprep.subr.bf16.mxu0 %v437
  %484 = vmatpush1.bf16.msra.mxu0 %v436
  %485 = vmatprep.subr.bf16.mxu0 %v434
  %486 = vmatpush1.bf16.msra.mxu0 %v433
  %487 = vmatprep.subr.bf16.mxu0 %v431
  %488 = vmatpush1.bf16.msra.mxu0 %v430
  %489 = vmatprep.subr.bf16.mxu0 %v428
  %490 = vmatpush1.bf16.msra.mxu0 %v427
  %491 = vmatprep.subr.bf16.mxu0 0
  %492 = vmatpush2.bf16.msra.mxu0 0
  %493 = vmatprep.subr.bf16.mxu0 0
  %494 = vmatpush2.bf16.msra.mxu0 0
  %495 = vmatprep.subr.bf16.mxu0 0
  %496 = vmatpush2.bf16.msra.mxu0 0
  %497 = vmatprep.subr.bf16.mxu0 0
  %498 = vmatpush2.bf16.msra.mxu0 0
  %499 = vmatprep.subr.bf16.mxu0 0
  %500 = vmatpush2.bf16.msra.mxu0 0
  %501 = vmatprep.subr.bf16.mxu0 0
  %502 = vmatpush2.bf16.msra.mxu0 0
  %503 = vmatprep.subr.bf16.mxu0 0
  %504 = vmatpush2.bf16.msra.mxu0 0
  %505 = vmatprep.subr.bf16.mxu0 0
  %506 = vmatpush2.bf16.msra.mxu0 0
  %507 = vmatprep.mubr.bf16.mxu0 0
  %508 = vmatmul.mubr.bf16.gmra.mxu0 0
  %v509 = vpop.f32.mrf.mxu0
  %v510 = vadd.f32 %v335, %v509
  %v511 = vpop.f32.mrf.mxu0
  %v512 = vadd.f32 %v339, %v511
  %v513 = vpop.f32.mrf.mxu0
  %v514 = vpop.f32.mrf.mxu0
  %515 = vdwg.mxu0
  %516 = vmatprep.subr.bf16.mxu0 0
  %517 = vmatpush1.bf16.msra.mxu0 %v450
  %518 = vmatprep.subr.bf16.mxu0 0
  %519 = vmatpush1.bf16.msra.mxu0 %v447
  %520 = vmatprep.subr.bf16.mxu0 0
  %521 = vmatpush1.bf16.msra.mxu0 %v444
  %522 = vmatprep.subr.bf16.mxu0 0
  %523 = vmatpush1.bf16.msra.mxu0 %v441
  %524 = vmatprep.subr.bf16.mxu0 0
  %525 = vmatpush1.bf16.msra.mxu0 %v438
  %526 = vmatprep.subr.bf16.mxu0 0
  %527 = vmatpush1.bf16.msra.mxu0 %v435
  %528 = vmatprep.subr.bf16.mxu0 0
  %529 = vmatpush1.bf16.msra.mxu0 %v432
  %530 = vmatprep.subr.bf16.mxu0 0
  %531 = vmatpush1.bf16.msra.mxu0 %v429
  %532 = vmatprep.subr.bf16.mxu0 0
  %533 = vmatpush2.bf16.msra.mxu0 0
  %534 = vmatprep.subr.bf16.mxu0 0
  %535 = vmatpush2.bf16.msra.mxu0 0
  %536 = vmatprep.subr.bf16.mxu0 0
  %537 = vmatpush2.bf16.msra.mxu0 0
  %538 = vmatprep.subr.bf16.mxu0 0
  %539 = vmatpush2.bf16.msra.mxu0 0
  %540 = vmatprep.subr.bf16.mxu0 0
  %541 = vmatpush2.bf16.msra.mxu0 0
  %542 = vmatprep.subr.bf16.mxu0 0
  %543 = vmatpush2.bf16.msra.mxu0 0
  %544 = vmatprep.subr.bf16.mxu0 0
  %545 = vmatpush2.bf16.msra.mxu0 0
  %546 = vmatprep.subr.bf16.mxu0 0
  %547 = vmatpush2.bf16.msra.mxu0 0
  %548 = vmatprep.mubr.bf16.mxu0 0
  %549 = vmatmul.mubr.bf16.gmra.mxu0 0
  %v550 = vpop.f32.mrf.mxu0
  %v551 = vadd.f32 %v343, %v550
  %v552 = vpop.f32.mrf.mxu0
  %v553 = vpop.f32.mrf.mxu0
  %v554 = vpop.f32.mrf.mxu0
  %555 = vdwg.mxu0
  %v556 = vadd.f32 %v252, %v510
  %v557 = vxor.u32 %v556, 2147483648
  %v558 = vmul.f32 %v557, 1.442695
  %v559 = vpow.pop %v558
  %v560 = vadd.f32 %v559, 1.0
  %v561 = vrcp.pop %v560
  %v562 = vmul.f32 1.0, %v561
  %v563 = vadd.f32 %v254, %v512
  %v564 = vxor.u32 %v563, 2147483648
  %v565 = vmul.f32 %v564, 1.442695
  %v566 = vpow.pop %v565
  %v567 = vadd.f32 %v566, 1.0
  %v568 = vrcp.pop %v567
  %v569 = vmul.f32 1.0, %v568
  %v570 = vmul.f32 %v562, %v551
  %v571 = vadd.f32 %v293, %v570
  %v572 = vtanh.pop %v571
  %v573 = vsub.f32 1.0, %v569
  %v574 = vmul.f32 %v573, %v572
  %v575 = vmul.f32 %v569, 0.0
  %v576 = vadd.f32 %v574, %v575
  %v577 = vpack.c.bf16 %v576, %v576
  %578 = vst [vmem:[#allocation2] sm:$0xf] %v577
  %s579 = scalar_lea.vmem %s0, 4
  %v580 = vld [vmem:[%s579] sm:$0xf]
  %v581 = vld [vmem:[%s1] sm:$0xff]
  %v582 = vld [vmem:[%s1 + $0x8] sm:$0xf]
  %v583 = vld [vmem:[%s1 + $0xc] sm:$0xff]
  %v584 = vld [vmem:[%s1 + $0x14] sm:$0xf]
  %v585 = vld [vmem:[%s1 + $0x18] sm:$0xff]
  %v586 = vld [vmem:[%s1 + $0x20] sm:$0xf]
  %v587 = vld [vmem:[%s1 + $0x24] sm:$0xff]
  %v588 = vld [vmem:[%s1 + $0x2c] sm:$0xf]
  %v589 = vld [vmem:[%s1 + $0x30] sm:$0xff]
  %v590 = vld [vmem:[%s1 + $0x38] sm:$0xf]
  %v591 = vld [vmem:[%s1 + $0x3c] sm:$0xff]
  %v592 = vld [vmem:[%s1 + $0x44] sm:$0xf]
  %v593 = vld [vmem:[%s1 + $0x48] sm:$0xff]
  %v594 = vld [vmem:[%s1 + $0x50] sm:$0xf]
  %v595 = vld [vmem:[%s1 + $0x54] sm:$0xff]
  %v596 = vld [vmem:[%s1 + $0x5c] sm:$0xf]
  %v597 = vld [vmem:[%s1 + $0x60] sm:$0xff]
  %v598 = vld [vmem:[%s1 + $0x68] sm:$0xf]
  %v599 = vld [vmem:[%s1 + $0x6c] sm:$0xff]
  %v600 = vld [vmem:[%s1 + $0x74] sm:$0xf]
  %v601 = vld [vmem:[%s1 + $0x78] sm:$0xff]
  %v602 = vld [vmem:[%s1 + $0x80] sm:$0xf]
  %v603 = vld [vmem:[%s1 + $0x84] sm:$0xff]
  %v604 = vld [vmem:[%s1 + $0x8c] sm:$0xf]
  %v605 = vld [vmem:[%s1 + $0x90] sm:$0xff]
  %v606 = vld [vmem:[%s1 + $0x98] sm:$0xf]
  %v607 = vld [vmem:[%s1 + $0x9c] sm:$0xff]
  %v608 = vld [vmem:[%s1 + $0xa4] sm:$0xf]
  %v609 = vld [vmem:[%s1 + $0xa8] sm:$0xff]
  %v610 = vld [vmem:[%s1 + $0xb0] sm:$0xf]
  %v611 = vld [vmem:[%s1 + $0xb4] sm:$0xff]
  %v612 = vld [vmem:[%s1 + $0xbc] sm:$0xf]
  %v613 = vld [vmem:[%s3] sm:$0x7]
  %v615 = vlaneseq
  %v616 = vshrl.u32 %v615, 7
  %v617 = vsub.s32 0, %v616
  %v618 = vrot.slane %v613, %v617
  %v619 = vlaneseq
  %v620 = vshrl.u32 %v619, 7
  %v621 = vsub.s32 1, %v620
  %v622 = vrot.slane %v613, %v621
  %v623 = vlaneseq
  %v624 = vshrl.u32 %v623, 7
  %v625 = vsub.s32 2, %v624
  %v626 = vrot.slane %v613, %v625
  %v662 = vunpack.c.l.b16 %v581
  %v663 = vunpack.c.h.b16 %v581
  %v664 = vunpack.c.l.b16 %v582
  %v665 = vunpack.c.l.b16 %v583
  %v666 = vunpack.c.h.b16 %v583
  %v667 = vunpack.c.l.b16 %v584
  %v668 = vunpack.c.l.b16 %v585
  %v669 = vunpack.c.h.b16 %v585
  %v670 = vunpack.c.l.b16 %v586
  %v671 = vunpack.c.l.b16 %v587
  %v672 = vunpack.c.h.b16 %v587
  %v673 = vunpack.c.l.b16 %v588
  %v674 = vunpack.c.l.b16 %v589
  %v675 = vunpack.c.h.b16 %v589
  %v676 = vunpack.c.l.b16 %v590
  %v677 = vunpack.c.l.b16 %v591
  %v678 = vunpack.c.h.b16 %v591
  %v679 = vunpack.c.l.b16 %v592
  %v680 = vunpack.c.l.b16 %v593
  %v681 = vunpack.c.h.b16 %v593
  %v682 = vunpack.c.l.b16 %v594
  %v683 = vunpack.c.l.b16 %v595
  %v684 = vunpack.c.h.b16 %v595
  %v685 = vunpack.c.l.b16 %v596
  %v686 = vunpack.c.l.b16 %v597
  %v687 = vunpack.c.h.b16 %v597
  %v688 = vunpack.c.l.b16 %v598
  %v689 = vunpack.c.l.b16 %v599
  %v690 = vunpack.c.h.b16 %v599
  %v691 = vunpack.c.l.b16 %v600
  %v692 = vunpack.c.l.b16 %v601
  %v693 = vunpack.c.h.b16 %v601
  %v694 = vunpack.c.l.b16 %v602
  %v695 = vunpack.c.l.b16 %v603
  %v696 = vunpack.c.h.b16 %v603
  %v697 = vunpack.c.l.b16 %v604
  %v698 = vunpack.c.l.b16 %v605
  %v699 = vunpack.c.h.b16 %v605
  %v700 = vunpack.c.l.b16 %v606
  %v701 = vunpack.c.l.b16 %v607
  %v702 = vunpack.c.h.b16 %v607
  %v703 = vunpack.c.l.b16 %v608
  %v704 = vunpack.c.l.b16 %v609
  %v705 = vunpack.c.h.b16 %v609
  %v706 = vunpack.c.l.b16 %v610
  %v707 = vunpack.c.l.b16 %v611
  %v708 = vunpack.c.h.b16 %v611
  %v709 = vunpack.c.l.b16 %v612
  %v710 = vpack.c.b16 %v665, %v662
  %v711 = vpack.c.b16 %v666, %v663
  %v712 = vpack.c.b16 %v667, %v664
  %v713 = vpack.c.b16 %v671, %v668
  %v714 = vpack.c.b16 %v672, %v669
  %v715 = vpack.c.b16 %v673, %v670
  %v716 = vpack.c.b16 %v677, %v674
  %v717 = vpack.c.b16 %v678, %v675
  %v718 = vpack.c.b16 %v679, %v676
  %v719 = vpack.c.b16 %v683, %v680
  %v720 = vpack.c.b16 %v684, %v681
  %v721 = vpack.c.b16 %v685, %v682
  %v722 = vpack.c.b16 %v689, %v686
  %v723 = vpack.c.b16 %v690, %v687
  %v724 = vpack.c.b16 %v691, %v688
  %v725 = vpack.c.b16 %v695, %v692
  %v726 = vpack.c.b16 %v696, %v693
  %v727 = vpack.c.b16 %v697, %v694
  %v728 = vpack.c.b16 %v701, %v698
  %v729 = vpack.c.b16 %v702, %v699
  %v730 = vpack.c.b16 %v703, %v700
  %v731 = vpack.c.b16 %v707, %v704
  %v732 = vpack.c.b16 %v708, %v705
  %v733 = vpack.c.b16 %v709, %v706
  %758 = vmatprep.subr.bf16.mxu0 %v732
  %759 = vmatpush1.bf16.msra.mxu0 %v731
  %760 = vmatprep.subr.bf16.mxu0 %v729
  %761 = vmatpush1.bf16.msra.mxu0 %v728
  %762 = vmatprep.subr.bf16.mxu0 %v726
  %763 = vmatpush1.bf16.msra.mxu0 %v725
  %764 = vmatprep.subr.bf16.mxu0 %v723
  %765 = vmatpush1.bf16.msra.mxu0 %v722
  %766 = vmatprep.subr.bf16.mxu0 %v720
  %767 = vmatpush1.bf16.msra.mxu0 %v719
  %768 = vmatprep.subr.bf16.mxu0 %v717
  %769 = vmatpush1.bf16.msra.mxu0 %v716
  %770 = vmatprep.subr.bf16.mxu0 %v714
  %771 = vmatpush1.bf16.msra.mxu0 %v713
  %772 = vmatprep.subr.bf16.mxu0 %v711
  %773 = vmatpush1.bf16.msra.mxu0 %v710
  %774 = vmatprep.subr.bf16.mxu0 0
  %775 = vmatpush2.bf16.msra.mxu0 0
  %776 = vmatprep.subr.bf16.mxu0 0
  %777 = vmatpush2.bf16.msra.mxu0 0
  %778 = vmatprep.subr.bf16.mxu0 0
  %779 = vmatpush2.bf16.msra.mxu0 0
  %780 = vmatprep.subr.bf16.mxu0 0
  %781 = vmatpush2.bf16.msra.mxu0 0
  %782 = vmatprep.subr.bf16.mxu0 0
  %783 = vmatpush2.bf16.msra.mxu0 0
  %784 = vmatprep.subr.bf16.mxu0 0
  %785 = vmatpush2.bf16.msra.mxu0 0
  %786 = vmatprep.subr.bf16.mxu0 0
  %787 = vmatpush2.bf16.msra.mxu0 0
  %788 = vmatprep.subr.bf16.mxu0 0
  %789 = vmatpush2.bf16.msra.mxu0 0
  %790 = vmatprep.mubr.bf16.mxu0 0
  %791 = vmatmul.mubr.bf16.gmra.mxu0 %v580
  %v792 = vpop.f32.mrf.mxu0
  %v793 = vadd.f32 %v618, %v792
  %v794 = vpop.f32.mrf.mxu0
  %v795 = vadd.f32 %v622, %v794
  %v796 = vpop.f32.mrf.mxu0
  %v797 = vpop.f32.mrf.mxu0
  %798 = vdwg.mxu0
  %799 = vmatprep.subr.bf16.mxu0 0
  %800 = vmatpush1.bf16.msra.mxu0 %v733
  %801 = vmatprep.subr.bf16.mxu0 0
  %802 = vmatpush1.bf16.msra.mxu0 %v730
  %803 = vmatprep.subr.bf16.mxu0 0
  %804 = vmatpush1.bf16.msra.mxu0 %v727
  %805 = vmatprep.subr.bf16.mxu0 0
  %806 = vmatpush1.bf16.msra.mxu0 %v724
  %807 = vmatprep.subr.bf16.mxu0 0
  %808 = vmatpush1.bf16.msra.mxu0 %v721
  %809 = vmatprep.subr.bf16.mxu0 0
  %810 = vmatpush1.bf16.msra.mxu0 %v718
  %811 = vmatprep.subr.bf16.mxu0 0
  %812 = vmatpush1.bf16.msra.mxu0 %v715
  %813 = vmatprep.subr.bf16.mxu0 0
  %814 = vmatpush1.bf16.msra.mxu0 %v712
  %815 = vmatprep.subr.bf16.mxu0 0
  %816 = vmatpush2.bf16.msra.mxu0 0
  %817 = vmatprep.subr.bf16.mxu0 0
  %818 = vmatpush2.bf16.msra.mxu0 0
  %819 = vmatprep.subr.bf16.mxu0 0
  %820 = vmatpush2.bf16.msra.mxu0 0
  %821 = vmatprep.subr.bf16.mxu0 0
  %822 = vmatpush2.bf16.msra.mxu0 0
  %823 = vmatprep.subr.bf16.mxu0 0
  %824 = vmatpush2.bf16.msra.mxu0 0
  %825 = vmatprep.subr.bf16.mxu0 0
  %826 = vmatpush2.bf16.msra.mxu0 0
  %827 = vmatprep.subr.bf16.mxu0 0
  %828 = vmatpush2.bf16.msra.mxu0 0
  %829 = vmatprep.subr.bf16.mxu0 0
  %830 = vmatpush2.bf16.msra.mxu0 0
  %831 = vmatprep.mubr.bf16.mxu0 0
  %832 = vmatmul.mubr.bf16.gmra.mxu0 %v580
  %v833 = vpop.f32.mrf.mxu0
  %v834 = vadd.f32 %v626, %v833
  %v835 = vpop.f32.mrf.mxu0
  %v836 = vpop.f32.mrf.mxu0
  %v837 = vpop.f32.mrf.mxu0
  %838 = vdwg.mxu0
  %v839 = vld [vmem:[%s2] sm:$0xff]
  %v840 = vld [vmem:[%s2 + $0x8] sm:$0xf]
  %v841 = vld [vmem:[%s2 + $0xc] sm:$0xff]
  %v842 = vld [vmem:[%s2 + $0x14] sm:$0xf]
  %v843 = vld [vmem:[%s2 + $0x18] sm:$0xff]
  %v844 = vld [vmem:[%s2 + $0x20] sm:$0xf]
  %v845 = vld [vmem:[%s2 + $0x24] sm:$0xff]
  %v846 = vld [vmem:[%s2 + $0x2c] sm:$0xf]
  %v847 = vld [vmem:[%s2 + $0x30] sm:$0xff]
  %v848 = vld [vmem:[%s2 + $0x38] sm:$0xf]
  %v849 = vld [vmem:[%s2 + $0x3c] sm:$0xff]
  %v850 = vld [vmem:[%s2 + $0x44] sm:$0xf]
  %v851 = vld [vmem:[%s2 + $0x48] sm:$0xff]
  %v852 = vld [vmem:[%s2 + $0x50] sm:$0xf]
  %v853 = vld [vmem:[%s2 + $0x54] sm:$0xff]
  %v854 = vld [vmem:[%s2 + $0x5c] sm:$0xf]
  %v855 = vld [vmem:[%s2 + $0x60] sm:$0xff]
  %v856 = vld [vmem:[%s2 + $0x68] sm:$0xf]
  %v857 = vld [vmem:[%s2 + $0x6c] sm:$0xff]
  %v858 = vld [vmem:[%s2 + $0x74] sm:$0xf]
  %v859 = vld [vmem:[%s2 + $0x78] sm:$0xff]
  %v860 = vld [vmem:[%s2 + $0x80] sm:$0xf]
  %v861 = vld [vmem:[%s2 + $0x84] sm:$0xff]
  %v862 = vld [vmem:[%s2 + $0x8c] sm:$0xf]
  %v863 = vld [vmem:[%s2 + $0x90] sm:$0xff]
  %v864 = vld [vmem:[%s2 + $0x98] sm:$0xf]
  %v865 = vld [vmem:[%s2 + $0x9c] sm:$0xff]
  %v866 = vld [vmem:[%s2 + $0xa4] sm:$0xf]
  %v867 = vld [vmem:[%s2 + $0xa8] sm:$0xff]
  %v868 = vld [vmem:[%s2 + $0xb0] sm:$0xf]
  %v869 = vld [vmem:[%s2 + $0xb4] sm:$0xff]
  %v870 = vld [vmem:[%s2 + $0xbc] sm:$0xf]
  %v871 = vld [vmem:[%s4] sm:$0x7]
  %v873 = vlaneseq
  %v874 = vshrl.u32 %v873, 7
  %v875 = vsub.s32 0, %v874
  %v876 = vrot.slane %v871, %v875
  %v877 = vlaneseq
  %v878 = vshrl.u32 %v877, 7
  %v879 = vsub.s32 1, %v878
  %v880 = vrot.slane %v871, %v879
  %v881 = vlaneseq
  %v882 = vshrl.u32 %v881, 7
  %v883 = vsub.s32 2, %v882
  %v884 = vrot.slane %v871, %v883
  %v920 = vunpack.c.l.b16 %v839
  %v921 = vunpack.c.h.b16 %v839
  %v922 = vunpack.c.l.b16 %v840
  %v923 = vunpack.c.l.b16 %v841
  %v924 = vunpack.c.h.b16 %v841
  %v925 = vunpack.c.l.b16 %v842
  %v926 = vunpack.c.l.b16 %v843
  %v927 = vunpack.c.h.b16 %v843
  %v928 = vunpack.c.l.b16 %v844
  %v929 = vunpack.c.l.b16 %v845
  %v930 = vunpack.c.h.b16 %v845
  %v931 = vunpack.c.l.b16 %v846
  %v932 = vunpack.c.l.b16 %v847
  %v933 = vunpack.c.h.b16 %v847
  %v934 = vunpack.c.l.b16 %v848
  %v935 = vunpack.c.l.b16 %v849
  %v936 = vunpack.c.h.b16 %v849
  %v937 = vunpack.c.l.b16 %v850
  %v938 = vunpack.c.l.b16 %v851
  %v939 = vunpack.c.h.b16 %v851
  %v940 = vunpack.c.l.b16 %v852
  %v941 = vunpack.c.l.b16 %v853
  %v942 = vunpack.c.h.b16 %v853
  %v943 = vunpack.c.l.b16 %v854
  %v944 = vunpack.c.l.b16 %v855
  %v945 = vunpack.c.h.b16 %v855
  %v946 = vunpack.c.l.b16 %v856
  %v947 = vunpack.c.l.b16 %v857
  %v948 = vunpack.c.h.b16 %v857
  %v949 = vunpack.c.l.b16 %v858
  %v950 = vunpack.c.l.b16 %v859
  %v951 = vunpack.c.h.b16 %v859
  %v952 = vunpack.c.l.b16 %v860
  %v953 = vunpack.c.l.b16 %v861
  %v954 = vunpack.c.h.b16 %v861
  %v955 = vunpack.c.l.b16 %v862
  %v956 = vunpack.c.l.b16 %v863
  %v957 = vunpack.c.h.b16 %v863
  %v958 = vunpack.c.l.b16 %v864
  %v959 = vunpack.c.l.b16 %v865
  %v960 = vunpack.c.h.b16 %v865
  %v961 = vunpack.c.l.b16 %v866
  %v962 = vunpack.c.l.b16 %v867
  %v963 = vunpack.c.h.b16 %v867
  %v964 = vunpack.c.l.b16 %v868
  %v965 = vunpack.c.l.b16 %v869
  %v966 = vunpack.c.h.b16 %v869
  %v967 = vunpack.c.l.b16 %v870
  %v968 = vpack.c.b16 %v923, %v920
  %v969 = vpack.c.b16 %v924, %v921
  %v970 = vpack.c.b16 %v925, %v922
  %v971 = vpack.c.b16 %v929, %v926
  %v972 = vpack.c.b16 %v930, %v927
  %v973 = vpack.c.b16 %v931, %v928
  %v974 = vpack.c.b16 %v935, %v932
  %v975 = vpack.c.b16 %v936, %v933
  %v976 = vpack.c.b16 %v937, %v934
  %v977 = vpack.c.b16 %v941, %v938
  %v978 = vpack.c.b16 %v942, %v939
  %v979 = vpack.c.b16 %v943, %v940
  %v980 = vpack.c.b16 %v947, %v944
  %v981 = vpack.c.b16 %v948, %v945
  %v982 = vpack.c.b16 %v949, %v946
  %v983 = vpack.c.b16 %v953, %v950
  %v984 = vpack.c.b16 %v954, %v951
  %v985 = vpack.c.b16 %v955, %v952
  %v986 = vpack.c.b16 %v959, %v956
  %v987 = vpack.c.b16 %v960, %v957
  %v988 = vpack.c.b16 %v961, %v958
  %v989 = vpack.c.b16 %v965, %v962
  %v990 = vpack.c.b16 %v966, %v963
  %v991 = vpack.c.b16 %v967, %v964
  %1016 = vmatprep.subr.bf16.mxu0 %v990
  %1017 = vmatpush1.bf16.msra.mxu0 %v989
  %1018 = vmatprep.subr.bf16.mxu0 %v987
  %1019 = vmatpush1.bf16.msra.mxu0 %v986
  %1020 = vmatprep.subr.bf16.mxu0 %v984
  %1021 = vmatpush1.bf16.msra.mxu0 %v983
  %1022 = vmatprep.subr.bf16.mxu0 %v981
  %1023 = vmatpush1.bf16.msra.mxu0 %v980
  %1024 = vmatprep.subr.bf16.mxu0 %v978
  %1025 = vmatpush1.bf16.msra.mxu0 %v977
  %1026 = vmatprep.subr.bf16.mxu0 %v975
  %1027 = vmatpush1.bf16.msra.mxu0 %v974
  %1028 = vmatprep.subr.bf16.mxu0 %v972
  %1029 = vmatpush1.bf16.msra.mxu0 %v971
  %1030 = vmatprep.subr.bf16.mxu0 %v969
  %1031 = vmatpush1.bf16.msra.mxu0 %v968
  %1032 = vmatprep.subr.bf16.mxu0 0
  %1033 = vmatpush2.bf16.msra.mxu0 0
  %1034 = vmatprep.subr.bf16.mxu0 0
  %1035 = vmatpush2.bf16.msra.mxu0 0
  %1036 = vmatprep.subr.bf16.mxu0 0
  %1037 = vmatpush2.bf16.msra.mxu0 0
  %1038 = vmatprep.subr.bf16.mxu0 0
  %1039 = vmatpush2.bf16.msra.mxu0 0
  %1040 = vmatprep.subr.bf16.mxu0 0
  %1041 = vmatpush2.bf16.msra.mxu0 0
  %1042 = vmatprep.subr.bf16.mxu0 0
  %1043 = vmatpush2.bf16.msra.mxu0 0
  %1044 = vmatprep.subr.bf16.mxu0 0
  %1045 = vmatpush2.bf16.msra.mxu0 0
  %1046 = vmatprep.subr.bf16.mxu0 0
  %1047 = vmatpush2.bf16.msra.mxu0 0
  %1048 = vmatprep.mubr.bf16.mxu0 0
  %1049 = vmatmul.mubr.bf16.gmra.mxu0 %v577
  %v1050 = vpop.f32.mrf.mxu0
  %v1051 = vadd.f32 %v876, %v1050
  %v1052 = vpop.f32.mrf.mxu0
  %v1053 = vadd.f32 %v880, %v1052
  %v1054 = vpop.f32.mrf.mxu0
  %v1055 = vpop.f32.mrf.mxu0
  %1056 = vdwg.mxu0
  %1057 = vmatprep.subr.bf16.mxu0 0
  %1058 = vmatpush1.bf16.msra.mxu0 %v991
  %1059 = vmatprep.subr.bf16.mxu0 0
  %1060 = vmatpush1.bf16.msra.mxu0 %v988
  %1061 = vmatprep.subr.bf16.mxu0 0
  %1062 = vmatpush1.bf16.msra.mxu0 %v985
  %1063 = vmatprep.subr.bf16.mxu0 0
  %1064 = vmatpush1.bf16.msra.mxu0 %v982
  %1065 = vmatprep.subr.bf16.mxu0 0
  %1066 = vmatpush1.bf16.msra.mxu0 %v979
  %1067 = vmatprep.subr.bf16.mxu0 0
  %1068 = vmatpush1.bf16.msra.mxu0 %v976
  %1069 = vmatprep.subr.bf16.mxu0 0
  %1070 = vmatpush1.bf16.msra.mxu0 %v973
  %1071 = vmatprep.subr.bf16.mxu0 0
  %1072 = vmatpush1.bf16.msra.mxu0 %v970
  %1073 = vmatprep.subr.bf16.mxu0 0
  %1074 = vmatpush2.bf16.msra.mxu0 0
  %1075 = vmatprep.subr.bf16.mxu0 0
  %1076 = vmatpush2.bf16.msra.mxu0 0
  %1077 = vmatprep.subr.bf16.mxu0 0
  %1078 = vmatpush2.bf16.msra.mxu0 0
  %1079 = vmatprep.subr.bf16.mxu0 0
  %1080 = vmatpush2.bf16.msra.mxu0 0
  %1081 = vmatprep.subr.bf16.mxu0 0
  %1082 = vmatpush2.bf16.msra.mxu0 0
  %1083 = vmatprep.subr.bf16.mxu0 0
  %1084 = vmatpush2.bf16.msra.mxu0 0
  %1085 = vmatprep.subr.bf16.mxu0 0
  %1086 = vmatpush2.bf16.msra.mxu0 0
  %1087 = vmatprep.subr.bf16.mxu0 0
  %1088 = vmatpush2.bf16.msra.mxu0 0
  %1089 = vmatprep.mubr.bf16.mxu0 0
  %1090 = vmatmul.mubr.bf16.gmra.mxu0 %v577
  %v1091 = vpop.f32.mrf.mxu0
  %v1092 = vadd.f32 %v884, %v1091
  %v1093 = vpop.f32.mrf.mxu0
  %v1094 = vpop.f32.mrf.mxu0
  %v1095 = vpop.f32.mrf.mxu0
  %1096 = vdwg.mxu0
  %v1097 = vadd.f32 %v793, %v1051
  %v1098 = vxor.u32 %v1097, 2147483648
  %v1099 = vmul.f32 %v1098, 1.442695
  %v1100 = vpow.pop %v1099
  %v1101 = vadd.f32 %v1100, 1.0
  %v1102 = vrcp.pop %v1101
  %v1103 = vmul.f32 1.0, %v1102
  %v1104 = vadd.f32 %v795, %v1053
  %v1105 = vxor.u32 %v1104, 2147483648
  %v1106 = vmul.f32 %v1105, 1.442695
  %v1107 = vpow.pop %v1106
  %v1108 = vadd.f32 %v1107, 1.0
  %v1109 = vrcp.pop %v1108
  %v1110 = vmul.f32 1.0, %v1109
  %v1111 = vmul.f32 %v1103, %v1092
  %v1112 = vadd.f32 %v834, %v1111
  %v1113 = vtanh.pop %v1112
  %v1114 = vsub.f32 1.0, %v1110
  %v1115 = vmul.f32 %v1114, %v1113
  %v1116 = vmul.f32 %v1110, %v576
  %v1117 = vadd.f32 %v1115, %v1116
  %v1118 = vpack.c.bf16 %v1117, %v1117
  %s1119 = scalar_lea.vmem [#allocation2], 4
  %1120 = vst [vmem:[%s1119] sm:$0xf] %v1118
  %s1121 = scalar_lea.vmem %s0, 8
  %v1122 = vld [vmem:[%s1121] sm:$0xf]
  %v1123 = vld [vmem:[%s1] sm:$0xff]
  %v1124 = vld [vmem:[%s1 + $0x8] sm:$0xf]
  %v1125 = vld [vmem:[%s1 + $0xc] sm:$0xff]
  %v1126 = vld [vmem:[%s1 + $0x14] sm:$0xf]
  %v1127 = vld [vmem:[%s1 + $0x18] sm:$0xff]
  %v1128 = vld [vmem:[%s1 + $0x20] sm:$0xf]
  %v1129 = vld [vmem:[%s1 + $0x24] sm:$0xff]
  %v1130 = vld [vmem:[%s1 + $0x2c] sm:$0xf]
  %v1131 = vld [vmem:[%s1 + $0x30] sm:$0xff]
  %v1132 = vld [vmem:[%s1 + $0x38] sm:$0xf]
  %v1133 = vld [vmem:[%s1 + $0x3c] sm:$0xff]
  %v1134 = vld [vmem:[%s1 + $0x44] sm:$0xf]
  %v1135 = vld [vmem:[%s1 + $0x48] sm:$0xff]
  %v1136 = vld [vmem:[%s1 + $0x50] sm:$0xf]
  %v1137 = vld [vmem:[%s1 + $0x54] sm:$0xff]
  %v1138 = vld [vmem:[%s1 + $0x5c] sm:$0xf]
  %v1139 = vld [vmem:[%s1 + $0x60] sm:$0xff]
  %v1140 = vld [vmem:[%s1 + $0x68] sm:$0xf]
  %v1141 = vld [vmem:[%s1 + $0x6c] sm:$0xff]
  %v1142 = vld [vmem:[%s1 + $0x74] sm:$0xf]
  %v1143 = vld [vmem:[%s1 + $0x78] sm:$0xff]
  %v1144 = vld [vmem:[%s1 + $0x80] sm:$0xf]
  %v1145 = vld [vmem:[%s1 + $0x84] sm:$0xff]
  %v1146 = vld [vmem:[%s1 + $0x8c] sm:$0xf]
  %v1147 = vld [vmem:[%s1 + $0x90] sm:$0xff]
  %v1148 = vld [vmem:[%s1 + $0x98] sm:$0xf]
  %v1149 = vld [vmem:[%s1 + $0x9c] sm:$0xff]
  %v1150 = vld [vmem:[%s1 + $0xa4] sm:$0xf]
  %v1151 = vld [vmem:[%s1 + $0xa8] sm:$0xff]
  %v1152 = vld [vmem:[%s1 + $0xb0] sm:$0xf]
  %v1153 = vld [vmem:[%s1 + $0xb4] sm:$0xff]
  %v1154 = vld [vmem:[%s1 + $0xbc] sm:$0xf]
  %v1155 = vld [vmem:[%s3] sm:$0x7]
  %v1157 = vlaneseq
  %v1158 = vshrl.u32 %v1157, 7
  %v1159 = vsub.s32 0, %v1158
  %v1160 = vrot.slane %v1155, %v1159
  %v1161 = vlaneseq
  %v1162 = vshrl.u32 %v1161, 7
  %v1163 = vsub.s32 1, %v1162
  %v1164 = vrot.slane %v1155, %v1163
  %v1165 = vlaneseq
  %v1166 = vshrl.u32 %v1165, 7
  %v1167 = vsub.s32 2, %v1166
  %v1168 = vrot.slane %v1155, %v1167
  %v1204 = vunpack.c.l.b16 %v1123
  %v1205 = vunpack.c.h.b16 %v1123
  %v1206 = vunpack.c.l.b16 %v1124
  %v1207 = vunpack.c.l.b16 %v1125
  %v1208 = vunpack.c.h.b16 %v1125
  %v1209 = vunpack.c.l.b16 %v1126
  %v1210 = vunpack.c.l.b16 %v1127
  %v1211 = vunpack.c.h.b16 %v1127
  %v1212 = vunpack.c.l.b16 %v1128
  %v1213 = vunpack.c.l.b16 %v1129
  %v1214 = vunpack.c.h.b16 %v1129
  %v1215 = vunpack.c.l.b16 %v1130
  %v1216 = vunpack.c.l.b16 %v1131
  %v1217 = vunpack.c.h.b16 %v1131
  %v1218 = vunpack.c.l.b16 %v1132
  %v1219 = vunpack.c.l.b16 %v1133
  %v1220 = vunpack.c.h.b16 %v1133
  %v1221 = vunpack.c.l.b16 %v1134
  %v1222 = vunpack.c.l.b16 %v1135
  %v1223 = vunpack.c.h.b16 %v1135
  %v1224 = vunpack.c.l.b16 %v1136
  %v1225 = vunpack.c.l.b16 %v1137
  %v1226 = vunpack.c.h.b16 %v1137
  %v1227 = vunpack.c.l.b16 %v1138
  %v1228 = vunpack.c.l.b16 %v1139
  %v1229 = vunpack.c.h.b16 %v1139
  %v1230 = vunpack.c.l.b16 %v1140
  %v1231 = vunpack.c.l.b16 %v1141
  %v1232 = vunpack.c.h.b16 %v1141
  %v1233 = vunpack.c.l.b16 %v1142
  %v1234 = vunpack.c.l.b16 %v1143
  %v1235 = vunpack.c.h.b16 %v1143
  %v1236 = vunpack.c.l.b16 %v1144
  %v1237 = vunpack.c.l.b16 %v1145
  %v1238 = vunpack.c.h.b16 %v1145
  %v1239 = vunpack.c.l.b16 %v1146
  %v1240 = vunpack.c.l.b16 %v1147
  %v1241 = vunpack.c.h.b16 %v1147
  %v1242 = vunpack.c.l.b16 %v1148
  %v1243 = vunpack.c.l.b16 %v1149
  %v1244 = vunpack.c.h.b16 %v1149
  %v1245 = vunpack.c.l.b16 %v1150
  %v1246 = vunpack.c.l.b16 %v1151
  %v1247 = vunpack.c.h.b16 %v1151
  %v1248 = vunpack.c.l.b16 %v1152
  %v1249 = vunpack.c.l.b16 %v1153
  %v1250 = vunpack.c.h.b16 %v1153
  %v1251 = vunpack.c.l.b16 %v1154
  %v1252 = vpack.c.b16 %v1207, %v1204
  %v1253 = vpack.c.b16 %v1208, %v1205
  %v1254 = vpack.c.b16 %v1209, %v1206
  %v1255 = vpack.c.b16 %v1213, %v1210
  %v1256 = vpack.c.b16 %v1214, %v1211
  %v1257 = vpack.c.b16 %v1215, %v1212
  %v1258 = vpack.c.b16 %v1219, %v1216
  %v1259 = vpack.c.b16 %v1220, %v1217
  %v1260 = vpack.c.b16 %v1221, %v1218
  %v1261 = vpack.c.b16 %v1225, %v1222
  %v1262 = vpack.c.b16 %v1226, %v1223
  %v1263 = vpack.c.b16 %v1227, %v1224
  %v1264 = vpack.c.b16 %v1231, %v1228
  %v1265 = vpack.c.b16 %v1232, %v1229
  %v1266 = vpack.c.b16 %v1233, %v1230
  %v1267 = vpack.c.b16 %v1237, %v1234
  %v1268 = vpack.c.b16 %v1238, %v1235
  %v1269 = vpack.c.b16 %v1239, %v1236
  %v1270 = vpack.c.b16 %v1243, %v1240
  %v1271 = vpack.c.b16 %v1244, %v1241
  %v1272 = vpack.c.b16 %v1245, %v1242
  %v1273 = vpack.c.b16 %v1249, %v1246
  %v1274 = vpack.c.b16 %v1250, %v1247
  %v1275 = vpack.c.b16 %v1251, %v1248
  %1300 = vmatprep.subr.bf16.mxu0 %v1274
  %1301 = vmatpush1.bf16.msra.mxu0 %v1273
  %1302 = vmatprep.subr.bf16.mxu0 %v1271
  %1303 = vmatpush1.bf16.msra.mxu0 %v1270
  %1304 = vmatprep.subr.bf16.mxu0 %v1268
  %1305 = vmatpush1.bf16.msra.mxu0 %v1267
  %1306 = vmatprep.subr.bf16.mxu0 %v1265
  %1307 = vmatpush1.bf16.msra.mxu0 %v1264
  %1308 = vmatprep.subr.bf16.mxu0 %v1262
  %1309 = vmatpush1.bf16.msra.mxu0 %v1261
  %1310 = vmatprep.subr.bf16.mxu0 %v1259
  %1311 = vmatpush1.bf16.msra.mxu0 %v1258
  %1312 = vmatprep.subr.bf16.mxu0 %v1256
  %1313 = vmatpush1.bf16.msra.mxu0 %v1255
  %1314 = vmatprep.subr.bf16.mxu0 %v1253
  %1315 = vmatpush1.bf16.msra.mxu0 %v1252
  %1316 = vmatprep.subr.bf16.mxu0 0
  %1317 = vmatpush2.bf16.msra.mxu0 0
  %1318 = vmatprep.subr.bf16.mxu0 0
  %1319 = vmatpush2.bf16.msra.mxu0 0
  %1320 = vmatprep.subr.bf16.mxu0 0
  %1321 = vmatpush2.bf16.msra.mxu0 0
  %1322 = vmatprep.subr.bf16.mxu0 0
  %1323 = vmatpush2.bf16.msra.mxu0 0
  %1324 = vmatprep.subr.bf16.mxu0 0
  %1325 = vmatpush2.bf16.msra.mxu0 0
  %1326 = vmatprep.subr.bf16.mxu0 0
  %1327 = vmatpush2.bf16.msra.mxu0 0
  %1328 = vmatprep.subr.bf16.mxu0 0
  %1329 = vmatpush2.bf16.msra.mxu0 0
  %1330 = vmatprep.subr.bf16.mxu0 0
  %1331 = vmatpush2.bf16.msra.mxu0 0
  %1332 = vmatprep.mubr.bf16.mxu0 0
  %1333 = vmatmul.mubr.bf16.gmra.mxu0 %v1122
  %v1334 = vpop.f32.mrf.mxu0
  %v1335 = vadd.f32 %v1160, %v1334
  %v1336 = vpop.f32.mrf.mxu0
  %v1337 = vadd.f32 %v1164, %v1336
  %v1338 = vpop.f32.mrf.mxu0
  %v1339 = vpop.f32.mrf.mxu0
  %1340 = vdwg.mxu0
  %1341 = vmatprep.subr.bf16.mxu0 0
  %1342 = vmatpush1.bf16.msra.mxu0 %v1275
  %1343 = vmatprep.subr.bf16.mxu0 0
  %1344 = vmatpush1.bf16.msra.mxu0 %v1272
  %1345 = vmatprep.subr.bf16.mxu0 0
  %1346 = vmatpush1.bf16.msra.mxu0 %v1269
  %1347 = vmatprep.subr.bf16.mxu0 0
  %1348 = vmatpush1.bf16.msra.mxu0 %v1266
  %1349 = vmatprep.subr.bf16.mxu0 0
  %1350 = vmatpush1.bf16.msra.mxu0 %v1263
  %1351 = vmatprep.subr.bf16.mxu0 0
  %1352 = vmatpush1.bf16.msra.mxu0 %v1260
  %1353 = vmatprep.subr.bf16.mxu0 0
  %1354 = vmatpush1.bf16.msra.mxu0 %v1257
  %1355 = vmatprep.subr.bf16.mxu0 0
  %1356 = vmatpush1.bf16.msra.mxu0 %v1254
  %1357 = vmatprep.subr.bf16.mxu0 0
  %1358 = vmatpush2.bf16.msra.mxu0 0
  %1359 = vmatprep.subr.bf16.mxu0 0
  %1360 = vmatpush2.bf16.msra.mxu0 0
  %1361 = vmatprep.subr.bf16.mxu0 0
  %1362 = vmatpush2.bf16.msra.mxu0 0
  %1363 = vmatprep.subr.bf16.mxu0 0
  %1364 = vmatpush2.bf16.msra.mxu0 0
  %1365 = vmatprep.subr.bf16.mxu0 0
  %1366 = vmatpush2.bf16.msra.mxu0 0
  %1367 = vmatprep.subr.bf16.mxu0 0
  %1368 = vmatpush2.bf16.msra.mxu0 0
  %1369 = vmatprep.subr.bf16.mxu0 0
  %1370 = vmatpush2.bf16.msra.mxu0 0
  %1371 = vmatprep.subr.bf16.mxu0 0
  %1372 = vmatpush2.bf16.msra.mxu0 0
  %1373 = vmatprep.mubr.bf16.mxu0 0
  %1374 = vmatmul.mubr.bf16.gmra.mxu0 %v1122
  %v1375 = vpop.f32.mrf.mxu0
  %v1376 = vadd.f32 %v1168, %v1375
  %v1377 = vpop.f32.mrf.mxu0
  %v1378 = vpop.f32.mrf.mxu0
  %v1379 = vpop.f32.mrf.mxu0
  %1380 = vdwg.mxu0
  %v1381 = vld [vmem:[%s2] sm:$0xff]
  %v1382 = vld [vmem:[%s2 + $0x8] sm:$0xf]
  %v1383 = vld [vmem:[%s2 + $0xc] sm:$0xff]
  %v1384 = vld [vmem:[%s2 + $0x14] sm:$0xf]
  %v1385 = vld [vmem:[%s2 + $0x18] sm:$0xff]
  %v1386 = vld [vmem:[%s2 + $0x20] sm:$0xf]
  %v1387 = vld [vmem:[%s2 + $0x24] sm:$0xff]
  %v1388 = vld [vmem:[%s2 + $0x2c] sm:$0xf]
  %v1389 = vld [vmem:[%s2 + $0x30] sm:$0xff]
  %v1390 = vld [vmem:[%s2 + $0x38] sm:$0xf]
  %v1391 = vld [vmem:[%s2 + $0x3c] sm:$0xff]
  %v1392 = vld [vmem:[%s2 + $0x44] sm:$0xf]
  %v1393 = vld [vmem:[%s2 + $0x48] sm:$0xff]
  %v1394 = vld [vmem:[%s2 + $0x50] sm:$0xf]
  %v1395 = vld [vmem:[%s2 + $0x54] sm:$0xff]
  %v1396 = vld [vmem:[%s2 + $0x5c] sm:$0xf]
  %v1397 = vld [vmem:[%s2 + $0x60] sm:$0xff]
  %v1398 = vld [vmem:[%s2 + $0x68] sm:$0xf]
  %v1399 = vld [vmem:[%s2 + $0x6c] sm:$0xff]
  %v1400 = vld [vmem:[%s2 + $0x74] sm:$0xf]
  %v1401 = vld [vmem:[%s2 + $0x78] sm:$0xff]
  %v1402 = vld [vmem:[%s2 + $0x80] sm:$0xf]
  %v1403 = vld [vmem:[%s2 + $0x84] sm:$0xff]
  %v1404 = vld [vmem:[%s2 + $0x8c] sm:$0xf]
  %v1405 = vld [vmem:[%s2 + $0x90] sm:$0xff]
  %v1406 = vld [vmem:[%s2 + $0x98] sm:$0xf]
  %v1407 = vld [vmem:[%s2 + $0x9c] sm:$0xff]
  %v1408 = vld [vmem:[%s2 + $0xa4] sm:$0xf]
  %v1409 = vld [vmem:[%s2 + $0xa8] sm:$0xff]
  %v1410 = vld [vmem:[%s2 + $0xb0] sm:$0xf]
  %v1411 = vld [vmem:[%s2 + $0xb4] sm:$0xff]
  %v1412 = vld [vmem:[%s2 + $0xbc] sm:$0xf]
  %v1413 = vld [vmem:[%s4] sm:$0x7]
  %v1415 = vlaneseq
  %v1416 = vshrl.u32 %v1415, 7
  %v1417 = vsub.s32 0, %v1416
  %v1418 = vrot.slane %v1413, %v1417
  %v1419 = vlaneseq
  %v1420 = vshrl.u32 %v1419, 7
  %v1421 = vsub.s32 1, %v1420
  %v1422 = vrot.slane %v1413, %v1421
  %v1423 = vlaneseq
  %v1424 = vshrl.u32 %v1423, 7
  %v1425 = vsub.s32 2, %v1424
  %v1426 = vrot.slane %v1413, %v1425
  %v1462 = vunpack.c.l.b16 %v1381
  %v1463 = vunpack.c.h.b16 %v1381
  %v1464 = vunpack.c.l.b16 %v1382
  %v1465 = vunpack.c.l.b16 %v1383
  %v1466 = vunpack.c.h.b16 %v1383
  %v1467 = vunpack.c.l.b16 %v1384
  %v1468 = vunpack.c.l.b16 %v1385
  %v1469 = vunpack.c.h.b16 %v1385
  %v1470 = vunpack.c.l.b16 %v1386
  %v1471 = vunpack.c.l.b16 %v1387
  %v1472 = vunpack.c.h.b16 %v1387
  %v1473 = vunpack.c.l.b16 %v1388
  %v1474 = vunpack.c.l.b16 %v1389
  %v1475 = vunpack.c.h.b16 %v1389
  %v1476 = vunpack.c.l.b16 %v1390
  %v1477 = vunpack.c.l.b16 %v1391
  %v1478 = vunpack.c.h.b16 %v1391
  %v1479 = vunpack.c.l.b16 %v1392
  %v1480 = vunpack.c.l.b16 %v1393
  %v1481 = vunpack.c.h.b16 %v1393
  %v1482 = vunpack.c.l.b16 %v1394
  %v1483 = vunpack.c.l.b16 %v1395
  %v1484 = vunpack.c.h.b16 %v1395
  %v1485 = vunpack.c.l.b16 %v1396
  %v1486 = vunpack.c.l.b16 %v1397
  %v1487 = vunpack.c.h.b16 %v1397
  %v1488 = vunpack.c.l.b16 %v1398
  %v1489 = vunpack.c.l.b16 %v1399
  %v1490 = vunpack.c.h.b16 %v1399
  %v1491 = vunpack.c.l.b16 %v1400
  %v1492 = vunpack.c.l.b16 %v1401
  %v1493 = vunpack.c.h.b16 %v1401
  %v1494 = vunpack.c.l.b16 %v1402
  %v1495 = vunpack.c.l.b16 %v1403
  %v1496 = vunpack.c.h.b16 %v1403
  %v1497 = vunpack.c.l.b16 %v1404
  %v1498 = vunpack.c.l.b16 %v1405
  %v1499 = vunpack.c.h.b16 %v1405
  %v1500 = vunpack.c.l.b16 %v1406
  %v1501 = vunpack.c.l.b16 %v1407
  %v1502 = vunpack.c.h.b16 %v1407
  %v1503 = vunpack.c.l.b16 %v1408
  %v1504 = vunpack.c.l.b16 %v1409
  %v1505 = vunpack.c.h.b16 %v1409
  %v1506 = vunpack.c.l.b16 %v1410
  %v1507 = vunpack.c.l.b16 %v1411
  %v1508 = vunpack.c.h.b16 %v1411
  %v1509 = vunpack.c.l.b16 %v1412
  %v1510 = vpack.c.b16 %v1465, %v1462
  %v1511 = vpack.c.b16 %v1466, %v1463
  %v1512 = vpack.c.b16 %v1467, %v1464
  %v1513 = vpack.c.b16 %v1471, %v1468
  %v1514 = vpack.c.b16 %v1472, %v1469
  %v1515 = vpack.c.b16 %v1473, %v1470
  %v1516 = vpack.c.b16 %v1477, %v1474
  %v1517 = vpack.c.b16 %v1478, %v1475
  %v1518 = vpack.c.b16 %v1479, %v1476
  %v1519 = vpack.c.b16 %v1483, %v1480
  %v1520 = vpack.c.b16 %v1484, %v1481
  %v1521 = vpack.c.b16 %v1485, %v1482
  %v1522 = vpack.c.b16 %v1489, %v1486
  %v1523 = vpack.c.b16 %v1490, %v1487
  %v1524 = vpack.c.b16 %v1491, %v1488
  %v1525 = vpack.c.b16 %v1495, %v1492
  %v1526 = vpack.c.b16 %v1496, %v1493
  %v1527 = vpack.c.b16 %v1497, %v1494
  %v1528 = vpack.c.b16 %v1501, %v1498
  %v1529 = vpack.c.b16 %v1502, %v1499
  %v1530 = vpack.c.b16 %v1503, %v1500
  %v1531 = vpack.c.b16 %v1507, %v1504
  %v1532 = vpack.c.b16 %v1508, %v1505
  %v1533 = vpack.c.b16 %v1509, %v1506
  %1558 = vmatprep.subr.bf16.mxu0 %v1532
  %1559 = vmatpush1.bf16.msra.mxu0 %v1531
  %1560 = vmatprep.subr.bf16.mxu0 %v1529
  %1561 = vmatpush1.bf16.msra.mxu0 %v1528
  %1562 = vmatprep.subr.bf16.mxu0 %v1526
  %1563 = vmatpush1.bf16.msra.mxu0 %v1525
  %1564 = vmatprep.subr.bf16.mxu0 %v1523
  %1565 = vmatpush1.bf16.msra.mxu0 %v1522
  %1566 = vmatprep.subr.bf16.mxu0 %v1520
  %1567 = vmatpush1.bf16.msra.mxu0 %v1519
  %1568 = vmatprep.subr.bf16.mxu0 %v1517
  %1569 = vmatpush1.bf16.msra.mxu0 %v1516
  %1570 = vmatprep.subr.bf16.mxu0 %v1514
  %1571 = vmatpush1.bf16.msra.mxu0 %v1513
  %1572 = vmatprep.subr.bf16.mxu0 %v1511
  %1573 = vmatpush1.bf16.msra.mxu0 %v1510
  %1574 = vmatprep.subr.bf16.mxu0 0
  %1575 = vmatpush2.bf16.msra.mxu0 0
  %1576 = vmatprep.subr.bf16.mxu0 0
  %1577 = vmatpush2.bf16.msra.mxu0 0
  %1578 = vmatprep.subr.bf16.mxu0 0
  %1579 = vmatpush2.bf16.msra.mxu0 0
  %1580 = vmatprep.subr.bf16.mxu0 0
  %1581 = vmatpush2.bf16.msra.mxu0 0
  %1582 = vmatprep.subr.bf16.mxu0 0
  %1583 = vmatpush2.bf16.msra.mxu0 0
  %1584 = vmatprep.subr.bf16.mxu0 0
  %1585 = vmatpush2.bf16.msra.mxu0 0
  %1586 = vmatprep.subr.bf16.mxu0 0
  %1587 = vmatpush2.bf16.msra.mxu0 0
  %1588 = vmatprep.subr.bf16.mxu0 0
  %1589 = vmatpush2.bf16.msra.mxu0 0
  %1590 = vmatprep.mubr.bf16.mxu0 0
  %1591 = vmatmul.mubr.bf16.gmra.mxu0 %v1118
  %v1592 = vpop.f32.mrf.mxu0
  %v1593 = vadd.f32 %v1418, %v1592
  %v1594 = vpop.f32.mrf.mxu0
  %v1595 = vadd.f32 %v1422, %v1594
  %v1596 = vpop.f32.mrf.mxu0
  %v1597 = vpop.f32.mrf.mxu0
  %1598 = vdwg.mxu0
  %1599 = vmatprep.subr.bf16.mxu0 0
  %1600 = vmatpush1.bf16.msra.mxu0 %v1533
  %1601 = vmatprep.subr.bf16.mxu0 0
  %1602 = vmatpush1.bf16.msra.mxu0 %v1530
  %1603 = vmatprep.subr.bf16.mxu0 0
  %1604 = vmatpush1.bf16.msra.mxu0 %v1527
  %1605 = vmatprep.subr.bf16.mxu0 0
  %1606 = vmatpush1.bf16.msra.mxu0 %v1524
  %1607 = vmatprep.subr.bf16.mxu0 0
  %1608 = vmatpush1.bf16.msra.mxu0 %v1521
  %1609 = vmatprep.subr.bf16.mxu0 0
  %1610 = vmatpush1.bf16.msra.mxu0 %v1518
  %1611 = vmatprep.subr.bf16.mxu0 0
  %1612 = vmatpush1.bf16.msra.mxu0 %v1515
  %1613 = vmatprep.subr.bf16.mxu0 0
  %1614 = vmatpush1.bf16.msra.mxu0 %v1512
  %1615 = vmatprep.subr.bf16.mxu0 0
  %1616 = vmatpush2.bf16.msra.mxu0 0
  %1617 = vmatprep.subr.bf16.mxu0 0
  %1618 = vmatpush2.bf16.msra.mxu0 0
  %1619 = vmatprep.subr.bf16.mxu0 0
  %1620 = vmatpush2.bf16.msra.mxu0 0
  %1621 = vmatprep.subr.bf16.mxu0 0
  %1622 = vmatpush2.bf16.msra.mxu0 0
  %1623 = vmatprep.subr.bf16.mxu0 0
  %1624 = vmatpush2.bf16.msra.mxu0 0
  %1625 = vmatprep.subr.bf16.mxu0 0
  %1626 = vmatpush2.bf16.msra.mxu0 0
  %1627 = vmatprep.subr.bf16.mxu0 0
  %1628 = vmatpush2.bf16.msra.mxu0 0
  %1629 = vmatprep.subr.bf16.mxu0 0
  %1630 = vmatpush2.bf16.msra.mxu0 0
  %1631 = vmatprep.mubr.bf16.mxu0 0
  %1632 = vmatmul.mubr.bf16.gmra.mxu0 %v1118
  %v1633 = vpop.f32.mrf.mxu0
  %v1634 = vadd.f32 %v1426, %v1633
  %v1635 = vpop.f32.mrf.mxu0
  %v1636 = vpop.f32.mrf.mxu0
  %v1637 = vpop.f32.mrf.mxu0
  %1638 = vdwg.mxu0
  %v1639 = vadd.f32 %v1335, %v1593
  %v1640 = vxor.u32 %v1639, 2147483648
  %v1641 = vmul.f32 %v1640, 1.442695
  %v1642 = vpow.pop %v1641
  %v1643 = vadd.f32 %v1642, 1.0
  %v1644 = vrcp.pop %v1643
  %v1645 = vmul.f32 1.0, %v1644
  %v1646 = vadd.f32 %v1337, %v1595
  %v1647 = vxor.u32 %v1646, 2147483648
  %v1648 = vmul.f32 %v1647, 1.442695
  %v1649 = vpow.pop %v1648
  %v1650 = vadd.f32 %v1649, 1.0
  %v1651 = vrcp.pop %v1650
  %v1652 = vmul.f32 1.0, %v1651
  %v1653 = vmul.f32 %v1645, %v1634
  %v1654 = vadd.f32 %v1376, %v1653
  %v1655 = vtanh.pop %v1654
  %v1656 = vsub.f32 1.0, %v1652
  %v1657 = vmul.f32 %v1656, %v1655
  %v1658 = vmul.f32 %v1652, %v1117
  %v1659 = vadd.f32 %v1657, %v1658
  %v1660 = vpack.c.bf16 %v1659, %v1659
  %s1661 = scalar_lea.vmem [#allocation2], 8
  %1662 = vst [vmem:[%s1661] sm:$0xf] %v1660
  %s1663 = scalar_lea.vmem %s0, 12
  %v1664 = vld [vmem:[%s1663] sm:$0xf]
  %v1665 = vld [vmem:[%s1] sm:$0xff]
  %v1666 = vld [vmem:[%s1 + $0x8] sm:$0xf]
  %v1667 = vld [vmem:[%s1 + $0xc] sm:$0xff]
  %v1668 = vld [vmem:[%s1 + $0x14] sm:$0xf]
  %v1669 = vld [vmem:[%s1 + $0x18] sm:$0xff]
  %v1670 = vld [vmem:[%s1 + $0x20] sm:$0xf]
  %v1671 = vld [vmem:[%s1 + $0x24] sm:$0xff]
  %v1672 = vld [vmem:[%s1 + $0x2c] sm:$0xf]
  %v1673 = vld [vmem:[%s1 + $0x30] sm:$0xff]
  %v1674 = vld [vmem:[%s1 + $0x38] sm:$0xf]
  %v1675 = vld [vmem:[%s1 + $0x3c] sm:$0xff]
  %v1676 = vld [vmem:[%s1 + $0x44] sm:$0xf]
  %v1677 = vld [vmem:[%s1 + $0x48] sm:$0xff]
  %v1678 = vld [vmem:[%s1 + $0x50] sm:$0xf]
  %v1679 = vld [vmem:[%s1 + $0x54] sm:$0xff]
  %v1680 = vld [vmem:[%s1 + $0x5c] sm:$0xf]
  %v1681 = vld [vmem:[%s1 + $0x60] sm:$0xff]
  %v1682 = vld [vmem:[%s1 + $0x68] sm:$0xf]
  %v1683 = vld [vmem:[%s1 + $0x6c] sm:$0xff]
  %v1684 = vld [vmem:[%s1 + $0x74] sm:$0xf]
  %v1685 = vld [vmem:[%s1 + $0x78] sm:$0xff]
  %v1686 = vld [vmem:[%s1 + $0x80] sm:$0xf]
  %v1687 = vld [vmem:[%s1 + $0x84] sm:$0xff]
  %v1688 = vld [vmem:[%s1 + $0x8c] sm:$0xf]
  %v1689 = vld [vmem:[%s1 + $0x90] sm:$0xff]
  %v1690 = vld [vmem:[%s1 + $0x98] sm:$0xf]
  %v1691 = vld [vmem:[%s1 + $0x9c] sm:$0xff]
  %v1692 = vld [vmem:[%s1 + $0xa4] sm:$0xf]
  %v1693 = vld [vmem:[%s1 + $0xa8] sm:$0xff]
  %v1694 = vld [vmem:[%s1 + $0xb0] sm:$0xf]
  %v1695 = vld [vmem:[%s1 + $0xb4] sm:$0xff]
  %v1696 = vld [vmem:[%s1 + $0xbc] sm:$0xf]
  %v1697 = vld [vmem:[%s3] sm:$0x7]
  %v1699 = vlaneseq
  %v1700 = vshrl.u32 %v1699, 7
  %v1701 = vsub.s32 0, %v1700
  %v1702 = vrot.slane %v1697, %v1701
  %v1703 = vlaneseq
  %v1704 = vshrl.u32 %v1703, 7
  %v1705 = vsub.s32 1, %v1704
  %v1706 = vrot.slane %v1697, %v1705
  %v1707 = vlaneseq
  %v1708 = vshrl.u32 %v1707, 7
  %v1709 = vsub.s32 2, %v1708
  %v1710 = vrot.slane %v1697, %v1709
  %v1746 = vunpack.c.l.b16 %v1665
  %v1747 = vunpack.c.h.b16 %v1665
  %v1748 = vunpack.c.l.b16 %v1666
  %v1749 = vunpack.c.l.b16 %v1667
  %v1750 = vunpack.c.h.b16 %v1667
  %v1751 = vunpack.c.l.b16 %v1668
  %v1752 = vunpack.c.l.b16 %v1669
  %v1753 = vunpack.c.h.b16 %v1669
  %v1754 = vunpack.c.l.b16 %v1670
  %v1755 = vunpack.c.l.b16 %v1671
  %v1756 = vunpack.c.h.b16 %v1671
  %v1757 = vunpack.c.l.b16 %v1672
  %v1758 = vunpack.c.l.b16 %v1673
  %v1759 = vunpack.c.h.b16 %v1673
  %v1760 = vunpack.c.l.b16 %v1674
  %v1761 = vunpack.c.l.b16 %v1675
  %v1762 = vunpack.c.h.b16 %v1675
  %v1763 = vunpack.c.l.b16 %v1676
  %v1764 = vunpack.c.l.b16 %v1677
  %v1765 = vunpack.c.h.b16 %v1677
  %v1766 = vunpack.c.l.b16 %v1678
  %v1767 = vunpack.c.l.b16 %v1679
  %v1768 = vunpack.c.h.b16 %v1679
  %v1769 = vunpack.c.l.b16 %v1680
  %v1770 = vunpack.c.l.b16 %v1681
  %v1771 = vunpack.c.h.b16 %v1681
  %v1772 = vunpack.c.l.b16 %v1682
  %v1773 = vunpack.c.l.b16 %v1683
  %v1774 = vunpack.c.h.b16 %v1683
  %v1775 = vunpack.c.l.b16 %v1684
  %v1776 = vunpack.c.l.b16 %v1685
  %v1777 = vunpack.c.h.b16 %v1685
  %v1778 = vunpack.c.l.b16 %v1686
  %v1779 = vunpack.c.l.b16 %v1687
  %v1780 = vunpack.c.h.b16 %v1687
  %v1781 = vunpack.c.l.b16 %v1688
  %v1782 = vunpack.c.l.b16 %v1689
  %v1783 = vunpack.c.h.b16 %v1689
  %v1784 = vunpack.c.l.b16 %v1690
  %v1785 = vunpack.c.l.b16 %v1691
  %v1786 = vunpack.c.h.b16 %v1691
  %v1787 = vunpack.c.l.b16 %v1692
  %v1788 = vunpack.c.l.b16 %v1693
  %v1789 = vunpack.c.h.b16 %v1693
  %v1790 = vunpack.c.l.b16 %v1694
  %v1791 = vunpack.c.l.b16 %v1695
  %v1792 = vunpack.c.h.b16 %v1695
  %v1793 = vunpack.c.l.b16 %v1696
  %v1794 = vpack.c.b16 %v1749, %v1746
  %v1795 = vpack.c.b16 %v1750, %v1747
  %v1796 = vpack.c.b16 %v1751, %v1748
  %v1797 = vpack.c.b16 %v1755, %v1752
  %v1798 = vpack.c.b16 %v1756, %v1753
  %v1799 = vpack.c.b16 %v1757, %v1754
  %v1800 = vpack.c.b16 %v1761, %v1758
  %v1801 = vpack.c.b16 %v1762, %v1759
  %v1802 = vpack.c.b16 %v1763, %v1760
  %v1803 = vpack.c.b16 %v1767, %v1764
  %v1804 = vpack.c.b16 %v1768, %v1765
  %v1805 = vpack.c.b16 %v1769, %v1766
  %v1806 = vpack.c.b16 %v1773, %v1770
  %v1807 = vpack.c.b16 %v1774, %v1771
  %v1808 = vpack.c.b16 %v1775, %v1772
  %v1809 = vpack.c.b16 %v1779, %v1776
  %v1810 = vpack.c.b16 %v1780, %v1777
  %v1811 = vpack.c.b16 %v1781, %v1778
  %v1812 = vpack.c.b16 %v1785, %v1782
  %v1813 = vpack.c.b16 %v1786, %v1783
  %v1814 = vpack.c.b16 %v1787, %v1784
  %v1815 = vpack.c.b16 %v1791, %v1788
  %v1816 = vpack.c.b16 %v1792, %v1789
  %v1817 = vpack.c.b16 %v1793, %v1790
  %1842 = vmatprep.subr.bf16.mxu0 %v1816
  %1843 = vmatpush1.bf16.msra.mxu0 %v1815
  %1844 = vmatprep.subr.bf16.mxu0 %v1813
  %1845 = vmatpush1.bf16.msra.mxu0 %v1812
  %1846 = vmatprep.subr.bf16.mxu0 %v1810
  %1847 = vmatpush1.bf16.msra.mxu0 %v1809
  %1848 = vmatprep.subr.bf16.mxu0 %v1807
  %1849 = vmatpush1.bf16.msra.mxu0 %v1806
  %1850 = vmatprep.subr.bf16.mxu0 %v1804
  %1851 = vmatpush1.bf16.msra.mxu0 %v1803
  %1852 = vmatprep.subr.bf16.mxu0 %v1801
  %1853 = vmatpush1.bf16.msra.mxu0 %v1800
  %1854 = vmatprep.subr.bf16.mxu0 %v1798
  %1855 = vmatpush1.bf16.msra.mxu0 %v1797
  %1856 = vmatprep.subr.bf16.mxu0 %v1795
  %1857 = vmatpush1.bf16.msra.mxu0 %v1794
  %1858 = vmatprep.subr.bf16.mxu0 0
  %1859 = vmatpush2.bf16.msra.mxu0 0
  %1860 = vmatprep.subr.bf16.mxu0 0
  %1861 = vmatpush2.bf16.msra.mxu0 0
  %1862 = vmatprep.subr.bf16.mxu0 0
  %1863 = vmatpush2.bf16.msra.mxu0 0
  %1864 = vmatprep.subr.bf16.mxu0 0
  %1865 = vmatpush2.bf16.msra.mxu0 0
  %1866 = vmatprep.subr.bf16.mxu0 0
  %1867 = vmatpush2.bf16.msra.mxu0 0
  %1868 = vmatprep.subr.bf16.mxu0 0
  %1869 = vmatpush2.bf16.msra.mxu0 0
  %1870 = vmatprep.subr.bf16.mxu0 0
  %1871 = vmatpush2.bf16.msra.mxu0 0
  %1872 = vmatprep.subr.bf16.mxu0 0
  %1873 = vmatpush2.bf16.msra.mxu0 0
  %1874 = vmatprep.mubr.bf16.mxu0 0
  %1875 = vmatmul.mubr.bf16.gmra.mxu0 %v1664
  %v1876 = vpop.f32.mrf.mxu0
  %v1877 = vadd.f32 %v1702, %v1876
  %v1878 = vpop.f32.mrf.mxu0
  %v1879 = vadd.f32 %v1706, %v1878
  %v1880 = vpop.f32.mrf.mxu0
  %v1881 = vpop.f32.mrf.mxu0
  %1882 = vdwg.mxu0
  %1883 = vmatprep.subr.bf16.mxu0 0
  %1884 = vmatpush1.bf16.msra.mxu0 %v1817
  %1885 = vmatprep.subr.bf16.mxu0 0
  %1886 = vmatpush1.bf16.msra.mxu0 %v1814
  %1887 = vmatprep.subr.bf16.mxu0 0
  %1888 = vmatpush1.bf16.msra.mxu0 %v1811
  %1889 = vmatprep.subr.bf16.mxu0 0
  %1890 = vmatpush1.bf16.msra.mxu0 %v1808
  %1891 = vmatprep.subr.bf16.mxu0 0
  %1892 = vmatpush1.bf16.msra.mxu0 %v1805
  %1893 = vmatprep.subr.bf16.mxu0 0
  %1894 = vmatpush1.bf16.msra.mxu0 %v1802
  %1895 = vmatprep.subr.bf16.mxu0 0
  %1896 = vmatpush1.bf16.msra.mxu0 %v1799
  %1897 = vmatprep.subr.bf16.mxu0 0
  %1898 = vmatpush1.bf16.msra.mxu0 %v1796
  %1899 = vmatprep.subr.bf16.mxu0 0
  %1900 = vmatpush2.bf16.msra.mxu0 0
  %1901 = vmatprep.subr.bf16.mxu0 0
  %1902 = vmatpush2.bf16.msra.mxu0 0
  %1903 = vmatprep.subr.bf16.mxu0 0
  %1904 = vmatpush2.bf16.msra.mxu0 0
  %1905 = vmatprep.subr.bf16.mxu0 0
  %1906 = vmatpush2.bf16.msra.mxu0 0
  %1907 = vmatprep.subr.bf16.mxu0 0
  %1908 = vmatpush2.bf16.msra.mxu0 0
  %1909 = vmatprep.subr.bf16.mxu0 0
  %1910 = vmatpush2.bf16.msra.mxu0 0
  %1911 = vmatprep.subr.bf16.mxu0 0
  %1912 = vmatpush2.bf16.msra.mxu0 0
  %1913 = vmatprep.subr.bf16.mxu0 0
  %1914 = vmatpush2.bf16.msra.mxu0 0
  %1915 = vmatprep.mubr.bf16.mxu0 0
  %1916 = vmatmul.mubr.bf16.gmra.mxu0 %v1664
  %v1917 = vpop.f32.mrf.mxu0
  %v1918 = vadd.f32 %v1710, %v1917
  %v1919 = vpop.f32.mrf.mxu0
  %v1920 = vpop.f32.mrf.mxu0
  %v1921 = vpop.f32.mrf.mxu0
  %1922 = vdwg.mxu0
  %v1923 = vld [vmem:[%s2] sm:$0xff]
  %v1924 = vld [vmem:[%s2 + $0x8] sm:$0xf]
  %v1925 = vld [vmem:[%s2 + $0xc] sm:$0xff]
  %v1926 = vld [vmem:[%s2 + $0x14] sm:$0xf]
  %v1927 = vld [vmem:[%s2 + $0x18] sm:$0xff]
  %v1928 = vld [vmem:[%s2 + $0x20] sm:$0xf]
  %v1929 = vld [vmem:[%s2 + $0x24] sm:$0xff]
  %v1930 = vld [vmem:[%s2 + $0x2c] sm:$0xf]
  %v1931 = vld [vmem:[%s2 + $0x30] sm:$0xff]
  %v1932 = vld [vmem:[%s2 + $0x38] sm:$0xf]
  %v1933 = vld [vmem:[%s2 + $0x3c] sm:$0xff]
  %v1934 = vld [vmem:[%s2 + $0x44] sm:$0xf]
  %v1935 = vld [vmem:[%s2 + $0x48] sm:$0xff]
  %v1936 = vld [vmem:[%s2 + $0x50] sm:$0xf]
  %v1937 = vld [vmem:[%s2 + $0x54] sm:$0xff]
  %v1938 = vld [vmem:[%s2 + $0x5c] sm:$0xf]
  %v1939 = vld [vmem:[%s2 + $0x60] sm:$0xff]
  %v1940 = vld [vmem:[%s2 + $0x68] sm:$0xf]
  %v1941 = vld [vmem:[%s2 + $0x6c] sm:$0xff]
  %v1942 = vld [vmem:[%s2 + $0x74] sm:$0xf]
  %v1943 = vld [vmem:[%s2 + $0x78] sm:$0xff]
  %v1944 = vld [vmem:[%s2 + $0x80] sm:$0xf]
  %v1945 = vld [vmem:[%s2 + $0x84] sm:$0xff]
  %v1946 = vld [vmem:[%s2 + $0x8c] sm:$0xf]
  %v1947 = vld [vmem:[%s2 + $0x90] sm:$0xff]
  %v1948 = vld [vmem:[%s2 + $0x98] sm:$0xf]
  %v1949 = vld [vmem:[%s2 + $0x9c] sm:$0xff]
  %v1950 = vld [vmem:[%s2 + $0xa4] sm:$0xf]
  %v1951 = vld [vmem:[%s2 + $0xa8] sm:$0xff]
  %v1952 = vld [vmem:[%s2 + $0xb0] sm:$0xf]
  %v1953 = vld [vmem:[%s2 + $0xb4] sm:$0xff]
  %v1954 = vld [vmem:[%s2 + $0xbc] sm:$0xf]
  %v1955 = vld [vmem:[%s4] sm:$0x7]
  %v1957 = vlaneseq
  %v1958 = vshrl.u32 %v1957, 7
  %v1959 = vsub.s32 0, %v1958
  %v1960 = vrot.slane %v1955, %v1959
  %v1961 = vlaneseq
  %v1962 = vshrl.u32 %v1961, 7
  %v1963 = vsub.s32 1, %v1962
  %v1964 = vrot.slane %v1955, %v1963
  %v1965 = vlaneseq
  %v1966 = vshrl.u32 %v1965, 7
  %v1967 = vsub.s32 2, %v1966
  %v1968 = vrot.slane %v1955, %v1967
  %v2004 = vunpack.c.l.b16 %v1923
  %v2005 = vunpack.c.h.b16 %v1923
  %v2006 = vunpack.c.l.b16 %v1924
  %v2007 = vunpack.c.l.b16 %v1925
  %v2008 = vunpack.c.h.b16 %v1925
  %v2009 = vunpack.c.l.b16 %v1926
  %v2010 = vunpack.c.l.b16 %v1927
  %v2011 = vunpack.c.h.b16 %v1927
  %v2012 = vunpack.c.l.b16 %v1928
  %v2013 = vunpack.c.l.b16 %v1929
  %v2014 = vunpack.c.h.b16 %v1929
  %v2015 = vunpack.c.l.b16 %v1930
  %v2016 = vunpack.c.l.b16 %v1931
  %v2017 = vunpack.c.h.b16 %v1931
  %v2018 = vunpack.c.l.b16 %v1932
  %v2019 = vunpack.c.l.b16 %v1933
  %v2020 = vunpack.c.h.b16 %v1933
  %v2021 = vunpack.c.l.b16 %v1934
  %v2022 = vunpack.c.l.b16 %v1935
  %v2023 = vunpack.c.h.b16 %v1935
  %v2024 = vunpack.c.l.b16 %v1936
  %v2025 = vunpack.c.l.b16 %v1937
  %v2026 = vunpack.c.h.b16 %v1937
  %v2027 = vunpack.c.l.b16 %v1938
  %v2028 = vunpack.c.l.b16 %v1939
  %v2029 = vunpack.c.h.b16 %v1939
  %v2030 = vunpack.c.l.b16 %v1940
  %v2031 = vunpack.c.l.b16 %v1941
  %v2032 = vunpack.c.h.b16 %v1941
  %v2033 = vunpack.c.l.b16 %v1942
  %v2034 = vunpack.c.l.b16 %v1943
  %v2035 = vunpack.c.h.b16 %v1943
  %v2036 = vunpack.c.l.b16 %v1944
  %v2037 = vunpack.c.l.b16 %v1945
  %v2038 = vunpack.c.h.b16 %v1945
  %v2039 = vunpack.c.l.b16 %v1946
  %v2040 = vunpack.c.l.b16 %v1947
  %v2041 = vunpack.c.h.b16 %v1947
  %v2042 = vunpack.c.l.b16 %v1948
  %v2043 = vunpack.c.l.b16 %v1949
  %v2044 = vunpack.c.h.b16 %v1949
  %v2045 = vunpack.c.l.b16 %v1950
  %v2046 = vunpack.c.l.b16 %v1951
  %v2047 = vunpack.c.h.b16 %v1951
  %v2048 = vunpack.c.l.b16 %v1952
  %v2049 = vunpack.c.l.b16 %v1953
  %v2050 = vunpack.c.h.b16 %v1953
  %v2051 = vunpack.c.l.b16 %v1954
  %v2052 = vpack.c.b16 %v2007, %v2004
  %v2053 = vpack.c.b16 %v2008, %v2005
  %v2054 = vpack.c.b16 %v2009, %v2006
  %v2055 = vpack.c.b16 %v2013, %v2010
  %v2056 = vpack.c.b16 %v2014, %v2011
  %v2057 = vpack.c.b16 %v2015, %v2012
  %v2058 = vpack.c.b16 %v2019, %v2016
  %v2059 = vpack.c.b16 %v2020, %v2017
  %v2060 = vpack.c.b16 %v2021, %v2018
  %v2061 = vpack.c.b16 %v2025, %v2022
  %v2062 = vpack.c.b16 %v2026, %v2023
  %v2063 = vpack.c.b16 %v2027, %v2024
  %v2064 = vpack.c.b16 %v2031, %v2028
  %v2065 = vpack.c.b16 %v2032, %v2029
  %v2066 = vpack.c.b16 %v2033, %v2030
  %v2067 = vpack.c.b16 %v2037, %v2034
  %v2068 = vpack.c.b16 %v2038, %v2035
  %v2069 = vpack.c.b16 %v2039, %v2036
  %v2070 = vpack.c.b16 %v2043, %v2040
  %v2071 = vpack.c.b16 %v2044, %v2041
  %v2072 = vpack.c.b16 %v2045, %v2042
  %v2073 = vpack.c.b16 %v2049, %v2046
  %v2074 = vpack.c.b16 %v2050, %v2047
  %v2075 = vpack.c.b16 %v2051, %v2048
  %2100 = vmatprep.subr.bf16.mxu0 %v2074
  %2101 = vmatpush1.bf16.msra.mxu0 %v2073
  %2102 = vmatprep.subr.bf16.mxu0 %v2071
  %2103 = vmatpush1.bf16.msra.mxu0 %v2070
  %2104 = vmatprep.subr.bf16.mxu0 %v2068
  %2105 = vmatpush1.bf16.msra.mxu0 %v2067
  %2106 = vmatprep.subr.bf16.mxu0 %v2065
  %2107 = vmatpush1.bf16.msra.mxu0 %v2064
  %2108 = vmatprep.subr.bf16.mxu0 %v2062
  %2109 = vmatpush1.bf16.msra.mxu0 %v2061
  %2110 = vmatprep.subr.bf16.mxu0 %v2059
  %2111 = vmatpush1.bf16.msra.mxu0 %v2058
  %2112 = vmatprep.subr.bf16.mxu0 %v2056
  %2113 = vmatpush1.bf16.msra.mxu0 %v2055
  %2114 = vmatprep.subr.bf16.mxu0 %v2053
  %2115 = vmatpush1.bf16.msra.mxu0 %v2052
  %2116 = vmatprep.subr.bf16.mxu0 0
  %2117 = vmatpush2.bf16.msra.mxu0 0
  %2118 = vmatprep.subr.bf16.mxu0 0
  %2119 = vmatpush2.bf16.msra.mxu0 0
  %2120 = vmatprep.subr.bf16.mxu0 0
  %2121 = vmatpush2.bf16.msra.mxu0 0
  %2122 = vmatprep.subr.bf16.mxu0 0
  %2123 = vmatpush2.bf16.msra.mxu0 0
  %2124 = vmatprep.subr.bf16.mxu0 0
  %2125 = vmatpush2.bf16.msra.mxu0 0
  %2126 = vmatprep.subr.bf16.mxu0 0
  %2127 = vmatpush2.bf16.msra.mxu0 0
  %2128 = vmatprep.subr.bf16.mxu0 0
  %2129 = vmatpush2.bf16.msra.mxu0 0
  %2130 = vmatprep.subr.bf16.mxu0 0
  %2131 = vmatpush2.bf16.msra.mxu0 0
  %2132 = vmatprep.mubr.bf16.mxu0 0
  %2133 = vmatmul.mubr.bf16.gmra.mxu0 %v1660
  %v2134 = vpop.f32.mrf.mxu0
  %v2135 = vadd.f32 %v1960, %v2134
  %v2136 = vpop.f32.mrf.mxu0
  %v2137 = vadd.f32 %v1964, %v2136
  %v2138 = vpop.f32.mrf.mxu0
  %v2139 = vpop.f32.mrf.mxu0
  %2140 = vdwg.mxu0
  %2141 = vmatprep.subr.bf16.mxu0 0
  %2142 = vmatpush1.bf16.msra.mxu0 %v2075
  %2143 = vmatprep.subr.bf16.mxu0 0
  %2144 = vmatpush1.bf16.msra.mxu0 %v2072
  %2145 = vmatprep.subr.bf16.mxu0 0
  %2146 = vmatpush1.bf16.msra.mxu0 %v2069
  %2147 = vmatprep.subr.bf16.mxu0 0
  %2148 = vmatpush1.bf16.msra.mxu0 %v2066
  %2149 = vmatprep.subr.bf16.mxu0 0
  %2150 = vmatpush1.bf16.msra.mxu0 %v2063
  %2151 = vmatprep.subr.bf16.mxu0 0
  %2152 = vmatpush1.bf16.msra.mxu0 %v2060
  %2153 = vmatprep.subr.bf16.mxu0 0
  %2154 = vmatpush1.bf16.msra.mxu0 %v2057
  %2155 = vmatprep.subr.bf16.mxu0 0
  %2156 = vmatpush1.bf16.msra.mxu0 %v2054
  %2157 = vmatprep.subr.bf16.mxu0 0
  %2158 = vmatpush2.bf16.msra.mxu0 0
  %2159 = vmatprep.subr.bf16.mxu0 0
  %2160 = vmatpush2.bf16.msra.mxu0 0
  %2161 = vmatprep.subr.bf16.mxu0 0
  %2162 = vmatpush2.bf16.msra.mxu0 0
  %2163 = vmatprep.subr.bf16.mxu0 0
  %2164 = vmatpush2.bf16.msra.mxu0 0
  %2165 = vmatprep.subr.bf16.mxu0 0
  %2166 = vmatpush2.bf16.msra.mxu0 0
  %2167 = vmatprep.subr.bf16.mxu0 0
  %2168 = vmatpush2.bf16.msra.mxu0 0
  %2169 = vmatprep.subr.bf16.mxu0 0
  %2170 = vmatpush2.bf16.msra.mxu0 0
  %2171 = vmatprep.subr.bf16.mxu0 0
  %2172 = vmatpush2.bf16.msra.mxu0 0
  %2173 = vmatprep.mubr.bf16.mxu0 0
  %2174 = vmatmul.mubr.bf16.gmra.mxu0 %v1660
  %v2175 = vpop.f32.mrf.mxu0
  %v2176 = vadd.f32 %v1968, %v2175
  %v2177 = vpop.f32.mrf.mxu0
  %v2178 = vpop.f32.mrf.mxu0
  %v2179 = vpop.f32.mrf.mxu0
  %2180 = vdwg.mxu0
  %v2181 = vadd.f32 %v1877, %v2135
  %v2182 = vxor.u32 %v2181, 2147483648
  %v2183 = vmul.f32 %v2182, 1.442695
  %v2184 = vpow.pop %v2183
  %v2185 = vadd.f32 %v2184, 1.0
  %v2186 = vrcp.pop %v2185
  %v2187 = vmul.f32 1.0, %v2186
  %v2188 = vadd.f32 %v1879, %v2137
  %v2189 = vxor.u32 %v2188, 2147483648
  %v2190 = vmul.f32 %v2189, 1.442695
  %v2191 = vpow.pop %v2190
  %v2192 = vadd.f32 %v2191, 1.0
  %v2193 = vrcp.pop %v2192
  %v2194 = vmul.f32 1.0, %v2193
  %v2195 = vmul.f32 %v2187, %v2176
  %v2196 = vadd.f32 %v1918, %v2195
  %v2197 = vtanh.pop %v2196
  %v2198 = vsub.f32 1.0, %v2194
  %v2199 = vmul.f32 %v2198, %v2197
  %v2200 = vmul.f32 %v2194, %v1659
  %v2201 = vadd.f32 %v2199, %v2200
  %v2202 = vpack.c.bf16 %v2201, %v2201
  %s2203 = scalar_lea.vmem [#allocation2], 12
  %2204 = vst [vmem:[%s2203] sm:$0xf] %v2202
  %s2205 = scalar_lea.vmem %s0, 16
  %v2206 = vld [vmem:[%s2205] sm:$0xf]
  %v2207 = vld [vmem:[%s1] sm:$0xff]
  %v2208 = vld [vmem:[%s1 + $0x8] sm:$0xf]
  %v2209 = vld [vmem:[%s1 + $0xc] sm:$0xff]
  %v2210 = vld [vmem:[%s1 + $0x14] sm:$0xf]
  %v2211 = vld [vmem:[%s1 + $0x18] sm:$0xff]
  %v2212 = vld [vmem:[%s1 + $0x20] sm:$0xf]
  %v2213 = vld [vmem:[%s1 + $0x24] sm:$0xff]
  %v2214 = vld [vmem:[%s1 + $0x2c] sm:$0xf]
  %v2215 = vld [vmem:[%s1 + $0x30] sm:$0xff]
  %v2216 = vld [vmem:[%s1 + $0x38] sm:$0xf]
  %v2217 = vld [vmem:[%s1 + $0x3c] sm:$0xff]
  %v2218 = vld [vmem:[%s1 + $0x44] sm:$0xf]
  %v2219 = vld [vmem:[%s1 + $0x48] sm:$0xff]
  %v2220 = vld [vmem:[%s1 + $0x50] sm:$0xf]
  %v2221 = vld [vmem:[%s1 + $0x54] sm:$0xff]
  %v2222 = vld [vmem:[%s1 + $0x5c] sm:$0xf]
  %v2223 = vld [vmem:[%s1 + $0x60] sm:$0xff]
  %v2224 = vld [vmem:[%s1 + $0x68] sm:$0xf]
  %v2225 = vld [vmem:[%s1 + $0x6c] sm:$0xff]
  %v2226 = vld [vmem:[%s1 + $0x74] sm:$0xf]
  %v2227 = vld [vmem:[%s1 + $0x78] sm:$0xff]
  %v2228 = vld [vmem:[%s1 + $0x80] sm:$0xf]
  %v2229 = vld [vmem:[%s1 + $0x84] sm:$0xff]
  %v2230 = vld [vmem:[%s1 + $0x8c] sm:$0xf]
  %v2231 = vld [vmem:[%s1 + $0x90] sm:$0xff]
  %v2232 = vld [vmem:[%s1 + $0x98] sm:$0xf]
  %v2233 = vld [vmem:[%s1 + $0x9c] sm:$0xff]
  %v2234 = vld [vmem:[%s1 + $0xa4] sm:$0xf]
  %v2235 = vld [vmem:[%s1 + $0xa8] sm:$0xff]
  %v2236 = vld [vmem:[%s1 + $0xb0] sm:$0xf]
  %v2237 = vld [vmem:[%s1 + $0xb4] sm:$0xff]
  %v2238 = vld [vmem:[%s1 + $0xbc] sm:$0xf]
  %v2239 = vld [vmem:[%s3] sm:$0x7]
  %v2241 = vlaneseq
  %v2242 = vshrl.u32 %v2241, 7
  %v2243 = vsub.s32 0, %v2242
  %v2244 = vrot.slane %v2239, %v2243
  %v2245 = vlaneseq
  %v2246 = vshrl.u32 %v2245, 7
  %v2247 = vsub.s32 1, %v2246
  %v2248 = vrot.slane %v2239, %v2247
  %v2249 = vlaneseq
  %v2250 = vshrl.u32 %v2249, 7
  %v2251 = vsub.s32 2, %v2250
  %v2252 = vrot.slane %v2239, %v2251
  %v2288 = vunpack.c.l.b16 %v2207
  %v2289 = vunpack.c.h.b16 %v2207
  %v2290 = vunpack.c.l.b16 %v2208
  %v2291 = vunpack.c.l.b16 %v2209
  %v2292 = vunpack.c.h.b16 %v2209
  %v2293 = vunpack.c.l.b16 %v2210
  %v2294 = vunpack.c.l.b16 %v2211
  %v2295 = vunpack.c.h.b16 %v2211
  %v2296 = vunpack.c.l.b16 %v2212
  %v2297 = vunpack.c.l.b16 %v2213
  %v2298 = vunpack.c.h.b16 %v2213
  %v2299 = vunpack.c.l.b16 %v2214
  %v2300 = vunpack.c.l.b16 %v2215
  %v2301 = vunpack.c.h.b16 %v2215
  %v2302 = vunpack.c.l.b16 %v2216
  %v2303 = vunpack.c.l.b16 %v2217
  %v2304 = vunpack.c.h.b16 %v2217
  %v2305 = vunpack.c.l.b16 %v2218
  %v2306 = vunpack.c.l.b16 %v2219
  %v2307 = vunpack.c.h.b16 %v2219
  %v2308 = vunpack.c.l.b16 %v2220
  %v2309 = vunpack.c.l.b16 %v2221
  %v2310 = vunpack.c.h.b16 %v2221
  %v2311 = vunpack.c.l.b16 %v2222
  %v2312 = vunpack.c.l.b16 %v2223
  %v2313 = vunpack.c.h.b16 %v2223
  %v2314 = vunpack.c.l.b16 %v2224
  %v2315 = vunpack.c.l.b16 %v2225
  %v2316 = vunpack.c.h.b16 %v2225
  %v2317 = vunpack.c.l.b16 %v2226
  %v2318 = vunpack.c.l.b16 %v2227
  %v2319 = vunpack.c.h.b16 %v2227
  %v2320 = vunpack.c.l.b16 %v2228
  %v2321 = vunpack.c.l.b16 %v2229
  %v2322 = vunpack.c.h.b16 %v2229
  %v2323 = vunpack.c.l.b16 %v2230
  %v2324 = vunpack.c.l.b16 %v2231
  %v2325 = vunpack.c.h.b16 %v2231
  %v2326 = vunpack.c.l.b16 %v2232
  %v2327 = vunpack.c.l.b16 %v2233
  %v2328 = vunpack.c.h.b16 %v2233
  %v2329 = vunpack.c.l.b16 %v2234
  %v2330 = vunpack.c.l.b16 %v2235
  %v2331 = vunpack.c.h.b16 %v2235
  %v2332 = vunpack.c.l.b16 %v2236
  %v2333 = vunpack.c.l.b16 %v2237
  %v2334 = vunpack.c.h.b16 %v2237
  %v2335 = vunpack.c.l.b16 %v2238
  %v2336 = vpack.c.b16 %v2291, %v2288
  %v2337 = vpack.c.b16 %v2292, %v2289
  %v2338 = vpack.c.b16 %v2293, %v2290
  %v2339 = vpack.c.b16 %v2297, %v2294
  %v2340 = vpack.c.b16 %v2298, %v2295
  %v2341 = vpack.c.b16 %v2299, %v2296
  %v2342 = vpack.c.b16 %v2303, %v2300
  %v2343 = vpack.c.b16 %v2304, %v2301
  %v2344 = vpack.c.b16 %v2305, %v2302
  %v2345 = vpack.c.b16 %v2309, %v2306
  %v2346 = vpack.c.b16 %v2310, %v2307
  %v2347 = vpack.c.b16 %v2311, %v2308
  %v2348 = vpack.c.b16 %v2315, %v2312
  %v2349 = vpack.c.b16 %v2316, %v2313
  %v2350 = vpack.c.b16 %v2317, %v2314
  %v2351 = vpack.c.b16 %v2321, %v2318
  %v2352 = vpack.c.b16 %v2322, %v2319
  %v2353 = vpack.c.b16 %v2323, %v2320
  %v2354 = vpack.c.b16 %v2327, %v2324
  %v2355 = vpack.c.b16 %v2328, %v2325
  %v2356 = vpack.c.b16 %v2329, %v2326
  %v2357 = vpack.c.b16 %v2333, %v2330
  %v2358 = vpack.c.b16 %v2334, %v2331
  %v2359 = vpack.c.b16 %v2335, %v2332
  %2384 = vmatprep.subr.bf16.mxu0 %v2358
  %2385 = vmatpush1.bf16.msra.mxu0 %v2357
  %2386 = vmatprep.subr.bf16.mxu0 %v2355
  %2387 = vmatpush1.bf16.msra.mxu0 %v2354
  %2388 = vmatprep.subr.bf16.mxu0 %v2352
  %2389 = vmatpush1.bf16.msra.mxu0 %v2351
  %2390 = vmatprep.subr.bf16.mxu0 %v2349
  %2391 = vmatpush1.bf16.msra.mxu0 %v2348
  %2392 = vmatprep.subr.bf16.mxu0 %v2346
  %2393 = vmatpush1.bf16.msra.mxu0 %v2345
  %2394 = vmatprep.subr.bf16.mxu0 %v2343
  %2395 = vmatpush1.bf16.msra.mxu0 %v2342
  %2396 = vmatprep.subr.bf16.mxu0 %v2340
  %2397 = vmatpush1.bf16.msra.mxu0 %v2339
  %2398 = vmatprep.subr.bf16.mxu0 %v2337
  %2399 = vmatpush1.bf16.msra.mxu0 %v2336
  %2400 = vmatprep.subr.bf16.mxu0 0
  %2401 = vmatpush2.bf16.msra.mxu0 0
  %2402 = vmatprep.subr.bf16.mxu0 0
  %2403 = vmatpush2.bf16.msra.mxu0 0
  %2404 = vmatprep.subr.bf16.mxu0 0
  %2405 = vmatpush2.bf16.msra.mxu0 0
  %2406 = vmatprep.subr.bf16.mxu0 0
  %2407 = vmatpush2.bf16.msra.mxu0 0
  %2408 = vmatprep.subr.bf16.mxu0 0
  %2409 = vmatpush2.bf16.msra.mxu0 0
  %2410 = vmatprep.subr.bf16.mxu0 0
  %2411 = vmatpush2.bf16.msra.mxu0 0
  %2412 = vmatprep.subr.bf16.mxu0 0
  %2413 = vmatpush2.bf16.msra.mxu0 0
  %2414 = vmatprep.subr.bf16.mxu0 0
  %2415 = vmatpush2.bf16.msra.mxu0 0
  %2416 = vmatprep.mubr.bf16.mxu0 0
  %2417 = vmatmul.mubr.bf16.gmra.mxu0 %v2206
  %v2418 = vpop.f32.mrf.mxu0
  %v2419 = vadd.f32 %v2244, %v2418
  %v2420 = vpop.f32.mrf.mxu0
  %v2421 = vadd.f32 %v2248, %v2420
  %v2422 = vpop.f32.mrf.mxu0
  %v2423 = vpop.f32.mrf.mxu0
  %2424 = vdwg.mxu0
  %2425 = vmatprep.subr.bf16.mxu0 0
  %2426 = vmatpush1.bf16.msra.mxu0 %v2359
  %2427 = vmatprep.subr.bf16.mxu0 0
  %2428 = vmatpush1.bf16.msra.mxu0 %v2356
  %2429 = vmatprep.subr.bf16.mxu0 0
  %2430 = vmatpush1.bf16.msra.mxu0 %v2353
  %2431 = vmatprep.subr.bf16.mxu0 0
  %2432 = vmatpush1.bf16.msra.mxu0 %v2350
  %2433 = vmatprep.subr.bf16.mxu0 0
  %2434 = vmatpush1.bf16.msra.mxu0 %v2347
  %2435 = vmatprep.subr.bf16.mxu0 0
  %2436 = vmatpush1.bf16.msra.mxu0 %v2344
  %2437 = vmatprep.subr.bf16.mxu0 0
  %2438 = vmatpush1.bf16.msra.mxu0 %v2341
  %2439 = vmatprep.subr.bf16.mxu0 0
  %2440 = vmatpush1.bf16.msra.mxu0 %v2338
  %2441 = vmatprep.subr.bf16.mxu0 0
  %2442 = vmatpush2.bf16.msra.mxu0 0
  %2443 = vmatprep.subr.bf16.mxu0 0
  %2444 = vmatpush2.bf16.msra.mxu0 0
  %2445 = vmatprep.subr.bf16.mxu0 0
  %2446 = vmatpush2.bf16.msra.mxu0 0
  %2447 = vmatprep.subr.bf16.mxu0 0
  %2448 = vmatpush2.bf16.msra.mxu0 0
  %2449 = vmatprep.subr.bf16.mxu0 0
  %2450 = vmatpush2.bf16.msra.mxu0 0
  %2451 = vmatprep.subr.bf16.mxu0 0
  %2452 = vmatpush2.bf16.msra.mxu0 0
  %2453 = vmatprep.subr.bf16.mxu0 0
  %2454 = vmatpush2.bf16.msra.mxu0 0
  %2455 = vmatprep.subr.bf16.mxu0 0
  %2456 = vmatpush2.bf16.msra.mxu0 0
  %2457 = vmatprep.mubr.bf16.mxu0 0
  %2458 = vmatmul.mubr.bf16.gmra.mxu0 %v2206
  %v2459 = vpop.f32.mrf.mxu0
  %v2460 = vadd.f32 %v2252, %v2459
  %v2461 = vpop.f32.mrf.mxu0
  %v2462 = vpop.f32.mrf.mxu0
  %v2463 = vpop.f32.mrf.mxu0
  %2464 = vdwg.mxu0
  %v2465 = vld [vmem:[%s2] sm:$0xff]
  %v2466 = vld [vmem:[%s2 + $0x8] sm:$0xf]
  %v2467 = vld [vmem:[%s2 + $0xc] sm:$0xff]
  %v2468 = vld [vmem:[%s2 + $0x14] sm:$0xf]
  %v2469 = vld [vmem:[%s2 + $0x18] sm:$0xff]
  %v2470 = vld [vmem:[%s2 + $0x20] sm:$0xf]
  %v2471 = vld [vmem:[%s2 + $0x24] sm:$0xff]
  %v2472 = vld [vmem:[%s2 + $0x2c] sm:$0xf]
  %v2473 = vld [vmem:[%s2 + $0x30] sm:$0xff]
  %v2474 = vld [vmem:[%s2 + $0x38] sm:$0xf]
  %v2475 = vld [vmem:[%s2 + $0x3c] sm:$0xff]
  %v2476 = vld [vmem:[%s2 + $0x44] sm:$0xf]
  %v2477 = vld [vmem:[%s2 + $0x48] sm:$0xff]
  %v2478 = vld [vmem:[%s2 + $0x50] sm:$0xf]
  %v2479 = vld [vmem:[%s2 + $0x54] sm:$0xff]
  %v2480 = vld [vmem:[%s2 + $0x5c] sm:$0xf]
  %v2481 = vld [vmem:[%s2 + $0x60] sm:$0xff]
  %v2482 = vld [vmem:[%s2 + $0x68] sm:$0xf]
  %v2483 = vld [vmem:[%s2 + $0x6c] sm:$0xff]
  %v2484 = vld [vmem:[%s2 + $0x74] sm:$0xf]
  %v2485 = vld [vmem:[%s2 + $0x78] sm:$0xff]
  %v2486 = vld [vmem:[%s2 + $0x80] sm:$0xf]
  %v2487 = vld [vmem:[%s2 + $0x84] sm:$0xff]
  %v2488 = vld [vmem:[%s2 + $0x8c] sm:$0xf]
  %v2489 = vld [vmem:[%s2 + $0x90] sm:$0xff]
  %v2490 = vld [vmem:[%s2 + $0x98] sm:$0xf]
  %v2491 = vld [vmem:[%s2 + $0x9c] sm:$0xff]
  %v2492 = vld [vmem:[%s2 + $0xa4] sm:$0xf]
  %v2493 = vld [vmem:[%s2 + $0xa8] sm:$0xff]
  %v2494 = vld [vmem:[%s2 + $0xb0] sm:$0xf]
  %v2495 = vld [vmem:[%s2 + $0xb4] sm:$0xff]
  %v2496 = vld [vmem:[%s2 + $0xbc] sm:$0xf]
  %v2497 = vld [vmem:[%s4] sm:$0x7]
  %v2499 = vlaneseq
  %v2500 = vshrl.u32 %v2499, 7
  %v2501 = vsub.s32 0, %v2500
  %v2502 = vrot.slane %v2497, %v2501
  %v2503 = vlaneseq
  %v2504 = vshrl.u32 %v2503, 7
  %v2505 = vsub.s32 1, %v2504
  %v2506 = vrot.slane %v2497, %v2505
  %v2507 = vlaneseq
  %v2508 = vshrl.u32 %v2507, 7
  %v2509 = vsub.s32 2, %v2508
  %v2510 = vrot.slane %v2497, %v2509
  %v2546 = vunpack.c.l.b16 %v2465
  %v2547 = vunpack.c.h.b16 %v2465
  %v2548 = vunpack.c.l.b16 %v2466
  %v2549 = vunpack.c.l.b16 %v2467
  %v2550 = vunpack.c.h.b16 %v2467
  %v2551 = vunpack.c.l.b16 %v2468
  %v2552 = vunpack.c.l.b16 %v2469
  %v2553 = vunpack.c.h.b16 %v2469
  %v2554 = vunpack.c.l.b16 %v2470
  %v2555 = vunpack.c.l.b16 %v2471
  %v2556 = vunpack.c.h.b16 %v2471
  %v2557 = vunpack.c.l.b16 %v2472
  %v2558 = vunpack.c.l.b16 %v2473
  %v2559 = vunpack.c.h.b16 %v2473
  %v2560 = vunpack.c.l.b16 %v2474
  %v2561 = vunpack.c.l.b16 %v2475
  %v2562 = vunpack.c.h.b16 %v2475
  %v2563 = vunpack.c.l.b16 %v2476
  %v2564 = vunpack.c.l.b16 %v2477
  %v2565 = vunpack.c.h.b16 %v2477
  %v2566 = vunpack.c.l.b16 %v2478
  %v2567 = vunpack.c.l.b16 %v2479
  %v2568 = vunpack.c.h.b16 %v2479
  %v2569 = vunpack.c.l.b16 %v2480
  %v2570 = vunpack.c.l.b16 %v2481
  %v2571 = vunpack.c.h.b16 %v2481
  %v2572 = vunpack.c.l.b16 %v2482
  %v2573 = vunpack.c.l.b16 %v2483
  %v2574 = vunpack.c.h.b16 %v2483
  %v2575 = vunpack.c.l.b16 %v2484
  %v2576 = vunpack.c.l.b16 %v2485
  %v2577 = vunpack.c.h.b16 %v2485
  %v2578 = vunpack.c.l.b16 %v2486
  %v2579 = vunpack.c.l.b16 %v2487
  %v2580 = vunpack.c.h.b16 %v2487
  %v2581 = vunpack.c.l.b16 %v2488
  %v2582 = vunpack.c.l.b16 %v2489
  %v2583 = vunpack.c.h.b16 %v2489
  %v2584 = vunpack.c.l.b16 %v2490
  %v2585 = vunpack.c.l.b16 %v2491
  %v2586 = vunpack.c.h.b16 %v2491
  %v2587 = vunpack.c.l.b16 %v2492
  %v2588 = vunpack.c.l.b16 %v2493
  %v2589 = vunpack.c.h.b16 %v2493
  %v2590 = vunpack.c.l.b16 %v2494
  %v2591 = vunpack.c.l.b16 %v2495
  %v2592 = vunpack.c.h.b16 %v2495
  %v2593 = vunpack.c.l.b16 %v2496
  %v2594 = vpack.c.b16 %v2549, %v2546
  %v2595 = vpack.c.b16 %v2550, %v2547
  %v2596 = vpack.c.b16 %v2551, %v2548
  %v2597 = vpack.c.b16 %v2555, %v2552
  %v2598 = vpack.c.b16 %v2556, %v2553
  %v2599 = vpack.c.b16 %v2557, %v2554
  %v2600 = vpack.c.b16 %v2561, %v2558
  %v2601 = vpack.c.b16 %v2562, %v2559
  %v2602 = vpack.c.b16 %v2563, %v2560
  %v2603 = vpack.c.b16 %v2567, %v2564
  %v2604 = vpack.c.b16 %v2568, %v2565
  %v2605 = vpack.c.b16 %v2569, %v2566
  %v2606 = vpack.c.b16 %v2573, %v2570
  %v2607 = vpack.c.b16 %v2574, %v2571
  %v2608 = vpack.c.b16 %v2575, %v2572
  %v2609 = vpack.c.b16 %v2579, %v2576
  %v2610 = vpack.c.b16 %v2580, %v2577
  %v2611 = vpack.c.b16 %v2581, %v2578
  %v2612 = vpack.c.b16 %v2585, %v2582
  %v2613 = vpack.c.b16 %v2586, %v2583
  %v2614 = vpack.c.b16 %v2587, %v2584
  %v2615 = vpack.c.b16 %v2591, %v2588
  %v2616 = vpack.c.b16 %v2592, %v2589
  %v2617 = vpack.c.b16 %v2593, %v2590
  %2642 = vmatprep.subr.bf16.mxu0 %v2616
  %2643 = vmatpush1.bf16.msra.mxu0 %v2615
  %2644 = vmatprep.subr.bf16.mxu0 %v2613
  %2645 = vmatpush1.bf16.msra.mxu0 %v2612
  %2646 = vmatprep.subr.bf16.mxu0 %v2610
  %2647 = vmatpush1.bf16.msra.mxu0 %v2609
  %2648 = vmatprep.subr.bf16.mxu0 %v2607
  %2649 = vmatpush1.bf16.msra.mxu0 %v2606
  %2650 = vmatprep.subr.bf16.mxu0 %v2604
  %2651 = vmatpush1.bf16.msra.mxu0 %v2603
  %2652 = vmatprep.subr.bf16.mxu0 %v2601
  %2653 = vmatpush1.bf16.msra.mxu0 %v2600
  %2654 = vmatprep.subr.bf16.mxu0 %v2598
  %2655 = vmatpush1.bf16.msra.mxu0 %v2597
  %2656 = vmatprep.subr.bf16.mxu0 %v2595
  %2657 = vmatpush1.bf16.msra.mxu0 %v2594
  %2658 = vmatprep.subr.bf16.mxu0 0
  %2659 = vmatpush2.bf16.msra.mxu0 0
  %2660 = vmatprep.subr.bf16.mxu0 0
  %2661 = vmatpush2.bf16.msra.mxu0 0
  %2662 = vmatprep.subr.bf16.mxu0 0
  %2663 = vmatpush2.bf16.msra.mxu0 0
  %2664 = vmatprep.subr.bf16.mxu0 0
  %2665 = vmatpush2.bf16.msra.mxu0 0
  %2666 = vmatprep.subr.bf16.mxu0 0
  %2667 = vmatpush2.bf16.msra.mxu0 0
  %2668 = vmatprep.subr.bf16.mxu0 0
  %2669 = vmatpush2.bf16.msra.mxu0 0
  %2670 = vmatprep.subr.bf16.mxu0 0
  %2671 = vmatpush2.bf16.msra.mxu0 0
  %2672 = vmatprep.subr.bf16.mxu0 0
  %2673 = vmatpush2.bf16.msra.mxu0 0
  %2674 = vmatprep.mubr.bf16.mxu0 0
  %2675 = vmatmul.mubr.bf16.gmra.mxu0 %v2202
  %v2676 = vpop.f32.mrf.mxu0
  %v2677 = vadd.f32 %v2502, %v2676
  %v2678 = vpop.f32.mrf.mxu0
  %v2679 = vadd.f32 %v2506, %v2678
  %v2680 = vpop.f32.mrf.mxu0
  %v2681 = vpop.f32.mrf.mxu0
  %2682 = vdwg.mxu0
  %2683 = vmatprep.subr.bf16.mxu0 0
  %2684 = vmatpush1.bf16.msra.mxu0 %v2617
  %2685 = vmatprep.subr.bf16.mxu0 0
  %2686 = vmatpush1.bf16.msra.mxu0 %v2614
  %2687 = vmatprep.subr.bf16.mxu0 0
  %2688 = vmatpush1.bf16.msra.mxu0 %v2611
  %2689 = vmatprep.subr.bf16.mxu0 0
  %2690 = vmatpush1.bf16.msra.mxu0 %v2608
  %2691 = vmatprep.subr.bf16.mxu0 0
  %2692 = vmatpush1.bf16.msra.mxu0 %v2605
  %2693 = vmatprep.subr.bf16.mxu0 0
  %2694 = vmatpush1.bf16.msra.mxu0 %v2602
  %2695 = vmatprep.subr.bf16.mxu0 0
  %2696 = vmatpush1.bf16.msra.mxu0 %v2599
  %2697 = vmatprep.subr.bf16.mxu0 0
  %2698 = vmatpush1.bf16.msra.mxu0 %v2596
  %2699 = vmatprep.subr.bf16.mxu0 0
  %2700 = vmatpush2.bf16.msra.mxu0 0
  %2701 = vmatprep.subr.bf16.mxu0 0
  %2702 = vmatpush2.bf16.msra.mxu0 0
  %2703 = vmatprep.subr.bf16.mxu0 0
  %2704 = vmatpush2.bf16.msra.mxu0 0
  %2705 = vmatprep.subr.bf16.mxu0 0
  %2706 = vmatpush2.bf16.msra.mxu0 0
  %2707 = vmatprep.subr.bf16.mxu0 0
  %2708 = vmatpush2.bf16.msra.mxu0 0
  %2709 = vmatprep.subr.bf16.mxu0 0
  %2710 = vmatpush2.bf16.msra.mxu0 0
  %2711 = vmatprep.subr.bf16.mxu0 0
  %2712 = vmatpush2.bf16.msra.mxu0 0
  %2713 = vmatprep.subr.bf16.mxu0 0
  %2714 = vmatpush2.bf16.msra.mxu0 0
  %2715 = vmatprep.mubr.bf16.mxu0 0
  %2716 = vmatmul.mubr.bf16.gmra.mxu0 %v2202
  %v2717 = vpop.f32.mrf.mxu0
  %v2718 = vadd.f32 %v2510, %v2717
  %v2719 = vpop.f32.mrf.mxu0
  %v2720 = vpop.f32.mrf.mxu0
  %v2721 = vpop.f32.mrf.mxu0
  %2722 = vdwg.mxu0
  %v2723 = vadd.f32 %v2419, %v2677
  %v2724 = vxor.u32 %v2723, 2147483648
  %v2725 = vmul.f32 %v2724, 1.442695
  %v2726 = vpow.pop %v2725
  %v2727 = vadd.f32 %v2726, 1.0
  %v2728 = vrcp.pop %v2727
  %v2729 = vmul.f32 1.0, %v2728
  %v2730 = vadd.f32 %v2421, %v2679
  %v2731 = vxor.u32 %v2730, 2147483648
  %v2732 = vmul.f32 %v2731, 1.442695
  %v2733 = vpow.pop %v2732
  %v2734 = vadd.f32 %v2733, 1.0
  %v2735 = vrcp.pop %v2734
  %v2736 = vmul.f32 1.0, %v2735
  %v2737 = vmul.f32 %v2729, %v2718
  %v2738 = vadd.f32 %v2460, %v2737
  %v2739 = vtanh.pop %v2738
  %v2740 = vsub.f32 1.0, %v2736
  %v2741 = vmul.f32 %v2740, %v2739
  %v2742 = vmul.f32 %v2736, %v2201
  %v2743 = vadd.f32 %v2741, %v2742
  %v2744 = vpack.c.bf16 %v2743, %v2743
  %s2745 = scalar_lea.vmem [#allocation2], 16
  %2746 = vst [vmem:[%s2745] sm:$0xf] %v2744
  %s2747 = scalar_lea.vmem %s0, 20
  %v2748 = vld [vmem:[%s2747] sm:$0xf]
  %v2749 = vld [vmem:[%s1] sm:$0xff]
  %v2750 = vld [vmem:[%s1 + $0x8] sm:$0xf]
  %v2751 = vld [vmem:[%s1 + $0xc] sm:$0xff]
  %v2752 = vld [vmem:[%s1 + $0x14] sm:$0xf]
  %v2753 = vld [vmem:[%s1 + $0x18] sm:$0xff]
  %v2754 = vld [vmem:[%s1 + $0x20] sm:$0xf]
  %v2755 = vld [vmem:[%s1 + $0x24] sm:$0xff]
  %v2756 = vld [vmem:[%s1 + $0x2c] sm:$0xf]
  %v2757 = vld [vmem:[%s1 + $0x30] sm:$0xff]
  %v2758 = vld [vmem:[%s1 + $0x38] sm:$0xf]
  %v2759 = vld [vmem:[%s1 + $0x3c] sm:$0xff]
  %v2760 = vld [vmem:[%s1 + $0x44] sm:$0xf]
  %v2761 = vld [vmem:[%s1 + $0x48] sm:$0xff]
  %v2762 = vld [vmem:[%s1 + $0x50] sm:$0xf]
  %v2763 = vld [vmem:[%s1 + $0x54] sm:$0xff]
  %v2764 = vld [vmem:[%s1 + $0x5c] sm:$0xf]
  %v2765 = vld [vmem:[%s1 + $0x60] sm:$0xff]
  %v2766 = vld [vmem:[%s1 + $0x68] sm:$0xf]
  %v2767 = vld [vmem:[%s1 + $0x6c] sm:$0xff]
  %v2768 = vld [vmem:[%s1 + $0x74] sm:$0xf]
  %v2769 = vld [vmem:[%s1 + $0x78] sm:$0xff]
  %v2770 = vld [vmem:[%s1 + $0x80] sm:$0xf]
  %v2771 = vld [vmem:[%s1 + $0x84] sm:$0xff]
  %v2772 = vld [vmem:[%s1 + $0x8c] sm:$0xf]
  %v2773 = vld [vmem:[%s1 + $0x90] sm:$0xff]
  %v2774 = vld [vmem:[%s1 + $0x98] sm:$0xf]
  %v2775 = vld [vmem:[%s1 + $0x9c] sm:$0xff]
  %v2776 = vld [vmem:[%s1 + $0xa4] sm:$0xf]
  %v2777 = vld [vmem:[%s1 + $0xa8] sm:$0xff]
  %v2778 = vld [vmem:[%s1 + $0xb0] sm:$0xf]
  %v2779 = vld [vmem:[%s1 + $0xb4] sm:$0xff]
  %v2780 = vld [vmem:[%s1 + $0xbc] sm:$0xf]
  %v2781 = vld [vmem:[%s3] sm:$0x7]
  %v2783 = vlaneseq
  %v2784 = vshrl.u32 %v2783, 7
  %v2785 = vsub.s32 0, %v2784
  %v2786 = vrot.slane %v2781, %v2785
  %v2787 = vlaneseq
  %v2788 = vshrl.u32 %v2787, 7
  %v2789 = vsub.s32 1, %v2788
  %v2790 = vrot.slane %v2781, %v2789
  %v2791 = vlaneseq
  %v2792 = vshrl.u32 %v2791, 7
  %v2793 = vsub.s32 2, %v2792
  %v2794 = vrot.slane %v2781, %v2793
  %v2830 = vunpack.c.l.b16 %v2749
  %v2831 = vunpack.c.h.b16 %v2749
  %v2832 = vunpack.c.l.b16 %v2750
  %v2833 = vunpack.c.l.b16 %v2751
  %v2834 = vunpack.c.h.b16 %v2751
  %v2835 = vunpack.c.l.b16 %v2752
  %v2836 = vunpack.c.l.b16 %v2753
  %v2837 = vunpack.c.h.b16 %v2753
  %v2838 = vunpack.c.l.b16 %v2754
  %v2839 = vunpack.c.l.b16 %v2755
  %v2840 = vunpack.c.h.b16 %v2755
  %v2841 = vunpack.c.l.b16 %v2756
  %v2842 = vunpack.c.l.b16 %v2757
  %v2843 = vunpack.c.h.b16 %v2757
  %v2844 = vunpack.c.l.b16 %v2758
  %v2845 = vunpack.c.l.b16 %v2759
  %v2846 = vunpack.c.h.b16 %v2759
  %v2847 = vunpack.c.l.b16 %v2760
  %v2848 = vunpack.c.l.b16 %v2761
  %v2849 = vunpack.c.h.b16 %v2761
  %v2850 = vunpack.c.l.b16 %v2762
  %v2851 = vunpack.c.l.b16 %v2763
  %v2852 = vunpack.c.h.b16 %v2763
  %v2853 = vunpack.c.l.b16 %v2764
  %v2854 = vunpack.c.l.b16 %v2765
  %v2855 = vunpack.c.h.b16 %v2765
  %v2856 = vunpack.c.l.b16 %v2766
  %v2857 = vunpack.c.l.b16 %v2767
  %v2858 = vunpack.c.h.b16 %v2767
  %v2859 = vunpack.c.l.b16 %v2768
  %v2860 = vunpack.c.l.b16 %v2769
  %v2861 = vunpack.c.h.b16 %v2769
  %v2862 = vunpack.c.l.b16 %v2770
  %v2863 = vunpack.c.l.b16 %v2771
  %v2864 = vunpack.c.h.b16 %v2771
  %v2865 = vunpack.c.l.b16 %v2772
  %v2866 = vunpack.c.l.b16 %v2773
  %v2867 = vunpack.c.h.b16 %v2773
  %v2868 = vunpack.c.l.b16 %v2774
  %v2869 = vunpack.c.l.b16 %v2775
  %v2870 = vunpack.c.h.b16 %v2775
  %v2871 = vunpack.c.l.b16 %v2776
  %v2872 = vunpack.c.l.b16 %v2777
  %v2873 = vunpack.c.h.b16 %v2777
  %v2874 = vunpack.c.l.b16 %v2778
  %v2875 = vunpack.c.l.b16 %v2779
  %v2876 = vunpack.c.h.b16 %v2779
  %v2877 = vunpack.c.l.b16 %v2780
  %v2878 = vpack.c.b16 %v2833, %v2830
  %v2879 = vpack.c.b16 %v2834, %v2831
  %v2880 = vpack.c.b16 %v2835, %v2832
  %v2881 = vpack.c.b16 %v2839, %v2836
  %v2882 = vpack.c.b16 %v2840, %v2837
  %v2883 = vpack.c.b16 %v2841, %v2838
  %v2884 = vpack.c.b16 %v2845, %v2842
  %v2885 = vpack.c.b16 %v2846, %v2843
  %v2886 = vpack.c.b16 %v2847, %v2844
  %v2887 = vpack.c.b16 %v2851, %v2848
  %v2888 = vpack.c.b16 %v2852, %v2849
  %v2889 = vpack.c.b16 %v2853, %v2850
  %v2890 = vpack.c.b16 %v2857, %v2854
  %v2891 = vpack.c.b16 %v2858, %v2855
  %v2892 = vpack.c.b16 %v2859, %v2856
  %v2893 = vpack.c.b16 %v2863, %v2860
  %v2894 = vpack.c.b16 %v2864, %v2861
  %v2895 = vpack.c.b16 %v2865, %v2862
  %v2896 = vpack.c.b16 %v2869, %v2866
  %v2897 = vpack.c.b16 %v2870, %v2867
  %v2898 = vpack.c.b16 %v2871, %v2868
  %v2899 = vpack.c.b16 %v2875, %v2872
  %v2900 = vpack.c.b16 %v2876, %v2873
  %v2901 = vpack.c.b16 %v2877, %v2874
  %2926 = vmatprep.subr.bf16.mxu0 %v2900
  %2927 = vmatpush1.bf16.msra.mxu0 %v2899
  %2928 = vmatprep.subr.bf16.mxu0 %v2897
  %2929 = vmatpush1.bf16.msra.mxu0 %v2896
  %2930 = vmatprep.subr.bf16.mxu0 %v2894
  %2931 = vmatpush1.bf16.msra.mxu0 %v2893
  %2932 = vmatprep.subr.bf16.mxu0 %v2891
  %2933 = vmatpush1.bf16.msra.mxu0 %v2890
  %2934 = vmatprep.subr.bf16.mxu0 %v2888
  %2935 = vmatpush1.bf16.msra.mxu0 %v2887
  %2936 = vmatprep.subr.bf16.mxu0 %v2885
  %2937 = vmatpush1.bf16.msra.mxu0 %v2884
  %2938 = vmatprep.subr.bf16.mxu0 %v2882
  %2939 = vmatpush1.bf16.msra.mxu0 %v2881
  %2940 = vmatprep.subr.bf16.mxu0 %v2879
  %2941 = vmatpush1.bf16.msra.mxu0 %v2878
  %2942 = vmatprep.subr.bf16.mxu0 0
  %2943 = vmatpush2.bf16.msra.mxu0 0
  %2944 = vmatprep.subr.bf16.mxu0 0
  %2945 = vmatpush2.bf16.msra.mxu0 0
  %2946 = vmatprep.subr.bf16.mxu0 0
  %2947 = vmatpush2.bf16.msra.mxu0 0
  %2948 = vmatprep.subr.bf16.mxu0 0
  %2949 = vmatpush2.bf16.msra.mxu0 0
  %2950 = vmatprep.subr.bf16.mxu0 0
  %2951 = vmatpush2.bf16.msra.mxu0 0
  %2952 = vmatprep.subr.bf16.mxu0 0
  %2953 = vmatpush2.bf16.msra.mxu0 0
  %2954 = vmatprep.subr.bf16.mxu0 0
  %2955 = vmatpush2.bf16.msra.mxu0 0
  %2956 = vmatprep.subr.bf16.mxu0 0
  %2957 = vmatpush2.bf16.msra.mxu0 0
  %2958 = vmatprep.mubr.bf16.mxu0 0
  %2959 = vmatmul.mubr.bf16.gmra.mxu0 %v2748
  %v2960 = vpop.f32.mrf.mxu0
  %v2961 = vadd.f32 %v2786, %v2960
  %v2962 = vpop.f32.mrf.mxu0
  %v2963 = vadd.f32 %v2790, %v2962
  %v2964 = vpop.f32.mrf.mxu0
  %v2965 = vpop.f32.mrf.mxu0
  %2966 = vdwg.mxu0
  %2967 = vmatprep.subr.bf16.mxu0 0
  %2968 = vmatpush1.bf16.msra.mxu0 %v2901
  %2969 = vmatprep.subr.bf16.mxu0 0
  %2970 = vmatpush1.bf16.msra.mxu0 %v2898
  %2971 = vmatprep.subr.bf16.mxu0 0
  %2972 = vmatpush1.bf16.msra.mxu0 %v2895
  %2973 = vmatprep.subr.bf16.mxu0 0
  %2974 = vmatpush1.bf16.msra.mxu0 %v2892
  %2975 = vmatprep.subr.bf16.mxu0 0
  %2976 = vmatpush1.bf16.msra.mxu0 %v2889
  %2977 = vmatprep.subr.bf16.mxu0 0
  %2978 = vmatpush1.bf16.msra.mxu0 %v2886
  %2979 = vmatprep.subr.bf16.mxu0 0
  %2980 = vmatpush1.bf16.msra.mxu0 %v2883
  %2981 = vmatprep.subr.bf16.mxu0 0
  %2982 = vmatpush1.bf16.msra.mxu0 %v2880
  %2983 = vmatprep.subr.bf16.mxu0 0
  %2984 = vmatpush2.bf16.msra.mxu0 0
  %2985 = vmatprep.subr.bf16.mxu0 0
  %2986 = vmatpush2.bf16.msra.mxu0 0
  %2987 = vmatprep.subr.bf16.mxu0 0
  %2988 = vmatpush2.bf16.msra.mxu0 0
  %2989 = vmatprep.subr.bf16.mxu0 0
  %2990 = vmatpush2.bf16.msra.mxu0 0
  %2991 = vmatprep.subr.bf16.mxu0 0
  %2992 = vmatpush2.bf16.msra.mxu0 0
  %2993 = vmatprep.subr.bf16.mxu0 0
  %2994 = vmatpush2.bf16.msra.mxu0 0
  %2995 = vmatprep.subr.bf16.mxu0 0
  %2996 = vmatpush2.bf16.msra.mxu0 0
  %2997 = vmatprep.subr.bf16.mxu0 0
  %2998 = vmatpush2.bf16.msra.mxu0 0
  %2999 = vmatprep.mubr.bf16.mxu0 0
  %3000 = vmatmul.mubr.bf16.gmra.mxu0 %v2748
  %v3001 = vpop.f32.mrf.mxu0
  %v3002 = vadd.f32 %v2794, %v3001
  %v3003 = vpop.f32.mrf.mxu0
  %v3004 = vpop.f32.mrf.mxu0
  %v3005 = vpop.f32.mrf.mxu0
  %3006 = vdwg.mxu0
  %v3007 = vld [vmem:[%s2] sm:$0xff]
  %v3008 = vld [vmem:[%s2 + $0x8] sm:$0xf]
  %v3009 = vld [vmem:[%s2 + $0xc] sm:$0xff]
  %v3010 = vld [vmem:[%s2 + $0x14] sm:$0xf]
  %v3011 = vld [vmem:[%s2 + $0x18] sm:$0xff]
  %v3012 = vld [vmem:[%s2 + $0x20] sm:$0xf]
  %v3013 = vld [vmem:[%s2 + $0x24] sm:$0xff]
  %v3014 = vld [vmem:[%s2 + $0x2c] sm:$0xf]
  %v3015 = vld [vmem:[%s2 + $0x30] sm:$0xff]
  %v3016 = vld [vmem:[%s2 + $0x38] sm:$0xf]
  %v3017 = vld [vmem:[%s2 + $0x3c] sm:$0xff]
  %v3018 = vld [vmem:[%s2 + $0x44] sm:$0xf]
  %v3019 = vld [vmem:[%s2 + $0x48] sm:$0xff]
  %v3020 = vld [vmem:[%s2 + $0x50] sm:$0xf]
  %v3021 = vld [vmem:[%s2 + $0x54] sm:$0xff]
  %v3022 = vld [vmem:[%s2 + $0x5c] sm:$0xf]
  %v3023 = vld [vmem:[%s2 + $0x60] sm:$0xff]
  %v3024 = vld [vmem:[%s2 + $0x68] sm:$0xf]
  %v3025 = vld [vmem:[%s2 + $0x6c] sm:$0xff]
  %v3026 = vld [vmem:[%s2 + $0x74] sm:$0xf]
  %v3027 = vld [vmem:[%s2 + $0x78] sm:$0xff]
  %v3028 = vld [vmem:[%s2 + $0x80] sm:$0xf]
  %v3029 = vld [vmem:[%s2 + $0x84] sm:$0xff]
  %v3030 = vld [vmem:[%s2 + $0x8c] sm:$0xf]
  %v3031 = vld [vmem:[%s2 + $0x90] sm:$0xff]
  %v3032 = vld [vmem:[%s2 + $0x98] sm:$0xf]
  %v3033 = vld [vmem:[%s2 + $0x9c] sm:$0xff]
  %v3034 = vld [vmem:[%s2 + $0xa4] sm:$0xf]
  %v3035 = vld [vmem:[%s2 + $0xa8] sm:$0xff]
  %v3036 = vld [vmem:[%s2 + $0xb0] sm:$0xf]
  %v3037 = vld [vmem:[%s2 + $0xb4] sm:$0xff]
  %v3038 = vld [vmem:[%s2 + $0xbc] sm:$0xf]
  %v3039 = vld [vmem:[%s4] sm:$0x7]
  %v3041 = vlaneseq
  %v3042 = vshrl.u32 %v3041, 7
  %v3043 = vsub.s32 0, %v3042
  %v3044 = vrot.slane %v3039, %v3043
  %v3045 = vlaneseq
  %v3046 = vshrl.u32 %v3045, 7
  %v3047 = vsub.s32 1, %v3046
  %v3048 = vrot.slane %v3039, %v3047
  %v3049 = vlaneseq
  %v3050 = vshrl.u32 %v3049, 7
  %v3051 = vsub.s32 2, %v3050
  %v3052 = vrot.slane %v3039, %v3051
  %v3088 = vunpack.c.l.b16 %v3007
  %v3089 = vunpack.c.h.b16 %v3007
  %v3090 = vunpack.c.l.b16 %v3008
  %v3091 = vunpack.c.l.b16 %v3009
  %v3092 = vunpack.c.h.b16 %v3009
  %v3093 = vunpack.c.l.b16 %v3010
  %v3094 = vunpack.c.l.b16 %v3011
  %v3095 = vunpack.c.h.b16 %v3011
  %v3096 = vunpack.c.l.b16 %v3012
  %v3097 = vunpack.c.l.b16 %v3013
  %v3098 = vunpack.c.h.b16 %v3013
  %v3099 = vunpack.c.l.b16 %v3014
  %v3100 = vunpack.c.l.b16 %v3015
  %v3101 = vunpack.c.h.b16 %v3015
  %v3102 = vunpack.c.l.b16 %v3016
  %v3103 = vunpack.c.l.b16 %v3017
  %v3104 = vunpack.c.h.b16 %v3017
  %v3105 = vunpack.c.l.b16 %v3018
  %v3106 = vunpack.c.l.b16 %v3019
  %v3107 = vunpack.c.h.b16 %v3019
  %v3108 = vunpack.c.l.b16 %v3020
  %v3109 = vunpack.c.l.b16 %v3021
  %v3110 = vunpack.c.h.b16 %v3021
  %v3111 = vunpack.c.l.b16 %v3022
  %v3112 = vunpack.c.l.b16 %v3023
  %v3113 = vunpack.c.h.b16 %v3023
  %v3114 = vunpack.c.l.b16 %v3024
  %v3115 = vunpack.c.l.b16 %v3025
  %v3116 = vunpack.c.h.b16 %v3025
  %v3117 = vunpack.c.l.b16 %v3026
  %v3118 = vunpack.c.l.b16 %v3027
  %v3119 = vunpack.c.h.b16 %v3027
  %v3120 = vunpack.c.l.b16 %v3028
  %v3121 = vunpack.c.l.b16 %v3029
  %v3122 = vunpack.c.h.b16 %v3029
  %v3123 = vunpack.c.l.b16 %v3030
  %v3124 = vunpack.c.l.b16 %v3031
  %v3125 = vunpack.c.h.b16 %v3031
  %v3126 = vunpack.c.l.b16 %v3032
  %v3127 = vunpack.c.l.b16 %v3033
  %v3128 = vunpack.c.h.b16 %v3033
  %v3129 = vunpack.c.l.b16 %v3034
  %v3130 = vunpack.c.l.b16 %v3035
  %v3131 = vunpack.c.h.b16 %v3035
  %v3132 = vunpack.c.l.b16 %v3036
  %v3133 = vunpack.c.l.b16 %v3037
  %v3134 = vunpack.c.h.b16 %v3037
  %v3135 = vunpack.c.l.b16 %v3038
  %v3136 = vpack.c.b16 %v3091, %v3088
  %v3137 = vpack.c.b16 %v3092, %v3089
  %v3138 = vpack.c.b16 %v3093, %v3090
  %v3139 = vpack.c.b16 %v3097, %v3094
  %v3140 = vpack.c.b16 %v3098, %v3095
  %v3141 = vpack.c.b16 %v3099, %v3096
  %v3142 = vpack.c.b16 %v3103, %v3100
  %v3143 = vpack.c.b16 %v3104, %v3101
  %v3144 = vpack.c.b16 %v3105, %v3102
  %v3145 = vpack.c.b16 %v3109, %v3106
  %v3146 = vpack.c.b16 %v3110, %v3107
  %v3147 = vpack.c.b16 %v3111, %v3108
  %v3148 = vpack.c.b16 %v3115, %v3112
  %v3149 = vpack.c.b16 %v3116, %v3113
  %v3150 = vpack.c.b16 %v3117, %v3114
  %v3151 = vpack.c.b16 %v3121, %v3118
  %v3152 = vpack.c.b16 %v3122, %v3119
  %v3153 = vpack.c.b16 %v3123, %v3120
  %v3154 = vpack.c.b16 %v3127, %v3124
  %v3155 = vpack.c.b16 %v3128, %v3125
  %v3156 = vpack.c.b16 %v3129, %v3126
  %v3157 = vpack.c.b16 %v3133, %v3130
  %v3158 = vpack.c.b16 %v3134, %v3131
  %v3159 = vpack.c.b16 %v3135, %v3132
  %3184 = vmatprep.subr.bf16.mxu0 %v3158
  %3185 = vmatpush1.bf16.msra.mxu0 %v3157
  %3186 = vmatprep.subr.bf16.mxu0 %v3155
  %3187 = vmatpush1.bf16.msra.mxu0 %v3154
  %3188 = vmatprep.subr.bf16.mxu0 %v3152
  %3189 = vmatpush1.bf16.msra.mxu0 %v3151
  %3190 = vmatprep.subr.bf16.mxu0 %v3149
  %3191 = vmatpush1.bf16.msra.mxu0 %v3148
  %3192 = vmatprep.subr.bf16.mxu0 %v3146
  %3193 = vmatpush1.bf16.msra.mxu0 %v3145
  %3194 = vmatprep.subr.bf16.mxu0 %v3143
  %3195 = vmatpush1.bf16.msra.mxu0 %v3142
  %3196 = vmatprep.subr.bf16.mxu0 %v3140
  %3197 = vmatpush1.bf16.msra.mxu0 %v3139
  %3198 = vmatprep.subr.bf16.mxu0 %v3137
  %3199 = vmatpush1.bf16.msra.mxu0 %v3136
  %3200 = vmatprep.subr.bf16.mxu0 0
  %3201 = vmatpush2.bf16.msra.mxu0 0
  %3202 = vmatprep.subr.bf16.mxu0 0
  %3203 = vmatpush2.bf16.msra.mxu0 0
  %3204 = vmatprep.subr.bf16.mxu0 0
  %3205 = vmatpush2.bf16.msra.mxu0 0
  %3206 = vmatprep.subr.bf16.mxu0 0
  %3207 = vmatpush2.bf16.msra.mxu0 0
  %3208 = vmatprep.subr.bf16.mxu0 0
  %3209 = vmatpush2.bf16.msra.mxu0 0
  %3210 = vmatprep.subr.bf16.mxu0 0
  %3211 = vmatpush2.bf16.msra.mxu0 0
  %3212 = vmatprep.subr.bf16.mxu0 0
  %3213 = vmatpush2.bf16.msra.mxu0 0
  %3214 = vmatprep.subr.bf16.mxu0 0
  %3215 = vmatpush2.bf16.msra.mxu0 0
  %3216 = vmatprep.mubr.bf16.mxu0 0
  %3217 = vmatmul.mubr.bf16.gmra.mxu0 %v2744
  %v3218 = vpop.f32.mrf.mxu0
  %v3219 = vadd.f32 %v3044, %v3218
  %v3220 = vpop.f32.mrf.mxu0
  %v3221 = vadd.f32 %v3048, %v3220
  %v3222 = vpop.f32.mrf.mxu0
  %v3223 = vpop.f32.mrf.mxu0
  %3224 = vdwg.mxu0
  %3225 = vmatprep.subr.bf16.mxu0 0
  %3226 = vmatpush1.bf16.msra.mxu0 %v3159
  %3227 = vmatprep.subr.bf16.mxu0 0
  %3228 = vmatpush1.bf16.msra.mxu0 %v3156
  %3229 = vmatprep.subr.bf16.mxu0 0
  %3230 = vmatpush1.bf16.msra.mxu0 %v3153
  %3231 = vmatprep.subr.bf16.mxu0 0
  %3232 = vmatpush1.bf16.msra.mxu0 %v3150
  %3233 = vmatprep.subr.bf16.mxu0 0
  %3234 = vmatpush1.bf16.msra.mxu0 %v3147
  %3235 = vmatprep.subr.bf16.mxu0 0
  %3236 = vmatpush1.bf16.msra.mxu0 %v3144
  %3237 = vmatprep.subr.bf16.mxu0 0
  %3238 = vmatpush1.bf16.msra.mxu0 %v3141
  %3239 = vmatprep.subr.bf16.mxu0 0
  %3240 = vmatpush1.bf16.msra.mxu0 %v3138
  %3241 = vmatprep.subr.bf16.mxu0 0
  %3242 = vmatpush2.bf16.msra.mxu0 0
  %3243 = vmatprep.subr.bf16.mxu0 0
  %3244 = vmatpush2.bf16.msra.mxu0 0
  %3245 = vmatprep.subr.bf16.mxu0 0
  %3246 = vmatpush2.bf16.msra.mxu0 0
  %3247 = vmatprep.subr.bf16.mxu0 0
  %3248 = vmatpush2.bf16.msra.mxu0 0
  %3249 = vmatprep.subr.bf16.mxu0 0
  %3250 = vmatpush2.bf16.msra.mxu0 0
  %3251 = vmatprep.subr.bf16.mxu0 0
  %3252 = vmatpush2.bf16.msra.mxu0 0
  %3253 = vmatprep.subr.bf16.mxu0 0
  %3254 = vmatpush2.bf16.msra.mxu0 0
  %3255 = vmatprep.subr.bf16.mxu0 0
  %3256 = vmatpush2.bf16.msra.mxu0 0
  %3257 = vmatprep.mubr.bf16.mxu0 0
  %3258 = vmatmul.mubr.bf16.gmra.mxu0 %v2744
  %v3259 = vpop.f32.mrf.mxu0
  %v3260 = vadd.f32 %v3052, %v3259
  %v3261 = vpop.f32.mrf.mxu0
  %v3262 = vpop.f32.mrf.mxu0
  %v3263 = vpop.f32.mrf.mxu0
  %3264 = vdwg.mxu0
  %v3265 = vadd.f32 %v2961, %v3219
  %v3266 = vxor.u32 %v3265, 2147483648
  %v3267 = vmul.f32 %v3266, 1.442695
  %v3268 = vpow.pop %v3267
  %v3269 = vadd.f32 %v3268, 1.0
  %v3270 = vrcp.pop %v3269
  %v3271 = vmul.f32 1.0, %v3270
  %v3272 = vadd.f32 %v2963, %v3221
  %v3273 = vxor.u32 %v3272, 2147483648
  %v3274 = vmul.f32 %v3273, 1.442695
  %v3275 = vpow.pop %v3274
  %v3276 = vadd.f32 %v3275, 1.0
  %v3277 = vrcp.pop %v3276
  %v3278 = vmul.f32 1.0, %v3277
  %v3279 = vmul.f32 %v3271, %v3260
  %v3280 = vadd.f32 %v3002, %v3279
  %v3281 = vtanh.pop %v3280
  %v3282 = vsub.f32 1.0, %v3278
  %v3283 = vmul.f32 %v3282, %v3281
  %v3284 = vmul.f32 %v3278, %v2743
  %v3285 = vadd.f32 %v3283, %v3284
  %v3286 = vpack.c.bf16 %v3285, %v3285
  %s3287 = scalar_lea.vmem [#allocation2], 20
  %3288 = vst [vmem:[%s3287] sm:$0xf] %v3286
  %s3289 = scalar_lea.vmem %s0, 24
  %v3290 = vld [vmem:[%s3289] sm:$0xf]
  %v3291 = vld [vmem:[%s1] sm:$0xff]
  %v3292 = vld [vmem:[%s1 + $0x8] sm:$0xf]
  %v3293 = vld [vmem:[%s1 + $0xc] sm:$0xff]
  %v3294 = vld [vmem:[%s1 + $0x14] sm:$0xf]
  %v3295 = vld [vmem:[%s1 + $0x18] sm:$0xff]
  %v3296 = vld [vmem:[%s1 + $0x20] sm:$0xf]
  %v3297 = vld [vmem:[%s1 + $0x24] sm:$0xff]
  %v3298 = vld [vmem:[%s1 + $0x2c] sm:$0xf]
  %v3299 = vld [vmem:[%s1 + $0x30] sm:$0xff]
  %v3300 = vld [vmem:[%s1 + $0x38] sm:$0xf]
  %v3301 = vld [vmem:[%s1 + $0x3c] sm:$0xff]
  %v3302 = vld [vmem:[%s1 + $0x44] sm:$0xf]
  %v3303 = vld [vmem:[%s1 + $0x48] sm:$0xff]
  %v3304 = vld [vmem:[%s1 + $0x50] sm:$0xf]
  %v3305 = vld [vmem:[%s1 + $0x54] sm:$0xff]
  %v3306 = vld [vmem:[%s1 + $0x5c] sm:$0xf]
  %v3307 = vld [vmem:[%s1 + $0x60] sm:$0xff]
  %v3308 = vld [vmem:[%s1 + $0x68] sm:$0xf]
  %v3309 = vld [vmem:[%s1 + $0x6c] sm:$0xff]
  %v3310 = vld [vmem:[%s1 + $0x74] sm:$0xf]
  %v3311 = vld [vmem:[%s1 + $0x78] sm:$0xff]
  %v3312 = vld [vmem:[%s1 + $0x80] sm:$0xf]
  %v3313 = vld [vmem:[%s1 + $0x84] sm:$0xff]
  %v3314 = vld [vmem:[%s1 + $0x8c] sm:$0xf]
  %v3315 = vld [vmem:[%s1 + $0x90] sm:$0xff]
  %v3316 = vld [vmem:[%s1 + $0x98] sm:$0xf]
  %v3317 = vld [vmem:[%s1 + $0x9c] sm:$0xff]
  %v3318 = vld [vmem:[%s1 + $0xa4] sm:$0xf]
  %v3319 = vld [vmem:[%s1 + $0xa8] sm:$0xff]
  %v3320 = vld [vmem:[%s1 + $0xb0] sm:$0xf]
  %v3321 = vld [vmem:[%s1 + $0xb4] sm:$0xff]
  %v3322 = vld [vmem:[%s1 + $0xbc] sm:$0xf]
  %v3323 = vld [vmem:[%s3] sm:$0x7]
  %v3325 = vlaneseq
  %v3326 = vshrl.u32 %v3325, 7
  %v3327 = vsub.s32 0, %v3326
  %v3328 = vrot.slane %v3323, %v3327
  %v3329 = vlaneseq
  %v3330 = vshrl.u32 %v3329, 7
  %v3331 = vsub.s32 1, %v3330
  %v3332 = vrot.slane %v3323, %v3331
  %v3333 = vlaneseq
  %v3334 = vshrl.u32 %v3333, 7
  %v3335 = vsub.s32 2, %v3334
  %v3336 = vrot.slane %v3323, %v3335
  %v3372 = vunpack.c.l.b16 %v3291
  %v3373 = vunpack.c.h.b16 %v3291
  %v3374 = vunpack.c.l.b16 %v3292
  %v3375 = vunpack.c.l.b16 %v3293
  %v3376 = vunpack.c.h.b16 %v3293
  %v3377 = vunpack.c.l.b16 %v3294
  %v3378 = vunpack.c.l.b16 %v3295
  %v3379 = vunpack.c.h.b16 %v3295
  %v3380 = vunpack.c.l.b16 %v3296
  %v3381 = vunpack.c.l.b16 %v3297
  %v3382 = vunpack.c.h.b16 %v3297
  %v3383 = vunpack.c.l.b16 %v3298
  %v3384 = vunpack.c.l.b16 %v3299
  %v3385 = vunpack.c.h.b16 %v3299
  %v3386 = vunpack.c.l.b16 %v3300
  %v3387 = vunpack.c.l.b16 %v3301
  %v3388 = vunpack.c.h.b16 %v3301
  %v3389 = vunpack.c.l.b16 %v3302
  %v3390 = vunpack.c.l.b16 %v3303
  %v3391 = vunpack.c.h.b16 %v3303
  %v3392 = vunpack.c.l.b16 %v3304
  %v3393 = vunpack.c.l.b16 %v3305
  %v3394 = vunpack.c.h.b16 %v3305
  %v3395 = vunpack.c.l.b16 %v3306
  %v3396 = vunpack.c.l.b16 %v3307
  %v3397 = vunpack.c.h.b16 %v3307
  %v3398 = vunpack.c.l.b16 %v3308
  %v3399 = vunpack.c.l.b16 %v3309
  %v3400 = vunpack.c.h.b16 %v3309
  %v3401 = vunpack.c.l.b16 %v3310
  %v3402 = vunpack.c.l.b16 %v3311
  %v3403 = vunpack.c.h.b16 %v3311
  %v3404 = vunpack.c.l.b16 %v3312
  %v3405 = vunpack.c.l.b16 %v3313
  %v3406 = vunpack.c.h.b16 %v3313
  %v3407 = vunpack.c.l.b16 %v3314
  %v3408 = vunpack.c.l.b16 %v3315
  %v3409 = vunpack.c.h.b16 %v3315
  %v3410 = vunpack.c.l.b16 %v3316
  %v3411 = vunpack.c.l.b16 %v3317
  %v3412 = vunpack.c.h.b16 %v3317
  %v3413 = vunpack.c.l.b16 %v3318
  %v3414 = vunpack.c.l.b16 %v3319
  %v3415 = vunpack.c.h.b16 %v3319
  %v3416 = vunpack.c.l.b16 %v3320
  %v3417 = vunpack.c.l.b16 %v3321
  %v3418 = vunpack.c.h.b16 %v3321
  %v3419 = vunpack.c.l.b16 %v3322
  %v3420 = vpack.c.b16 %v3375, %v3372
  %v3421 = vpack.c.b16 %v3376, %v3373
  %v3422 = vpack.c.b16 %v3377, %v3374
  %v3423 = vpack.c.b16 %v3381, %v3378
  %v3424 = vpack.c.b16 %v3382, %v3379
  %v3425 = vpack.c.b16 %v3383, %v3380
  %v3426 = vpack.c.b16 %v3387, %v3384
  %v3427 = vpack.c.b16 %v3388, %v3385
  %v3428 = vpack.c.b16 %v3389, %v3386
  %v3429 = vpack.c.b16 %v3393, %v3390
  %v3430 = vpack.c.b16 %v3394, %v3391
  %v3431 = vpack.c.b16 %v3395, %v3392
  %v3432 = vpack.c.b16 %v3399, %v3396
  %v3433 = vpack.c.b16 %v3400, %v3397
  %v3434 = vpack.c.b16 %v3401, %v3398
  %v3435 = vpack.c.b16 %v3405, %v3402
  %v3436 = vpack.c.b16 %v3406, %v3403
  %v3437 = vpack.c.b16 %v3407, %v3404
  %v3438 = vpack.c.b16 %v3411, %v3408
  %v3439 = vpack.c.b16 %v3412, %v3409
  %v3440 = vpack.c.b16 %v3413, %v3410
  %v3441 = vpack.c.b16 %v3417, %v3414
  %v3442 = vpack.c.b16 %v3418, %v3415
  %v3443 = vpack.c.b16 %v3419, %v3416
  %3468 = vmatprep.subr.bf16.mxu0 %v3442
  %3469 = vmatpush1.bf16.msra.mxu0 %v3441
  %3470 = vmatprep.subr.bf16.mxu0 %v3439
  %3471 = vmatpush1.bf16.msra.mxu0 %v3438
  %3472 = vmatprep.subr.bf16.mxu0 %v3436
  %3473 = vmatpush1.bf16.msra.mxu0 %v3435
  %3474 = vmatprep.subr.bf16.mxu0 %v3433
  %3475 = vmatpush1.bf16.msra.mxu0 %v3432
  %3476 = vmatprep.subr.bf16.mxu0 %v3430
  %3477 = vmatpush1.bf16.msra.mxu0 %v3429
  %3478 = vmatprep.subr.bf16.mxu0 %v3427
  %3479 = vmatpush1.bf16.msra.mxu0 %v3426
  %3480 = vmatprep.subr.bf16.mxu0 %v3424
  %3481 = vmatpush1.bf16.msra.mxu0 %v3423
  %3482 = vmatprep.subr.bf16.mxu0 %v3421
  %3483 = vmatpush1.bf16.msra.mxu0 %v3420
  %3484 = vmatprep.subr.bf16.mxu0 0
  %3485 = vmatpush2.bf16.msra.mxu0 0
  %3486 = vmatprep.subr.bf16.mxu0 0
  %3487 = vmatpush2.bf16.msra.mxu0 0
  %3488 = vmatprep.subr.bf16.mxu0 0
  %3489 = vmatpush2.bf16.msra.mxu0 0
  %3490 = vmatprep.subr.bf16.mxu0 0
  %3491 = vmatpush2.bf16.msra.mxu0 0
  %3492 = vmatprep.subr.bf16.mxu0 0
  %3493 = vmatpush2.bf16.msra.mxu0 0
  %3494 = vmatprep.subr.bf16.mxu0 0
  %3495 = vmatpush2.bf16.msra.mxu0 0
  %3496 = vmatprep.subr.bf16.mxu0 0
  %3497 = vmatpush2.bf16.msra.mxu0 0
  %3498 = vmatprep.subr.bf16.mxu0 0
  %3499 = vmatpush2.bf16.msra.mxu0 0
  %3500 = vmatprep.mubr.bf16.mxu0 0
  %3501 = vmatmul.mubr.bf16.gmra.mxu0 %v3290
  %v3502 = vpop.f32.mrf.mxu0
  %v3503 = vadd.f32 %v3328, %v3502
  %v3504 = vpop.f32.mrf.mxu0
  %v3505 = vadd.f32 %v3332, %v3504
  %v3506 = vpop.f32.mrf.mxu0
  %v3507 = vpop.f32.mrf.mxu0
  %3508 = vdwg.mxu0
  %3509 = vmatprep.subr.bf16.mxu0 0
  %3510 = vmatpush1.bf16.msra.mxu0 %v3443
  %3511 = vmatprep.subr.bf16.mxu0 0
  %3512 = vmatpush1.bf16.msra.mxu0 %v3440
  %3513 = vmatprep.subr.bf16.mxu0 0
  %3514 = vmatpush1.bf16.msra.mxu0 %v3437
  %3515 = vmatprep.subr.bf16.mxu0 0
  %3516 = vmatpush1.bf16.msra.mxu0 %v3434
  %3517 = vmatprep.subr.bf16.mxu0 0
  %3518 = vmatpush1.bf16.msra.mxu0 %v3431
  %3519 = vmatprep.subr.bf16.mxu0 0
  %3520 = vmatpush1.bf16.msra.mxu0 %v3428
  %3521 = vmatprep.subr.bf16.mxu0 0
  %3522 = vmatpush1.bf16.msra.mxu0 %v3425
  %3523 = vmatprep.subr.bf16.mxu0 0
  %3524 = vmatpush1.bf16.msra.mxu0 %v3422
  %3525 = vmatprep.subr.bf16.mxu0 0
  %3526 = vmatpush2.bf16.msra.mxu0 0
  %3527 = vmatprep.subr.bf16.mxu0 0
  %3528 = vmatpush2.bf16.msra.mxu0 0
  %3529 = vmatprep.subr.bf16.mxu0 0
  %3530 = vmatpush2.bf16.msra.mxu0 0
  %3531 = vmatprep.subr.bf16.mxu0 0
  %3532 = vmatpush2.bf16.msra.mxu0 0
  %3533 = vmatprep.subr.bf16.mxu0 0
  %3534 = vmatpush2.bf16.msra.mxu0 0
  %3535 = vmatprep.subr.bf16.mxu0 0
  %3536 = vmatpush2.bf16.msra.mxu0 0
  %3537 = vmatprep.subr.bf16.mxu0 0
  %3538 = vmatpush2.bf16.msra.mxu0 0
  %3539 = vmatprep.subr.bf16.mxu0 0
  %3540 = vmatpush2.bf16.msra.mxu0 0
  %3541 = vmatprep.mubr.bf16.mxu0 0
  %3542 = vmatmul.mubr.bf16.gmra.mxu0 %v3290
  %v3543 = vpop.f32.mrf.mxu0
  %v3544 = vadd.f32 %v3336, %v3543
  %v3545 = vpop.f32.mrf.mxu0
  %v3546 = vpop.f32.mrf.mxu0
  %v3547 = vpop.f32.mrf.mxu0
  %3548 = vdwg.mxu0
  %v3549 = vld [vmem:[%s2] sm:$0xff]
  %v3550 = vld [vmem:[%s2 + $0x8] sm:$0xf]
  %v3551 = vld [vmem:[%s2 + $0xc] sm:$0xff]
  %v3552 = vld [vmem:[%s2 + $0x14] sm:$0xf]
  %v3553 = vld [vmem:[%s2 + $0x18] sm:$0xff]
  %v3554 = vld [vmem:[%s2 + $0x20] sm:$0xf]
  %v3555 = vld [vmem:[%s2 + $0x24] sm:$0xff]
  %v3556 = vld [vmem:[%s2 + $0x2c] sm:$0xf]
  %v3557 = vld [vmem:[%s2 + $0x30] sm:$0xff]
  %v3558 = vld [vmem:[%s2 + $0x38] sm:$0xf]
  %v3559 = vld [vmem:[%s2 + $0x3c] sm:$0xff]
  %v3560 = vld [vmem:[%s2 + $0x44] sm:$0xf]
  %v3561 = vld [vmem:[%s2 + $0x48] sm:$0xff]
  %v3562 = vld [vmem:[%s2 + $0x50] sm:$0xf]
  %v3563 = vld [vmem:[%s2 + $0x54] sm:$0xff]
  %v3564 = vld [vmem:[%s2 + $0x5c] sm:$0xf]
  %v3565 = vld [vmem:[%s2 + $0x60] sm:$0xff]
  %v3566 = vld [vmem:[%s2 + $0x68] sm:$0xf]
  %v3567 = vld [vmem:[%s2 + $0x6c] sm:$0xff]
  %v3568 = vld [vmem:[%s2 + $0x74] sm:$0xf]
  %v3569 = vld [vmem:[%s2 + $0x78] sm:$0xff]
  %v3570 = vld [vmem:[%s2 + $0x80] sm:$0xf]
  %v3571 = vld [vmem:[%s2 + $0x84] sm:$0xff]
  %v3572 = vld [vmem:[%s2 + $0x8c] sm:$0xf]
  %v3573 = vld [vmem:[%s2 + $0x90] sm:$0xff]
  %v3574 = vld [vmem:[%s2 + $0x98] sm:$0xf]
  %v3575 = vld [vmem:[%s2 + $0x9c] sm:$0xff]
  %v3576 = vld [vmem:[%s2 + $0xa4] sm:$0xf]
  %v3577 = vld [vmem:[%s2 + $0xa8] sm:$0xff]
  %v3578 = vld [vmem:[%s2 + $0xb0] sm:$0xf]
  %v3579 = vld [vmem:[%s2 + $0xb4] sm:$0xff]
  %v3580 = vld [vmem:[%s2 + $0xbc] sm:$0xf]
  %v3581 = vld [vmem:[%s4] sm:$0x7]
  %v3583 = vlaneseq
  %v3584 = vshrl.u32 %v3583, 7
  %v3585 = vsub.s32 0, %v3584
  %v3586 = vrot.slane %v3581, %v3585
  %v3587 = vlaneseq
  %v3588 = vshrl.u32 %v3587, 7
  %v3589 = vsub.s32 1, %v3588
  %v3590 = vrot.slane %v3581, %v3589
  %v3591 = vlaneseq
  %v3592 = vshrl.u32 %v3591, 7
  %v3593 = vsub.s32 2, %v3592
  %v3594 = vrot.slane %v3581, %v3593
  %v3630 = vunpack.c.l.b16 %v3549
  %v3631 = vunpack.c.h.b16 %v3549
  %v3632 = vunpack.c.l.b16 %v3550
  %v3633 = vunpack.c.l.b16 %v3551
  %v3634 = vunpack.c.h.b16 %v3551
  %v3635 = vunpack.c.l.b16 %v3552
  %v3636 = vunpack.c.l.b16 %v3553
  %v3637 = vunpack.c.h.b16 %v3553
  %v3638 = vunpack.c.l.b16 %v3554
  %v3639 = vunpack.c.l.b16 %v3555
  %v3640 = vunpack.c.h.b16 %v3555
  %v3641 = vunpack.c.l.b16 %v3556
  %v3642 = vunpack.c.l.b16 %v3557
  %v3643 = vunpack.c.h.b16 %v3557
  %v3644 = vunpack.c.l.b16 %v3558
  %v3645 = vunpack.c.l.b16 %v3559
  %v3646 = vunpack.c.h.b16 %v3559
  %v3647 = vunpack.c.l.b16 %v3560
  %v3648 = vunpack.c.l.b16 %v3561
  %v3649 = vunpack.c.h.b16 %v3561
  %v3650 = vunpack.c.l.b16 %v3562
  %v3651 = vunpack.c.l.b16 %v3563
  %v3652 = vunpack.c.h.b16 %v3563
  %v3653 = vunpack.c.l.b16 %v3564
  %v3654 = vunpack.c.l.b16 %v3565
  %v3655 = vunpack.c.h.b16 %v3565
  %v3656 = vunpack.c.l.b16 %v3566
  %v3657 = vunpack.c.l.b16 %v3567
  %v3658 = vunpack.c.h.b16 %v3567
  %v3659 = vunpack.c.l.b16 %v3568
  %v3660 = vunpack.c.l.b16 %v3569
  %v3661 = vunpack.c.h.b16 %v3569
  %v3662 = vunpack.c.l.b16 %v3570
  %v3663 = vunpack.c.l.b16 %v3571
  %v3664 = vunpack.c.h.b16 %v3571
  %v3665 = vunpack.c.l.b16 %v3572
  %v3666 = vunpack.c.l.b16 %v3573
  %v3667 = vunpack.c.h.b16 %v3573
  %v3668 = vunpack.c.l.b16 %v3574
  %v3669 = vunpack.c.l.b16 %v3575
  %v3670 = vunpack.c.h.b16 %v3575
  %v3671 = vunpack.c.l.b16 %v3576
  %v3672 = vunpack.c.l.b16 %v3577
  %v3673 = vunpack.c.h.b16 %v3577
  %v3674 = vunpack.c.l.b16 %v3578
  %v3675 = vunpack.c.l.b16 %v3579
  %v3676 = vunpack.c.h.b16 %v3579
  %v3677 = vunpack.c.l.b16 %v3580
  %v3678 = vpack.c.b16 %v3633, %v3630
  %v3679 = vpack.c.b16 %v3634, %v3631
  %v3680 = vpack.c.b16 %v3635, %v3632
  %v3681 = vpack.c.b16 %v3639, %v3636
  %v3682 = vpack.c.b16 %v3640, %v3637
  %v3683 = vpack.c.b16 %v3641, %v3638
  %v3684 = vpack.c.b16 %v3645, %v3642
  %v3685 = vpack.c.b16 %v3646, %v3643
  %v3686 = vpack.c.b16 %v3647, %v3644
  %v3687 = vpack.c.b16 %v3651, %v3648
  %v3688 = vpack.c.b16 %v3652, %v3649
  %v3689 = vpack.c.b16 %v3653, %v3650
  %v3690 = vpack.c.b16 %v3657, %v3654
  %v3691 = vpack.c.b16 %v3658, %v3655
  %v3692 = vpack.c.b16 %v3659, %v3656
  %v3693 = vpack.c.b16 %v3663, %v3660
  %v3694 = vpack.c.b16 %v3664, %v3661
  %v3695 = vpack.c.b16 %v3665, %v3662
  %v3696 = vpack.c.b16 %v3669, %v3666
  %v3697 = vpack.c.b16 %v3670, %v3667
  %v3698 = vpack.c.b16 %v3671, %v3668
  %v3699 = vpack.c.b16 %v3675, %v3672
  %v3700 = vpack.c.b16 %v3676, %v3673
  %v3701 = vpack.c.b16 %v3677, %v3674
  %3726 = vmatprep.subr.bf16.mxu0 %v3700
  %3727 = vmatpush1.bf16.msra.mxu0 %v3699
  %3728 = vmatprep.subr.bf16.mxu0 %v3697
  %3729 = vmatpush1.bf16.msra.mxu0 %v3696
  %3730 = vmatprep.subr.bf16.mxu0 %v3694
  %3731 = vmatpush1.bf16.msra.mxu0 %v3693
  %3732 = vmatprep.subr.bf16.mxu0 %v3691
  %3733 = vmatpush1.bf16.msra.mxu0 %v3690
  %3734 = vmatprep.subr.bf16.mxu0 %v3688
  %3735 = vmatpush1.bf16.msra.mxu0 %v3687
  %3736 = vmatprep.subr.bf16.mxu0 %v3685
  %3737 = vmatpush1.bf16.msra.mxu0 %v3684
  %3738 = vmatprep.subr.bf16.mxu0 %v3682
  %3739 = vmatpush1.bf16.msra.mxu0 %v3681
  %3740 = vmatprep.subr.bf16.mxu0 %v3679
  %3741 = vmatpush1.bf16.msra.mxu0 %v3678
  %3742 = vmatprep.subr.bf16.mxu0 0
  %3743 = vmatpush2.bf16.msra.mxu0 0
  %3744 = vmatprep.subr.bf16.mxu0 0
  %3745 = vmatpush2.bf16.msra.mxu0 0
  %3746 = vmatprep.subr.bf16.mxu0 0
  %3747 = vmatpush2.bf16.msra.mxu0 0
  %3748 = vmatprep.subr.bf16.mxu0 0
  %3749 = vmatpush2.bf16.msra.mxu0 0
  %3750 = vmatprep.subr.bf16.mxu0 0
  %3751 = vmatpush2.bf16.msra.mxu0 0
  %3752 = vmatprep.subr.bf16.mxu0 0
  %3753 = vmatpush2.bf16.msra.mxu0 0
  %3754 = vmatprep.subr.bf16.mxu0 0
  %3755 = vmatpush2.bf16.msra.mxu0 0
  %3756 = vmatprep.subr.bf16.mxu0 0
  %3757 = vmatpush2.bf16.msra.mxu0 0
  %3758 = vmatprep.mubr.bf16.mxu0 0
  %3759 = vmatmul.mubr.bf16.gmra.mxu0 %v3286
  %v3760 = vpop.f32.mrf.mxu0
  %v3761 = vadd.f32 %v3586, %v3760
  %v3762 = vpop.f32.mrf.mxu0
  %v3763 = vadd.f32 %v3590, %v3762
  %v3764 = vpop.f32.mrf.mxu0
  %v3765 = vpop.f32.mrf.mxu0
  %3766 = vdwg.mxu0
  %3767 = vmatprep.subr.bf16.mxu0 0
  %3768 = vmatpush1.bf16.msra.mxu0 %v3701
  %3769 = vmatprep.subr.bf16.mxu0 0
  %3770 = vmatpush1.bf16.msra.mxu0 %v3698
  %3771 = vmatprep.subr.bf16.mxu0 0
  %3772 = vmatpush1.bf16.msra.mxu0 %v3695
  %3773 = vmatprep.subr.bf16.mxu0 0
  %3774 = vmatpush1.bf16.msra.mxu0 %v3692
  %3775 = vmatprep.subr.bf16.mxu0 0
  %3776 = vmatpush1.bf16.msra.mxu0 %v3689
  %3777 = vmatprep.subr.bf16.mxu0 0
  %3778 = vmatpush1.bf16.msra.mxu0 %v3686
  %3779 = vmatprep.subr.bf16.mxu0 0
  %3780 = vmatpush1.bf16.msra.mxu0 %v3683
  %3781 = vmatprep.subr.bf16.mxu0 0
  %3782 = vmatpush1.bf16.msra.mxu0 %v3680
  %3783 = vmatprep.subr.bf16.mxu0 0
  %3784 = vmatpush2.bf16.msra.mxu0 0
  %3785 = vmatprep.subr.bf16.mxu0 0
  %3786 = vmatpush2.bf16.msra.mxu0 0
  %3787 = vmatprep.subr.bf16.mxu0 0
  %3788 = vmatpush2.bf16.msra.mxu0 0
  %3789 = vmatprep.subr.bf16.mxu0 0
  %3790 = vmatpush2.bf16.msra.mxu0 0
  %3791 = vmatprep.subr.bf16.mxu0 0
  %3792 = vmatpush2.bf16.msra.mxu0 0
  %3793 = vmatprep.subr.bf16.mxu0 0
  %3794 = vmatpush2.bf16.msra.mxu0 0
  %3795 = vmatprep.subr.bf16.mxu0 0
  %3796 = vmatpush2.bf16.msra.mxu0 0
  %3797 = vmatprep.subr.bf16.mxu0 0
  %3798 = vmatpush2.bf16.msra.mxu0 0
  %3799 = vmatprep.mubr.bf16.mxu0 0
  %3800 = vmatmul.mubr.bf16.gmra.mxu0 %v3286
  %v3801 = vpop.f32.mrf.mxu0
  %v3802 = vadd.f32 %v3594, %v3801
  %v3803 = vpop.f32.mrf.mxu0
  %v3804 = vpop.f32.mrf.mxu0
  %v3805 = vpop.f32.mrf.mxu0
  %3806 = vdwg.mxu0
  %v3807 = vadd.f32 %v3503, %v3761
  %v3808 = vxor.u32 %v3807, 2147483648
  %v3809 = vmul.f32 %v3808, 1.442695
  %v3810 = vpow.pop %v3809
  %v3811 = vadd.f32 %v3810, 1.0
  %v3812 = vrcp.pop %v3811
  %v3813 = vmul.f32 1.0, %v3812
  %v3814 = vadd.f32 %v3505, %v3763
  %v3815 = vxor.u32 %v3814, 2147483648
  %v3816 = vmul.f32 %v3815, 1.442695
  %v3817 = vpow.pop %v3816
  %v3818 = vadd.f32 %v3817, 1.0
  %v3819 = vrcp.pop %v3818
  %v3820 = vmul.f32 1.0, %v3819
  %v3821 = vmul.f32 %v3813, %v3802
  %v3822 = vadd.f32 %v3544, %v3821
  %v3823 = vtanh.pop %v3822
  %v3824 = vsub.f32 1.0, %v3820
  %v3825 = vmul.f32 %v3824, %v3823
  %v3826 = vmul.f32 %v3820, %v3285
  %v3827 = vadd.f32 %v3825, %v3826
  %v3828 = vpack.c.bf16 %v3827, %v3827
  %s3829 = scalar_lea.vmem [#allocation2], 24
  %3830 = vst [vmem:[%s3829] sm:$0xf] %v3828
  %s3831 = scalar_lea.vmem %s0, 28
  %v3832 = vld [vmem:[%s3831] sm:$0xf]
  %v3833 = vld [vmem:[%s1] sm:$0xff]
  %v3834 = vld [vmem:[%s1 + $0x8] sm:$0xf]
  %v3835 = vld [vmem:[%s1 + $0xc] sm:$0xff]
  %v3836 = vld [vmem:[%s1 + $0x14] sm:$0xf]
  %v3837 = vld [vmem:[%s1 + $0x18] sm:$0xff]
  %v3838 = vld [vmem:[%s1 + $0x20] sm:$0xf]
  %v3839 = vld [vmem:[%s1 + $0x24] sm:$0xff]
  %v3840 = vld [vmem:[%s1 + $0x2c] sm:$0xf]
  %v3841 = vld [vmem:[%s1 + $0x30] sm:$0xff]
  %v3842 = vld [vmem:[%s1 + $0x38] sm:$0xf]
  %v3843 = vld [vmem:[%s1 + $0x3c] sm:$0xff]
  %v3844 = vld [vmem:[%s1 + $0x44] sm:$0xf]
  %v3845 = vld [vmem:[%s1 + $0x48] sm:$0xff]
  %v3846 = vld [vmem:[%s1 + $0x50] sm:$0xf]
  %v3847 = vld [vmem:[%s1 + $0x54] sm:$0xff]
  %v3848 = vld [vmem:[%s1 + $0x5c] sm:$0xf]
  %v3849 = vld [vmem:[%s1 + $0x60] sm:$0xff]
  %v3850 = vld [vmem:[%s1 + $0x68] sm:$0xf]
  %v3851 = vld [vmem:[%s1 + $0x6c] sm:$0xff]
  %v3852 = vld [vmem:[%s1 + $0x74] sm:$0xf]
  %v3853 = vld [vmem:[%s1 + $0x78] sm:$0xff]
  %v3854 = vld [vmem:[%s1 + $0x80] sm:$0xf]
  %v3855 = vld [vmem:[%s1 + $0x84] sm:$0xff]
  %v3856 = vld [vmem:[%s1 + $0x8c] sm:$0xf]
  %v3857 = vld [vmem:[%s1 + $0x90] sm:$0xff]
  %v3858 = vld [vmem:[%s1 + $0x98] sm:$0xf]
  %v3859 = vld [vmem:[%s1 + $0x9c] sm:$0xff]
  %v3860 = vld [vmem:[%s1 + $0xa4] sm:$0xf]
  %v3861 = vld [vmem:[%s1 + $0xa8] sm:$0xff]
  %v3862 = vld [vmem:[%s1 + $0xb0] sm:$0xf]
  %v3863 = vld [vmem:[%s1 + $0xb4] sm:$0xff]
  %v3864 = vld [vmem:[%s1 + $0xbc] sm:$0xf]
  %v3865 = vld [vmem:[%s3] sm:$0x7]
  %v3867 = vlaneseq
  %v3868 = vshrl.u32 %v3867, 7
  %v3869 = vsub.s32 0, %v3868
  %v3870 = vrot.slane %v3865, %v3869
  %v3871 = vlaneseq
  %v3872 = vshrl.u32 %v3871, 7
  %v3873 = vsub.s32 1, %v3872
  %v3874 = vrot.slane %v3865, %v3873
  %v3875 = vlaneseq
  %v3876 = vshrl.u32 %v3875, 7
  %v3877 = vsub.s32 2, %v3876
  %v3878 = vrot.slane %v3865, %v3877
  %v3914 = vunpack.c.l.b16 %v3833
  %v3915 = vunpack.c.h.b16 %v3833
  %v3916 = vunpack.c.l.b16 %v3834
  %v3917 = vunpack.c.l.b16 %v3835
  %v3918 = vunpack.c.h.b16 %v3835
  %v3919 = vunpack.c.l.b16 %v3836
  %v3920 = vunpack.c.l.b16 %v3837
  %v3921 = vunpack.c.h.b16 %v3837
  %v3922 = vunpack.c.l.b16 %v3838
  %v3923 = vunpack.c.l.b16 %v3839
  %v3924 = vunpack.c.h.b16 %v3839
  %v3925 = vunpack.c.l.b16 %v3840
  %v3926 = vunpack.c.l.b16 %v3841
  %v3927 = vunpack.c.h.b16 %v3841
  %v3928 = vunpack.c.l.b16 %v3842
  %v3929 = vunpack.c.l.b16 %v3843
  %v3930 = vunpack.c.h.b16 %v3843
  %v3931 = vunpack.c.l.b16 %v3844
  %v3932 = vunpack.c.l.b16 %v3845
  %v3933 = vunpack.c.h.b16 %v3845
  %v3934 = vunpack.c.l.b16 %v3846
  %v3935 = vunpack.c.l.b16 %v3847
  %v3936 = vunpack.c.h.b16 %v3847
  %v3937 = vunpack.c.l.b16 %v3848
  %v3938 = vunpack.c.l.b16 %v3849
  %v3939 = vunpack.c.h.b16 %v3849
  %v3940 = vunpack.c.l.b16 %v3850
  %v3941 = vunpack.c.l.b16 %v3851
  %v3942 = vunpack.c.h.b16 %v3851
  %v3943 = vunpack.c.l.b16 %v3852
  %v3944 = vunpack.c.l.b16 %v3853
  %v3945 = vunpack.c.h.b16 %v3853
  %v3946 = vunpack.c.l.b16 %v3854
  %v3947 = vunpack.c.l.b16 %v3855
  %v3948 = vunpack.c.h.b16 %v3855
  %v3949 = vunpack.c.l.b16 %v3856
  %v3950 = vunpack.c.l.b16 %v3857
  %v3951 = vunpack.c.h.b16 %v3857
  %v3952 = vunpack.c.l.b16 %v3858
  %v3953 = vunpack.c.l.b16 %v3859
  %v3954 = vunpack.c.h.b16 %v3859
  %v3955 = vunpack.c.l.b16 %v3860
  %v3956 = vunpack.c.l.b16 %v3861
  %v3957 = vunpack.c.h.b16 %v3861
  %v3958 = vunpack.c.l.b16 %v3862
  %v3959 = vunpack.c.l.b16 %v3863
  %v3960 = vunpack.c.h.b16 %v3863
  %v3961 = vunpack.c.l.b16 %v3864
  %v3962 = vpack.c.b16 %v3917, %v3914
  %v3963 = vpack.c.b16 %v3918, %v3915
  %v3964 = vpack.c.b16 %v3919, %v3916
  %v3965 = vpack.c.b16 %v3923, %v3920
  %v3966 = vpack.c.b16 %v3924, %v3921
  %v3967 = vpack.c.b16 %v3925, %v3922
  %v3968 = vpack.c.b16 %v3929, %v3926
  %v3969 = vpack.c.b16 %v3930, %v3927
  %v3970 = vpack.c.b16 %v3931, %v3928
  %v3971 = vpack.c.b16 %v3935, %v3932
  %v3972 = vpack.c.b16 %v3936, %v3933
  %v3973 = vpack.c.b16 %v3937, %v3934
  %v3974 = vpack.c.b16 %v3941, %v3938
  %v3975 = vpack.c.b16 %v3942, %v3939
  %v3976 = vpack.c.b16 %v3943, %v3940
  %v3977 = vpack.c.b16 %v3947, %v3944
  %v3978 = vpack.c.b16 %v3948, %v3945
  %v3979 = vpack.c.b16 %v3949, %v3946
  %v3980 = vpack.c.b16 %v3953, %v3950
  %v3981 = vpack.c.b16 %v3954, %v3951
  %v3982 = vpack.c.b16 %v3955, %v3952
  %v3983 = vpack.c.b16 %v3959, %v3956
  %v3984 = vpack.c.b16 %v3960, %v3957
  %v3985 = vpack.c.b16 %v3961, %v3958
  %4010 = vmatprep.subr.bf16.mxu0 %v3984
  %4011 = vmatpush1.bf16.msra.mxu0 %v3983
  %4012 = vmatprep.subr.bf16.mxu0 %v3981
  %4013 = vmatpush1.bf16.msra.mxu0 %v3980
  %4014 = vmatprep.subr.bf16.mxu0 %v3978
  %4015 = vmatpush1.bf16.msra.mxu0 %v3977
  %4016 = vmatprep.subr.bf16.mxu0 %v3975
  %4017 = vmatpush1.bf16.msra.mxu0 %v3974
  %4018 = vmatprep.subr.bf16.mxu0 %v3972
  %4019 = vmatpush1.bf16.msra.mxu0 %v3971
  %4020 = vmatprep.subr.bf16.mxu0 %v3969
  %4021 = vmatpush1.bf16.msra.mxu0 %v3968
  %4022 = vmatprep.subr.bf16.mxu0 %v3966
  %4023 = vmatpush1.bf16.msra.mxu0 %v3965
  %4024 = vmatprep.subr.bf16.mxu0 %v3963
  %4025 = vmatpush1.bf16.msra.mxu0 %v3962
  %4026 = vmatprep.subr.bf16.mxu0 0
  %4027 = vmatpush2.bf16.msra.mxu0 0
  %4028 = vmatprep.subr.bf16.mxu0 0
  %4029 = vmatpush2.bf16.msra.mxu0 0
  %4030 = vmatprep.subr.bf16.mxu0 0
  %4031 = vmatpush2.bf16.msra.mxu0 0
  %4032 = vmatprep.subr.bf16.mxu0 0
  %4033 = vmatpush2.bf16.msra.mxu0 0
  %4034 = vmatprep.subr.bf16.mxu0 0
  %4035 = vmatpush2.bf16.msra.mxu0 0
  %4036 = vmatprep.subr.bf16.mxu0 0
  %4037 = vmatpush2.bf16.msra.mxu0 0
  %4038 = vmatprep.subr.bf16.mxu0 0
  %4039 = vmatpush2.bf16.msra.mxu0 0
  %4040 = vmatprep.subr.bf16.mxu0 0
  %4041 = vmatpush2.bf16.msra.mxu0 0
  %4042 = vmatprep.mubr.bf16.mxu0 0
  %4043 = vmatmul.mubr.bf16.gmra.mxu0 %v3832
  %v4044 = vpop.f32.mrf.mxu0
  %v4045 = vadd.f32 %v3870, %v4044
  %v4046 = vpop.f32.mrf.mxu0
  %v4047 = vadd.f32 %v3874, %v4046
  %v4048 = vpop.f32.mrf.mxu0
  %v4049 = vpop.f32.mrf.mxu0
  %4050 = vdwg.mxu0
  %4051 = vmatprep.subr.bf16.mxu0 0
  %4052 = vmatpush1.bf16.msra.mxu0 %v3985
  %4053 = vmatprep.subr.bf16.mxu0 0
  %4054 = vmatpush1.bf16.msra.mxu0 %v3982
  %4055 = vmatprep.subr.bf16.mxu0 0
  %4056 = vmatpush1.bf16.msra.mxu0 %v3979
  %4057 = vmatprep.subr.bf16.mxu0 0
  %4058 = vmatpush1.bf16.msra.mxu0 %v3976
  %4059 = vmatprep.subr.bf16.mxu0 0
  %4060 = vmatpush1.bf16.msra.mxu0 %v3973
  %4061 = vmatprep.subr.bf16.mxu0 0
  %4062 = vmatpush1.bf16.msra.mxu0 %v3970
  %4063 = vmatprep.subr.bf16.mxu0 0
  %4064 = vmatpush1.bf16.msra.mxu0 %v3967
  %4065 = vmatprep.subr.bf16.mxu0 0
  %4066 = vmatpush1.bf16.msra.mxu0 %v3964
  %4067 = vmatprep.subr.bf16.mxu0 0
  %4068 = vmatpush2.bf16.msra.mxu0 0
  %4069 = vmatprep.subr.bf16.mxu0 0
  %4070 = vmatpush2.bf16.msra.mxu0 0
  %4071 = vmatprep.subr.bf16.mxu0 0
  %4072 = vmatpush2.bf16.msra.mxu0 0
  %4073 = vmatprep.subr.bf16.mxu0 0
  %4074 = vmatpush2.bf16.msra.mxu0 0
  %4075 = vmatprep.subr.bf16.mxu0 0
  %4076 = vmatpush2.bf16.msra.mxu0 0
  %4077 = vmatprep.subr.bf16.mxu0 0
  %4078 = vmatpush2.bf16.msra.mxu0 0
  %4079 = vmatprep.subr.bf16.mxu0 0
  %4080 = vmatpush2.bf16.msra.mxu0 0
  %4081 = vmatprep.subr.bf16.mxu0 0
  %4082 = vmatpush2.bf16.msra.mxu0 0
  %4083 = vmatprep.mubr.bf16.mxu0 0
  %4084 = vmatmul.mubr.bf16.gmra.mxu0 %v3832
  %v4085 = vpop.f32.mrf.mxu0
  %v4086 = vadd.f32 %v3878, %v4085
  %v4087 = vpop.f32.mrf.mxu0
  %v4088 = vpop.f32.mrf.mxu0
  %v4089 = vpop.f32.mrf.mxu0
  %4090 = vdwg.mxu0
  %v4091 = vld [vmem:[%s2] sm:$0xff]
  %v4092 = vld [vmem:[%s2 + $0x8] sm:$0xf]
  %v4093 = vld [vmem:[%s2 + $0xc] sm:$0xff]
  %v4094 = vld [vmem:[%s2 + $0x14] sm:$0xf]
  %v4095 = vld [vmem:[%s2 + $0x18] sm:$0xff]
  %v4096 = vld [vmem:[%s2 + $0x20] sm:$0xf]
  %v4097 = vld [vmem:[%s2 + $0x24] sm:$0xff]
  %v4098 = vld [vmem:[%s2 + $0x2c] sm:$0xf]
  %v4099 = vld [vmem:[%s2 + $0x30] sm:$0xff]
  %v4100 = vld [vmem:[%s2 + $0x38] sm:$0xf]
  %v4101 = vld [vmem:[%s2 + $0x3c] sm:$0xff]
  %v4102 = vld [vmem:[%s2 + $0x44] sm:$0xf]
  %v4103 = vld [vmem:[%s2 + $0x48] sm:$0xff]
  %v4104 = vld [vmem:[%s2 + $0x50] sm:$0xf]
  %v4105 = vld [vmem:[%s2 + $0x54] sm:$0xff]
  %v4106 = vld [vmem:[%s2 + $0x5c] sm:$0xf]
  %v4107 = vld [vmem:[%s2 + $0x60] sm:$0xff]
  %v4108 = vld [vmem:[%s2 + $0x68] sm:$0xf]
  %v4109 = vld [vmem:[%s2 + $0x6c] sm:$0xff]
  %v4110 = vld [vmem:[%s2 + $0x74] sm:$0xf]
  %v4111 = vld [vmem:[%s2 + $0x78] sm:$0xff]
  %v4112 = vld [vmem:[%s2 + $0x80] sm:$0xf]
  %v4113 = vld [vmem:[%s2 + $0x84] sm:$0xff]
  %v4114 = vld [vmem:[%s2 + $0x8c] sm:$0xf]
  %v4115 = vld [vmem:[%s2 + $0x90] sm:$0xff]
  %v4116 = vld [vmem:[%s2 + $0x98] sm:$0xf]
  %v4117 = vld [vmem:[%s2 + $0x9c] sm:$0xff]
  %v4118 = vld [vmem:[%s2 + $0xa4] sm:$0xf]
  %v4119 = vld [vmem:[%s2 + $0xa8] sm:$0xff]
  %v4120 = vld [vmem:[%s2 + $0xb0] sm:$0xf]
  %v4121 = vld [vmem:[%s2 + $0xb4] sm:$0xff]
  %v4122 = vld [vmem:[%s2 + $0xbc] sm:$0xf]
  %v4123 = vld [vmem:[%s4] sm:$0x7]
  %v4125 = vlaneseq
  %v4126 = vshrl.u32 %v4125, 7
  %v4127 = vsub.s32 0, %v4126
  %v4128 = vrot.slane %v4123, %v4127
  %v4129 = vlaneseq
  %v4130 = vshrl.u32 %v4129, 7
  %v4131 = vsub.s32 1, %v4130
  %v4132 = vrot.slane %v4123, %v4131
  %v4133 = vlaneseq
  %v4134 = vshrl.u32 %v4133, 7
  %v4135 = vsub.s32 2, %v4134
  %v4136 = vrot.slane %v4123, %v4135
  %v4172 = vunpack.c.l.b16 %v4091
  %v4173 = vunpack.c.h.b16 %v4091
  %v4174 = vunpack.c.l.b16 %v4092
  %v4175 = vunpack.c.l.b16 %v4093
  %v4176 = vunpack.c.h.b16 %v4093
  %v4177 = vunpack.c.l.b16 %v4094
  %v4178 = vunpack.c.l.b16 %v4095
  %v4179 = vunpack.c.h.b16 %v4095
  %v4180 = vunpack.c.l.b16 %v4096
  %v4181 = vunpack.c.l.b16 %v4097
  %v4182 = vunpack.c.h.b16 %v4097
  %v4183 = vunpack.c.l.b16 %v4098
  %v4184 = vunpack.c.l.b16 %v4099
  %v4185 = vunpack.c.h.b16 %v4099
  %v4186 = vunpack.c.l.b16 %v4100
  %v4187 = vunpack.c.l.b16 %v4101
  %v4188 = vunpack.c.h.b16 %v4101
  %v4189 = vunpack.c.l.b16 %v4102
  %v4190 = vunpack.c.l.b16 %v4103
  %v4191 = vunpack.c.h.b16 %v4103
  %v4192 = vunpack.c.l.b16 %v4104
  %v4193 = vunpack.c.l.b16 %v4105
  %v4194 = vunpack.c.h.b16 %v4105
  %v4195 = vunpack.c.l.b16 %v4106
  %v4196 = vunpack.c.l.b16 %v4107
  %v4197 = vunpack.c.h.b16 %v4107
  %v4198 = vunpack.c.l.b16 %v4108
  %v4199 = vunpack.c.l.b16 %v4109
  %v4200 = vunpack.c.h.b16 %v4109
  %v4201 = vunpack.c.l.b16 %v4110
  %v4202 = vunpack.c.l.b16 %v4111
  %v4203 = vunpack.c.h.b16 %v4111
  %v4204 = vunpack.c.l.b16 %v4112
  %v4205 = vunpack.c.l.b16 %v4113
  %v4206 = vunpack.c.h.b16 %v4113
  %v4207 = vunpack.c.l.b16 %v4114
  %v4208 = vunpack.c.l.b16 %v4115
  %v4209 = vunpack.c.h.b16 %v4115
  %v4210 = vunpack.c.l.b16 %v4116
  %v4211 = vunpack.c.l.b16 %v4117
  %v4212 = vunpack.c.h.b16 %v4117
  %v4213 = vunpack.c.l.b16 %v4118
  %v4214 = vunpack.c.l.b16 %v4119
  %v4215 = vunpack.c.h.b16 %v4119
  %v4216 = vunpack.c.l.b16 %v4120
  %v4217 = vunpack.c.l.b16 %v4121
  %v4218 = vunpack.c.h.b16 %v4121
  %v4219 = vunpack.c.l.b16 %v4122
  %v4220 = vpack.c.b16 %v4175, %v4172
  %v4221 = vpack.c.b16 %v4176, %v4173
  %v4222 = vpack.c.b16 %v4177, %v4174
  %v4223 = vpack.c.b16 %v4181, %v4178
  %v4224 = vpack.c.b16 %v4182, %v4179
  %v4225 = vpack.c.b16 %v4183, %v4180
  %v4226 = vpack.c.b16 %v4187, %v4184
  %v4227 = vpack.c.b16 %v4188, %v4185
  %v4228 = vpack.c.b16 %v4189, %v4186
  %v4229 = vpack.c.b16 %v4193, %v4190
  %v4230 = vpack.c.b16 %v4194, %v4191
  %v4231 = vpack.c.b16 %v4195, %v4192
  %v4232 = vpack.c.b16 %v4199, %v4196
  %v4233 = vpack.c.b16 %v4200, %v4197
  %v4234 = vpack.c.b16 %v4201, %v4198
  %v4235 = vpack.c.b16 %v4205, %v4202
  %v4236 = vpack.c.b16 %v4206, %v4203
  %v4237 = vpack.c.b16 %v4207, %v4204
  %v4238 = vpack.c.b16 %v4211, %v4208
  %v4239 = vpack.c.b16 %v4212, %v4209
  %v4240 = vpack.c.b16 %v4213, %v4210
  %v4241 = vpack.c.b16 %v4217, %v4214
  %v4242 = vpack.c.b16 %v4218, %v4215
  %v4243 = vpack.c.b16 %v4219, %v4216
  %4268 = vmatprep.subr.bf16.mxu0 %v4242
  %4269 = vmatpush1.bf16.msra.mxu0 %v4241
  %4270 = vmatprep.subr.bf16.mxu0 %v4239
  %4271 = vmatpush1.bf16.msra.mxu0 %v4238
  %4272 = vmatprep.subr.bf16.mxu0 %v4236
  %4273 = vmatpush1.bf16.msra.mxu0 %v4235
  %4274 = vmatprep.subr.bf16.mxu0 %v4233
  %4275 = vmatpush1.bf16.msra.mxu0 %v4232
  %4276 = vmatprep.subr.bf16.mxu0 %v4230
  %4277 = vmatpush1.bf16.msra.mxu0 %v4229
  %4278 = vmatprep.subr.bf16.mxu0 %v4227
  %4279 = vmatpush1.bf16.msra.mxu0 %v4226
  %4280 = vmatprep.subr.bf16.mxu0 %v4224
  %4281 = vmatpush1.bf16.msra.mxu0 %v4223
  %4282 = vmatprep.subr.bf16.mxu0 %v4221
  %4283 = vmatpush1.bf16.msra.mxu0 %v4220
  %4284 = vmatprep.subr.bf16.mxu0 0
  %4285 = vmatpush2.bf16.msra.mxu0 0
  %4286 = vmatprep.subr.bf16.mxu0 0
  %4287 = vmatpush2.bf16.msra.mxu0 0
  %4288 = vmatprep.subr.bf16.mxu0 0
  %4289 = vmatpush2.bf16.msra.mxu0 0
  %4290 = vmatprep.subr.bf16.mxu0 0
  %4291 = vmatpush2.bf16.msra.mxu0 0
  %4292 = vmatprep.subr.bf16.mxu0 0
  %4293 = vmatpush2.bf16.msra.mxu0 0
  %4294 = vmatprep.subr.bf16.mxu0 0
  %4295 = vmatpush2.bf16.msra.mxu0 0
  %4296 = vmatprep.subr.bf16.mxu0 0
  %4297 = vmatpush2.bf16.msra.mxu0 0
  %4298 = vmatprep.subr.bf16.mxu0 0
  %4299 = vmatpush2.bf16.msra.mxu0 0
  %4300 = vmatprep.mubr.bf16.mxu0 0
  %4301 = vmatmul.mubr.bf16.gmra.mxu0 %v3828
  %v4302 = vpop.f32.mrf.mxu0
  %v4303 = vadd.f32 %v4128, %v4302
  %v4304 = vpop.f32.mrf.mxu0
  %v4305 = vadd.f32 %v4132, %v4304
  %v4306 = vpop.f32.mrf.mxu0
  %v4307 = vpop.f32.mrf.mxu0
  %4308 = vdwg.mxu0
  %4309 = vmatprep.subr.bf16.mxu0 0
  %4310 = vmatpush1.bf16.msra.mxu0 %v4243
  %4311 = vmatprep.subr.bf16.mxu0 0
  %4312 = vmatpush1.bf16.msra.mxu0 %v4240
  %4313 = vmatprep.subr.bf16.mxu0 0
  %4314 = vmatpush1.bf16.msra.mxu0 %v4237
  %4315 = vmatprep.subr.bf16.mxu0 0
  %4316 = vmatpush1.bf16.msra.mxu0 %v4234
  %4317 = vmatprep.subr.bf16.mxu0 0
  %4318 = vmatpush1.bf16.msra.mxu0 %v4231
  %4319 = vmatprep.subr.bf16.mxu0 0
  %4320 = vmatpush1.bf16.msra.mxu0 %v4228
  %4321 = vmatprep.subr.bf16.mxu0 0
  %4322 = vmatpush1.bf16.msra.mxu0 %v4225
  %4323 = vmatprep.subr.bf16.mxu0 0
  %4324 = vmatpush1.bf16.msra.mxu0 %v4222
  %4325 = vmatprep.subr.bf16.mxu0 0
  %4326 = vmatpush2.bf16.msra.mxu0 0
  %4327 = vmatprep.subr.bf16.mxu0 0
  %4328 = vmatpush2.bf16.msra.mxu0 0
  %4329 = vmatprep.subr.bf16.mxu0 0
  %4330 = vmatpush2.bf16.msra.mxu0 0
  %4331 = vmatprep.subr.bf16.mxu0 0
  %4332 = vmatpush2.bf16.msra.mxu0 0
  %4333 = vmatprep.subr.bf16.mxu0 0
  %4334 = vmatpush2.bf16.msra.mxu0 0
  %4335 = vmatprep.subr.bf16.mxu0 0
  %4336 = vmatpush2.bf16.msra.mxu0 0
  %4337 = vmatprep.subr.bf16.mxu0 0
  %4338 = vmatpush2.bf16.msra.mxu0 0
  %4339 = vmatprep.subr.bf16.mxu0 0
  %4340 = vmatpush2.bf16.msra.mxu0 0
  %4341 = vmatprep.mubr.bf16.mxu0 0
  %4342 = vmatmul.mubr.bf16.gmra.mxu0 %v3828
  %v4343 = vpop.f32.mrf.mxu0
  %v4344 = vadd.f32 %v4136, %v4343
  %v4345 = vpop.f32.mrf.mxu0
  %v4346 = vpop.f32.mrf.mxu0
  %v4347 = vpop.f32.mrf.mxu0
  %4348 = vdwg.mxu0
  %v4349 = vadd.f32 %v4045, %v4303
  %v4350 = vxor.u32 %v4349, 2147483648
  %v4351 = vmul.f32 %v4350, 1.442695
  %v4352 = vpow.pop %v4351
  %v4353 = vadd.f32 %v4352, 1.0
  %v4354 = vrcp.pop %v4353
  %v4355 = vmul.f32 1.0, %v4354
  %v4356 = vadd.f32 %v4047, %v4305
  %v4357 = vxor.u32 %v4356, 2147483648
  %v4358 = vmul.f32 %v4357, 1.442695
  %v4359 = vpow.pop %v4358
  %v4360 = vadd.f32 %v4359, 1.0
  %v4361 = vrcp.pop %v4360
  %v4362 = vmul.f32 1.0, %v4361
  %v4363 = vmul.f32 %v4355, %v4344
  %v4364 = vadd.f32 %v4086, %v4363
  %v4365 = vtanh.pop %v4364
  %v4366 = vsub.f32 1.0, %v4362
  %v4367 = vmul.f32 %v4366, %v4365
  %v4368 = vmul.f32 %v4362, %v3827
  %v4369 = vadd.f32 %v4367, %v4368
  %v4370 = vpack.c.bf16 %v4369, %v4369
  %s4371 = scalar_lea.vmem [#allocation2], 28
  %4372 = vst [vmem:[%s4371] sm:$0xf] %v4370
  %v4373 = vld [vmem:[#allocation2] sm:$0xf]
  %v4374 = vld [vmem:[%s5] sm:$0xff]
  %v4375 = vld [vmem:[%s5 + $0x8] sm:$0xf]
  %v4376 = vld [vmem:[%s5 + $0xc] sm:$0xff]
  %v4377 = vld [vmem:[%s5 + $0x14] sm:$0xf]
  %v4378 = vld [vmem:[%s5 + $0x18] sm:$0xff]
  %v4379 = vld [vmem:[%s5 + $0x20] sm:$0xf]
  %v4380 = vld [vmem:[%s5 + $0x24] sm:$0xff]
  %v4381 = vld [vmem:[%s5 + $0x2c] sm:$0xf]
  %v4382 = vld [vmem:[%s5 + $0x30] sm:$0xff]
  %v4383 = vld [vmem:[%s5 + $0x38] sm:$0xf]
  %v4384 = vld [vmem:[%s5 + $0x3c] sm:$0xff]
  %v4385 = vld [vmem:[%s5 + $0x44] sm:$0xf]
  %v4386 = vld [vmem:[%s5 + $0x48] sm:$0xff]
  %v4387 = vld [vmem:[%s5 + $0x50] sm:$0xf]
  %v4388 = vld [vmem:[%s5 + $0x54] sm:$0xff]
  %v4389 = vld [vmem:[%s5 + $0x5c] sm:$0xf]
  %v4390 = vld [vmem:[%s5 + $0x60] sm:$0xff]
  %v4391 = vld [vmem:[%s5 + $0x68] sm:$0xf]
  %v4392 = vld [vmem:[%s5 + $0x6c] sm:$0xff]
  %v4393 = vld [vmem:[%s5 + $0x74] sm:$0xf]
  %v4394 = vld [vmem:[%s5 + $0x78] sm:$0xff]
  %v4395 = vld [vmem:[%s5 + $0x80] sm:$0xf]
  %v4396 = vld [vmem:[%s5 + $0x84] sm:$0xff]
  %v4397 = vld [vmem:[%s5 + $0x8c] sm:$0xf]
  %v4398 = vld [vmem:[%s5 + $0x90] sm:$0xff]
  %v4399 = vld [vmem:[%s5 + $0x98] sm:$0xf]
  %v4400 = vld [vmem:[%s5 + $0x9c] sm:$0xff]
  %v4401 = vld [vmem:[%s5 + $0xa4] sm:$0xf]
  %v4402 = vld [vmem:[%s5 + $0xa8] sm:$0xff]
  %v4403 = vld [vmem:[%s5 + $0xb0] sm:$0xf]
  %v4404 = vld [vmem:[%s5 + $0xb4] sm:$0xff]
  %v4405 = vld [vmem:[%s5 + $0xbc] sm:$0xf]
  %v4406 = vld [vmem:[%s7] sm:$0x7]
  %v4408 = vlaneseq
  %v4409 = vshrl.u32 %v4408, 7
  %v4410 = vsub.s32 0, %v4409
  %v4411 = vrot.slane %v4406, %v4410
  %v4412 = vlaneseq
  %v4413 = vshrl.u32 %v4412, 7
  %v4414 = vsub.s32 1, %v4413
  %v4415 = vrot.slane %v4406, %v4414
  %v4416 = vlaneseq
  %v4417 = vshrl.u32 %v4416, 7
  %v4418 = vsub.s32 2, %v4417
  %v4419 = vrot.slane %v4406, %v4418
  %v4455 = vunpack.c.l.b16 %v4374
  %v4456 = vunpack.c.h.b16 %v4374
  %v4457 = vunpack.c.l.b16 %v4375
  %v4458 = vunpack.c.l.b16 %v4376
  %v4459 = vunpack.c.h.b16 %v4376
  %v4460 = vunpack.c.l.b16 %v4377
  %v4461 = vunpack.c.l.b16 %v4378
  %v4462 = vunpack.c.h.b16 %v4378
  %v4463 = vunpack.c.l.b16 %v4379
  %v4464 = vunpack.c.l.b16 %v4380
  %v4465 = vunpack.c.h.b16 %v4380
  %v4466 = vunpack.c.l.b16 %v4381
  %v4467 = vunpack.c.l.b16 %v4382
  %v4468 = vunpack.c.h.b16 %v4382
  %v4469 = vunpack.c.l.b16 %v4383
  %v4470 = vunpack.c.l.b16 %v4384
  %v4471 = vunpack.c.h.b16 %v4384
  %v4472 = vunpack.c.l.b16 %v4385
  %v4473 = vunpack.c.l.b16 %v4386
  %v4474 = vunpack.c.h.b16 %v4386
  %v4475 = vunpack.c.l.b16 %v4387
  %v4476 = vunpack.c.l.b16 %v4388
  %v4477 = vunpack.c.h.b16 %v4388
  %v4478 = vunpack.c.l.b16 %v4389
  %v4479 = vunpack.c.l.b16 %v4390
  %v4480 = vunpack.c.h.b16 %v4390
  %v4481 = vunpack.c.l.b16 %v4391
  %v4482 = vunpack.c.l.b16 %v4392
  %v4483 = vunpack.c.h.b16 %v4392
  %v4484 = vunpack.c.l.b16 %v4393
  %v4485 = vunpack.c.l.b16 %v4394
  %v4486 = vunpack.c.h.b16 %v4394
  %v4487 = vunpack.c.l.b16 %v4395
  %v4488 = vunpack.c.l.b16 %v4396
  %v4489 = vunpack.c.h.b16 %v4396
  %v4490 = vunpack.c.l.b16 %v4397
  %v4491 = vunpack.c.l.b16 %v4398
  %v4492 = vunpack.c.h.b16 %v4398
  %v4493 = vunpack.c.l.b16 %v4399
  %v4494 = vunpack.c.l.b16 %v4400
  %v4495 = vunpack.c.h.b16 %v4400
  %v4496 = vunpack.c.l.b16 %v4401
  %v4497 = vunpack.c.l.b16 %v4402
  %v4498 = vunpack.c.h.b16 %v4402
  %v4499 = vunpack.c.l.b16 %v4403
  %v4500 = vunpack.c.l.b16 %v4404
  %v4501 = vunpack.c.h.b16 %v4404
  %v4502 = vunpack.c.l.b16 %v4405
  %v4503 = vpack.c.b16 %v4458, %v4455
  %v4504 = vpack.c.b16 %v4459, %v4456
  %v4505 = vpack.c.b16 %v4460, %v4457
  %v4506 = vpack.c.b16 %v4464, %v4461
  %v4507 = vpack.c.b16 %v4465, %v4462
  %v4508 = vpack.c.b16 %v4466, %v4463
  %v4509 = vpack.c.b16 %v4470, %v4467
  %v4510 = vpack.c.b16 %v4471, %v4468
  %v4511 = vpack.c.b16 %v4472, %v4469
  %v4512 = vpack.c.b16 %v4476, %v4473
  %v4513 = vpack.c.b16 %v4477, %v4474
  %v4514 = vpack.c.b16 %v4478, %v4475
  %v4515 = vpack.c.b16 %v4482, %v4479
  %v4516 = vpack.c.b16 %v4483, %v4480
  %v4517 = vpack.c.b16 %v4484, %v4481
  %v4518 = vpack.c.b16 %v4488, %v4485
  %v4519 = vpack.c.b16 %v4489, %v4486
  %v4520 = vpack.c.b16 %v4490, %v4487
  %v4521 = vpack.c.b16 %v4494, %v4491
  %v4522 = vpack.c.b16 %v4495, %v4492
  %v4523 = vpack.c.b16 %v4496, %v4493
  %v4524 = vpack.c.b16 %v4500, %v4497
  %v4525 = vpack.c.b16 %v4501, %v4498
  %v4526 = vpack.c.b16 %v4502, %v4499
  %4551 = vmatprep.subr.bf16.mxu0 %v4525
  %4552 = vmatpush1.bf16.msra.mxu0 %v4524
  %4553 = vmatprep.subr.bf16.mxu0 %v4522
  %4554 = vmatpush1.bf16.msra.mxu0 %v4521
  %4555 = vmatprep.subr.bf16.mxu0 %v4519
  %4556 = vmatpush1.bf16.msra.mxu0 %v4518
  %4557 = vmatprep.subr.bf16.mxu0 %v4516
  %4558 = vmatpush1.bf16.msra.mxu0 %v4515
  %4559 = vmatprep.subr.bf16.mxu0 %v4513
  %4560 = vmatpush1.bf16.msra.mxu0 %v4512
  %4561 = vmatprep.subr.bf16.mxu0 %v4510
  %4562 = vmatpush1.bf16.msra.mxu0 %v4509
  %4563 = vmatprep.subr.bf16.mxu0 %v4507
  %4564 = vmatpush1.bf16.msra.mxu0 %v4506
  %4565 = vmatprep.subr.bf16.mxu0 %v4504
  %4566 = vmatpush1.bf16.msra.mxu0 %v4503
  %4567 = vmatprep.subr.bf16.mxu0 0
  %4568 = vmatpush2.bf16.msra.mxu0 0
  %4569 = vmatprep.subr.bf16.mxu0 0
  %4570 = vmatpush2.bf16.msra.mxu0 0
  %4571 = vmatprep.subr.bf16.mxu0 0
  %4572 = vmatpush2.bf16.msra.mxu0 0
  %4573 = vmatprep.subr.bf16.mxu0 0
  %4574 = vmatpush2.bf16.msra.mxu0 0
  %4575 = vmatprep.subr.bf16.mxu0 0
  %4576 = vmatpush2.bf16.msra.mxu0 0
  %4577 = vmatprep.subr.bf16.mxu0 0
  %4578 = vmatpush2.bf16.msra.mxu0 0
  %4579 = vmatprep.subr.bf16.mxu0 0
  %4580 = vmatpush2.bf16.msra.mxu0 0
  %4581 = vmatprep.subr.bf16.mxu0 0
  %4582 = vmatpush2.bf16.msra.mxu0 0
  %4583 = vmatprep.mubr.bf16.mxu0 0
  %4584 = vmatmul.mubr.bf16.gmra.mxu0 %v4373
  %v4585 = vpop.f32.mrf.mxu0
  %v4586 = vadd.f32 %v4411, %v4585
  %v4587 = vpop.f32.mrf.mxu0
  %v4588 = vadd.f32 %v4415, %v4587
  %v4589 = vpop.f32.mrf.mxu0
  %v4590 = vpop.f32.mrf.mxu0
  %4591 = vdwg.mxu0
  %4592 = vmatprep.subr.bf16.mxu0 0
  %4593 = vmatpush1.bf16.msra.mxu0 %v4526
  %4594 = vmatprep.subr.bf16.mxu0 0
  %4595 = vmatpush1.bf16.msra.mxu0 %v4523
  %4596 = vmatprep.subr.bf16.mxu0 0
  %4597 = vmatpush1.bf16.msra.mxu0 %v4520
  %4598 = vmatprep.subr.bf16.mxu0 0
  %4599 = vmatpush1.bf16.msra.mxu0 %v4517
  %4600 = vmatprep.subr.bf16.mxu0 0
  %4601 = vmatpush1.bf16.msra.mxu0 %v4514
  %4602 = vmatprep.subr.bf16.mxu0 0
  %4603 = vmatpush1.bf16.msra.mxu0 %v4511
  %4604 = vmatprep.subr.bf16.mxu0 0
  %4605 = vmatpush1.bf16.msra.mxu0 %v4508
  %4606 = vmatprep.subr.bf16.mxu0 0
  %4607 = vmatpush1.bf16.msra.mxu0 %v4505
  %4608 = vmatprep.subr.bf16.mxu0 0
  %4609 = vmatpush2.bf16.msra.mxu0 0
  %4610 = vmatprep.subr.bf16.mxu0 0
  %4611 = vmatpush2.bf16.msra.mxu0 0
  %4612 = vmatprep.subr.bf16.mxu0 0
  %4613 = vmatpush2.bf16.msra.mxu0 0
  %4614 = vmatprep.subr.bf16.mxu0 0
  %4615 = vmatpush2.bf16.msra.mxu0 0
  %4616 = vmatprep.subr.bf16.mxu0 0
  %4617 = vmatpush2.bf16.msra.mxu0 0
  %4618 = vmatprep.subr.bf16.mxu0 0
  %4619 = vmatpush2.bf16.msra.mxu0 0
  %4620 = vmatprep.subr.bf16.mxu0 0
  %4621 = vmatpush2.bf16.msra.mxu0 0
  %4622 = vmatprep.subr.bf16.mxu0 0
  %4623 = vmatpush2.bf16.msra.mxu0 0
  %4624 = vmatprep.mubr.bf16.mxu0 0
  %4625 = vmatmul.mubr.bf16.gmra.mxu0 %v4373
  %v4626 = vpop.f32.mrf.mxu0
  %v4627 = vadd.f32 %v4419, %v4626
  %v4628 = vpop.f32.mrf.mxu0
  %v4629 = vpop.f32.mrf.mxu0
  %v4630 = vpop.f32.mrf.mxu0
  %4631 = vdwg.mxu0
  %v4632 = vld [vmem:[%s6] sm:$0xff]
  %v4633 = vld [vmem:[%s6 + $0x8] sm:$0xf]
  %v4634 = vld [vmem:[%s6 + $0xc] sm:$0xff]
  %v4635 = vld [vmem:[%s6 + $0x14] sm:$0xf]
  %v4636 = vld [vmem:[%s6 + $0x18] sm:$0xff]
  %v4637 = vld [vmem:[%s6 + $0x20] sm:$0xf]
  %v4638 = vld [vmem:[%s6 + $0x24] sm:$0xff]
  %v4639 = vld [vmem:[%s6 + $0x2c] sm:$0xf]
  %v4640 = vld [vmem:[%s6 + $0x30] sm:$0xff]
  %v4641 = vld [vmem:[%s6 + $0x38] sm:$0xf]
  %v4642 = vld [vmem:[%s6 + $0x3c] sm:$0xff]
  %v4643 = vld [vmem:[%s6 + $0x44] sm:$0xf]
  %v4644 = vld [vmem:[%s6 + $0x48] sm:$0xff]
  %v4645 = vld [vmem:[%s6 + $0x50] sm:$0xf]
  %v4646 = vld [vmem:[%s6 + $0x54] sm:$0xff]
  %v4647 = vld [vmem:[%s6 + $0x5c] sm:$0xf]
  %v4648 = vld [vmem:[%s6 + $0x60] sm:$0xff]
  %v4649 = vld [vmem:[%s6 + $0x68] sm:$0xf]
  %v4650 = vld [vmem:[%s6 + $0x6c] sm:$0xff]
  %v4651 = vld [vmem:[%s6 + $0x74] sm:$0xf]
  %v4652 = vld [vmem:[%s6 + $0x78] sm:$0xff]
  %v4653 = vld [vmem:[%s6 + $0x80] sm:$0xf]
  %v4654 = vld [vmem:[%s6 + $0x84] sm:$0xff]
  %v4655 = vld [vmem:[%s6 + $0x8c] sm:$0xf]
  %v4656 = vld [vmem:[%s6 + $0x90] sm:$0xff]
  %v4657 = vld [vmem:[%s6 + $0x98] sm:$0xf]
  %v4658 = vld [vmem:[%s6 + $0x9c] sm:$0xff]
  %v4659 = vld [vmem:[%s6 + $0xa4] sm:$0xf]
  %v4660 = vld [vmem:[%s6 + $0xa8] sm:$0xff]
  %v4661 = vld [vmem:[%s6 + $0xb0] sm:$0xf]
  %v4662 = vld [vmem:[%s6 + $0xb4] sm:$0xff]
  %v4663 = vld [vmem:[%s6 + $0xbc] sm:$0xf]
  %v4664 = vld [vmem:[%s8] sm:$0x7]
  %v4666 = vlaneseq
  %v4667 = vshrl.u32 %v4666, 7
  %v4668 = vsub.s32 0, %v4667
  %v4669 = vrot.slane %v4664, %v4668
  %v4670 = vlaneseq
  %v4671 = vshrl.u32 %v4670, 7
  %v4672 = vsub.s32 1, %v4671
  %v4673 = vrot.slane %v4664, %v4672
  %v4674 = vlaneseq
  %v4675 = vshrl.u32 %v4674, 7
  %v4676 = vsub.s32 2, %v4675
  %v4677 = vrot.slane %v4664, %v4676
  %v4713 = vunpack.c.l.b16 %v4632
  %v4714 = vunpack.c.h.b16 %v4632
  %v4715 = vunpack.c.l.b16 %v4633
  %v4716 = vunpack.c.l.b16 %v4634
  %v4717 = vunpack.c.h.b16 %v4634
  %v4718 = vunpack.c.l.b16 %v4635
  %v4719 = vunpack.c.l.b16 %v4636
  %v4720 = vunpack.c.h.b16 %v4636
  %v4721 = vunpack.c.l.b16 %v4637
  %v4722 = vunpack.c.l.b16 %v4638
  %v4723 = vunpack.c.h.b16 %v4638
  %v4724 = vunpack.c.l.b16 %v4639
  %v4725 = vunpack.c.l.b16 %v4640
  %v4726 = vunpack.c.h.b16 %v4640
  %v4727 = vunpack.c.l.b16 %v4641
  %v4728 = vunpack.c.l.b16 %v4642
  %v4729 = vunpack.c.h.b16 %v4642
  %v4730 = vunpack.c.l.b16 %v4643
  %v4731 = vunpack.c.l.b16 %v4644
  %v4732 = vunpack.c.h.b16 %v4644
  %v4733 = vunpack.c.l.b16 %v4645
  %v4734 = vunpack.c.l.b16 %v4646
  %v4735 = vunpack.c.h.b16 %v4646
  %v4736 = vunpack.c.l.b16 %v4647
  %v4737 = vunpack.c.l.b16 %v4648
  %v4738 = vunpack.c.h.b16 %v4648
  %v4739 = vunpack.c.l.b16 %v4649
  %v4740 = vunpack.c.l.b16 %v4650
  %v4741 = vunpack.c.h.b16 %v4650
  %v4742 = vunpack.c.l.b16 %v4651
  %v4743 = vunpack.c.l.b16 %v4652
  %v4744 = vunpack.c.h.b16 %v4652
  %v4745 = vunpack.c.l.b16 %v4653
  %v4746 = vunpack.c.l.b16 %v4654
  %v4747 = vunpack.c.h.b16 %v4654
  %v4748 = vunpack.c.l.b16 %v4655
  %v4749 = vunpack.c.l.b16 %v4656
  %v4750 = vunpack.c.h.b16 %v4656
  %v4751 = vunpack.c.l.b16 %v4657
  %v4752 = vunpack.c.l.b16 %v4658
  %v4753 = vunpack.c.h.b16 %v4658
  %v4754 = vunpack.c.l.b16 %v4659
  %v4755 = vunpack.c.l.b16 %v4660
  %v4756 = vunpack.c.h.b16 %v4660
  %v4757 = vunpack.c.l.b16 %v4661
  %v4758 = vunpack.c.l.b16 %v4662
  %v4759 = vunpack.c.h.b16 %v4662
  %v4760 = vunpack.c.l.b16 %v4663
  %v4761 = vpack.c.b16 %v4716, %v4713
  %v4762 = vpack.c.b16 %v4717, %v4714
  %v4763 = vpack.c.b16 %v4718, %v4715
  %v4764 = vpack.c.b16 %v4722, %v4719
  %v4765 = vpack.c.b16 %v4723, %v4720
  %v4766 = vpack.c.b16 %v4724, %v4721
  %v4767 = vpack.c.b16 %v4728, %v4725
  %v4768 = vpack.c.b16 %v4729, %v4726
  %v4769 = vpack.c.b16 %v4730, %v4727
  %v4770 = vpack.c.b16 %v4734, %v4731
  %v4771 = vpack.c.b16 %v4735, %v4732
  %v4772 = vpack.c.b16 %v4736, %v4733
  %v4773 = vpack.c.b16 %v4740, %v4737
  %v4774 = vpack.c.b16 %v4741, %v4738
  %v4775 = vpack.c.b16 %v4742, %v4739
  %v4776 = vpack.c.b16 %v4746, %v4743
  %v4777 = vpack.c.b16 %v4747, %v4744
  %v4778 = vpack.c.b16 %v4748, %v4745
  %v4779 = vpack.c.b16 %v4752, %v4749
  %v4780 = vpack.c.b16 %v4753, %v4750
  %v4781 = vpack.c.b16 %v4754, %v4751
  %v4782 = vpack.c.b16 %v4758, %v4755
  %v4783 = vpack.c.b16 %v4759, %v4756
  %v4784 = vpack.c.b16 %v4760, %v4757
  %4809 = vmatprep.subr.bf16.mxu0 %v4783
  %4810 = vmatpush1.bf16.msra.mxu0 %v4782
  %4811 = vmatprep.subr.bf16.mxu0 %v4780
  %4812 = vmatpush1.bf16.msra.mxu0 %v4779
  %4813 = vmatprep.subr.bf16.mxu0 %v4777
  %4814 = vmatpush1.bf16.msra.mxu0 %v4776
  %4815 = vmatprep.subr.bf16.mxu0 %v4774
  %4816 = vmatpush1.bf16.msra.mxu0 %v4773
  %4817 = vmatprep.subr.bf16.mxu0 %v4771
  %4818 = vmatpush1.bf16.msra.mxu0 %v4770
  %4819 = vmatprep.subr.bf16.mxu0 %v4768
  %4820 = vmatpush1.bf16.msra.mxu0 %v4767
  %4821 = vmatprep.subr.bf16.mxu0 %v4765
  %4822 = vmatpush1.bf16.msra.mxu0 %v4764
  %4823 = vmatprep.subr.bf16.mxu0 %v4762
  %4824 = vmatpush1.bf16.msra.mxu0 %v4761
  %4825 = vmatprep.subr.bf16.mxu0 0
  %4826 = vmatpush2.bf16.msra.mxu0 0
  %4827 = vmatprep.subr.bf16.mxu0 0
  %4828 = vmatpush2.bf16.msra.mxu0 0
  %4829 = vmatprep.subr.bf16.mxu0 0
  %4830 = vmatpush2.bf16.msra.mxu0 0
  %4831 = vmatprep.subr.bf16.mxu0 0
  %4832 = vmatpush2.bf16.msra.mxu0 0
  %4833 = vmatprep.subr.bf16.mxu0 0
  %4834 = vmatpush2.bf16.msra.mxu0 0
  %4835 = vmatprep.subr.bf16.mxu0 0
  %4836 = vmatpush2.bf16.msra.mxu0 0
  %4837 = vmatprep.subr.bf16.mxu0 0
  %4838 = vmatpush2.bf16.msra.mxu0 0
  %4839 = vmatprep.subr.bf16.mxu0 0
  %4840 = vmatpush2.bf16.msra.mxu0 0
  %4841 = vmatprep.mubr.bf16.mxu0 0
  %4842 = vmatmul.mubr.bf16.gmra.mxu0 0
  %v4843 = vpop.f32.mrf.mxu0
  %v4844 = vadd.f32 %v4669, %v4843
  %v4845 = vpop.f32.mrf.mxu0
  %v4846 = vadd.f32 %v4673, %v4845
  %v4847 = vpop.f32.mrf.mxu0
  %v4848 = vpop.f32.mrf.mxu0
  %4849 = vdwg.mxu0
  %4850 = vmatprep.subr.bf16.mxu0 0
  %4851 = vmatpush1.bf16.msra.mxu0 %v4784
  %4852 = vmatprep.subr.bf16.mxu0 0
  %4853 = vmatpush1.bf16.msra.mxu0 %v4781
  %4854 = vmatprep.subr.bf16.mxu0 0
  %4855 = vmatpush1.bf16.msra.mxu0 %v4778
  %4856 = vmatprep.subr.bf16.mxu0 0
  %4857 = vmatpush1.bf16.msra.mxu0 %v4775
  %4858 = vmatprep.subr.bf16.mxu0 0
  %4859 = vmatpush1.bf16.msra.mxu0 %v4772
  %4860 = vmatprep.subr.bf16.mxu0 0
  %4861 = vmatpush1.bf16.msra.mxu0 %v4769
  %4862 = vmatprep.subr.bf16.mxu0 0
  %4863 = vmatpush1.bf16.msra.mxu0 %v4766
  %4864 = vmatprep.subr.bf16.mxu0 0
  %4865 = vmatpush1.bf16.msra.mxu0 %v4763
  %4866 = vmatprep.subr.bf16.mxu0 0
  %4867 = vmatpush2.bf16.msra.mxu0 0
  %4868 = vmatprep.subr.bf16.mxu0 0
  %4869 = vmatpush2.bf16.msra.mxu0 0
  %4870 = vmatprep.subr.bf16.mxu0 0
  %4871 = vmatpush2.bf16.msra.mxu0 0
  %4872 = vmatprep.subr.bf16.mxu0 0
  %4873 = vmatpush2.bf16.msra.mxu0 0
  %4874 = vmatprep.subr.bf16.mxu0 0
  %4875 = vmatpush2.bf16.msra.mxu0 0
  %4876 = vmatprep.subr.bf16.mxu0 0
  %4877 = vmatpush2.bf16.msra.mxu0 0
  %4878 = vmatprep.subr.bf16.mxu0 0
  %4879 = vmatpush2.bf16.msra.mxu0 0
  %4880 = vmatprep.subr.bf16.mxu0 0
  %4881 = vmatpush2.bf16.msra.mxu0 0
  %4882 = vmatprep.mubr.bf16.mxu0 0
  %4883 = vmatmul.mubr.bf16.gmra.mxu0 0
  %v4884 = vpop.f32.mrf.mxu0
  %v4885 = vadd.f32 %v4677, %v4884
  %v4886 = vpop.f32.mrf.mxu0
  %v4887 = vpop.f32.mrf.mxu0
  %v4888 = vpop.f32.mrf.mxu0
  %4889 = vdwg.mxu0
  %v4890 = vadd.f32 %v4586, %v4844
  %v4891 = vxor.u32 %v4890, 2147483648
  %v4892 = vmul.f32 %v4891, 1.442695
  %v4893 = vpow.pop %v4892
  %v4894 = vadd.f32 %v4893, 1.0
  %v4895 = vrcp.pop %v4894
  %v4896 = vmul.f32 1.0, %v4895
  %v4897 = vadd.f32 %v4588, %v4846
  %v4898 = vxor.u32 %v4897, 2147483648
  %v4899 = vmul.f32 %v4898, 1.442695
  %v4900 = vpow.pop %v4899
  %v4901 = vadd.f32 %v4900, 1.0
  %v4902 = vrcp.pop %v4901
  %v4903 = vmul.f32 1.0, %v4902
  %v4904 = vmul.f32 %v4896, %v4885
  %v4905 = vadd.f32 %v4627, %v4904
  %v4906 = vtanh.pop %v4905
  %v4907 = vsub.f32 1.0, %v4903
  %v4908 = vmul.f32 %v4907, %v4906
  %v4909 = vmul.f32 %v4903, 0.0
  %v4910 = vadd.f32 %v4908, %v4909
  %v4911 = vld [vmem:[%s1119] sm:$0xf]
  %4912 = vmatprep.subr.bf16.mxu0 %v4525
  %4913 = vmatpush1.bf16.msra.mxu0 %v4524
  %4914 = vmatprep.subr.bf16.mxu0 %v4522
  %4915 = vmatpush1.bf16.msra.mxu0 %v4521
  %4916 = vmatprep.subr.bf16.mxu0 %v4519
  %4917 = vmatpush1.bf16.msra.mxu0 %v4518
  %4918 = vmatprep.subr.bf16.mxu0 %v4516
  %4919 = vmatpush1.bf16.msra.mxu0 %v4515
  %4920 = vmatprep.subr.bf16.mxu0 %v4513
  %4921 = vmatpush1.bf16.msra.mxu0 %v4512
  %4922 = vmatprep.subr.bf16.mxu0 %v4510
  %4923 = vmatpush1.bf16.msra.mxu0 %v4509
  %4924 = vmatprep.subr.bf16.mxu0 %v4507
  %4925 = vmatpush1.bf16.msra.mxu0 %v4506
  %4926 = vmatprep.subr.bf16.mxu0 %v4504
  %4927 = vmatpush1.bf16.msra.mxu0 %v4503
  %4928 = vmatprep.subr.bf16.mxu0 0
  %4929 = vmatpush2.bf16.msra.mxu0 0
  %4930 = vmatprep.subr.bf16.mxu0 0
  %4931 = vmatpush2.bf16.msra.mxu0 0
  %4932 = vmatprep.subr.bf16.mxu0 0
  %4933 = vmatpush2.bf16.msra.mxu0 0
  %4934 = vmatprep.subr.bf16.mxu0 0
  %4935 = vmatpush2.bf16.msra.mxu0 0
  %4936 = vmatprep.subr.bf16.mxu0 0
  %4937 = vmatpush2.bf16.msra.mxu0 0
  %4938 = vmatprep.subr.bf16.mxu0 0
  %4939 = vmatpush2.bf16.msra.mxu0 0
  %4940 = vmatprep.subr.bf16.mxu0 0
  %4941 = vmatpush2.bf16.msra.mxu0 0
  %4942 = vmatprep.subr.bf16.mxu0 0
  %4943 = vmatpush2.bf16.msra.mxu0 0
  %4944 = vmatprep.mubr.bf16.mxu0 0
  %4945 = vmatmul.mubr.bf16.gmra.mxu0 %v4911
  %v4946 = vpop.f32.mrf.mxu0
  %v4947 = vadd.f32 %v4411, %v4946
  %v4948 = vpop.f32.mrf.mxu0
  %v4949 = vadd.f32 %v4415, %v4948
  %v4950 = vpop.f32.mrf.mxu0
  %v4951 = vpop.f32.mrf.mxu0
  %4952 = vdwg.mxu0
  %4953 = vmatprep.subr.bf16.mxu0 0
  %4954 = vmatpush1.bf16.msra.mxu0 %v4526
  %4955 = vmatprep.subr.bf16.mxu0 0
  %4956 = vmatpush1.bf16.msra.mxu0 %v4523
  %4957 = vmatprep.subr.bf16.mxu0 0
  %4958 = vmatpush1.bf16.msra.mxu0 %v4520
  %4959 = vmatprep.subr.bf16.mxu0 0
  %4960 = vmatpush1.bf16.msra.mxu0 %v4517
  %4961 = vmatprep.subr.bf16.mxu0 0
  %4962 = vmatpush1.bf16.msra.mxu0 %v4514
  %4963 = vmatprep.subr.bf16.mxu0 0
  %4964 = vmatpush1.bf16.msra.mxu0 %v4511
  %4965 = vmatprep.subr.bf16.mxu0 0
  %4966 = vmatpush1.bf16.msra.mxu0 %v4508
  %4967 = vmatprep.subr.bf16.mxu0 0
  %4968 = vmatpush1.bf16.msra.mxu0 %v4505
  %4969 = vmatprep.subr.bf16.mxu0 0
  %4970 = vmatpush2.bf16.msra.mxu0 0
  %4971 = vmatprep.subr.bf16.mxu0 0
  %4972 = vmatpush2.bf16.msra.mxu0 0
  %4973 = vmatprep.subr.bf16.mxu0 0
  %4974 = vmatpush2.bf16.msra.mxu0 0
  %4975 = vmatprep.subr.bf16.mxu0 0
  %4976 = vmatpush2.bf16.msra.mxu0 0
  %4977 = vmatprep.subr.bf16.mxu0 0
  %4978 = vmatpush2.bf16.msra.mxu0 0
  %4979 = vmatprep.subr.bf16.mxu0 0
  %4980 = vmatpush2.bf16.msra.mxu0 0
  %4981 = vmatprep.subr.bf16.mxu0 0
  %4982 = vmatpush2.bf16.msra.mxu0 0
  %4983 = vmatprep.subr.bf16.mxu0 0
  %4984 = vmatpush2.bf16.msra.mxu0 0
  %4985 = vmatprep.mubr.bf16.mxu0 0
  %4986 = vmatmul.mubr.bf16.gmra.mxu0 %v4911
  %v4987 = vpop.f32.mrf.mxu0
  %v4988 = vadd.f32 %v4419, %v4987
  %v4989 = vpop.f32.mrf.mxu0
  %v4990 = vpop.f32.mrf.mxu0
  %v4991 = vpop.f32.mrf.mxu0
  %4992 = vdwg.mxu0
  %v4993 = vpack.c.bf16 %v4910, %v4910
  %4994 = vmatprep.subr.bf16.mxu0 %v4783
  %4995 = vmatpush1.bf16.msra.mxu0 %v4782
  %4996 = vmatprep.subr.bf16.mxu0 %v4780
  %4997 = vmatpush1.bf16.msra.mxu0 %v4779
  %4998 = vmatprep.subr.bf16.mxu0 %v4777
  %4999 = vmatpush1.bf16.msra.mxu0 %v4776
  %5000 = vmatprep.subr.bf16.mxu0 %v4774
  %5001 = vmatpush1.bf16.msra.mxu0 %v4773
  %5002 = vmatprep.subr.bf16.mxu0 %v4771
  %5003 = vmatpush1.bf16.msra.mxu0 %v4770
  %5004 = vmatprep.subr.bf16.mxu0 %v4768
  %5005 = vmatpush1.bf16.msra.mxu0 %v4767
  %5006 = vmatprep.subr.bf16.mxu0 %v4765
  %5007 = vmatpush1.bf16.msra.mxu0 %v4764
  %5008 = vmatprep.subr.bf16.mxu0 %v4762
  %5009 = vmatpush1.bf16.msra.mxu0 %v4761
  %5010 = vmatprep.subr.bf16.mxu0 0
  %5011 = vmatpush2.bf16.msra.mxu0 0
  %5012 = vmatprep.subr.bf16.mxu0 0
  %5013 = vmatpush2.bf16.msra.mxu0 0
  %5014 = vmatprep.subr.bf16.mxu0 0
  %5015 = vmatpush2.bf16.msra.mxu0 0
  %5016 = vmatprep.subr.bf16.mxu0 0
  %5017 = vmatpush2.bf16.msra.mxu0 0
  %5018 = vmatprep.subr.bf16.mxu0 0
  %5019 = vmatpush2.bf16.msra.mxu0 0
  %5020 = vmatprep.subr.bf16.mxu0 0
  %5021 = vmatpush2.bf16.msra.mxu0 0
  %5022 = vmatprep.subr.bf16.mxu0 0
  %5023 = vmatpush2.bf16.msra.mxu0 0
  %5024 = vmatprep.subr.bf16.mxu0 0
  %5025 = vmatpush2.bf16.msra.mxu0 0
  %5026 = vmatprep.mubr.bf16.mxu0 0
  %5027 = vmatmul.mubr.bf16.gmra.mxu0 %v4993
  %v5028 = vpop.f32.mrf.mxu0
  %v5029 = vadd.f32 %v4669, %v5028
  %v5030 = vpop.f32.mrf.mxu0
  %v5031 = vadd.f32 %v4673, %v5030
  %v5032 = vpop.f32.mrf.mxu0
  %v5033 = vpop.f32.mrf.mxu0
  %5034 = vdwg.mxu0
  %5035 = vmatprep.subr.bf16.mxu0 0
  %5036 = vmatpush1.bf16.msra.mxu0 %v4784
  %5037 = vmatprep.subr.bf16.mxu0 0
  %5038 = vmatpush1.bf16.msra.mxu0 %v4781
  %5039 = vmatprep.subr.bf16.mxu0 0
  %5040 = vmatpush1.bf16.msra.mxu0 %v4778
  %5041 = vmatprep.subr.bf16.mxu0 0
  %5042 = vmatpush1.bf16.msra.mxu0 %v4775
  %5043 = vmatprep.subr.bf16.mxu0 0
  %5044 = vmatpush1.bf16.msra.mxu0 %v4772
  %5045 = vmatprep.subr.bf16.mxu0 0
  %5046 = vmatpush1.bf16.msra.mxu0 %v4769
  %5047 = vmatprep.subr.bf16.mxu0 0
  %5048 = vmatpush1.bf16.msra.mxu0 %v4766
  %5049 = vmatprep.subr.bf16.mxu0 0
  %5050 = vmatpush1.bf16.msra.mxu0 %v4763
  %5051 = vmatprep.subr.bf16.mxu0 0
  %5052 = vmatpush2.bf16.msra.mxu0 0
  %5053 = vmatprep.subr.bf16.mxu0 0
  %5054 = vmatpush2.bf16.msra.mxu0 0
  %5055 = vmatprep.subr.bf16.mxu0 0
  %5056 = vmatpush2.bf16.msra.mxu0 0
  %5057 = vmatprep.subr.bf16.mxu0 0
  %5058 = vmatpush2.bf16.msra.mxu0 0
  %5059 = vmatprep.subr.bf16.mxu0 0
  %5060 = vmatpush2.bf16.msra.mxu0 0
  %5061 = vmatprep.subr.bf16.mxu0 0
  %5062 = vmatpush2.bf16.msra.mxu0 0
  %5063 = vmatprep.subr.bf16.mxu0 0
  %5064 = vmatpush2.bf16.msra.mxu0 0
  %5065 = vmatprep.subr.bf16.mxu0 0
  %5066 = vmatpush2.bf16.msra.mxu0 0
  %5067 = vmatprep.mubr.bf16.mxu0 0
  %5068 = vmatmul.mubr.bf16.gmra.mxu0 %v4993
  %v5069 = vpop.f32.mrf.mxu0
  %v5070 = vadd.f32 %v4677, %v5069
  %v5071 = vpop.f32.mrf.mxu0
  %v5072 = vpop.f32.mrf.mxu0
  %v5073 = vpop.f32.mrf.mxu0
  %5074 = vdwg.mxu0
  %v5075 = vadd.f32 %v4947, %v5029
  %v5076 = vxor.u32 %v5075, 2147483648
  %v5077 = vmul.f32 %v5076, 1.442695
  %v5078 = vpow.pop %v5077
  %v5079 = vadd.f32 %v5078, 1.0
  %v5080 = vrcp.pop %v5079
  %v5081 = vmul.f32 1.0, %v5080
  %v5082 = vadd.f32 %v4949, %v5031
  %v5083 = vxor.u32 %v5082, 2147483648
  %v5084 = vmul.f32 %v5083, 1.442695
  %v5085 = vpow.pop %v5084
  %v5086 = vadd.f32 %v5085, 1.0
  %v5087 = vrcp.pop %v5086
  %v5088 = vmul.f32 1.0, %v5087
  %v5089 = vmul.f32 %v5081, %v5070
  %v5090 = vadd.f32 %v4988, %v5089
  %v5091 = vtanh.pop %v5090
  %v5092 = vsub.f32 1.0, %v5088
  %v5093 = vmul.f32 %v5092, %v5091
  %v5094 = vmul.f32 %v5088, %v4910
  %v5095 = vadd.f32 %v5093, %v5094
  %v5096 = vld [vmem:[%s1661] sm:$0xf]
  %5097 = vmatprep.subr.bf16.mxu0 %v4525
  %5098 = vmatpush1.bf16.msra.mxu0 %v4524
  %5099 = vmatprep.subr.bf16.mxu0 %v4522
  %5100 = vmatpush1.bf16.msra.mxu0 %v4521
  %5101 = vmatprep.subr.bf16.mxu0 %v4519
  %5102 = vmatpush1.bf16.msra.mxu0 %v4518
  %5103 = vmatprep.subr.bf16.mxu0 %v4516
  %5104 = vmatpush1.bf16.msra.mxu0 %v4515
  %5105 = vmatprep.subr.bf16.mxu0 %v4513
  %5106 = vmatpush1.bf16.msra.mxu0 %v4512
  %5107 = vmatprep.subr.bf16.mxu0 %v4510
  %5108 = vmatpush1.bf16.msra.mxu0 %v4509
  %5109 = vmatprep.subr.bf16.mxu0 %v4507
  %5110 = vmatpush1.bf16.msra.mxu0 %v4506
  %5111 = vmatprep.subr.bf16.mxu0 %v4504
  %5112 = vmatpush1.bf16.msra.mxu0 %v4503
  %5113 = vmatprep.subr.bf16.mxu0 0
  %5114 = vmatpush2.bf16.msra.mxu0 0
  %5115 = vmatprep.subr.bf16.mxu0 0
  %5116 = vmatpush2.bf16.msra.mxu0 0
  %5117 = vmatprep.subr.bf16.mxu0 0
  %5118 = vmatpush2.bf16.msra.mxu0 0
  %5119 = vmatprep.subr.bf16.mxu0 0
  %5120 = vmatpush2.bf16.msra.mxu0 0
  %5121 = vmatprep.subr.bf16.mxu0 0
  %5122 = vmatpush2.bf16.msra.mxu0 0
  %5123 = vmatprep.subr.bf16.mxu0 0
  %5124 = vmatpush2.bf16.msra.mxu0 0
  %5125 = vmatprep.subr.bf16.mxu0 0
  %5126 = vmatpush2.bf16.msra.mxu0 0
  %5127 = vmatprep.subr.bf16.mxu0 0
  %5128 = vmatpush2.bf16.msra.mxu0 0
  %5129 = vmatprep.mubr.bf16.mxu0 0
  %5130 = vmatmul.mubr.bf16.gmra.mxu0 %v5096
  %v5131 = vpop.f32.mrf.mxu0
  %v5132 = vadd.f32 %v4411, %v5131
  %v5133 = vpop.f32.mrf.mxu0
  %v5134 = vadd.f32 %v4415, %v5133
  %v5135 = vpop.f32.mrf.mxu0
  %v5136 = vpop.f32.mrf.mxu0
  %5137 = vdwg.mxu0
  %5138 = vmatprep.subr.bf16.mxu0 0
  %5139 = vmatpush1.bf16.msra.mxu0 %v4526
  %5140 = vmatprep.subr.bf16.mxu0 0
  %5141 = vmatpush1.bf16.msra.mxu0 %v4523
  %5142 = vmatprep.subr.bf16.mxu0 0
  %5143 = vmatpush1.bf16.msra.mxu0 %v4520
  %5144 = vmatprep.subr.bf16.mxu0 0
  %5145 = vmatpush1.bf16.msra.mxu0 %v4517
  %5146 = vmatprep.subr.bf16.mxu0 0
  %5147 = vmatpush1.bf16.msra.mxu0 %v4514
  %5148 = vmatprep.subr.bf16.mxu0 0
  %5149 = vmatpush1.bf16.msra.mxu0 %v4511
  %5150 = vmatprep.subr.bf16.mxu0 0
  %5151 = vmatpush1.bf16.msra.mxu0 %v4508
  %5152 = vmatprep.subr.bf16.mxu0 0
  %5153 = vmatpush1.bf16.msra.mxu0 %v4505
  %5154 = vmatprep.subr.bf16.mxu0 0
  %5155 = vmatpush2.bf16.msra.mxu0 0
  %5156 = vmatprep.subr.bf16.mxu0 0
  %5157 = vmatpush2.bf16.msra.mxu0 0
  %5158 = vmatprep.subr.bf16.mxu0 0
  %5159 = vmatpush2.bf16.msra.mxu0 0
  %5160 = vmatprep.subr.bf16.mxu0 0
  %5161 = vmatpush2.bf16.msra.mxu0 0
  %5162 = vmatprep.subr.bf16.mxu0 0
  %5163 = vmatpush2.bf16.msra.mxu0 0
  %5164 = vmatprep.subr.bf16.mxu0 0
  %5165 = vmatpush2.bf16.msra.mxu0 0
  %5166 = vmatprep.subr.bf16.mxu0 0
  %5167 = vmatpush2.bf16.msra.mxu0 0
  %5168 = vmatprep.subr.bf16.mxu0 0
  %5169 = vmatpush2.bf16.msra.mxu0 0
  %5170 = vmatprep.mubr.bf16.mxu0 0
  %5171 = vmatmul.mubr.bf16.gmra.mxu0 %v5096
  %v5172 = vpop.f32.mrf.mxu0
  %v5173 = vadd.f32 %v4419, %v5172
  %v5174 = vpop.f32.mrf.mxu0
  %v5175 = vpop.f32.mrf.mxu0
  %v5176 = vpop.f32.mrf.mxu0
  %5177 = vdwg.mxu0
  %v5178 = vpack.c.bf16 %v5095, %v5095
  %5179 = vmatprep.subr.bf16.mxu0 %v4783
  %5180 = vmatpush1.bf16.msra.mxu0 %v4782
  %5181 = vmatprep.subr.bf16.mxu0 %v4780
  %5182 = vmatpush1.bf16.msra.mxu0 %v4779
  %5183 = vmatprep.subr.bf16.mxu0 %v4777
  %5184 = vmatpush1.bf16.msra.mxu0 %v4776
  %5185 = vmatprep.subr.bf16.mxu0 %v4774
  %5186 = vmatpush1.bf16.msra.mxu0 %v4773
  %5187 = vmatprep.subr.bf16.mxu0 %v4771
  %5188 = vmatpush1.bf16.msra.mxu0 %v4770
  %5189 = vmatprep.subr.bf16.mxu0 %v4768
  %5190 = vmatpush1.bf16.msra.mxu0 %v4767
  %5191 = vmatprep.subr.bf16.mxu0 %v4765
  %5192 = vmatpush1.bf16.msra.mxu0 %v4764
  %5193 = vmatprep.subr.bf16.mxu0 %v4762
  %5194 = vmatpush1.bf16.msra.mxu0 %v4761
  %5195 = vmatprep.subr.bf16.mxu0 0
  %5196 = vmatpush2.bf16.msra.mxu0 0
  %5197 = vmatprep.subr.bf16.mxu0 0
  %5198 = vmatpush2.bf16.msra.mxu0 0
  %5199 = vmatprep.subr.bf16.mxu0 0
  %5200 = vmatpush2.bf16.msra.mxu0 0
  %5201 = vmatprep.subr.bf16.mxu0 0
  %5202 = vmatpush2.bf16.msra.mxu0 0
  %5203 = vmatprep.subr.bf16.mxu0 0
  %5204 = vmatpush2.bf16.msra.mxu0 0
  %5205 = vmatprep.subr.bf16.mxu0 0
  %5206 = vmatpush2.bf16.msra.mxu0 0
  %5207 = vmatprep.subr.bf16.mxu0 0
  %5208 = vmatpush2.bf16.msra.mxu0 0
  %5209 = vmatprep.subr.bf16.mxu0 0
  %5210 = vmatpush2.bf16.msra.mxu0 0
  %5211 = vmatprep.mubr.bf16.mxu0 0
  %5212 = vmatmul.mubr.bf16.gmra.mxu0 %v5178
  %v5213 = vpop.f32.mrf.mxu0
  %v5214 = vadd.f32 %v4669, %v5213
  %v5215 = vpop.f32.mrf.mxu0
  %v5216 = vadd.f32 %v4673, %v5215
  %v5217 = vpop.f32.mrf.mxu0
  %v5218 = vpop.f32.mrf.mxu0
  %5219 = vdwg.mxu0
  %5220 = vmatprep.subr.bf16.mxu0 0
  %5221 = vmatpush1.bf16.msra.mxu0 %v4784
  %5222 = vmatprep.subr.bf16.mxu0 0
  %5223 = vmatpush1.bf16.msra.mxu0 %v4781
  %5224 = vmatprep.subr.bf16.mxu0 0
  %5225 = vmatpush1.bf16.msra.mxu0 %v4778
  %5226 = vmatprep.subr.bf16.mxu0 0
  %5227 = vmatpush1.bf16.msra.mxu0 %v4775
  %5228 = vmatprep.subr.bf16.mxu0 0
  %5229 = vmatpush1.bf16.msra.mxu0 %v4772
  %5230 = vmatprep.subr.bf16.mxu0 0
  %5231 = vmatpush1.bf16.msra.mxu0 %v4769
  %5232 = vmatprep.subr.bf16.mxu0 0
  %5233 = vmatpush1.bf16.msra.mxu0 %v4766
  %5234 = vmatprep.subr.bf16.mxu0 0
  %5235 = vmatpush1.bf16.msra.mxu0 %v4763
  %5236 = vmatprep.subr.bf16.mxu0 0
  %5237 = vmatpush2.bf16.msra.mxu0 0
  %5238 = vmatprep.subr.bf16.mxu0 0
  %5239 = vmatpush2.bf16.msra.mxu0 0
  %5240 = vmatprep.subr.bf16.mxu0 0
  %5241 = vmatpush2.bf16.msra.mxu0 0
  %5242 = vmatprep.subr.bf16.mxu0 0
  %5243 = vmatpush2.bf16.msra.mxu0 0
  %5244 = vmatprep.subr.bf16.mxu0 0
  %5245 = vmatpush2.bf16.msra.mxu0 0
  %5246 = vmatprep.subr.bf16.mxu0 0
  %5247 = vmatpush2.bf16.msra.mxu0 0
  %5248 = vmatprep.subr.bf16.mxu0 0
  %5249 = vmatpush2.bf16.msra.mxu0 0
  %5250 = vmatprep.subr.bf16.mxu0 0
  %5251 = vmatpush2.bf16.msra.mxu0 0
  %5252 = vmatprep.mubr.bf16.mxu0 0
  %5253 = vmatmul.mubr.bf16.gmra.mxu0 %v5178
  %v5254 = vpop.f32.mrf.mxu0
  %v5255 = vadd.f32 %v4677, %v5254
  %v5256 = vpop.f32.mrf.mxu0
  %v5257 = vpop.f32.mrf.mxu0
  %v5258 = vpop.f32.mrf.mxu0
  %5259 = vdwg.mxu0
  %v5260 = vadd.f32 %v5132, %v5214
  %v5261 = vxor.u32 %v5260, 2147483648
  %v5262 = vmul.f32 %v5261, 1.442695
  %v5263 = vpow.pop %v5262
  %v5264 = vadd.f32 %v5263, 1.0
  %v5265 = vrcp.pop %v5264
  %v5266 = vmul.f32 1.0, %v5265
  %v5267 = vadd.f32 %v5134, %v5216
  %v5268 = vxor.u32 %v5267, 2147483648
  %v5269 = vmul.f32 %v5268, 1.442695
  %v5270 = vpow.pop %v5269
  %v5271 = vadd.f32 %v5270, 1.0
  %v5272 = vrcp.pop %v5271
  %v5273 = vmul.f32 1.0, %v5272
  %v5274 = vmul.f32 %v5266, %v5255
  %v5275 = vadd.f32 %v5173, %v5274
  %v5276 = vtanh.pop %v5275
  %v5277 = vsub.f32 1.0, %v5273
  %v5278 = vmul.f32 %v5277, %v5276
  %v5279 = vmul.f32 %v5273, %v5095
  %v5280 = vadd.f32 %v5278, %v5279
  %v5281 = vld [vmem:[%s2203] sm:$0xf]
  %5282 = vmatprep.subr.bf16.mxu0 %v4525
  %5283 = vmatpush1.bf16.msra.mxu0 %v4524
  %5284 = vmatprep.subr.bf16.mxu0 %v4522
  %5285 = vmatpush1.bf16.msra.mxu0 %v4521
  %5286 = vmatprep.subr.bf16.mxu0 %v4519
  %5287 = vmatpush1.bf16.msra.mxu0 %v4518
  %5288 = vmatprep.subr.bf16.mxu0 %v4516
  %5289 = vmatpush1.bf16.msra.mxu0 %v4515
  %5290 = vmatprep.subr.bf16.mxu0 %v4513
  %5291 = vmatpush1.bf16.msra.mxu0 %v4512
  %5292 = vmatprep.subr.bf16.mxu0 %v4510
  %5293 = vmatpush1.bf16.msra.mxu0 %v4509
  %5294 = vmatprep.subr.bf16.mxu0 %v4507
  %5295 = vmatpush1.bf16.msra.mxu0 %v4506
  %5296 = vmatprep.subr.bf16.mxu0 %v4504
  %5297 = vmatpush1.bf16.msra.mxu0 %v4503
  %5298 = vmatprep.subr.bf16.mxu0 0
  %5299 = vmatpush2.bf16.msra.mxu0 0
  %5300 = vmatprep.subr.bf16.mxu0 0
  %5301 = vmatpush2.bf16.msra.mxu0 0
  %5302 = vmatprep.subr.bf16.mxu0 0
  %5303 = vmatpush2.bf16.msra.mxu0 0
  %5304 = vmatprep.subr.bf16.mxu0 0
  %5305 = vmatpush2.bf16.msra.mxu0 0
  %5306 = vmatprep.subr.bf16.mxu0 0
  %5307 = vmatpush2.bf16.msra.mxu0 0
  %5308 = vmatprep.subr.bf16.mxu0 0
  %5309 = vmatpush2.bf16.msra.mxu0 0
  %5310 = vmatprep.subr.bf16.mxu0 0
  %5311 = vmatpush2.bf16.msra.mxu0 0
  %5312 = vmatprep.subr.bf16.mxu0 0
  %5313 = vmatpush2.bf16.msra.mxu0 0
  %5314 = vmatprep.mubr.bf16.mxu0 0
  %5315 = vmatmul.mubr.bf16.gmra.mxu0 %v5281
  %v5316 = vpop.f32.mrf.mxu0
  %v5317 = vadd.f32 %v4411, %v5316
  %v5318 = vpop.f32.mrf.mxu0
  %v5319 = vadd.f32 %v4415, %v5318
  %v5320 = vpop.f32.mrf.mxu0
  %v5321 = vpop.f32.mrf.mxu0
  %5322 = vdwg.mxu0
  %5323 = vmatprep.subr.bf16.mxu0 0
  %5324 = vmatpush1.bf16.msra.mxu0 %v4526
  %5325 = vmatprep.subr.bf16.mxu0 0
  %5326 = vmatpush1.bf16.msra.mxu0 %v4523
  %5327 = vmatprep.subr.bf16.mxu0 0
  %5328 = vmatpush1.bf16.msra.mxu0 %v4520
  %5329 = vmatprep.subr.bf16.mxu0 0
  %5330 = vmatpush1.bf16.msra.mxu0 %v4517
  %5331 = vmatprep.subr.bf16.mxu0 0
  %5332 = vmatpush1.bf16.msra.mxu0 %v4514
  %5333 = vmatprep.subr.bf16.mxu0 0
  %5334 = vmatpush1.bf16.msra.mxu0 %v4511
  %5335 = vmatprep.subr.bf16.mxu0 0
  %5336 = vmatpush1.bf16.msra.mxu0 %v4508
  %5337 = vmatprep.subr.bf16.mxu0 0
  %5338 = vmatpush1.bf16.msra.mxu0 %v4505
  %5339 = vmatprep.subr.bf16.mxu0 0
  %5340 = vmatpush2.bf16.msra.mxu0 0
  %5341 = vmatprep.subr.bf16.mxu0 0
  %5342 = vmatpush2.bf16.msra.mxu0 0
  %5343 = vmatprep.subr.bf16.mxu0 0
  %5344 = vmatpush2.bf16.msra.mxu0 0
  %5345 = vmatprep.subr.bf16.mxu0 0
  %5346 = vmatpush2.bf16.msra.mxu0 0
  %5347 = vmatprep.subr.bf16.mxu0 0
  %5348 = vmatpush2.bf16.msra.mxu0 0
  %5349 = vmatprep.subr.bf16.mxu0 0
  %5350 = vmatpush2.bf16.msra.mxu0 0
  %5351 = vmatprep.subr.bf16.mxu0 0
  %5352 = vmatpush2.bf16.msra.mxu0 0
  %5353 = vmatprep.subr.bf16.mxu0 0
  %5354 = vmatpush2.bf16.msra.mxu0 0
  %5355 = vmatprep.mubr.bf16.mxu0 0
  %5356 = vmatmul.mubr.bf16.gmra.mxu0 %v5281
  %v5357 = vpop.f32.mrf.mxu0
  %v5358 = vadd.f32 %v4419, %v5357
  %v5359 = vpop.f32.mrf.mxu0
  %v5360 = vpop.f32.mrf.mxu0
  %v5361 = vpop.f32.mrf.mxu0
  %5362 = vdwg.mxu0
  %v5363 = vpack.c.bf16 %v5280, %v5280
  %5364 = vmatprep.subr.bf16.mxu0 %v4783
  %5365 = vmatpush1.bf16.msra.mxu0 %v4782
  %5366 = vmatprep.subr.bf16.mxu0 %v4780
  %5367 = vmatpush1.bf16.msra.mxu0 %v4779
  %5368 = vmatprep.subr.bf16.mxu0 %v4777
  %5369 = vmatpush1.bf16.msra.mxu0 %v4776
  %5370 = vmatprep.subr.bf16.mxu0 %v4774
  %5371 = vmatpush1.bf16.msra.mxu0 %v4773
  %5372 = vmatprep.subr.bf16.mxu0 %v4771
  %5373 = vmatpush1.bf16.msra.mxu0 %v4770
  %5374 = vmatprep.subr.bf16.mxu0 %v4768
  %5375 = vmatpush1.bf16.msra.mxu0 %v4767
  %5376 = vmatprep.subr.bf16.mxu0 %v4765
  %5377 = vmatpush1.bf16.msra.mxu0 %v4764
  %5378 = vmatprep.subr.bf16.mxu0 %v4762
  %5379 = vmatpush1.bf16.msra.mxu0 %v4761
  %5380 = vmatprep.subr.bf16.mxu0 0
  %5381 = vmatpush2.bf16.msra.mxu0 0
  %5382 = vmatprep.subr.bf16.mxu0 0
  %5383 = vmatpush2.bf16.msra.mxu0 0
  %5384 = vmatprep.subr.bf16.mxu0 0
  %5385 = vmatpush2.bf16.msra.mxu0 0
  %5386 = vmatprep.subr.bf16.mxu0 0
  %5387 = vmatpush2.bf16.msra.mxu0 0
  %5388 = vmatprep.subr.bf16.mxu0 0
  %5389 = vmatpush2.bf16.msra.mxu0 0
  %5390 = vmatprep.subr.bf16.mxu0 0
  %5391 = vmatpush2.bf16.msra.mxu0 0
  %5392 = vmatprep.subr.bf16.mxu0 0
  %5393 = vmatpush2.bf16.msra.mxu0 0
  %5394 = vmatprep.subr.bf16.mxu0 0
  %5395 = vmatpush2.bf16.msra.mxu0 0
  %5396 = vmatprep.mubr.bf16.mxu0 0
  %5397 = vmatmul.mubr.bf16.gmra.mxu0 %v5363
  %v5398 = vpop.f32.mrf.mxu0
  %v5399 = vadd.f32 %v4669, %v5398
  %v5400 = vpop.f32.mrf.mxu0
  %v5401 = vadd.f32 %v4673, %v5400
  %v5402 = vpop.f32.mrf.mxu0
  %v5403 = vpop.f32.mrf.mxu0
  %5404 = vdwg.mxu0
  %5405 = vmatprep.subr.bf16.mxu0 0
  %5406 = vmatpush1.bf16.msra.mxu0 %v4784
  %5407 = vmatprep.subr.bf16.mxu0 0
  %5408 = vmatpush1.bf16.msra.mxu0 %v4781
  %5409 = vmatprep.subr.bf16.mxu0 0
  %5410 = vmatpush1.bf16.msra.mxu0 %v4778
  %5411 = vmatprep.subr.bf16.mxu0 0
  %5412 = vmatpush1.bf16.msra.mxu0 %v4775
  %5413 = vmatprep.subr.bf16.mxu0 0
  %5414 = vmatpush1.bf16.msra.mxu0 %v4772
  %5415 = vmatprep.subr.bf16.mxu0 0
  %5416 = vmatpush1.bf16.msra.mxu0 %v4769
  %5417 = vmatprep.subr.bf16.mxu0 0
  %5418 = vmatpush1.bf16.msra.mxu0 %v4766
  %5419 = vmatprep.subr.bf16.mxu0 0
  %5420 = vmatpush1.bf16.msra.mxu0 %v4763
  %5421 = vmatprep.subr.bf16.mxu0 0
  %5422 = vmatpush2.bf16.msra.mxu0 0
  %5423 = vmatprep.subr.bf16.mxu0 0
  %5424 = vmatpush2.bf16.msra.mxu0 0
  %5425 = vmatprep.subr.bf16.mxu0 0
  %5426 = vmatpush2.bf16.msra.mxu0 0
  %5427 = vmatprep.subr.bf16.mxu0 0
  %5428 = vmatpush2.bf16.msra.mxu0 0
  %5429 = vmatprep.subr.bf16.mxu0 0
  %5430 = vmatpush2.bf16.msra.mxu0 0
  %5431 = vmatprep.subr.bf16.mxu0 0
  %5432 = vmatpush2.bf16.msra.mxu0 0
  %5433 = vmatprep.subr.bf16.mxu0 0
  %5434 = vmatpush2.bf16.msra.mxu0 0
  %5435 = vmatprep.subr.bf16.mxu0 0
  %5436 = vmatpush2.bf16.msra.mxu0 0
  %5437 = vmatprep.mubr.bf16.mxu0 0
  %5438 = vmatmul.mubr.bf16.gmra.mxu0 %v5363
  %v5439 = vpop.f32.mrf.mxu0
  %v5440 = vadd.f32 %v4677, %v5439
  %v5441 = vpop.f32.mrf.mxu0
  %v5442 = vpop.f32.mrf.mxu0
  %v5443 = vpop.f32.mrf.mxu0
  %5444 = vdwg.mxu0
  %v5445 = vadd.f32 %v5317, %v5399
  %v5446 = vxor.u32 %v5445, 2147483648
  %v5447 = vmul.f32 %v5446, 1.442695
  %v5448 = vpow.pop %v5447
  %v5449 = vadd.f32 %v5448, 1.0
  %v5450 = vrcp.pop %v5449
  %v5451 = vmul.f32 1.0, %v5450
  %v5452 = vadd.f32 %v5319, %v5401
  %v5453 = vxor.u32 %v5452, 2147483648
  %v5454 = vmul.f32 %v5453, 1.442695
  %v5455 = vpow.pop %v5454
  %v5456 = vadd.f32 %v5455, 1.0
  %v5457 = vrcp.pop %v5456
  %v5458 = vmul.f32 1.0, %v5457
  %v5459 = vmul.f32 %v5451, %v5440
  %v5460 = vadd.f32 %v5358, %v5459
  %v5461 = vtanh.pop %v5460
  %v5462 = vsub.f32 1.0, %v5458
  %v5463 = vmul.f32 %v5462, %v5461
  %v5464 = vmul.f32 %v5458, %v5280
  %v5465 = vadd.f32 %v5463, %v5464
  %v5466 = vld [vmem:[%s2745] sm:$0xf]
  %5467 = vmatprep.subr.bf16.mxu0 %v4525
  %5468 = vmatpush1.bf16.msra.mxu0 %v4524
  %5469 = vmatprep.subr.bf16.mxu0 %v4522
  %5470 = vmatpush1.bf16.msra.mxu0 %v4521
  %5471 = vmatprep.subr.bf16.mxu0 %v4519
  %5472 = vmatpush1.bf16.msra.mxu0 %v4518
  %5473 = vmatprep.subr.bf16.mxu0 %v4516
  %5474 = vmatpush1.bf16.msra.mxu0 %v4515
  %5475 = vmatprep.subr.bf16.mxu0 %v4513
  %5476 = vmatpush1.bf16.msra.mxu0 %v4512
  %5477 = vmatprep.subr.bf16.mxu0 %v4510
  %5478 = vmatpush1.bf16.msra.mxu0 %v4509
  %5479 = vmatprep.subr.bf16.mxu0 %v4507
  %5480 = vmatpush1.bf16.msra.mxu0 %v4506
  %5481 = vmatprep.subr.bf16.mxu0 %v4504
  %5482 = vmatpush1.bf16.msra.mxu0 %v4503
  %5483 = vmatprep.subr.bf16.mxu0 0
  %5484 = vmatpush2.bf16.msra.mxu0 0
  %5485 = vmatprep.subr.bf16.mxu0 0
  %5486 = vmatpush2.bf16.msra.mxu0 0
  %5487 = vmatprep.subr.bf16.mxu0 0
  %5488 = vmatpush2.bf16.msra.mxu0 0
  %5489 = vmatprep.subr.bf16.mxu0 0
  %5490 = vmatpush2.bf16.msra.mxu0 0
  %5491 = vmatprep.subr.bf16.mxu0 0
  %5492 = vmatpush2.bf16.msra.mxu0 0
  %5493 = vmatprep.subr.bf16.mxu0 0
  %5494 = vmatpush2.bf16.msra.mxu0 0
  %5495 = vmatprep.subr.bf16.mxu0 0
  %5496 = vmatpush2.bf16.msra.mxu0 0
  %5497 = vmatprep.subr.bf16.mxu0 0
  %5498 = vmatpush2.bf16.msra.mxu0 0
  %5499 = vmatprep.mubr.bf16.mxu0 0
  %5500 = vmatmul.mubr.bf16.gmra.mxu0 %v5466
  %v5501 = vpop.f32.mrf.mxu0
  %v5502 = vadd.f32 %v4411, %v5501
  %v5503 = vpop.f32.mrf.mxu0
  %v5504 = vadd.f32 %v4415, %v5503
  %v5505 = vpop.f32.mrf.mxu0
  %v5506 = vpop.f32.mrf.mxu0
  %5507 = vdwg.mxu0
  %5508 = vmatprep.subr.bf16.mxu0 0
  %5509 = vmatpush1.bf16.msra.mxu0 %v4526
  %5510 = vmatprep.subr.bf16.mxu0 0
  %5511 = vmatpush1.bf16.msra.mxu0 %v4523
  %5512 = vmatprep.subr.bf16.mxu0 0
  %5513 = vmatpush1.bf16.msra.mxu0 %v4520
  %5514 = vmatprep.subr.bf16.mxu0 0
  %5515 = vmatpush1.bf16.msra.mxu0 %v4517
  %5516 = vmatprep.subr.bf16.mxu0 0
  %5517 = vmatpush1.bf16.msra.mxu0 %v4514
  %5518 = vmatprep.subr.bf16.mxu0 0
  %5519 = vmatpush1.bf16.msra.mxu0 %v4511
  %5520 = vmatprep.subr.bf16.mxu0 0
  %5521 = vmatpush1.bf16.msra.mxu0 %v4508
  %5522 = vmatprep.subr.bf16.mxu0 0
  %5523 = vmatpush1.bf16.msra.mxu0 %v4505
  %5524 = vmatprep.subr.bf16.mxu0 0
  %5525 = vmatpush2.bf16.msra.mxu0 0
  %5526 = vmatprep.subr.bf16.mxu0 0
  %5527 = vmatpush2.bf16.msra.mxu0 0
  %5528 = vmatprep.subr.bf16.mxu0 0
  %5529 = vmatpush2.bf16.msra.mxu0 0
  %5530 = vmatprep.subr.bf16.mxu0 0
  %5531 = vmatpush2.bf16.msra.mxu0 0
  %5532 = vmatprep.subr.bf16.mxu0 0
  %5533 = vmatpush2.bf16.msra.mxu0 0
  %5534 = vmatprep.subr.bf16.mxu0 0
  %5535 = vmatpush2.bf16.msra.mxu0 0
  %5536 = vmatprep.subr.bf16.mxu0 0
  %5537 = vmatpush2.bf16.msra.mxu0 0
  %5538 = vmatprep.subr.bf16.mxu0 0
  %5539 = vmatpush2.bf16.msra.mxu0 0
  %5540 = vmatprep.mubr.bf16.mxu0 0
  %5541 = vmatmul.mubr.bf16.gmra.mxu0 %v5466
  %v5542 = vpop.f32.mrf.mxu0
  %v5543 = vadd.f32 %v4419, %v5542
  %v5544 = vpop.f32.mrf.mxu0
  %v5545 = vpop.f32.mrf.mxu0
  %v5546 = vpop.f32.mrf.mxu0
  %5547 = vdwg.mxu0
  %v5548 = vpack.c.bf16 %v5465, %v5465
  %5549 = vmatprep.subr.bf16.mxu0 %v4783
  %5550 = vmatpush1.bf16.msra.mxu0 %v4782
  %5551 = vmatprep.subr.bf16.mxu0 %v4780
  %5552 = vmatpush1.bf16.msra.mxu0 %v4779
  %5553 = vmatprep.subr.bf16.mxu0 %v4777
  %5554 = vmatpush1.bf16.msra.mxu0 %v4776
  %5555 = vmatprep.subr.bf16.mxu0 %v4774
  %5556 = vmatpush1.bf16.msra.mxu0 %v4773
  %5557 = vmatprep.subr.bf16.mxu0 %v4771
  %5558 = vmatpush1.bf16.msra.mxu0 %v4770
  %5559 = vmatprep.subr.bf16.mxu0 %v4768
  %5560 = vmatpush1.bf16.msra.mxu0 %v4767
  %5561 = vmatprep.subr.bf16.mxu0 %v4765
  %5562 = vmatpush1.bf16.msra.mxu0 %v4764
  %5563 = vmatprep.subr.bf16.mxu0 %v4762
  %5564 = vmatpush1.bf16.msra.mxu0 %v4761
  %5565 = vmatprep.subr.bf16.mxu0 0
  %5566 = vmatpush2.bf16.msra.mxu0 0
  %5567 = vmatprep.subr.bf16.mxu0 0
  %5568 = vmatpush2.bf16.msra.mxu0 0
  %5569 = vmatprep.subr.bf16.mxu0 0
  %5570 = vmatpush2.bf16.msra.mxu0 0
  %5571 = vmatprep.subr.bf16.mxu0 0
  %5572 = vmatpush2.bf16.msra.mxu0 0
  %5573 = vmatprep.subr.bf16.mxu0 0
  %5574 = vmatpush2.bf16.msra.mxu0 0
  %5575 = vmatprep.subr.bf16.mxu0 0
  %5576 = vmatpush2.bf16.msra.mxu0 0
  %5577 = vmatprep.subr.bf16.mxu0 0
  %5578 = vmatpush2.bf16.msra.mxu0 0
  %5579 = vmatprep.subr.bf16.mxu0 0
  %5580 = vmatpush2.bf16.msra.mxu0 0
  %5581 = vmatprep.mubr.bf16.mxu0 0
  %5582 = vmatmul.mubr.bf16.gmra.mxu0 %v5548
  %v5583 = vpop.f32.mrf.mxu0
  %v5584 = vadd.f32 %v4669, %v5583
  %v5585 = vpop.f32.mrf.mxu0
  %v5586 = vadd.f32 %v4673, %v5585
  %v5587 = vpop.f32.mrf.mxu0
  %v5588 = vpop.f32.mrf.mxu0
  %5589 = vdwg.mxu0
  %5590 = vmatprep.subr.bf16.mxu0 0
  %5591 = vmatpush1.bf16.msra.mxu0 %v4784
  %5592 = vmatprep.subr.bf16.mxu0 0
  %5593 = vmatpush1.bf16.msra.mxu0 %v4781
  %5594 = vmatprep.subr.bf16.mxu0 0
  %5595 = vmatpush1.bf16.msra.mxu0 %v4778
  %5596 = vmatprep.subr.bf16.mxu0 0
  %5597 = vmatpush1.bf16.msra.mxu0 %v4775
  %5598 = vmatprep.subr.bf16.mxu0 0
  %5599 = vmatpush1.bf16.msra.mxu0 %v4772
  %5600 = vmatprep.subr.bf16.mxu0 0
  %5601 = vmatpush1.bf16.msra.mxu0 %v4769
  %5602 = vmatprep.subr.bf16.mxu0 0
  %5603 = vmatpush1.bf16.msra.mxu0 %v4766
  %5604 = vmatprep.subr.bf16.mxu0 0
  %5605 = vmatpush1.bf16.msra.mxu0 %v4763
  %5606 = vmatprep.subr.bf16.mxu0 0
  %5607 = vmatpush2.bf16.msra.mxu0 0
  %5608 = vmatprep.subr.bf16.mxu0 0
  %5609 = vmatpush2.bf16.msra.mxu0 0
  %5610 = vmatprep.subr.bf16.mxu0 0
  %5611 = vmatpush2.bf16.msra.mxu0 0
  %5612 = vmatprep.subr.bf16.mxu0 0
  %5613 = vmatpush2.bf16.msra.mxu0 0
  %5614 = vmatprep.subr.bf16.mxu0 0
  %5615 = vmatpush2.bf16.msra.mxu0 0
  %5616 = vmatprep.subr.bf16.mxu0 0
  %5617 = vmatpush2.bf16.msra.mxu0 0
  %5618 = vmatprep.subr.bf16.mxu0 0
  %5619 = vmatpush2.bf16.msra.mxu0 0
  %5620 = vmatprep.subr.bf16.mxu0 0
  %5621 = vmatpush2.bf16.msra.mxu0 0
  %5622 = vmatprep.mubr.bf16.mxu0 0
  %5623 = vmatmul.mubr.bf16.gmra.mxu0 %v5548
  %v5624 = vpop.f32.mrf.mxu0
  %v5625 = vadd.f32 %v4677, %v5624
  %v5626 = vpop.f32.mrf.mxu0
  %v5627 = vpop.f32.mrf.mxu0
  %v5628 = vpop.f32.mrf.mxu0
  %5629 = vdwg.mxu0
  %v5630 = vadd.f32 %v5502, %v5584
  %v5631 = vxor.u32 %v5630, 2147483648
  %v5632 = vmul.f32 %v5631, 1.442695
  %v5633 = vpow.pop %v5632
  %v5634 = vadd.f32 %v5633, 1.0
  %v5635 = vrcp.pop %v5634
  %v5636 = vmul.f32 1.0, %v5635
  %v5637 = vadd.f32 %v5504, %v5586
  %v5638 = vxor.u32 %v5637, 2147483648
  %v5639 = vmul.f32 %v5638, 1.442695
  %v5640 = vpow.pop %v5639
  %v5641 = vadd.f32 %v5640, 1.0
  %v5642 = vrcp.pop %v5641
  %v5643 = vmul.f32 1.0, %v5642
  %v5644 = vmul.f32 %v5636, %v5625
  %v5645 = vadd.f32 %v5543, %v5644
  %v5646 = vtanh.pop %v5645
  %v5647 = vsub.f32 1.0, %v5643
  %v5648 = vmul.f32 %v5647, %v5646
  %v5649 = vmul.f32 %v5643, %v5465
  %v5650 = vadd.f32 %v5648, %v5649
  %v5651 = vld [vmem:[%s3287] sm:$0xf]
  %5652 = vmatprep.subr.bf16.mxu0 %v4525
  %5653 = vmatpush1.bf16.msra.mxu0 %v4524
  %5654 = vmatprep.subr.bf16.mxu0 %v4522
  %5655 = vmatpush1.bf16.msra.mxu0 %v4521
  %5656 = vmatprep.subr.bf16.mxu0 %v4519
  %5657 = vmatpush1.bf16.msra.mxu0 %v4518
  %5658 = vmatprep.subr.bf16.mxu0 %v4516
  %5659 = vmatpush1.bf16.msra.mxu0 %v4515
  %5660 = vmatprep.subr.bf16.mxu0 %v4513
  %5661 = vmatpush1.bf16.msra.mxu0 %v4512
  %5662 = vmatprep.subr.bf16.mxu0 %v4510
  %5663 = vmatpush1.bf16.msra.mxu0 %v4509
  %5664 = vmatprep.subr.bf16.mxu0 %v4507
  %5665 = vmatpush1.bf16.msra.mxu0 %v4506
  %5666 = vmatprep.subr.bf16.mxu0 %v4504
  %5667 = vmatpush1.bf16.msra.mxu0 %v4503
  %5668 = vmatprep.subr.bf16.mxu0 0
  %5669 = vmatpush2.bf16.msra.mxu0 0
  %5670 = vmatprep.subr.bf16.mxu0 0
  %5671 = vmatpush2.bf16.msra.mxu0 0
  %5672 = vmatprep.subr.bf16.mxu0 0
  %5673 = vmatpush2.bf16.msra.mxu0 0
  %5674 = vmatprep.subr.bf16.mxu0 0
  %5675 = vmatpush2.bf16.msra.mxu0 0
  %5676 = vmatprep.subr.bf16.mxu0 0
  %5677 = vmatpush2.bf16.msra.mxu0 0
  %5678 = vmatprep.subr.bf16.mxu0 0
  %5679 = vmatpush2.bf16.msra.mxu0 0
  %5680 = vmatprep.subr.bf16.mxu0 0
  %5681 = vmatpush2.bf16.msra.mxu0 0
  %5682 = vmatprep.subr.bf16.mxu0 0
  %5683 = vmatpush2.bf16.msra.mxu0 0
  %5684 = vmatprep.mubr.bf16.mxu0 0
  %5685 = vmatmul.mubr.bf16.gmra.mxu0 %v5651
  %v5686 = vpop.f32.mrf.mxu0
  %v5687 = vadd.f32 %v4411, %v5686
  %v5688 = vpop.f32.mrf.mxu0
  %v5689 = vadd.f32 %v4415, %v5688
  %v5690 = vpop.f32.mrf.mxu0
  %v5691 = vpop.f32.mrf.mxu0
  %5692 = vdwg.mxu0
  %5693 = vmatprep.subr.bf16.mxu0 0
  %5694 = vmatpush1.bf16.msra.mxu0 %v4526
  %5695 = vmatprep.subr.bf16.mxu0 0
  %5696 = vmatpush1.bf16.msra.mxu0 %v4523
  %5697 = vmatprep.subr.bf16.mxu0 0
  %5698 = vmatpush1.bf16.msra.mxu0 %v4520
  %5699 = vmatprep.subr.bf16.mxu0 0
  %5700 = vmatpush1.bf16.msra.mxu0 %v4517
  %5701 = vmatprep.subr.bf16.mxu0 0
  %5702 = vmatpush1.bf16.msra.mxu0 %v4514
  %5703 = vmatprep.subr.bf16.mxu0 0
  %5704 = vmatpush1.bf16.msra.mxu0 %v4511
  %5705 = vmatprep.subr.bf16.mxu0 0
  %5706 = vmatpush1.bf16.msra.mxu0 %v4508
  %5707 = vmatprep.subr.bf16.mxu0 0
  %5708 = vmatpush1.bf16.msra.mxu0 %v4505
  %5709 = vmatprep.subr.bf16.mxu0 0
  %5710 = vmatpush2.bf16.msra.mxu0 0
  %5711 = vmatprep.subr.bf16.mxu0 0
  %5712 = vmatpush2.bf16.msra.mxu0 0
  %5713 = vmatprep.subr.bf16.mxu0 0
  %5714 = vmatpush2.bf16.msra.mxu0 0
  %5715 = vmatprep.subr.bf16.mxu0 0
  %5716 = vmatpush2.bf16.msra.mxu0 0
  %5717 = vmatprep.subr.bf16.mxu0 0
  %5718 = vmatpush2.bf16.msra.mxu0 0
  %5719 = vmatprep.subr.bf16.mxu0 0
  %5720 = vmatpush2.bf16.msra.mxu0 0
  %5721 = vmatprep.subr.bf16.mxu0 0
  %5722 = vmatpush2.bf16.msra.mxu0 0
  %5723 = vmatprep.subr.bf16.mxu0 0
  %5724 = vmatpush2.bf16.msra.mxu0 0
  %5725 = vmatprep.mubr.bf16.mxu0 0
  %5726 = vmatmul.mubr.bf16.gmra.mxu0 %v5651
  %v5727 = vpop.f32.mrf.mxu0
  %v5728 = vadd.f32 %v4419, %v5727
  %v5729 = vpop.f32.mrf.mxu0
  %v5730 = vpop.f32.mrf.mxu0
  %v5731 = vpop.f32.mrf.mxu0
  %5732 = vdwg.mxu0
  %v5733 = vpack.c.bf16 %v5650, %v5650
  %5734 = vmatprep.subr.bf16.mxu0 %v4783
  %5735 = vmatpush1.bf16.msra.mxu0 %v4782
  %5736 = vmatprep.subr.bf16.mxu0 %v4780
  %5737 = vmatpush1.bf16.msra.mxu0 %v4779
  %5738 = vmatprep.subr.bf16.mxu0 %v4777
  %5739 = vmatpush1.bf16.msra.mxu0 %v4776
  %5740 = vmatprep.subr.bf16.mxu0 %v4774
  %5741 = vmatpush1.bf16.msra.mxu0 %v4773
  %5742 = vmatprep.subr.bf16.mxu0 %v4771
  %5743 = vmatpush1.bf16.msra.mxu0 %v4770
  %5744 = vmatprep.subr.bf16.mxu0 %v4768
  %5745 = vmatpush1.bf16.msra.mxu0 %v4767
  %5746 = vmatprep.subr.bf16.mxu0 %v4765
  %5747 = vmatpush1.bf16.msra.mxu0 %v4764
  %5748 = vmatprep.subr.bf16.mxu0 %v4762
  %5749 = vmatpush1.bf16.msra.mxu0 %v4761
  %5750 = vmatprep.subr.bf16.mxu0 0
  %5751 = vmatpush2.bf16.msra.mxu0 0
  %5752 = vmatprep.subr.bf16.mxu0 0
  %5753 = vmatpush2.bf16.msra.mxu0 0
  %5754 = vmatprep.subr.bf16.mxu0 0
  %5755 = vmatpush2.bf16.msra.mxu0 0
  %5756 = vmatprep.subr.bf16.mxu0 0
  %5757 = vmatpush2.bf16.msra.mxu0 0
  %5758 = vmatprep.subr.bf16.mxu0 0
  %5759 = vmatpush2.bf16.msra.mxu0 0
  %5760 = vmatprep.subr.bf16.mxu0 0
  %5761 = vmatpush2.bf16.msra.mxu0 0
  %5762 = vmatprep.subr.bf16.mxu0 0
  %5763 = vmatpush2.bf16.msra.mxu0 0
  %5764 = vmatprep.subr.bf16.mxu0 0
  %5765 = vmatpush2.bf16.msra.mxu0 0
  %5766 = vmatprep.mubr.bf16.mxu0 0
  %5767 = vmatmul.mubr.bf16.gmra.mxu0 %v5733
  %v5768 = vpop.f32.mrf.mxu0
  %v5769 = vadd.f32 %v4669, %v5768
  %v5770 = vpop.f32.mrf.mxu0
  %v5771 = vadd.f32 %v4673, %v5770
  %v5772 = vpop.f32.mrf.mxu0
  %v5773 = vpop.f32.mrf.mxu0
  %5774 = vdwg.mxu0
  %5775 = vmatprep.subr.bf16.mxu0 0
  %5776 = vmatpush1.bf16.msra.mxu0 %v4784
  %5777 = vmatprep.subr.bf16.mxu0 0
  %5778 = vmatpush1.bf16.msra.mxu0 %v4781
  %5779 = vmatprep.subr.bf16.mxu0 0
  %5780 = vmatpush1.bf16.msra.mxu0 %v4778
  %5781 = vmatprep.subr.bf16.mxu0 0
  %5782 = vmatpush1.bf16.msra.mxu0 %v4775
  %5783 = vmatprep.subr.bf16.mxu0 0
  %5784 = vmatpush1.bf16.msra.mxu0 %v4772
  %5785 = vmatprep.subr.bf16.mxu0 0
  %5786 = vmatpush1.bf16.msra.mxu0 %v4769
  %5787 = vmatprep.subr.bf16.mxu0 0
  %5788 = vmatpush1.bf16.msra.mxu0 %v4766
  %5789 = vmatprep.subr.bf16.mxu0 0
  %5790 = vmatpush1.bf16.msra.mxu0 %v4763
  %5791 = vmatprep.subr.bf16.mxu0 0
  %5792 = vmatpush2.bf16.msra.mxu0 0
  %5793 = vmatprep.subr.bf16.mxu0 0
  %5794 = vmatpush2.bf16.msra.mxu0 0
  %5795 = vmatprep.subr.bf16.mxu0 0
  %5796 = vmatpush2.bf16.msra.mxu0 0
  %5797 = vmatprep.subr.bf16.mxu0 0
  %5798 = vmatpush2.bf16.msra.mxu0 0
  %5799 = vmatprep.subr.bf16.mxu0 0
  %5800 = vmatpush2.bf16.msra.mxu0 0
  %5801 = vmatprep.subr.bf16.mxu0 0
  %5802 = vmatpush2.bf16.msra.mxu0 0
  %5803 = vmatprep.subr.bf16.mxu0 0
  %5804 = vmatpush2.bf16.msra.mxu0 0
  %5805 = vmatprep.subr.bf16.mxu0 0
  %5806 = vmatpush2.bf16.msra.mxu0 0
  %5807 = vmatprep.mubr.bf16.mxu0 0
  %5808 = vmatmul.mubr.bf16.gmra.mxu0 %v5733
  %v5809 = vpop.f32.mrf.mxu0
  %v5810 = vadd.f32 %v4677, %v5809
  %v5811 = vpop.f32.mrf.mxu0
  %v5812 = vpop.f32.mrf.mxu0
  %v5813 = vpop.f32.mrf.mxu0
  %5814 = vdwg.mxu0
  %v5815 = vadd.f32 %v5687, %v5769
  %v5816 = vxor.u32 %v5815, 2147483648
  %v5817 = vmul.f32 %v5816, 1.442695
  %v5818 = vpow.pop %v5817
  %v5819 = vadd.f32 %v5818, 1.0
  %v5820 = vrcp.pop %v5819
  %v5821 = vmul.f32 1.0, %v5820
  %v5822 = vadd.f32 %v5689, %v5771
  %v5823 = vxor.u32 %v5822, 2147483648
  %v5824 = vmul.f32 %v5823, 1.442695
  %v5825 = vpow.pop %v5824
  %v5826 = vadd.f32 %v5825, 1.0
  %v5827 = vrcp.pop %v5826
  %v5828 = vmul.f32 1.0, %v5827
  %v5829 = vmul.f32 %v5821, %v5810
  %v5830 = vadd.f32 %v5728, %v5829
  %v5831 = vtanh.pop %v5830
  %v5832 = vsub.f32 1.0, %v5828
  %v5833 = vmul.f32 %v5832, %v5831
  %v5834 = vmul.f32 %v5828, %v5650
  %v5835 = vadd.f32 %v5833, %v5834
  %v5836 = vld [vmem:[%s3829] sm:$0xf]
  %5837 = vmatprep.subr.bf16.mxu0 %v4525
  %5838 = vmatpush1.bf16.msra.mxu0 %v4524
  %5839 = vmatprep.subr.bf16.mxu0 %v4522
  %5840 = vmatpush1.bf16.msra.mxu0 %v4521
  %5841 = vmatprep.subr.bf16.mxu0 %v4519
  %5842 = vmatpush1.bf16.msra.mxu0 %v4518
  %5843 = vmatprep.subr.bf16.mxu0 %v4516
  %5844 = vmatpush1.bf16.msra.mxu0 %v4515
  %5845 = vmatprep.subr.bf16.mxu0 %v4513
  %5846 = vmatpush1.bf16.msra.mxu0 %v4512
  %5847 = vmatprep.subr.bf16.mxu0 %v4510
  %5848 = vmatpush1.bf16.msra.mxu0 %v4509
  %5849 = vmatprep.subr.bf16.mxu0 %v4507
  %5850 = vmatpush1.bf16.msra.mxu0 %v4506
  %5851 = vmatprep.subr.bf16.mxu0 %v4504
  %5852 = vmatpush1.bf16.msra.mxu0 %v4503
  %5853 = vmatprep.subr.bf16.mxu0 0
  %5854 = vmatpush2.bf16.msra.mxu0 0
  %5855 = vmatprep.subr.bf16.mxu0 0
  %5856 = vmatpush2.bf16.msra.mxu0 0
  %5857 = vmatprep.subr.bf16.mxu0 0
  %5858 = vmatpush2.bf16.msra.mxu0 0
  %5859 = vmatprep.subr.bf16.mxu0 0
  %5860 = vmatpush2.bf16.msra.mxu0 0
  %5861 = vmatprep.subr.bf16.mxu0 0
  %5862 = vmatpush2.bf16.msra.mxu0 0
  %5863 = vmatprep.subr.bf16.mxu0 0
  %5864 = vmatpush2.bf16.msra.mxu0 0
  %5865 = vmatprep.subr.bf16.mxu0 0
  %5866 = vmatpush2.bf16.msra.mxu0 0
  %5867 = vmatprep.subr.bf16.mxu0 0
  %5868 = vmatpush2.bf16.msra.mxu0 0
  %5869 = vmatprep.mubr.bf16.mxu0 0
  %5870 = vmatmul.mubr.bf16.gmra.mxu0 %v5836
  %v5871 = vpop.f32.mrf.mxu0
  %v5872 = vadd.f32 %v4411, %v5871
  %v5873 = vpop.f32.mrf.mxu0
  %v5874 = vadd.f32 %v4415, %v5873
  %v5875 = vpop.f32.mrf.mxu0
  %v5876 = vpop.f32.mrf.mxu0
  %5877 = vdwg.mxu0
  %5878 = vmatprep.subr.bf16.mxu0 0
  %5879 = vmatpush1.bf16.msra.mxu0 %v4526
  %5880 = vmatprep.subr.bf16.mxu0 0
  %5881 = vmatpush1.bf16.msra.mxu0 %v4523
  %5882 = vmatprep.subr.bf16.mxu0 0
  %5883 = vmatpush1.bf16.msra.mxu0 %v4520
  %5884 = vmatprep.subr.bf16.mxu0 0
  %5885 = vmatpush1.bf16.msra.mxu0 %v4517
  %5886 = vmatprep.subr.bf16.mxu0 0
  %5887 = vmatpush1.bf16.msra.mxu0 %v4514
  %5888 = vmatprep.subr.bf16.mxu0 0
  %5889 = vmatpush1.bf16.msra.mxu0 %v4511
  %5890 = vmatprep.subr.bf16.mxu0 0
  %5891 = vmatpush1.bf16.msra.mxu0 %v4508
  %5892 = vmatprep.subr.bf16.mxu0 0
  %5893 = vmatpush1.bf16.msra.mxu0 %v4505
  %5894 = vmatprep.subr.bf16.mxu0 0
  %5895 = vmatpush2.bf16.msra.mxu0 0
  %5896 = vmatprep.subr.bf16.mxu0 0
  %5897 = vmatpush2.bf16.msra.mxu0 0
  %5898 = vmatprep.subr.bf16.mxu0 0
  %5899 = vmatpush2.bf16.msra.mxu0 0
  %5900 = vmatprep.subr.bf16.mxu0 0
  %5901 = vmatpush2.bf16.msra.mxu0 0
  %5902 = vmatprep.subr.bf16.mxu0 0
  %5903 = vmatpush2.bf16.msra.mxu0 0
  %5904 = vmatprep.subr.bf16.mxu0 0
  %5905 = vmatpush2.bf16.msra.mxu0 0
  %5906 = vmatprep.subr.bf16.mxu0 0
  %5907 = vmatpush2.bf16.msra.mxu0 0
  %5908 = vmatprep.subr.bf16.mxu0 0
  %5909 = vmatpush2.bf16.msra.mxu0 0
  %5910 = vmatprep.mubr.bf16.mxu0 0
  %5911 = vmatmul.mubr.bf16.gmra.mxu0 %v5836
  %v5912 = vpop.f32.mrf.mxu0
  %v5913 = vadd.f32 %v4419, %v5912
  %v5914 = vpop.f32.mrf.mxu0
  %v5915 = vpop.f32.mrf.mxu0
  %v5916 = vpop.f32.mrf.mxu0
  %5917 = vdwg.mxu0
  %v5918 = vpack.c.bf16 %v5835, %v5835
  %5919 = vmatprep.subr.bf16.mxu0 %v4783
  %5920 = vmatpush1.bf16.msra.mxu0 %v4782
  %5921 = vmatprep.subr.bf16.mxu0 %v4780
  %5922 = vmatpush1.bf16.msra.mxu0 %v4779
  %5923 = vmatprep.subr.bf16.mxu0 %v4777
  %5924 = vmatpush1.bf16.msra.mxu0 %v4776
  %5925 = vmatprep.subr.bf16.mxu0 %v4774
  %5926 = vmatpush1.bf16.msra.mxu0 %v4773
  %5927 = vmatprep.subr.bf16.mxu0 %v4771
  %5928 = vmatpush1.bf16.msra.mxu0 %v4770
  %5929 = vmatprep.subr.bf16.mxu0 %v4768
  %5930 = vmatpush1.bf16.msra.mxu0 %v4767
  %5931 = vmatprep.subr.bf16.mxu0 %v4765
  %5932 = vmatpush1.bf16.msra.mxu0 %v4764
  %5933 = vmatprep.subr.bf16.mxu0 %v4762
  %5934 = vmatpush1.bf16.msra.mxu0 %v4761
  %5935 = vmatprep.subr.bf16.mxu0 0
  %5936 = vmatpush2.bf16.msra.mxu0 0
  %5937 = vmatprep.subr.bf16.mxu0 0
  %5938 = vmatpush2.bf16.msra.mxu0 0
  %5939 = vmatprep.subr.bf16.mxu0 0
  %5940 = vmatpush2.bf16.msra.mxu0 0
  %5941 = vmatprep.subr.bf16.mxu0 0
  %5942 = vmatpush2.bf16.msra.mxu0 0
  %5943 = vmatprep.subr.bf16.mxu0 0
  %5944 = vmatpush2.bf16.msra.mxu0 0
  %5945 = vmatprep.subr.bf16.mxu0 0
  %5946 = vmatpush2.bf16.msra.mxu0 0
  %5947 = vmatprep.subr.bf16.mxu0 0
  %5948 = vmatpush2.bf16.msra.mxu0 0
  %5949 = vmatprep.subr.bf16.mxu0 0
  %5950 = vmatpush2.bf16.msra.mxu0 0
  %5951 = vmatprep.mubr.bf16.mxu0 0
  %5952 = vmatmul.mubr.bf16.gmra.mxu0 %v5918
  %v5953 = vpop.f32.mrf.mxu0
  %v5954 = vadd.f32 %v4669, %v5953
  %v5955 = vpop.f32.mrf.mxu0
  %v5956 = vadd.f32 %v4673, %v5955
  %v5957 = vpop.f32.mrf.mxu0
  %v5958 = vpop.f32.mrf.mxu0
  %5959 = vdwg.mxu0
  %5960 = vmatprep.subr.bf16.mxu0 0
  %5961 = vmatpush1.bf16.msra.mxu0 %v4784
  %5962 = vmatprep.subr.bf16.mxu0 0
  %5963 = vmatpush1.bf16.msra.mxu0 %v4781
  %5964 = vmatprep.subr.bf16.mxu0 0
  %5965 = vmatpush1.bf16.msra.mxu0 %v4778
  %5966 = vmatprep.subr.bf16.mxu0 0
  %5967 = vmatpush1.bf16.msra.mxu0 %v4775
  %5968 = vmatprep.subr.bf16.mxu0 0
  %5969 = vmatpush1.bf16.msra.mxu0 %v4772
  %5970 = vmatprep.subr.bf16.mxu0 0
  %5971 = vmatpush1.bf16.msra.mxu0 %v4769
  %5972 = vmatprep.subr.bf16.mxu0 0
  %5973 = vmatpush1.bf16.msra.mxu0 %v4766
  %5974 = vmatprep.subr.bf16.mxu0 0
  %5975 = vmatpush1.bf16.msra.mxu0 %v4763
  %5976 = vmatprep.subr.bf16.mxu0 0
  %5977 = vmatpush2.bf16.msra.mxu0 0
  %5978 = vmatprep.subr.bf16.mxu0 0
  %5979 = vmatpush2.bf16.msra.mxu0 0
  %5980 = vmatprep.subr.bf16.mxu0 0
  %5981 = vmatpush2.bf16.msra.mxu0 0
  %5982 = vmatprep.subr.bf16.mxu0 0
  %5983 = vmatpush2.bf16.msra.mxu0 0
  %5984 = vmatprep.subr.bf16.mxu0 0
  %5985 = vmatpush2.bf16.msra.mxu0 0
  %5986 = vmatprep.subr.bf16.mxu0 0
  %5987 = vmatpush2.bf16.msra.mxu0 0
  %5988 = vmatprep.subr.bf16.mxu0 0
  %5989 = vmatpush2.bf16.msra.mxu0 0
  %5990 = vmatprep.subr.bf16.mxu0 0
  %5991 = vmatpush2.bf16.msra.mxu0 0
  %5992 = vmatprep.mubr.bf16.mxu0 0
  %5993 = vmatmul.mubr.bf16.gmra.mxu0 %v5918
  %v5994 = vpop.f32.mrf.mxu0
  %v5995 = vadd.f32 %v4677, %v5994
  %v5996 = vpop.f32.mrf.mxu0
  %v5997 = vpop.f32.mrf.mxu0
  %v5998 = vpop.f32.mrf.mxu0
  %5999 = vdwg.mxu0
  %v6000 = vadd.f32 %v5872, %v5954
  %v6001 = vxor.u32 %v6000, 2147483648
  %v6002 = vmul.f32 %v6001, 1.442695
  %v6003 = vpow.pop %v6002
  %v6004 = vadd.f32 %v6003, 1.0
  %v6005 = vrcp.pop %v6004
  %v6006 = vmul.f32 1.0, %v6005
  %v6007 = vadd.f32 %v5874, %v5956
  %v6008 = vxor.u32 %v6007, 2147483648
  %v6009 = vmul.f32 %v6008, 1.442695
  %v6010 = vpow.pop %v6009
  %v6011 = vadd.f32 %v6010, 1.0
  %v6012 = vrcp.pop %v6011
  %v6013 = vmul.f32 1.0, %v6012
  %v6014 = vmul.f32 %v6006, %v5995
  %v6015 = vadd.f32 %v5913, %v6014
  %v6016 = vtanh.pop %v6015
  %v6017 = vsub.f32 1.0, %v6013
  %v6018 = vmul.f32 %v6017, %v6016
  %v6019 = vmul.f32 %v6013, %v5835
  %v6020 = vadd.f32 %v6018, %v6019
  %v6021 = vld [vmem:[%s4371] sm:$0xf]
  %6022 = vmatprep.subr.bf16.mxu0 %v4525
  %6023 = vmatpush1.bf16.msra.mxu0 %v4524
  %6024 = vmatprep.subr.bf16.mxu0 %v4522
  %6025 = vmatpush1.bf16.msra.mxu0 %v4521
  %6026 = vmatprep.subr.bf16.mxu0 %v4519
  %6027 = vmatpush1.bf16.msra.mxu0 %v4518
  %6028 = vmatprep.subr.bf16.mxu0 %v4516
  %6029 = vmatpush1.bf16.msra.mxu0 %v4515
  %6030 = vmatprep.subr.bf16.mxu0 %v4513
  %6031 = vmatpush1.bf16.msra.mxu0 %v4512
  %6032 = vmatprep.subr.bf16.mxu0 %v4510
  %6033 = vmatpush1.bf16.msra.mxu0 %v4509
  %6034 = vmatprep.subr.bf16.mxu0 %v4507
  %6035 = vmatpush1.bf16.msra.mxu0 %v4506
  %6036 = vmatprep.subr.bf16.mxu0 %v4504
  %6037 = vmatpush1.bf16.msra.mxu0 %v4503
  %6038 = vmatprep.subr.bf16.mxu0 0
  %6039 = vmatpush2.bf16.msra.mxu0 0
  %6040 = vmatprep.subr.bf16.mxu0 0
  %6041 = vmatpush2.bf16.msra.mxu0 0
  %6042 = vmatprep.subr.bf16.mxu0 0
  %6043 = vmatpush2.bf16.msra.mxu0 0
  %6044 = vmatprep.subr.bf16.mxu0 0
  %6045 = vmatpush2.bf16.msra.mxu0 0
  %6046 = vmatprep.subr.bf16.mxu0 0
  %6047 = vmatpush2.bf16.msra.mxu0 0
  %6048 = vmatprep.subr.bf16.mxu0 0
  %6049 = vmatpush2.bf16.msra.mxu0 0
  %6050 = vmatprep.subr.bf16.mxu0 0
  %6051 = vmatpush2.bf16.msra.mxu0 0
  %6052 = vmatprep.subr.bf16.mxu0 0
  %6053 = vmatpush2.bf16.msra.mxu0 0
  %6054 = vmatprep.mubr.bf16.mxu0 0
  %6055 = vmatmul.mubr.bf16.gmra.mxu0 %v6021
  %v6056 = vpop.f32.mrf.mxu0
  %v6057 = vadd.f32 %v4411, %v6056
  %v6058 = vpop.f32.mrf.mxu0
  %v6059 = vadd.f32 %v4415, %v6058
  %v6060 = vpop.f32.mrf.mxu0
  %v6061 = vpop.f32.mrf.mxu0
  %6062 = vdwg.mxu0
  %6063 = vmatprep.subr.bf16.mxu0 0
  %6064 = vmatpush1.bf16.msra.mxu0 %v4526
  %6065 = vmatprep.subr.bf16.mxu0 0
  %6066 = vmatpush1.bf16.msra.mxu0 %v4523
  %6067 = vmatprep.subr.bf16.mxu0 0
  %6068 = vmatpush1.bf16.msra.mxu0 %v4520
  %6069 = vmatprep.subr.bf16.mxu0 0
  %6070 = vmatpush1.bf16.msra.mxu0 %v4517
  %6071 = vmatprep.subr.bf16.mxu0 0
  %6072 = vmatpush1.bf16.msra.mxu0 %v4514
  %6073 = vmatprep.subr.bf16.mxu0 0
  %6074 = vmatpush1.bf16.msra.mxu0 %v4511
  %6075 = vmatprep.subr.bf16.mxu0 0
  %6076 = vmatpush1.bf16.msra.mxu0 %v4508
  %6077 = vmatprep.subr.bf16.mxu0 0
  %6078 = vmatpush1.bf16.msra.mxu0 %v4505
  %6079 = vmatprep.subr.bf16.mxu0 0
  %6080 = vmatpush2.bf16.msra.mxu0 0
  %6081 = vmatprep.subr.bf16.mxu0 0
  %6082 = vmatpush2.bf16.msra.mxu0 0
  %6083 = vmatprep.subr.bf16.mxu0 0
  %6084 = vmatpush2.bf16.msra.mxu0 0
  %6085 = vmatprep.subr.bf16.mxu0 0
  %6086 = vmatpush2.bf16.msra.mxu0 0
  %6087 = vmatprep.subr.bf16.mxu0 0
  %6088 = vmatpush2.bf16.msra.mxu0 0
  %6089 = vmatprep.subr.bf16.mxu0 0
  %6090 = vmatpush2.bf16.msra.mxu0 0
  %6091 = vmatprep.subr.bf16.mxu0 0
  %6092 = vmatpush2.bf16.msra.mxu0 0
  %6093 = vmatprep.subr.bf16.mxu0 0
  %6094 = vmatpush2.bf16.msra.mxu0 0
  %6095 = vmatprep.mubr.bf16.mxu0 0
  %6096 = vmatmul.mubr.bf16.gmra.mxu0 %v6021
  %v6097 = vpop.f32.mrf.mxu0
  %v6098 = vadd.f32 %v4419, %v6097
  %v6099 = vpop.f32.mrf.mxu0
  %v6100 = vpop.f32.mrf.mxu0
  %v6101 = vpop.f32.mrf.mxu0
  %6102 = vdwg.mxu0
  %v6103 = vpack.c.bf16 %v6020, %v6020
  %6104 = vmatprep.subr.bf16.mxu0 %v4783
  %6105 = vmatpush1.bf16.msra.mxu0 %v4782
  %6106 = vmatprep.subr.bf16.mxu0 %v4780
  %6107 = vmatpush1.bf16.msra.mxu0 %v4779
  %6108 = vmatprep.subr.bf16.mxu0 %v4777
  %6109 = vmatpush1.bf16.msra.mxu0 %v4776
  %6110 = vmatprep.subr.bf16.mxu0 %v4774
  %6111 = vmatpush1.bf16.msra.mxu0 %v4773
  %6112 = vmatprep.subr.bf16.mxu0 %v4771
  %6113 = vmatpush1.bf16.msra.mxu0 %v4770
  %6114 = vmatprep.subr.bf16.mxu0 %v4768
  %6115 = vmatpush1.bf16.msra.mxu0 %v4767
  %6116 = vmatprep.subr.bf16.mxu0 %v4765
  %6117 = vmatpush1.bf16.msra.mxu0 %v4764
  %6118 = vmatprep.subr.bf16.mxu0 %v4762
  %6119 = vmatpush1.bf16.msra.mxu0 %v4761
  %6120 = vmatprep.subr.bf16.mxu0 0
  %6121 = vmatpush2.bf16.msra.mxu0 0
  %6122 = vmatprep.subr.bf16.mxu0 0
  %6123 = vmatpush2.bf16.msra.mxu0 0
  %6124 = vmatprep.subr.bf16.mxu0 0
  %6125 = vmatpush2.bf16.msra.mxu0 0
  %6126 = vmatprep.subr.bf16.mxu0 0
  %6127 = vmatpush2.bf16.msra.mxu0 0
  %6128 = vmatprep.subr.bf16.mxu0 0
  %6129 = vmatpush2.bf16.msra.mxu0 0
  %6130 = vmatprep.subr.bf16.mxu0 0
  %6131 = vmatpush2.bf16.msra.mxu0 0
  %6132 = vmatprep.subr.bf16.mxu0 0
  %6133 = vmatpush2.bf16.msra.mxu0 0
  %6134 = vmatprep.subr.bf16.mxu0 0
  %6135 = vmatpush2.bf16.msra.mxu0 0
  %6136 = vmatprep.mubr.bf16.mxu0 0
  %6137 = vmatmul.mubr.bf16.gmra.mxu0 %v6103
  %v6138 = vpop.f32.mrf.mxu0
  %v6139 = vadd.f32 %v4669, %v6138
  %v6140 = vpop.f32.mrf.mxu0
  %v6141 = vadd.f32 %v4673, %v6140
  %v6142 = vpop.f32.mrf.mxu0
  %v6143 = vpop.f32.mrf.mxu0
  %6144 = vdwg.mxu0
  %6145 = vmatprep.subr.bf16.mxu0 0
  %6146 = vmatpush1.bf16.msra.mxu0 %v4784
  %6147 = vmatprep.subr.bf16.mxu0 0
  %6148 = vmatpush1.bf16.msra.mxu0 %v4781
  %6149 = vmatprep.subr.bf16.mxu0 0
  %6150 = vmatpush1.bf16.msra.mxu0 %v4778
  %6151 = vmatprep.subr.bf16.mxu0 0
  %6152 = vmatpush1.bf16.msra.mxu0 %v4775
  %6153 = vmatprep.subr.bf16.mxu0 0
  %6154 = vmatpush1.bf16.msra.mxu0 %v4772
  %6155 = vmatprep.subr.bf16.mxu0 0
  %6156 = vmatpush1.bf16.msra.mxu0 %v4769
  %6157 = vmatprep.subr.bf16.mxu0 0
  %6158 = vmatpush1.bf16.msra.mxu0 %v4766
  %6159 = vmatprep.subr.bf16.mxu0 0
  %6160 = vmatpush1.bf16.msra.mxu0 %v4763
  %6161 = vmatprep.subr.bf16.mxu0 0
  %6162 = vmatpush2.bf16.msra.mxu0 0
  %6163 = vmatprep.subr.bf16.mxu0 0
  %6164 = vmatpush2.bf16.msra.mxu0 0
  %6165 = vmatprep.subr.bf16.mxu0 0
  %6166 = vmatpush2.bf16.msra.mxu0 0
  %6167 = vmatprep.subr.bf16.mxu0 0
  %6168 = vmatpush2.bf16.msra.mxu0 0
  %6169 = vmatprep.subr.bf16.mxu0 0
  %6170 = vmatpush2.bf16.msra.mxu0 0
  %6171 = vmatprep.subr.bf16.mxu0 0
  %6172 = vmatpush2.bf16.msra.mxu0 0
  %6173 = vmatprep.subr.bf16.mxu0 0
  %6174 = vmatpush2.bf16.msra.mxu0 0
  %6175 = vmatprep.subr.bf16.mxu0 0
  %6176 = vmatpush2.bf16.msra.mxu0 0
  %6177 = vmatprep.mubr.bf16.mxu0 0
  %6178 = vmatmul.mubr.bf16.gmra.mxu0 %v6103
  %v6179 = vpop.f32.mrf.mxu0
  %v6180 = vadd.f32 %v4677, %v6179
  %v6181 = vpop.f32.mrf.mxu0
  %v6182 = vpop.f32.mrf.mxu0
  %v6183 = vpop.f32.mrf.mxu0
  %6184 = vdwg.mxu0
  %v6185 = vadd.f32 %v6057, %v6139
  %v6186 = vxor.u32 %v6185, 2147483648
  %v6187 = vmul.f32 %v6186, 1.442695
  %v6188 = vpow.pop %v6187
  %v6189 = vadd.f32 %v6188, 1.0
  %v6190 = vrcp.pop %v6189
  %v6191 = vmul.f32 1.0, %v6190
  %v6192 = vadd.f32 %v6059, %v6141
  %v6193 = vxor.u32 %v6192, 2147483648
  %v6194 = vmul.f32 %v6193, 1.442695
  %v6195 = vpow.pop %v6194
  %v6196 = vadd.f32 %v6195, 1.0
  %v6197 = vrcp.pop %v6196
  %v6198 = vmul.f32 1.0, %v6197
  %v6199 = vmul.f32 %v6191, %v6180
  %v6200 = vadd.f32 %v6098, %v6199
  %v6201 = vtanh.pop %v6200
  %v6202 = vsub.f32 1.0, %v6198
  %v6203 = vmul.f32 %v6202, %v6201
  %v6204 = vmul.f32 %v6198, %v6020
  %v6205 = vadd.f32 %v6203, %v6204
  %v6206 = vld [vmem:[%s9] sm:$0xff]
  %v6207 = vld [vmem:[%s9 + $0x8] sm:$0xff]
  %v6208 = vld [vmem:[%s9 + $0x10] sm:$0xff]
  %v6209 = vld [vmem:[%s9 + $0x18] sm:$0xff]
  %v6210 = vld [vmem:[%s9 + $0x20] sm:$0xff]
  %v6211 = vld [vmem:[%s9 + $0x28] sm:$0xff]
  %v6212 = vld [vmem:[%s9 + $0x30] sm:$0xff]
  %v6213 = vld [vmem:[%s9 + $0x38] sm:$0xff]
  %v6214 = vld [vmem:[%s9 + $0x40] sm:$0xff]
  %v6215 = vld [vmem:[%s9 + $0x48] sm:$0xff]
  %v6216 = vld [vmem:[%s9 + $0x50] sm:$0xff]
  %v6217 = vld [vmem:[%s9 + $0x58] sm:$0xff]
  %v6218 = vld [vmem:[%s9 + $0x60] sm:$0xff]
  %v6219 = vld [vmem:[%s9 + $0x68] sm:$0xff]
  %v6220 = vld [vmem:[%s9 + $0x70] sm:$0xff]
  %v6221 = vld [vmem:[%s9 + $0x78] sm:$0xff]
  %v6222 = vld [vmem:[%s10] sm:$0x1]
  %v6224 = vlaneseq
  %v6225 = vshrl.u32 %v6224, 7
  %v6226 = vsub.s32 0, %v6225
  %v6227 = vrot.slane %v6222, %v6226
  %6229 = vmatprep.subr.mxu0 0.0
  %6230 = vmatpush1.msra.mxu0 %v6221
  %6231 = vmatprep.subr.mxu0 0.0
  %6232 = vmatpush1.msra.mxu0 %v6220
  %6233 = vmatprep.subr.mxu0 0.0
  %6234 = vmatpush1.msra.mxu0 %v6219
  %6235 = vmatprep.subr.mxu0 0.0
  %6236 = vmatpush1.msra.mxu0 %v6218
  %6237 = vmatprep.subr.mxu0 0.0
  %6238 = vmatpush1.msra.mxu0 %v6217
  %6239 = vmatprep.subr.mxu0 0.0
  %6240 = vmatpush1.msra.mxu0 %v6216
  %6241 = vmatprep.subr.mxu0 0.0
  %6242 = vmatpush1.msra.mxu0 %v6215
  %6243 = vmatprep.subr.mxu0 0.0
  %6244 = vmatpush1.msra.mxu0 %v6214
  %6245 = vmatprep.subr.mxu0 0.0
  %6246 = vmatpush1.msra.mxu0 %v6213
  %6247 = vmatprep.subr.mxu0 0.0
  %6248 = vmatpush1.msra.mxu0 %v6212
  %6249 = vmatprep.subr.mxu0 0.0
  %6250 = vmatpush1.msra.mxu0 %v6211
  %6251 = vmatprep.subr.mxu0 0.0
  %6252 = vmatpush1.msra.mxu0 %v6210
  %6253 = vmatprep.subr.mxu0 0.0
  %6254 = vmatpush1.msra.mxu0 %v6209
  %6255 = vmatprep.subr.mxu0 0.0
  %6256 = vmatpush1.msra.mxu0 %v6208
  %6257 = vmatprep.subr.mxu0 0.0
  %6258 = vmatpush1.msra.mxu0 %v6207
  %6259 = vmatprep.subr.mxu0 0.0
  %6260 = vmatpush1.msra.mxu0 %v6206
  %6261 = vmatprep.subr.mxu0 0.0
  %6262 = vmatpush2.msra.mxu0 0.0
  %6263 = vmatprep.subr.mxu0 0.0
  %6264 = vmatpush2.msra.mxu0 0.0
  %6265 = vmatprep.subr.mxu0 0.0
  %6266 = vmatpush2.msra.mxu0 0.0
  %6267 = vmatprep.subr.mxu0 0.0
  %6268 = vmatpush2.msra.mxu0 0.0
  %6269 = vmatprep.subr.mxu0 0.0
  %6270 = vmatpush2.msra.mxu0 0.0
  %6271 = vmatprep.subr.mxu0 0.0
  %6272 = vmatpush2.msra.mxu0 0.0
  %6273 = vmatprep.subr.mxu0 0.0
  %6274 = vmatpush2.msra.mxu0 0.0
  %6275 = vmatprep.subr.mxu0 0.0
  %6276 = vmatpush2.msra.mxu0 0.0
  %6277 = vmatprep.subr.mxu0 0.0
  %6278 = vmatpush2.msra.mxu0 0.0
  %6279 = vmatprep.subr.mxu0 0.0
  %6280 = vmatpush2.msra.mxu0 0.0
  %6281 = vmatprep.subr.mxu0 0.0
  %6282 = vmatpush2.msra.mxu0 0.0
  %6283 = vmatprep.subr.mxu0 0.0
  %6284 = vmatpush2.msra.mxu0 0.0
  %6285 = vmatprep.subr.mxu0 0.0
  %6286 = vmatpush2.msra.mxu0 0.0
  %6287 = vmatprep.subr.mxu0 0.0
  %6288 = vmatpush2.msra.mxu0 0.0
  %6289 = vmatprep.subr.mxu0 0.0
  %6290 = vmatpush2.msra.mxu0 0.0
  %6291 = vmatprep.subr.mxu0 0.0
  %6292 = vmatpush2.msra.mxu0 0.0
  %6293 = vmatprep.mubr.f32.mxu0 0.0
  %6294 = vmatmul.mubr.f32.gmra.mxu0 %v6205
  %v6295 = vpop.f32.mrf.mxu0
  %v6296 = vadd.f32 %v6227, %v6295
  %v6297 = vpop.f32.mrf.mxu0
  %6298 = vdwg.mxu0
  %vm6299 = vcmask 31744
  %6300 = vst.msk [vmem:[%s11] sm:$0xff] %vm6299, %v6296
  // Predicated region
  $region46: #{gru_model_forward.1} parent=0 // pred_check
    _
  $region47: #{gru_model_forward.1} parent=0 // pred_check_branch
    %6302 = sbr.rel (0) target = $region49
  $region48: #{gru_model_forward.1} parent=0 // pred_region
    _
  $region49: #{gru_model_forward.1} parent=0 // pred_fallthru
    _
  // Predicated region
  $region50: #{gru_model_forward.1} parent=0 // pred_check
    _
  $region51: #{gru_model_forward.1} parent=0 // pred_check_branch
    %6304 = sbr.rel (0) target = $region53
  $region52: #{gru_model_forward.1} parent=0 // pred_region
    _
  $region53: #{gru_model_forward.1} parent=0 // pred_fallthru
    _

</llo_original>
